<compile_context>
chip_gen: v7x
topology: tpu7x:2x2x1
jax: 0.10.0
libtpu: 0.0.40
codegen_flags: <defaults>
</compile_context>

<pallas_src>
import functools

import jax
import jax.numpy as jnp
from jax.experimental import pallas as pl
from jax.experimental.pallas import tpu as pltpu

LN_EPS = 1e-5
NEG_INF = -1e9


def _round_up(n, m):
    return ((n + m - 1) // m) * m


def _vmem_limit_bytes():
    # Explicit VMEM budget: v5e's default scoped limit is only 16 MiB, v7x has
    # only 64 MiB physical.  Use 48 MiB capped at 3/4 of physical capacity.
    try:
        cap = pltpu.get_tpu_info().vmem_capacity_bytes
        return int(min(48 * 1024 * 1024, (cap * 3) // 4))
    except Exception:
        return 32 * 1024 * 1024


_VMEM_LIMIT = _vmem_limit_bytes()


# ----------------------------------------------------------------------------
# In-kernel helpers
# ----------------------------------------------------------------------------
def _ln(x, g, b):
    mu = jnp.mean(x, axis=-1, keepdims=True)
    var = jnp.mean(jnp.square(x - mu), axis=-1, keepdims=True)
    return (x - mu) * jax.lax.rsqrt(var + LN_EPS) * g + b


# ----------------------------------------------------------------------------
# Kernel 1: row-wise LayerNorm (+ fused positional add)   y = LN(x)*g + b + pos
# ----------------------------------------------------------------------------
def _layernorm_pos_kernel(x_ref, g_ref, b_ref, pos_ref, o_ref):
    x = x_ref[...].astype(jnp.float32)
    o_ref[...] = (_ln(x, g_ref[...], b_ref[...]) + pos_ref[...]).astype(o_ref.dtype)


def layernorm_pos_pallas(x, g, b, pos, *, out_dtype=jnp.float32, row_tile=512):
    N, D = x.shape
    tile = N if N <= row_tile else row_tile       # full dim or 8-aligned 512
    grid = (pl.cdiv(N, tile),)                    # cdiv grid: no pad / no slice
    # TODO(synk): if dim_str is not a multiple of 128 in production, present a
    #             lane-dense (N*D//128, 128) output slab to avoid masked stores.
    return pl.pallas_call(
        _layernorm_pos_kernel,
        out_shape=jax.ShapeDtypeStruct((N, D), out_dtype),
        grid=grid,
        in_specs=[
            pl.BlockSpec((tile, D), lambda i: (i, 0)),
            pl.BlockSpec((1, D), lambda i: (0, 0)),
            pl.BlockSpec((1, D), lambda i: (0, 0)),
            pl.BlockSpec((1, D), lambda i: (0, 0)),
        ],
        out_specs=pl.BlockSpec((tile, D), lambda i: (i, 0)),
        compiler_params=pltpu.CompilerParams(
            dimension_semantics=("parallel",),
            vmem_limit_bytes=_VMEM_LIMIT),
    )(x, g, b, pos)


# ----------------------------------------------------------------------------
# Kernel 2: fused Linear + LayerNorm (+ pos)   y = LN(x @ W + bias)*g + beta + pos
# GEMM operands are bf16; accumulation / LN in f32.
# ----------------------------------------------------------------------------
def _linear_ln_pos_kernel(x_ref, w_ref, bias_ref, g_ref, beta_ref, pos_ref, o_ref):
    y = jnp.dot(x_ref[...], w_ref[...],
                preferred_element_type=jnp.float32) + bias_ref[...]
    o_ref[...] = (_ln(y, g_ref[...], beta_ref[...]) + pos_ref[...]).astype(o_ref.dtype)


def linear_ln_pos_pallas(x, w, bias, g, beta, pos, *,
                         out_dtype=jnp.float32, row_tile=512):
    N, Din = x.shape
    D = w.shape[1]
    tile = N if N <= row_tile else row_tile
    grid = (pl.cdiv(N, tile),)
    # TODO(synk): for very large Din (real BEiT/BERT token dims) add a K-axis
    #             grid dimension with a VMEM accumulator.
    return pl.pallas_call(
        _linear_ln_pos_kernel,
        out_shape=jax.ShapeDtypeStruct((N, D), out_dtype),
        grid=grid,
        in_specs=[
            pl.BlockSpec((tile, Din), lambda i: (i, 0)),
            pl.BlockSpec((Din, D), lambda i: (0, 0)),
            pl.BlockSpec((1, D), lambda i: (0, 0)),
            pl.BlockSpec((1, D), lambda i: (0, 0)),
            pl.BlockSpec((1, D), lambda i: (0, 0)),
            pl.BlockSpec((1, D), lambda i: (0, 0)),
        ],
        out_specs=pl.BlockSpec((tile, D), lambda i: (i, 0)),
        compiler_params=pltpu.CompilerParams(
            dimension_semantics=("parallel",),
            vmem_limit_bytes=_VMEM_LIMIT),
    )(x.astype(jnp.bfloat16), w.astype(jnp.bfloat16), bias, g, beta, pos)


# ----------------------------------------------------------------------------
# Kernel 3: one full post-norm TransformerEncoderLayer (batch_first, ReLU FFN).
# Grid iterates over blocks of Eb entities.  QKV / out-proj / FFN are flat
# (Eb*L, D) GEMMs; attention is batched entity-local (Eb, L, L) per head, so
# no block-diagonal mask and no cross-entity wasted work.
# ----------------------------------------------------------------------------
def _enc_layer_kernel(x_ref, km_ref,
                      wqkv_ref, bqkv_ref, wo_ref, bo_ref, g1_ref, be1_ref,
                      w1_ref, bf1_ref, w2_ref, bf2_ref, g2_ref, be2_ref,
                      o_ref, *, num_head):
    Eb, L, D = x_ref.shape
    NL = Eb * L
    hd = D // num_head
    scale = 1.0 / float(hd) ** 0.5

    xb = x_ref[...].reshape(NL, D)                # bf16 activations for GEMMs
    x = xb.astype(jnp.float32)                    # f32 copy for residual / LN
    km = km_ref[...]                              # (Eb, 1, L) additive mask, f32

    # Fused QKV projection: one (NL, D) x (D, 3D) MXU pass.
    qkv = jnp.dot(xb, wqkv_ref[...], preferred_element_type=jnp.float32)
    qkv = qkv + bqkv_ref[...]

    # Entity-local attention: batched per-head (Eb, L, L) scores; per-head
    # temporaries are only Eb*L*L f32, so the unrolled head loop stays small.
    ctx_heads = []
    for h in range(num_head):
        lo = h * hd
        qh = qkv[:, lo:lo + hd].reshape(Eb, L, hd).astype(jnp.bfloat16)
        kh = qkv[:, D + lo:D + lo + hd].reshape(Eb, L, hd).astype(jnp.bfloat16)
        vh = qkv[:, 2 * D + lo:2 * D + lo + hd].reshape(Eb, L, hd).astype(jnp.bfloat16)
        s = jnp.einsum("bld,bmd->blm", qh, kh,
                       preferred_element_type=jnp.float32) * scale + km
        s = s - jnp.max(s, axis=-1, keepdims=True)
        p = jnp.exp(s)
        p = p / jnp.sum(p, axis=-1, keepdims=True)          # exact softmax (f32)
        c = jnp.einsum("blm,bmd->bld", p.astype(jnp.bfloat16), vh,
                       preferred_element_type=jnp.float32)
        ctx_heads.append(c.reshape(NL, hd))
    ctx = jnp.concatenate(ctx_heads, axis=-1)               # (NL, D) f32

    attn = jnp.dot(ctx.astype(jnp.bfloat16), wo_ref[...],
                   preferred_element_type=jnp.float32) + bo_ref[...]
    h1 = _ln(x + attn, g1_ref[...], be1_ref[...])

    ff = jnp.dot(h1.astype(jnp.bfloat16), w1_ref[...],
                 preferred_element_type=jnp.float32) + bf1_ref[...]
    ff = jnp.maximum(ff, 0.0)
    ff = jnp.dot(ff.astype(jnp.bfloat16), w2_ref[...],
                 preferred_element_type=jnp.float32) + bf2_ref[...]
    out = _ln(h1 + ff, g2_ref[...], be2_ref[...])

    o_ref[...] = out.reshape(Eb, L, D).astype(o_ref.dtype)


def encoder_layer_pallas(x, km, p, num_head, Eb):
    """x: (E_pad, L, D) bf16; km: (E_pad, 1, L) f32 additive key-padding mask."""
    E_pad, L, D = x.shape
    n_blocks = E_pad // Eb
    NL = Eb * L
    dim_hid = p["w1"].shape[1]

    # Pack QKV into one (D, 3D) GEMM operand; GEMM weights bf16, rest f32.
    wqkv = jnp.concatenate([p["wq"], p["wk"], p["wv"]], axis=1).astype(jnp.bfloat16)
    bqkv = jnp.concatenate([p["bq"], p["bk"], p["bv"]], axis=1).astype(jnp.float32)
    weights = [
        wqkv, bqkv,
        p["wo"].astype(jnp.bfloat16), p["bo"],
        p["g1"], p["be1"],
        p["w1"].astype(jnp.bfloat16), p["bf1"],
        p["w2"].astype(jnp.bfloat16), p["bf2"],
        p["g2"], p["be2"],
    ]

    kernel = functools.partial(_enc_layer_kernel, num_head=num_head)

    flops_block = (2 * NL * D * (3 * D)        # fused QKV projection
                   + 4 * Eb * L * L * D        # entity-local scores + context
                   + 2 * NL * D * D            # output projection
                   + 4 * NL * D * dim_hid)     # FFN (two GEMMs)
    bytes_weights = sum(int(w.size) * w.dtype.itemsize for w in weights)
    cost = pl.CostEstimate(
        flops=int(flops_block) * n_blocks,
        transcendentals=int(Eb * num_head * L * L + 2 * NL) * n_blocks,
        bytes_accessed=int(2 * x.size * x.dtype.itemsize + km.size * 4
                           + bytes_weights * n_blocks),
    )

    # TODO(synk): on v7x mark the grid-invariant weight specs with
    #             pipeline_mode=pl.Buffered(1) to avoid double-buffering constants.
    in_specs = [
        pl.BlockSpec((Eb, L, D), lambda e: (e, 0, 0)),     # entity block
        pl.BlockSpec((Eb, 1, L), lambda e: (e, 0, 0)),     # key-padding rows
    ] + [pl.BlockSpec(w.shape, lambda e: (0, 0)) for w in weights]

    return pl.pallas_call(
        kernel,
        out_shape=jax.ShapeDtypeStruct((E_pad, L, D), jnp.bfloat16),
        grid=(n_blocks,),
        in_specs=in_specs,
        out_specs=pl.BlockSpec((Eb, L, D), lambda e: (e, 0, 0)),
        compiler_params=pltpu.CompilerParams(
            dimension_semantics=("parallel",),
            vmem_limit_bytes=_VMEM_LIMIT),
        cost_estimate=cost,
    )(x, km, *weights)


# ----------------------------------------------------------------------------
# MyGO forward (eval mode): Pallas kernels on the hot path, glue in plain JAX
# ----------------------------------------------------------------------------
def mygo_forward(params, enc_layers, vis_table, txt_table,
                 vis_idx, txt_idx, ent_mask, *, num_head):
    E = params["ent_embeddings"].shape[0]
    D = params["ent_token"].shape[-1]

    # [CLS]-style entity token tiled over entities
    ent_tkn = jnp.broadcast_to(params["ent_token"], (E, 1, D)).astype(jnp.bfloat16)

    # structural branch: LN(ent_embeddings) + pos (dropout = identity in eval)
    rep_ent_str = layernorm_pos_pallas(
        params["ent_embeddings"].reshape(E, D),
        params["str_ent_ln_g"], params["str_ent_ln_b"],
        params["pos_str_ent"].reshape(1, D),
        out_dtype=jnp.bfloat16).reshape(E, 1, D)

    # visual branch: embedding gather (glue) -> fused Linear + LN + pos kernel
    vis_tok = vis_table[vis_idx]                        # (E, Nv, img_dim)
    Ev, Nv, Di = vis_tok.shape
    rep_ent_vis = linear_ln_pos_pallas(
        vis_tok.reshape(Ev * Nv, Di),
        params["proj_vis_w"], params["proj_vis_b"],
        params["vis_ln_g"], params["vis_ln_b"],
        params["pos_vis_ent"].reshape(1, D),
        out_dtype=jnp.bfloat16).reshape(Ev, Nv, D)

    # textual branch
    txt_tok = txt_table[txt_idx]                        # (E, Nt, txt_dim)
    Et, Nt, Dt = txt_tok.shape
    rep_ent_txt = linear_ln_pos_pallas(
        txt_tok.reshape(Et * Nt, Dt),
        params["proj_txt_w"], params["proj_txt_b"],
        params["txt_ln_g"], params["txt_ln_b"],
        params["pos_txt_ent"].reshape(1, D),
        out_dtype=jnp.bfloat16).reshape(Et, Nt, D)

    # entity sequence (bf16 activations through the encoder stack)
    ent_seq = jnp.concatenate([ent_tkn, rep_ent_str, rep_ent_vis, rep_ent_txt],
                              axis=1)                   # (E, L, D) bf16
    L = ent_seq.shape[1]

    # Entity blocking: target ~512 rows (Eb*L) per block, but keep >= 2 blocks
    # so both v7x TensorCores get work and grid pipelining exists.
    Eb = max(1, min(E, max(1, 512 // max(L, 1))))
    if E >= 2:
        Eb = min(Eb, -(-E // 2))
    E_pad = _round_up(E, Eb)

    ent_seq = jnp.pad(ent_seq, ((0, E_pad - E), (0, 0), (0, 0)))
    km = jnp.where(ent_mask, NEG_INF, 0.0).astype(jnp.float32)   # (E, L) additive
    km = jnp.pad(km, ((0, E_pad - E), (0, 0))).reshape(E_pad, 1, L)

    x = ent_seq
    for lp in enc_layers:
        x = encoder_layer_pallas(x, km, lp, num_head, Eb)
    ent_embs = x[:E, 0].astype(jnp.float32)                      # (E, D) [CLS]

    # relation structural embeddings: LayerNorm only (no pos / encoder here)
    R = params["rel_embeddings"].shape[0]
    rep_rel_str = layernorm_pos_pallas(
        params["rel_embeddings"].reshape(R, D),
        params["str_rel_ln_g"], params["str_rel_ln_b"],
        jnp.zeros((1, D), jnp.float32))

    emb_ent = jnp.concatenate([ent_embs, params["lp_token"]], axis=0)  # (E+1, D)
    return emb_ent, rep_rel_str


# ----------------------------------------------------------------------------
# Pure-JAX reference (sanity check of the Pallas kernels, f32)
# ----------------------------------------------------------------------------
def _ref_ln(x, g, b):
    mu = x.mean(-1, keepdims=True)
    var = ((x - mu) ** 2).mean(-1, keepdims=True)
    return (x - mu) / jnp.sqrt(var + LN_EPS) * g + b


def _ref_enc_layer(x, addm, p, num_head):
    E, L, D = x.shape
    hd = D // num_head
    q = x @ p["wq"] + p["bq"]
    k = x @ p["wk"] + p["bk"]
    v = x @ p["wv"] + p["bv"]
    qh = q.reshape(E, L, num_head, hd).transpose(0, 2, 1, 3)
    kh = k.reshape(E, L, num_head, hd).transpose(0, 2, 1, 3)
    vh = v.reshape(E, L, num_head, hd).transpose(0, 2, 1, 3)
    s = jnp.einsum("ehqd,ehkd->ehqk", qh, kh) / jnp.sqrt(float(hd))
    s = s + addm[:, None, :, :]
    a = jax.nn.softmax(s, axis=-1)
    ctx = jnp.einsum("ehqk,ehkd->ehqd", a, vh).transpose(0, 2, 1, 3).reshape(E, L, D)
    attn = ctx @ p["wo"] + p["bo"]
    h1 = _ref_ln(x + attn, p["g1"], p["be1"])
    ff = jax.nn.relu(h1 @ p["w1"] + p["bf1"]) @ p["w2"] + p["bf2"]
    return _ref_ln(h1 + ff, p["g2"], p["be2"])


def reference_forward(params, enc_layers, vis_table, txt_table,
                      vis_idx, txt_idx, ent_mask, *, num_head):
    E = params["ent_embeddings"].shape[0]
    D = params["ent_token"].shape[-1]
    ent_tkn = jnp.broadcast_to(params["ent_token"], (E, 1, D))
    rep_str = _ref_ln(params["ent_embeddings"].reshape(E, D),
                      params["str_ent_ln_g"], params["str_ent_ln_b"]
                      ).reshape(E, 1, D) + params["pos_str_ent"]
    vis_tok = vis_table[vis_idx]
    rep_vis = _ref_ln(vis_tok @ params["proj_vis_w"] + params["proj_vis_b"],
                      params["vis_ln_g"], params["vis_ln_b"]) + params["pos_vis_ent"]
    txt_tok = txt_table[txt_idx]
    rep_txt = _ref_ln(txt_tok @ params["proj_txt_w"] + params["proj_txt_b"],
                      params["txt_ln_g"], params["txt_ln_b"]) + params["pos_txt_ent"]
    x = jnp.concatenate([ent_tkn, rep_str, rep_vis, rep_txt], axis=1)
    addm = jnp.where(ent_mask, NEG_INF, 0.0).astype(jnp.float32)[:, None, :]
    for lp in enc_layers:
        x = _ref_enc_layer(x, addm, lp, num_head)
    ent_embs = x[:, 0]
    R = params["rel_embeddings"].shape[0]
    rel = _ref_ln(params["rel_embeddings"].reshape(R, D),
                  params["str_rel_ln_g"], params["str_rel_ln_b"])
    return jnp.concatenate([ent_embs, params["lp_token"]], axis=0), rel


# ----------------------------------------------------------------------------
# Deterministic parameter / input construction (synthetic, no checkpoint load)
# ----------------------------------------------------------------------------
def _xavier(key, shape):
    if len(shape) >= 2:
        fan_in, fan_out = shape[-2], shape[-1]
    else:
        fan_in = fan_out = shape[-1]
    bound = (6.0 / (fan_in + fan_out)) ** 0.5
    return jax.random.uniform(key, shape, jnp.float32, -bound, bound)


def build_model(key, cfg):
    E, R, D, H = cfg["num_ent"], cfg["num_rel"], cfg["dim_str"], cfg["dim_hid"]
    keys = iter(jax.random.split(key, 64))

    params = {
        "ent_token": _xavier(next(keys), (1, 1, D)),
        "ent_embeddings": _xavier(next(keys), (E, 1, D)),
        "rel_embeddings": _xavier(next(keys), (R, 1, D)),
        "lp_token": _xavier(next(keys), (1, D)),
        "pos_str_ent": _xavier(next(keys), (1, 1, D)),
        "pos_vis_ent": _xavier(next(keys), (1, 1, D)),
        "pos_txt_ent": _xavier(next(keys), (1, 1, D)),
        "str_ent_ln_g": jnp.ones((1, D), jnp.float32),
        "str_ent_ln_b": jnp.zeros((1, D), jnp.float32),
        "str_rel_ln_g": jnp.ones((1, D), jnp.float32),
        "str_rel_ln_b": jnp.zeros((1, D), jnp.float32),
        "vis_ln_g": jnp.ones((1, D), jnp.float32),
        "vis_ln_b": jnp.zeros((1, D), jnp.float32),
        "txt_ln_g": jnp.ones((1, D), jnp.float32),
        "txt_ln_b": jnp.zeros((1, D), jnp.float32),
        "proj_vis_w": _xavier(next(keys), (cfg["img_dim"], D)),
        "proj_vis_b": jnp.zeros((1, D), jnp.float32),
        "proj_txt_w": _xavier(next(keys), (cfg["txt_dim"], D)),
        "proj_txt_b": jnp.zeros((1, D), jnp.float32),
    }

    enc_layers = []
    for _ in range(cfg["num_layer_enc_ent"]):
        enc_layers.append({
            "wq": _xavier(next(keys), (D, D)), "bq": jnp.zeros((1, D), jnp.float32),
            "wk": _xavier(next(keys), (D, D)), "bk": jnp.zeros((1, D), jnp.float32),
            "wv": _xavier(next(keys), (D, D)), "bv": jnp.zeros((1, D), jnp.float32),
            "wo": _xavier(next(keys), (D, D)), "bo": jnp.zeros((1, D), jnp.float32),
            "g1": jnp.ones((1, D), jnp.float32), "be1": jnp.zeros((1, D), jnp.float32),
            "w1": _xavier(next(keys), (D, H)), "bf1": jnp.zeros((1, H), jnp.float32),
            "w2": _xavier(next(keys), (H, D)), "bf2": jnp.zeros((1, D), jnp.float32),
            "g2": jnp.ones((1, D), jnp.float32), "be2": jnp.zeros((1, D), jnp.float32),
        })

    # frozen token tables (stand-ins for tokens/visual.pth, tokens/textual.pth)
    vis_table = jax.random.normal(next(keys), (cfg["vis_vocab"], cfg["img_dim"]),
                                  jnp.float32)
    txt_table = jax.random.normal(next(keys), (cfg["txt_vocab"], cfg["txt_dim"]),
                                  jnp.float32)
    vis_idx = jax.random.randint(next(keys), (E, cfg["num_vis"]), 0, cfg["vis_vocab"])
    txt_idx = jax.random.randint(next(keys), (E, cfg["num_txt"]), 0, cfg["txt_vocab"])

    # ent_mask = [False, False, ent_vis_mask, ent_txt_mask]
    false2 = jnp.zeros((E, 2), bool)
    ent_vis_mask = jnp.zeros((E, cfg["num_vis"]), bool).at[:, -1].set(
        (jnp.arange(E) % 2) == 0)                   # mask last vis token on even ids
    ent_txt_mask = jnp.zeros((E, cfg["num_txt"]), bool)
    ent_mask = jnp.concatenate([false2, ent_vis_mask, ent_txt_mask], axis=1)

    return params, enc_layers, vis_table, txt_table, vis_idx, txt_idx, ent_mask


# ----------------------------------------------------------------------------
if __name__ == "__main__":
    cfg = dict(num_ent=16, num_rel=8, dim_str=128, num_head=4, dim_hid=256,
               num_layer_enc_ent=2, num_vis=6, num_txt=8,
               img_dim=192, txt_dim=160, vis_vocab=32, txt_vocab=64)

    key = jax.random.PRNGKey(0)
    (params, enc_layers, vis_table, txt_table,
     vis_idx, txt_idx, ent_mask) = build_model(key, cfg)

    fwd = jax.jit(functools.partial(mygo_forward, num_head=cfg["num_head"]))
    emb_ent, rep_rel = fwd(params, enc_layers, vis_table, txt_table,
                           vis_idx, txt_idx, ent_mask)
    jax.block_until_ready((emb_ent, rep_rel))

    # shape / sanity checks against a pure-JAX f32 reference
    assert emb_ent.shape == (cfg["num_ent"] + 1, cfg["dim_str"])
    assert rep_rel.shape == (cfg["num_rel"], cfg["dim_str"])
    assert bool(jnp.all(jnp.isfinite(emb_ent))) and bool(jnp.all(jnp.isfinite(rep_rel)))

    ref_ent, ref_rel = reference_forward(params, enc_layers, vis_table, txt_table,
                                         vis_idx, txt_idx, ent_mask,
                                         num_head=cfg["num_head"])
    rel_err = float(jnp.linalg.norm(emb_ent - ref_ent)
                    / (jnp.linalg.norm(ref_ent) + 1e-9))
    assert rel_err < 3e-2, f"entity embedding relative error too large: {rel_err}"
    assert jnp.allclose(emb_ent, ref_ent, rtol=1e-1, atol=1e-1)   # bf16 GEMM chain
    assert jnp.allclose(rep_rel, ref_rel, rtol=1e-3, atol=1e-3)   # f32 LN path

    print("KERNEL_OK")
</pallas_src>

<mosaic_0001>
module attributes {stable_mosaic.version = 11 : i64} {
  func.func @_linear_ln_pos_kernel(%arg0: i32, %arg1: memref<96x192xbf16, #tpu.memory_space<vmem>>, %arg2: memref<192x128xbf16, #tpu.memory_space<vmem>>, %arg3: memref<1x128xf32, #tpu.memory_space<vmem>>, %arg4: memref<1x128xf32, #tpu.memory_space<vmem>>, %arg5: memref<1x128xf32, #tpu.memory_space<vmem>>, %arg6: memref<1x128xf32, #tpu.memory_space<vmem>>, %arg7: memref<96x128xbf16, #tpu.memory_space<vmem>>) attributes {dimension_semantics = [#tpu.dimension_semantics<parallel>], iteration_bounds = array<i64: 1>, scalar_prefetch = 0 : i64, scratch_operands = 0 : i64, tpu.core_type = #tpu.core_type<tc>, window_params = [{transform_indices = @transform_0, window_bounds = array<i64: 96, 192>}, {pipeline_mode = #tpu.pipeline_mode<synchronous>, transform_indices = @transform_1, window_bounds = array<i64: 192, 128>}, {pipeline_mode = #tpu.pipeline_mode<synchronous>, transform_indices = @transform_2, window_bounds = array<i64: 1, 128>}, {pipeline_mode = #tpu.pipeline_mode<synchronous>, transform_indices = @transform_3, window_bounds = array<i64: 1, 128>}, {pipeline_mode = #tpu.pipeline_mode<synchronous>, transform_indices = @transform_4, window_bounds = array<i64: 1, 128>}, {pipeline_mode = #tpu.pipeline_mode<synchronous>, transform_indices = @transform_5, window_bounds = array<i64: 1, 128>}, {transform_indices = @transform_6, window_bounds = array<i64: 96, 128>}]} {
    %c0 = arith.constant 0 : index
    %c0_0 = arith.constant 0 : index
    %0 = vector.load %arg1[%c0, %c0_0] : memref<96x192xbf16, #tpu.memory_space<vmem>>, vector<96x192xbf16>
    %c0_1 = arith.constant 0 : index
    %c0_2 = arith.constant 0 : index
    %1 = vector.load %arg2[%c0_1, %c0_2] : memref<192x128xbf16, #tpu.memory_space<vmem>>, vector<192x128xbf16>
    %cst = arith.constant dense<0.000000e+00> : vector<96x128xf32>
    %2 = tpu.matmul %0, %1, %cst {dimension_numbers = #tpu.dot_dimension_numbers<[1], [0], [0], [1], [0, 0, 1, 1], [], []>} : vector<96x192xbf16>, vector<192x128xbf16>, vector<96x128xf32> -> vector<96x128xf32>
    %c0_3 = arith.constant 0 : index
    %c0_4 = arith.constant 0 : index
    %3 = vector.load %arg3[%c0_3, %c0_4] : memref<1x128xf32, #tpu.memory_space<vmem>>, vector<1x128xf32>
    %4 = vector.broadcast %3 : vector<1x128xf32> to vector<96x128xf32>
    %5 = arith.addf %2, %4 : vector<96x128xf32>
    %c0_5 = arith.constant 0 : index
    %c0_6 = arith.constant 0 : index
    %6 = vector.load %arg4[%c0_5, %c0_6] : memref<1x128xf32, #tpu.memory_space<vmem>>, vector<1x128xf32>
    %c0_7 = arith.constant 0 : index
    %c0_8 = arith.constant 0 : index
    %7 = vector.load %arg5[%c0_7, %c0_8] : memref<1x128xf32, #tpu.memory_space<vmem>>, vector<1x128xf32>
    %cst_9 = arith.constant dense<0.000000e+00> : vector<96xf32>
    %8 = vector.multi_reduction <add>, %5, %cst_9 [1] : vector<96x128xf32> to vector<96xf32>
    %9 = vector.shape_cast %8 : vector<96xf32> to vector<96x1xf32>
    %cst_10 = arith.constant 1.280000e+02 : f32
    %10 = vector.broadcast %cst_10 : f32 to vector<96x1xf32>
    %11 = arith.divf %9, %10 : vector<96x1xf32>
    %12 = vector.broadcast %11 : vector<96x1xf32> to vector<96x128xf32>
    %13 = arith.subf %5, %12 : vector<96x128xf32>
    %14 = arith.mulf %13, %13 : vector<96x128xf32>
    %cst_11 = arith.constant dense<0.000000e+00> : vector<96xf32>
    %15 = vector.multi_reduction <add>, %14, %cst_11 [1] : vector<96x128xf32> to vector<96xf32>
    %16 = vector.shape_cast %15 : vector<96xf32> to vector<96x1xf32>
    %cst_12 = arith.constant 1.280000e+02 : f32
    %17 = vector.broadcast %cst_12 : f32 to vector<96x1xf32>
    %18 = arith.divf %16, %17 : vector<96x1xf32>
    %19 = vector.broadcast %11 : vector<96x1xf32> to vector<96x128xf32>
    %20 = arith.subf %5, %19 : vector<96x128xf32>
    %cst_13 = arith.constant 9.99999974E-6 : f32
    %21 = vector.broadcast %cst_13 : f32 to vector<96x1xf32>
    %22 = arith.addf %18, %21 : vector<96x1xf32>
    %23 = math.rsqrt %22 : vector<96x1xf32>
    %24 = vector.broadcast %23 : vector<96x1xf32> to vector<96x128xf32>
    %25 = arith.mulf %20, %24 : vector<96x128xf32>
    %26 = vector.broadcast %6 : vector<1x128xf32> to vector<96x128xf32>
    %27 = arith.mulf %25, %26 : vector<96x128xf32>
    %28 = vector.broadcast %7 : vector<1x128xf32> to vector<96x128xf32>
    %29 = arith.addf %27, %28 : vector<96x128xf32>
    %c0_14 = arith.constant 0 : index
    %c0_15 = arith.constant 0 : index
    %30 = vector.load %arg6[%c0_14, %c0_15] : memref<1x128xf32, #tpu.memory_space<vmem>>, vector<1x128xf32>
    %31 = vector.broadcast %30 : vector<1x128xf32> to vector<96x128xf32>
    %32 = arith.addf %29, %31 : vector<96x128xf32>
    %33 = arith.truncf %32 : vector<96x128xf32> to vector<96x128xbf16>
    %c0_16 = arith.constant 0 : index
    %c0_17 = arith.constant 0 : index
    %34 = vector.load %arg7[%c0_16, %c0_17] : memref<96x128xbf16, #tpu.memory_space<vmem>>, vector<96x128xbf16>
    tpu.vector_store %arg7[%c0_16, %c0_17], %33 {strides = array<i32>} : memref<96x128xbf16, #tpu.memory_space<vmem>>, vector<96x128xbf16>,
    return
  }
  func.func @transform_0(%arg0: i32) -> (i32, i32) {
    %c0_i32 = arith.constant 0 : i32
    %c0_i32_0 = arith.constant 0 : i32
    return %arg0, %c0_i32 : i32, i32
  }
  func.func @transform_1(%arg0: i32) -> (i32, i32) {
    %c0_i32 = arith.constant 0 : i32
    %c0_i32_0 = arith.constant 0 : i32
    %c0_i32_1 = arith.constant 0 : i32
    return %c0_i32, %c0_i32_0 : i32, i32
  }
  func.func @transform_2(%arg0: i32) -> (i32, i32) {
    %c0_i32 = arith.constant 0 : i32
    %c0_i32_0 = arith.constant 0 : i32
    %c0_i32_1 = arith.constant 0 : i32
    return %c0_i32, %c0_i32_0 : i32, i32
  }
  func.func @transform_3(%arg0: i32) -> (i32, i32) {
    %c0_i32 = arith.constant 0 : i32
    %c0_i32_0 = arith.constant 0 : i32
    %c0_i32_1 = arith.constant 0 : i32
    return %c0_i32, %c0_i32_0 : i32, i32
  }
  func.func @transform_4(%arg0: i32) -> (i32, i32) {
    %c0_i32 = arith.constant 0 : i32
    %c0_i32_0 = arith.constant 0 : i32
    %c0_i32_1 = arith.constant 0 : i32
    return %c0_i32, %c0_i32_0 : i32, i32
  }
  func.func @transform_5(%arg0: i32) -> (i32, i32) {
    %c0_i32 = arith.constant 0 : i32
    %c0_i32_0 = arith.constant 0 : i32
    %c0_i32_1 = arith.constant 0 : i32
    return %c0_i32, %c0_i32_0 : i32, i32
  }
  func.func @transform_6(%arg0: i32) -> (i32, i32) {
    %c0_i32 = arith.constant 0 : i32
    %c0_i32_0 = arith.constant 0 : i32
    return %arg0, %c0_i32 : i32, i32
  }
}

module attributes {stable_mosaic.version = 11 : i64} {
  func.func @_linear_ln_pos_kernel(%arg0: i32, %arg1: memref<128x160xbf16, #tpu.memory_space<vmem>>, %arg2: memref<160x128xbf16, #tpu.memory_space<vmem>>, %arg3: memref<1x128xf32, #tpu.memory_space<vmem>>, %arg4: memref<1x128xf32, #tpu.memory_space<vmem>>, %arg5: memref<1x128xf32, #tpu.memory_space<vmem>>, %arg6: memref<1x128xf32, #tpu.memory_space<vmem>>, %arg7: memref<128x128xbf16, #tpu.memory_space<vmem>>) attributes {dimension_semantics = [#tpu.dimension_semantics<parallel>], iteration_bounds = array<i64: 1>, scalar_prefetch = 0 : i64, scratch_operands = 0 : i64, tpu.core_type = #tpu.core_type<tc>, window_params = [{transform_indices = @transform_0, window_bounds = array<i64: 128, 160>}, {pipeline_mode = #tpu.pipeline_mode<synchronous>, transform_indices = @transform_1, window_bounds = array<i64: 160, 128>}, {pipeline_mode = #tpu.pipeline_mode<synchronous>, transform_indices = @transform_2, window_bounds = array<i64: 1, 128>}, {pipeline_mode = #tpu.pipeline_mode<synchronous>, transform_indices = @transform_3, window_bounds = array<i64: 1, 128>}, {pipeline_mode = #tpu.pipeline_mode<synchronous>, transform_indices = @transform_4, window_bounds = array<i64: 1, 128>}, {pipeline_mode = #tpu.pipeline_mode<synchronous>, transform_indices = @transform_5, window_bounds = array<i64: 1, 128>}, {transform_indices = @transform_6, window_bounds = array<i64: 128, 128>}]} {
    %c0 = arith.constant 0 : index
    %c0_0 = arith.constant 0 : index
    %0 = vector.load %arg1[%c0, %c0_0] : memref<128x160xbf16, #tpu.memory_space<vmem>>, vector<128x160xbf16>
    %c0_1 = arith.constant 0 : index
    %c0_2 = arith.constant 0 : index
    %1 = vector.load %arg2[%c0_1, %c0_2] : memref<160x128xbf16, #tpu.memory_space<vmem>>, vector<160x128xbf16>
    %cst = arith.constant dense<0.000000e+00> : vector<128x128xf32>
    %2 = tpu.matmul %0, %1, %cst {dimension_numbers = #tpu.dot_dimension_numbers<[1], [0], [0], [1], [0, 0, 1, 1], [], []>} : vector<128x160xbf16>, vector<160x128xbf16>, vector<128x128xf32> -> vector<128x128xf32>
    %c0_3 = arith.constant 0 : index
    %c0_4 = arith.constant 0 : index
    %3 = vector.load %arg3[%c0_3, %c0_4] : memref<1x128xf32, #tpu.memory_space<vmem>>, vector<1x128xf32>
    %4 = vector.broadcast %3 : vector<1x128xf32> to vector<128x128xf32>
    %5 = arith.addf %2, %4 : vector<128x128xf32>
    %c0_5 = arith.constant 0 : index
    %c0_6 = arith.constant 0 : index
    %6 = vector.load %arg4[%c0_5, %c0_6] : memref<1x128xf32, #tpu.memory_space<vmem>>, vector<1x128xf32>
    %c0_7 = arith.constant 0 : index
    %c0_8 = arith.constant 0 : index
    %7 = vector.load %arg5[%c0_7, %c0_8] : memref<1x128xf32, #tpu.memory_space<vmem>>, vector<1x128xf32>
    %cst_9 = arith.constant dense<0.000000e+00> : vector<128xf32>
    %8 = vector.multi_reduction <add>, %5, %cst_9 [1] : vector<128x128xf32> to vector<128xf32>
    %9 = vector.shape_cast %8 : vector<128xf32> to vector<128x1xf32>
    %cst_10 = arith.constant 1.280000e+02 : f32
    %10 = vector.broadcast %cst_10 : f32 to vector<128x1xf32>
    %11 = arith.divf %9, %10 : vector<128x1xf32>
    %12 = vector.broadcast %11 : vector<128x1xf32> to vector<128x128xf32>
    %13 = arith.subf %5, %12 : vector<128x128xf32>
    %14 = arith.mulf %13, %13 : vector<128x128xf32>
    %cst_11 = arith.constant dense<0.000000e+00> : vector<128xf32>
    %15 = vector.multi_reduction <add>, %14, %cst_11 [1] : vector<128x128xf32> to vector<128xf32>
    %16 = vector.shape_cast %15 : vector<128xf32> to vector<128x1xf32>
    %cst_12 = arith.constant 1.280000e+02 : f32
    %17 = vector.broadcast %cst_12 : f32 to vector<128x1xf32>
    %18 = arith.divf %16, %17 : vector<128x1xf32>
    %19 = vector.broadcast %11 : vector<128x1xf32> to vector<128x128xf32>
    %20 = arith.subf %5, %19 : vector<128x128xf32>
    %cst_13 = arith.constant 9.99999974E-6 : f32
    %21 = vector.broadcast %cst_13 : f32 to vector<128x1xf32>
    %22 = arith.addf %18, %21 : vector<128x1xf32>
    %23 = math.rsqrt %22 : vector<128x1xf32>
    %24 = vector.broadcast %23 : vector<128x1xf32> to vector<128x128xf32>
    %25 = arith.mulf %20, %24 : vector<128x128xf32>
    %26 = vector.broadcast %6 : vector<1x128xf32> to vector<128x128xf32>
    %27 = arith.mulf %25, %26 : vector<128x128xf32>
    %28 = vector.broadcast %7 : vector<1x128xf32> to vector<128x128xf32>
    %29 = arith.addf %27, %28 : vector<128x128xf32>
    %c0_14 = arith.constant 0 : index
    %c0_15 = arith.constant 0 : index
    %30 = vector.load %arg6[%c0_14, %c0_15] : memref<1x128xf32, #tpu.memory_space<vmem>>, vector<1x128xf32>
    %31 = vector.broadcast %30 : vector<1x128xf32> to vector<128x128xf32>
    %32 = arith.addf %29, %31 : vector<128x128xf32>
    %33 = arith.truncf %32 : vector<128x128xf32> to vector<128x128xbf16>
    %c0_16 = arith.constant 0 : index
    %c0_17 = arith.constant 0 : index
    %34 = vector.load %arg7[%c0_16, %c0_17] : memref<128x128xbf16, #tpu.memory_space<vmem>>, vector<128x128xbf16>
    tpu.vector_store %arg7[%c0_16, %c0_17], %33 {strides = array<i32>} : memref<128x128xbf16, #tpu.memory_space<vmem>>, vector<128x128xbf16>,
    return
  }
  func.func @transform_0(%arg0: i32) -> (i32, i32) {
    %c0_i32 = arith.constant 0 : i32
    %c0_i32_0 = arith.constant 0 : i32
    return %arg0, %c0_i32 : i32, i32
  }
  func.func @transform_1(%arg0: i32) -> (i32, i32) {
    %c0_i32 = arith.constant 0 : i32
    %c0_i32_0 = arith.constant 0 : i32
    %c0_i32_1 = arith.constant 0 : i32
    return %c0_i32, %c0_i32_0 : i32, i32
  }
  func.func @transform_2(%arg0: i32) -> (i32, i32) {
    %c0_i32 = arith.constant 0 : i32
    %c0_i32_0 = arith.constant 0 : i32
    %c0_i32_1 = arith.constant 0 : i32
    return %c0_i32, %c0_i32_0 : i32, i32
  }
  func.func @transform_3(%arg0: i32) -> (i32, i32) {
    %c0_i32 = arith.constant 0 : i32
    %c0_i32_0 = arith.constant 0 : i32
    %c0_i32_1 = arith.constant 0 : i32
    return %c0_i32, %c0_i32_0 : i32, i32
  }
  func.func @transform_4(%arg0: i32) -> (i32, i32) {
    %c0_i32 = arith.constant 0 : i32
    %c0_i32_0 = arith.constant 0 : i32
    %c0_i32_1 = arith.constant 0 : i32
    return %c0_i32, %c0_i32_0 : i32, i32
  }
  func.func @transform_5(%arg0: i32) -> (i32, i32) {
    %c0_i32 = arith.constant 0 : i32
    %c0_i32_0 = arith.constant 0 : i32
    %c0_i32_1 = arith.constant 0 : i32
    return %c0_i32, %c0_i32_0 : i32, i32
  }
  func.func @transform_6(%arg0: i32) -> (i32, i32) {
    %c0_i32 = arith.constant 0 : i32
    %c0_i32_0 = arith.constant 0 : i32
    return %arg0, %c0_i32 : i32, i32
  }
}

module attributes {stable_mosaic.version = 11 : i64} {
  func.func @_layernorm_pos_kernel(%arg0: i32, %arg1: memref<16x128xf32, #tpu.memory_space<vmem>>, %arg2: memref<1x128xf32, #tpu.memory_space<vmem>>, %arg3: memref<1x128xf32, #tpu.memory_space<vmem>>, %arg4: memref<1x128xf32, #tpu.memory_space<vmem>>, %arg5: memref<16x128xbf16, #tpu.memory_space<vmem>>) attributes {dimension_semantics = [#tpu.dimension_semantics<parallel>], iteration_bounds = array<i64: 1>, scalar_prefetch = 0 : i64, scratch_operands = 0 : i64, tpu.core_type = #tpu.core_type<tc>, window_params = [{transform_indices = @transform_0, window_bounds = array<i64: 16, 128>}, {pipeline_mode = #tpu.pipeline_mode<synchronous>, transform_indices = @transform_1, window_bounds = array<i64: 1, 128>}, {pipeline_mode = #tpu.pipeline_mode<synchronous>, transform_indices = @transform_2, window_bounds = array<i64: 1, 128>}, {pipeline_mode = #tpu.pipeline_mode<synchronous>, transform_indices = @transform_3, window_bounds = array<i64: 1, 128>}, {transform_indices = @transform_4, window_bounds = array<i64: 16, 128>}]} {
    %c0 = arith.constant 0 : index
    %c0_0 = arith.constant 0 : index
    %0 = vector.load %arg1[%c0, %c0_0] : memref<16x128xf32, #tpu.memory_space<vmem>>, vector<16x128xf32>
    %c0_1 = arith.constant 0 : index
    %c0_2 = arith.constant 0 : index
    %1 = vector.load %arg2[%c0_1, %c0_2] : memref<1x128xf32, #tpu.memory_space<vmem>>, vector<1x128xf32>
    %c0_3 = arith.constant 0 : index
    %c0_4 = arith.constant 0 : index
    %2 = vector.load %arg3[%c0_3, %c0_4] : memref<1x128xf32, #tpu.memory_space<vmem>>, vector<1x128xf32>
    %cst = arith.constant dense<0.000000e+00> : vector<16xf32>
    %3 = vector.multi_reduction <add>, %0, %cst [1] : vector<16x128xf32> to vector<16xf32>
    %4 = vector.shape_cast %3 : vector<16xf32> to vector<16x1xf32>
    %cst_5 = arith.constant 1.280000e+02 : f32
    %5 = vector.broadcast %cst_5 : f32 to vector<16x1xf32>
    %6 = arith.divf %4, %5 : vector<16x1xf32>
    %7 = vector.broadcast %6 : vector<16x1xf32> to vector<16x128xf32>
    %8 = arith.subf %0, %7 : vector<16x128xf32>
    %9 = arith.mulf %8, %8 : vector<16x128xf32>
    %cst_6 = arith.constant dense<0.000000e+00> : vector<16xf32>
    %10 = vector.multi_reduction <add>, %9, %cst_6 [1] : vector<16x128xf32> to vector<16xf32>
    %11 = vector.shape_cast %10 : vector<16xf32> to vector<16x1xf32>
    %cst_7 = arith.constant 1.280000e+02 : f32
    %12 = vector.broadcast %cst_7 : f32 to vector<16x1xf32>
    %13 = arith.divf %11, %12 : vector<16x1xf32>
    %14 = vector.broadcast %6 : vector<16x1xf32> to vector<16x128xf32>
    %15 = arith.subf %0, %14 : vector<16x128xf32>
    %cst_8 = arith.constant 9.99999974E-6 : f32
    %16 = vector.broadcast %cst_8 : f32 to vector<16x1xf32>
    %17 = arith.addf %13, %16 : vector<16x1xf32>
    %18 = math.rsqrt %17 : vector<16x1xf32>
    %19 = vector.broadcast %18 : vector<16x1xf32> to vector<16x128xf32>
    %20 = arith.mulf %15, %19 : vector<16x128xf32>
    %21 = vector.broadcast %1 : vector<1x128xf32> to vector<16x128xf32>
    %22 = arith.mulf %20, %21 : vector<16x128xf32>
    %23 = vector.broadcast %2 : vector<1x128xf32> to vector<16x128xf32>
    %24 = arith.addf %22, %23 : vector<16x128xf32>
    %c0_9 = arith.constant 0 : index
    %c0_10 = arith.constant 0 : index
    %25 = vector.load %arg4[%c0_9, %c0_10] : memref<1x128xf32, #tpu.memory_space<vmem>>, vector<1x128xf32>
    %26 = vector.broadcast %25 : vector<1x128xf32> to vector<16x128xf32>
    %27 = arith.addf %24, %26 : vector<16x128xf32>
    %28 = arith.truncf %27 : vector<16x128xf32> to vector<16x128xbf16>
    %c0_11 = arith.constant 0 : index
    %c0_12 = arith.constant 0 : index
    %29 = vector.load %arg5[%c0_11, %c0_12] : memref<16x128xbf16, #tpu.memory_space<vmem>>, vector<16x128xbf16>
    tpu.vector_store %arg5[%c0_11, %c0_12], %28 {strides = array<i32>} : memref<16x128xbf16, #tpu.memory_space<vmem>>, vector<16x128xbf16>,
    return
  }
  func.func @transform_0(%arg0: i32) -> (i32, i32) {
    %c0_i32 = arith.constant 0 : i32
    %c0_i32_0 = arith.constant 0 : i32
    return %arg0, %c0_i32 : i32, i32
  }
  func.func @transform_1(%arg0: i32) -> (i32, i32) {
    %c0_i32 = arith.constant 0 : i32
    %c0_i32_0 = arith.constant 0 : i32
    %c0_i32_1 = arith.constant 0 : i32
    return %c0_i32, %c0_i32_0 : i32, i32
  }
  func.func @transform_2(%arg0: i32) -> (i32, i32) {
    %c0_i32 = arith.constant 0 : i32
    %c0_i32_0 = arith.constant 0 : i32
    %c0_i32_1 = arith.constant 0 : i32
    return %c0_i32, %c0_i32_0 : i32, i32
  }
  func.func @transform_3(%arg0: i32) -> (i32, i32) {
    %c0_i32 = arith.constant 0 : i32
    %c0_i32_0 = arith.constant 0 : i32
    %c0_i32_1 = arith.constant 0 : i32
    return %c0_i32, %c0_i32_0 : i32, i32
  }
  func.func @transform_4(%arg0: i32) -> (i32, i32) {
    %c0_i32 = arith.constant 0 : i32
    %c0_i32_0 = arith.constant 0 : i32
    return %arg0, %c0_i32 : i32, i32
  }
}

module attributes {stable_mosaic.version = 11 : i64} {
  func.func @_layernorm_pos_kernel(%arg0: i32, %arg1: memref<8x128xf32, #tpu.memory_space<vmem>>, %arg2: memref<1x128xf32, #tpu.memory_space<vmem>>, %arg3: memref<1x128xf32, #tpu.memory_space<vmem>>, %arg4: memref<1x128xf32, #tpu.memory_space<vmem>>, %arg5: memref<8x128xf32, #tpu.memory_space<vmem>>) attributes {dimension_semantics = [#tpu.dimension_semantics<parallel>], iteration_bounds = array<i64: 1>, scalar_prefetch = 0 : i64, scratch_operands = 0 : i64, tpu.core_type = #tpu.core_type<tc>, window_params = [{transform_indices = @transform_0, window_bounds = array<i64: 8, 128>}, {pipeline_mode = #tpu.pipeline_mode<synchronous>, transform_indices = @transform_1, window_bounds = array<i64: 1, 128>}, {pipeline_mode = #tpu.pipeline_mode<synchronous>, transform_indices = @transform_2, window_bounds = array<i64: 1, 128>}, {pipeline_mode = #tpu.pipeline_mode<synchronous>, transform_indices = @transform_3, window_bounds = array<i64: 1, 128>}, {transform_indices = @transform_4, window_bounds = array<i64: 8, 128>}]} {
    %c0 = arith.constant 0 : index
    %c0_0 = arith.constant 0 : index
    %0 = vector.load %arg1[%c0, %c0_0] : memref<8x128xf32, #tpu.memory_space<vmem>>, vector<8x128xf32>
    %c0_1 = arith.constant 0 : index
    %c0_2 = arith.constant 0 : index
    %1 = vector.load %arg2[%c0_1, %c0_2] : memref<1x128xf32, #tpu.memory_space<vmem>>, vector<1x128xf32>
    %c0_3 = arith.constant 0 : index
    %c0_4 = arith.constant 0 : index
    %2 = vector.load %arg3[%c0_3, %c0_4] : memref<1x128xf32, #tpu.memory_space<vmem>>, vector<1x128xf32>
    %cst = arith.constant dense<0.000000e+00> : vector<8xf32>
    %3 = vector.multi_reduction <add>, %0, %cst [1] : vector<8x128xf32> to vector<8xf32>
    %4 = vector.shape_cast %3 : vector<8xf32> to vector<8x1xf32>
    %cst_5 = arith.constant 1.280000e+02 : f32
    %5 = vector.broadcast %cst_5 : f32 to vector<8x1xf32>
    %6 = arith.divf %4, %5 : vector<8x1xf32>
    %7 = vector.broadcast %6 : vector<8x1xf32> to vector<8x128xf32>
    %8 = arith.subf %0, %7 : vector<8x128xf32>
    %9 = arith.mulf %8, %8 : vector<8x128xf32>
    %cst_6 = arith.constant dense<0.000000e+00> : vector<8xf32>
    %10 = vector.multi_reduction <add>, %9, %cst_6 [1] : vector<8x128xf32> to vector<8xf32>
    %11 = vector.shape_cast %10 : vector<8xf32> to vector<8x1xf32>
    %cst_7 = arith.constant 1.280000e+02 : f32
    %12 = vector.broadcast %cst_7 : f32 to vector<8x1xf32>
    %13 = arith.divf %11, %12 : vector<8x1xf32>
    %14 = vector.broadcast %6 : vector<8x1xf32> to vector<8x128xf32>
    %15 = arith.subf %0, %14 : vector<8x128xf32>
    %cst_8 = arith.constant 9.99999974E-6 : f32
    %16 = vector.broadcast %cst_8 : f32 to vector<8x1xf32>
    %17 = arith.addf %13, %16 : vector<8x1xf32>
    %18 = math.rsqrt %17 : vector<8x1xf32>
    %19 = vector.broadcast %18 : vector<8x1xf32> to vector<8x128xf32>
    %20 = arith.mulf %15, %19 : vector<8x128xf32>
    %21 = vector.broadcast %1 : vector<1x128xf32> to vector<8x128xf32>
    %22 = arith.mulf %20, %21 : vector<8x128xf32>
    %23 = vector.broadcast %2 : vector<1x128xf32> to vector<8x128xf32>
    %24 = arith.addf %22, %23 : vector<8x128xf32>
    %c0_9 = arith.constant 0 : index
    %c0_10 = arith.constant 0 : index
    %25 = vector.load %arg4[%c0_9, %c0_10] : memref<1x128xf32, #tpu.memory_space<vmem>>, vector<1x128xf32>
    %26 = vector.broadcast %25 : vector<1x128xf32> to vector<8x128xf32>
    %27 = arith.addf %24, %26 : vector<8x128xf32>
    %c0_11 = arith.constant 0 : index
    %c0_12 = arith.constant 0 : index
    %28 = vector.load %arg5[%c0_11, %c0_12] : memref<8x128xf32, #tpu.memory_space<vmem>>, vector<8x128xf32>
    tpu.vector_store %arg5[%c0_11, %c0_12], %27 {strides = array<i32>} : memref<8x128xf32, #tpu.memory_space<vmem>>, vector<8x128xf32>,
    return
  }
  func.func @transform_0(%arg0: i32) -> (i32, i32) {
    %c0_i32 = arith.constant 0 : i32
    %c0_i32_0 = arith.constant 0 : i32
    return %arg0, %c0_i32 : i32, i32
  }
  func.func @transform_1(%arg0: i32) -> (i32, i32) {
    %c0_i32 = arith.constant 0 : i32
    %c0_i32_0 = arith.constant 0 : i32
    %c0_i32_1 = arith.constant 0 : i32
    return %c0_i32, %c0_i32_0 : i32, i32
  }
  func.func @transform_2(%arg0: i32) -> (i32, i32) {
    %c0_i32 = arith.constant 0 : i32
    %c0_i32_0 = arith.constant 0 : i32
    %c0_i32_1 = arith.constant 0 : i32
    return %c0_i32, %c0_i32_0 : i32, i32
  }
  func.func @transform_3(%arg0: i32) -> (i32, i32) {
    %c0_i32 = arith.constant 0 : i32
    %c0_i32_0 = arith.constant 0 : i32
    %c0_i32_1 = arith.constant 0 : i32
    return %c0_i32, %c0_i32_0 : i32, i32
  }
  func.func @transform_4(%arg0: i32) -> (i32, i32) {
    %c0_i32 = arith.constant 0 : i32
    %c0_i32_0 = arith.constant 0 : i32
    return %arg0, %c0_i32 : i32, i32
  }
}

module attributes {stable_mosaic.version = 11 : i64} {
  func.func @_enc_layer_kernel(%arg0: i32, %arg1: memref<8x16x128xbf16, #tpu.memory_space<vmem>>, %arg2: memref<8x1x16xf32, #tpu.memory_space<vmem>>, %arg3: memref<128x384xbf16, #tpu.memory_space<vmem>>, %arg4: memref<1x384xf32, #tpu.memory_space<vmem>>, %arg5: memref<128x128xbf16, #tpu.memory_space<vmem>>, %arg6: memref<1x128xf32, #tpu.memory_space<vmem>>, %arg7: memref<1x128xf32, #tpu.memory_space<vmem>>, %arg8: memref<1x128xf32, #tpu.memory_space<vmem>>, %arg9: memref<128x256xbf16, #tpu.memory_space<vmem>>, %arg10: memref<1x256xf32, #tpu.memory_space<vmem>>, %arg11: memref<256x128xbf16, #tpu.memory_space<vmem>>, %arg12: memref<1x128xf32, #tpu.memory_space<vmem>>, %arg13: memref<1x128xf32, #tpu.memory_space<vmem>>, %arg14: memref<1x128xf32, #tpu.memory_space<vmem>>, %arg15: memref<8x16x128xbf16, #tpu.memory_space<vmem>>) attributes {dimension_semantics = [#tpu.dimension_semantics<parallel>], iteration_bounds = array<i64: 2>, scalar_prefetch = 0 : i64, scratch_operands = 0 : i64, tpu.core_type = #tpu.core_type<tc>, window_params = [{transform_indices = @transform_0, window_bounds = array<i64: 8, 16, 128>}, {transform_indices = @transform_1, window_bounds = array<i64: 8, 1, 16>}, {pipeline_mode = #tpu.pipeline_mode<synchronous>, transform_indices = @transform_2, window_bounds = array<i64: 128, 384>}, {pipeline_mode = #tpu.pipeline_mode<synchronous>, transform_indices = @transform_3, window_bounds = array<i64: 1, 384>}, {pipeline_mode = #tpu.pipeline_mode<synchronous>, transform_indices = @transform_4, window_bounds = array<i64: 128, 128>}, {pipeline_mode = #tpu.pipeline_mode<synchronous>, transform_indices = @transform_5, window_bounds = array<i64: 1, 128>}, {pipeline_mode = #tpu.pipeline_mode<synchronous>, transform_indices = @transform_6, window_bounds = array<i64: 1, 128>}, {pipeline_mode = #tpu.pipeline_mode<synchronous>, transform_indices = @transform_7, window_bounds = array<i64: 1, 128>}, {pipeline_mode = #tpu.pipeline_mode<synchronous>, transform_indices = @transform_8, window_bounds = array<i64: 128, 256>}, {pipeline_mode = #tpu.pipeline_mode<synchronous>, transform_indices = @transform_9, window_bounds = array<i64: 1, 256>}, {pipeline_mode = #tpu.pipeline_mode<synchronous>, transform_indices = @transform_10, window_bounds = array<i64: 256, 128>}, {pipeline_mode = #tpu.pipeline_mode<synchronous>, transform_indices = @transform_11, window_bounds = array<i64: 1, 128>}, {pipeline_mode = #tpu.pipeline_mode<synchronous>, transform_indices = @transform_12, window_bounds = array<i64: 1, 128>}, {pipeline_mode = #tpu.pipeline_mode<synchronous>, transform_indices = @transform_13, window_bounds = array<i64: 1, 128>}, {transform_indices = @transform_14, window_bounds = array<i64: 8, 16, 128>}]} {
    %c0 = arith.constant 0 : index
    %c0_0 = arith.constant 0 : index
    %c0_1 = arith.constant 0 : index
    %0 = vector.load %arg1[%c0, %c0_0, %c0_1] : memref<8x16x128xbf16, #tpu.memory_space<vmem>>, vector<8x16x128xbf16>
    %1 = vector.shape_cast %0 : vector<8x16x128xbf16> to vector<128x128xbf16>
    %2 = arith.extf %1 : vector<128x128xbf16> to vector<128x128xf32>
    %c0_2 = arith.constant 0 : index
    %c0_3 = arith.constant 0 : index
    %c0_4 = arith.constant 0 : index
    %3 = vector.load %arg2[%c0_2, %c0_3, %c0_4] : memref<8x1x16xf32, #tpu.memory_space<vmem>>, vector<8x1x16xf32>
    %c0_5 = arith.constant 0 : index
    %c0_6 = arith.constant 0 : index
    %4 = vector.load %arg3[%c0_5, %c0_6] : memref<128x384xbf16, #tpu.memory_space<vmem>>, vector<128x384xbf16>
    %cst = arith.constant dense<0.000000e+00> : vector<128x384xf32>
    %5 = tpu.matmul %1, %4, %cst {dimension_numbers = #tpu.dot_dimension_numbers<[1], [0], [0], [1], [0, 0, 1, 1], [], []>} : vector<128x128xbf16>, vector<128x384xbf16>, vector<128x384xf32> -> vector<128x384xf32>
    %c0_7 = arith.constant 0 : index
    %c0_8 = arith.constant 0 : index
    %6 = vector.load %arg4[%c0_7, %c0_8] : memref<1x384xf32, #tpu.memory_space<vmem>>, vector<1x384xf32>
    %7 = vector.broadcast %6 : vector<1x384xf32> to vector<128x384xf32>
    %8 = arith.addf %5, %7 : vector<128x384xf32>
    %9 = vector.extract_strided_slice %8 {offsets = [0, 0], sizes = [128, 32], strides = [1, 1]} : vector<128x384xf32> to vector<128x32xf32>
    %10 = vector.shape_cast %9 : vector<128x32xf32> to vector<8x16x32xf32>
    %11 = arith.truncf %10 : vector<8x16x32xf32> to vector<8x16x32xbf16>
    %12 = vector.extract_strided_slice %8 {offsets = [0, 128], sizes = [128, 32], strides = [1, 1]} : vector<128x384xf32> to vector<128x32xf32>
    %13 = vector.shape_cast %12 : vector<128x32xf32> to vector<8x16x32xf32>
    %14 = arith.truncf %13 : vector<8x16x32xf32> to vector<8x16x32xbf16>
    %15 = vector.extract_strided_slice %8 {offsets = [0, 256], sizes = [128, 32], strides = [1, 1]} : vector<128x384xf32> to vector<128x32xf32>
    %16 = vector.shape_cast %15 : vector<128x32xf32> to vector<8x16x32xf32>
    %17 = arith.truncf %16 : vector<8x16x32xf32> to vector<8x16x32xbf16>
    "tpu.trace_start"() <{level = 10 : i32, message = "bld,bmd->blm"}> : () -> ()
    %cst_9 = arith.constant dense<0.000000e+00> : vector<8x16x16xf32>
    %18 = tpu.matmul %11, %14, %cst_9 {dimension_numbers = #tpu.dot_dimension_numbers<[2], [2], [1], [1], [0, 0, 0, 1, 1, 1], [0], [0]>} : vector<8x16x32xbf16>, vector<8x16x32xbf16>, vector<8x16x16xf32> -> vector<8x16x16xf32>
    "tpu.trace_stop"() : () -> ()
    %cst_10 = arith.constant 0.176776692 : f32
    %19 = vector.broadcast %cst_10 : f32 to vector<8x16x16xf32>
    %20 = arith.mulf %18, %19 : vector<8x16x16xf32>
    %21 = vector.broadcast %3 : vector<8x1x16xf32> to vector<8x16x16xf32>
    %22 = arith.addf %20, %21 : vector<8x16x16xf32>
    %cst_11 = arith.constant dense<0xFF800000> : vector<8x16xf32>
    %23 = vector.multi_reduction <maximumf>, %22, %cst_11 [2] : vector<8x16x16xf32> to vector<8x16xf32>
    %24 = vector.shape_cast %23 : vector<8x16xf32> to vector<8x16x1xf32>
    %25 = vector.broadcast %24 : vector<8x16x1xf32> to vector<8x16x16xf32>
    %26 = arith.subf %22, %25 : vector<8x16x16xf32>
    %27 = math.exp %26 : vector<8x16x16xf32>
    %cst_12 = arith.constant dense<0.000000e+00> : vector<8x16xf32>
    %28 = vector.multi_reduction <add>, %27, %cst_12 [2] : vector<8x16x16xf32> to vector<8x16xf32>
    %29 = vector.shape_cast %28 : vector<8x16xf32> to vector<8x16x1xf32>
    %30 = vector.broadcast %29 : vector<8x16x1xf32> to vector<8x16x16xf32>
    %31 = arith.divf %27, %30 : vector<8x16x16xf32>
    %32 = arith.truncf %31 : vector<8x16x16xf32> to vector<8x16x16xbf16>
    "tpu.trace_start"() <{level = 10 : i32, message = "blm,bmd->bld"}> : () -> ()
    %cst_13 = arith.constant dense<0.000000e+00> : vector<8x16x32xf32>
    %33 = tpu.matmul %32, %17, %cst_13 {dimension_numbers = #tpu.dot_dimension_numbers<[2], [1], [1], [2], [0, 0, 0, 1, 1, 2], [0], [0]>} : vector<8x16x16xbf16>, vector<8x16x32xbf16>, vector<8x16x32xf32> -> vector<8x16x32xf32>
    "tpu.trace_stop"() : () -> ()
    %34 = vector.shape_cast %33 : vector<8x16x32xf32> to vector<128x32xf32>
    %35 = vector.extract_strided_slice %8 {offsets = [0, 32], sizes = [128, 32], strides = [1, 1]} : vector<128x384xf32> to vector<128x32xf32>
    %36 = vector.shape_cast %35 : vector<128x32xf32> to vector<8x16x32xf32>
    %37 = arith.truncf %36 : vector<8x16x32xf32> to vector<8x16x32xbf16>
    %38 = vector.extract_strided_slice %8 {offsets = [0, 160], sizes = [128, 32], strides = [1, 1]} : vector<128x384xf32> to vector<128x32xf32>
    %39 = vector.shape_cast %38 : vector<128x32xf32> to vector<8x16x32xf32>
    %40 = arith.truncf %39 : vector<8x16x32xf32> to vector<8x16x32xbf16>
    %41 = vector.extract_strided_slice %8 {offsets = [0, 288], sizes = [128, 32], strides = [1, 1]} : vector<128x384xf32> to vector<128x32xf32>
    %42 = vector.shape_cast %41 : vector<128x32xf32> to vector<8x16x32xf32>
    %43 = arith.truncf %42 : vector<8x16x32xf32> to vector<8x16x32xbf16>
    "tpu.trace_start"() <{level = 10 : i32, message = "bld,bmd->blm"}> : () -> ()
    %cst_14 = arith.constant dense<0.000000e+00> : vector<8x16x16xf32>
    %44 = tpu.matmul %37, %40, %cst_14 {dimension_numbers = #tpu.dot_dimension_numbers<[2], [2], [1], [1], [0, 0, 0, 1, 1, 1], [0], [0]>} : vector<8x16x32xbf16>, vector<8x16x32xbf16>, vector<8x16x16xf32> -> vector<8x16x16xf32>
    "tpu.trace_stop"() : () -> ()
    %cst_15 = arith.constant 0.176776692 : f32
    %45 = vector.broadcast %cst_15 : f32 to vector<8x16x16xf32>
    %46 = arith.mulf %44, %45 : vector<8x16x16xf32>
    %47 = vector.broadcast %3 : vector<8x1x16xf32> to vector<8x16x16xf32>
    %48 = arith.addf %46, %47 : vector<8x16x16xf32>
    %cst_16 = arith.constant dense<0xFF800000> : vector<8x16xf32>
    %49 = vector.multi_reduction <maximumf>, %48, %cst_16 [2] : vector<8x16x16xf32> to vector<8x16xf32>
    %50 = vector.shape_cast %49 : vector<8x16xf32> to vector<8x16x1xf32>
    %51 = vector.broadcast %50 : vector<8x16x1xf32> to vector<8x16x16xf32>
    %52 = arith.subf %48, %51 : vector<8x16x16xf32>
    %53 = math.exp %52 : vector<8x16x16xf32>
    %cst_17 = arith.constant dense<0.000000e+00> : vector<8x16xf32>
    %54 = vector.multi_reduction <add>, %53, %cst_17 [2] : vector<8x16x16xf32> to vector<8x16xf32>
    %55 = vector.shape_cast %54 : vector<8x16xf32> to vector<8x16x1xf32>
    %56 = vector.broadcast %55 : vector<8x16x1xf32> to vector<8x16x16xf32>
    %57 = arith.divf %53, %56 : vector<8x16x16xf32>
    %58 = arith.truncf %57 : vector<8x16x16xf32> to vector<8x16x16xbf16>
    "tpu.trace_start"() <{level = 10 : i32, message = "blm,bmd->bld"}> : () -> ()
    %cst_18 = arith.constant dense<0.000000e+00> : vector<8x16x32xf32>
    %59 = tpu.matmul %58, %43, %cst_18 {dimension_numbers = #tpu.dot_dimension_numbers<[2], [1], [1], [2], [0, 0, 0, 1, 1, 2], [0], [0]>} : vector<8x16x16xbf16>, vector<8x16x32xbf16>, vector<8x16x32xf32> -> vector<8x16x32xf32>
    "tpu.trace_stop"() : () -> ()
    %60 = vector.shape_cast %59 : vector<8x16x32xf32> to vector<128x32xf32>
    %61 = vector.extract_strided_slice %8 {offsets = [0, 64], sizes = [128, 32], strides = [1, 1]} : vector<128x384xf32> to vector<128x32xf32>
    %62 = vector.shape_cast %61 : vector<128x32xf32> to vector<8x16x32xf32>
    %63 = arith.truncf %62 : vector<8x16x32xf32> to vector<8x16x32xbf16>
    %64 = vector.extract_strided_slice %8 {offsets = [0, 192], sizes = [128, 32], strides = [1, 1]} : vector<128x384xf32> to vector<128x32xf32>
    %65 = vector.shape_cast %64 : vector<128x32xf32> to vector<8x16x32xf32>
    %66 = arith.truncf %65 : vector<8x16x32xf32> to vector<8x16x32xbf16>
    %67 = vector.extract_strided_slice %8 {offsets = [0, 320], sizes = [128, 32], strides = [1, 1]} : vector<128x384xf32> to vector<128x32xf32>
    %68 = vector.shape_cast %67 : vector<128x32xf32> to vector<8x16x32xf32>
    %69 = arith.truncf %68 : vector<8x16x32xf32> to vector<8x16x32xbf16>
    "tpu.trace_start"() <{level = 10 : i32, message = "bld,bmd->blm"}> : () -> ()
    %cst_19 = arith.constant dense<0.000000e+00> : vector<8x16x16xf32>
    %70 = tpu.matmul %63, %66, %cst_19 {dimension_numbers = #tpu.dot_dimension_numbers<[2], [2], [1], [1], [0, 0, 0, 1, 1, 1], [0], [0]>} : vector<8x16x32xbf16>, vector<8x16x32xbf16>, vector<8x16x16xf32> -> vector<8x16x16xf32>
    "tpu.trace_stop"() : () -> ()
    %cst_20 = arith.constant 0.176776692 : f32
    %71 = vector.broadcast %cst_20 : f32 to vector<8x16x16xf32>
    %72 = arith.mulf %70, %71 : vector<8x16x16xf32>
    %73 = vector.broadcast %3 : vector<8x1x16xf32> to vector<8x16x16xf32>
    %74 = arith.addf %72, %73 : vector<8x16x16xf32>
    %cst_21 = arith.constant dense<0xFF800000> : vector<8x16xf32>
    %75 = vector.multi_reduction <maximumf>, %74, %cst_21 [2] : vector<8x16x16xf32> to vector<8x16xf32>
    %76 = vector.shape_cast %75 : vector<8x16xf32> to vector<8x16x1xf32>
    %77 = vector.broadcast %76 : vector<8x16x1xf32> to vector<8x16x16xf32>
    %78 = arith.subf %74, %77 : vector<8x16x16xf32>
    %79 = math.exp %78 : vector<8x16x16xf32>
    %cst_22 = arith.constant dense<0.000000e+00> : vector<8x16xf32>
    %80 = vector.multi_reduction <add>, %79, %cst_22 [2] : vector<8x16x16xf32> to vector<8x16xf32>
    %81 = vector.shape_cast %80 : vector<8x16xf32> to vector<8x16x1xf32>
    %82 = vector.broadcast %81 : vector<8x16x1xf32> to vector<8x16x16xf32>
    %83 = arith.divf %79, %82 : vector<8x16x16xf32>
    %84 = arith.truncf %83 : vector<8x16x16xf32> to vector<8x16x16xbf16>
    "tpu.trace_start"() <{level = 10 : i32, message = "blm,bmd->bld"}> : () -> ()
    %cst_23 = arith.constant dense<0.000000e+00> : vector<8x16x32xf32>
    %85 = tpu.matmul %84, %69, %cst_23 {dimension_numbers = #tpu.dot_dimension_numbers<[2], [1], [1], [2], [0, 0, 0, 1, 1, 2], [0], [0]>} : vector<8x16x16xbf16>, vector<8x16x32xbf16>, vector<8x16x32xf32> -> vector<8x16x32xf32>
    "tpu.trace_stop"() : () -> ()
    %86 = vector.shape_cast %85 : vector<8x16x32xf32> to vector<128x32xf32>
    %87 = vector.extract_strided_slice %8 {offsets = [0, 96], sizes = [128, 32], strides = [1, 1]} : vector<128x384xf32> to vector<128x32xf32>
    %88 = vector.shape_cast %87 : vector<128x32xf32> to vector<8x16x32xf32>
    %89 = arith.truncf %88 : vector<8x16x32xf32> to vector<8x16x32xbf16>
    %90 = vector.extract_strided_slice %8 {offsets = [0, 224], sizes = [128, 32], strides = [1, 1]} : vector<128x384xf32> to vector<128x32xf32>
    %91 = vector.shape_cast %90 : vector<128x32xf32> to vector<8x16x32xf32>
    %92 = arith.truncf %91 : vector<8x16x32xf32> to vector<8x16x32xbf16>
    %93 = vector.extract_strided_slice %8 {offsets = [0, 352], sizes = [128, 32], strides = [1, 1]} : vector<128x384xf32> to vector<128x32xf32>
    %94 = vector.shape_cast %93 : vector<128x32xf32> to vector<8x16x32xf32>
    %95 = arith.truncf %94 : vector<8x16x32xf32> to vector<8x16x32xbf16>
    "tpu.trace_start"() <{level = 10 : i32, message = "bld,bmd->blm"}> : () -> ()
    %cst_24 = arith.constant dense<0.000000e+00> : vector<8x16x16xf32>
    %96 = tpu.matmul %89, %92, %cst_24 {dimension_numbers = #tpu.dot_dimension_numbers<[2], [2], [1], [1], [0, 0, 0, 1, 1, 1], [0], [0]>} : vector<8x16x32xbf16>, vector<8x16x32xbf16>, vector<8x16x16xf32> -> vector<8x16x16xf32>
    "tpu.trace_stop"() : () -> ()
    %cst_25 = arith.constant 0.176776692 : f32
    %97 = vector.broadcast %cst_25 : f32 to vector<8x16x16xf32>
    %98 = arith.mulf %96, %97 : vector<8x16x16xf32>
    %99 = vector.broadcast %3 : vector<8x1x16xf32> to vector<8x16x16xf32>
    %100 = arith.addf %98, %99 : vector<8x16x16xf32>
    %cst_26 = arith.constant dense<0xFF800000> : vector<8x16xf32>
    %101 = vector.multi_reduction <maximumf>, %100, %cst_26 [2] : vector<8x16x16xf32> to vector<8x16xf32>
    %102 = vector.shape_cast %101 : vector<8x16xf32> to vector<8x16x1xf32>
    %103 = vector.broadcast %102 : vector<8x16x1xf32> to vector<8x16x16xf32>
    %104 = arith.subf %100, %103 : vector<8x16x16xf32>
    %105 = math.exp %104 : vector<8x16x16xf32>
    %cst_27 = arith.constant dense<0.000000e+00> : vector<8x16xf32>
    %106 = vector.multi_reduction <add>, %105, %cst_27 [2] : vector<8x16x16xf32> to vector<8x16xf32>
    %107 = vector.shape_cast %106 : vector<8x16xf32> to vector<8x16x1xf32>
    %108 = vector.broadcast %107 : vector<8x16x1xf32> to vector<8x16x16xf32>
    %109 = arith.divf %105, %108 : vector<8x16x16xf32>
    %110 = arith.truncf %109 : vector<8x16x16xf32> to vector<8x16x16xbf16>
    "tpu.trace_start"() <{level = 10 : i32, message = "blm,bmd->bld"}> : () -> ()
    %cst_28 = arith.constant dense<0.000000e+00> : vector<8x16x32xf32>
    %111 = tpu.matmul %110, %95, %cst_28 {dimension_numbers = #tpu.dot_dimension_numbers<[2], [1], [1], [2], [0, 0, 0, 1, 1, 2], [0], [0]>} : vector<8x16x16xbf16>, vector<8x16x32xbf16>, vector<8x16x32xf32> -> vector<8x16x32xf32>
    "tpu.trace_stop"() : () -> ()
    %112 = vector.shape_cast %111 : vector<8x16x32xf32> to vector<128x32xf32>
    %113 = tpu.concatenate %34, %60, %86, %112 in 1 : vector<128x32xf32>, vector<128x32xf32>, vector<128x32xf32>, vector<128x32xf32> -> vector<128x128xf32>
    %114 = arith.truncf %113 : vector<128x128xf32> to vector<128x128xbf16>
    %c0_29 = arith.constant 0 : index
    %c0_30 = arith.constant 0 : index
    %115 = vector.load %arg5[%c0_29, %c0_30] : memref<128x128xbf16, #tpu.memory_space<vmem>>, vector<128x128xbf16>
    %cst_31 = arith.constant dense<0.000000e+00> : vector<128x128xf32>
    %116 = tpu.matmul %114, %115, %cst_31 {dimension_numbers = #tpu.dot_dimension_numbers<[1], [0], [0], [1], [0, 0, 1, 1], [], []>} : vector<128x128xbf16>, vector<128x128xbf16>, vector<128x128xf32> -> vector<128x128xf32>
    %c0_32 = arith.constant 0 : index
    %c0_33 = arith.constant 0 : index
    %117 = vector.load %arg6[%c0_32, %c0_33] : memref<1x128xf32, #tpu.memory_space<vmem>>, vector<1x128xf32>
    %118 = vector.broadcast %117 : vector<1x128xf32> to vector<128x128xf32>
    %119 = arith.addf %116, %118 : vector<128x128xf32>
    %120 = arith.addf %2, %119 : vector<128x128xf32>
    %c0_34 = arith.constant 0 : index
    %c0_35 = arith.constant 0 : index
    %121 = vector.load %arg7[%c0_34, %c0_35] : memref<1x128xf32, #tpu.memory_space<vmem>>, vector<1x128xf32>
    %c0_36 = arith.constant 0 : index
    %c0_37 = arith.constant 0 : index
    %122 = vector.load %arg8[%c0_36, %c0_37] : memref<1x128xf32, #tpu.memory_space<vmem>>, vector<1x128xf32>
    %cst_38 = arith.constant dense<0.000000e+00> : vector<128xf32>
    %123 = vector.multi_reduction <add>, %120, %cst_38 [1] : vector<128x128xf32> to vector<128xf32>
    %124 = vector.shape_cast %123 : vector<128xf32> to vector<128x1xf32>
    %cst_39 = arith.constant 1.280000e+02 : f32
    %125 = vector.broadcast %cst_39 : f32 to vector<128x1xf32>
    %126 = arith.divf %124, %125 : vector<128x1xf32>
    %127 = vector.broadcast %126 : vector<128x1xf32> to vector<128x128xf32>
    %128 = arith.subf %120, %127 : vector<128x128xf32>
    %129 = arith.mulf %128, %128 : vector<128x128xf32>
    %cst_40 = arith.constant dense<0.000000e+00> : vector<128xf32>
    %130 = vector.multi_reduction <add>, %129, %cst_40 [1] : vector<128x128xf32> to vector<128xf32>
    %131 = vector.shape_cast %130 : vector<128xf32> to vector<128x1xf32>
    %cst_41 = arith.constant 1.280000e+02 : f32
    %132 = vector.broadcast %cst_41 : f32 to vector<128x1xf32>
    %133 = arith.divf %131, %132 : vector<128x1xf32>
    %134 = vector.broadcast %126 : vector<128x1xf32> to vector<128x128xf32>
    %135 = arith.subf %120, %134 : vector<128x128xf32>
    %cst_42 = arith.constant 9.99999974E-6 : f32
    %136 = vector.broadcast %cst_42 : f32 to vector<128x1xf32>
    %137 = arith.addf %133, %136 : vector<128x1xf32>
    %138 = math.rsqrt %137 : vector<128x1xf32>
    %139 = vector.broadcast %138 : vector<128x1xf32> to vector<128x128xf32>
    %140 = arith.mulf %135, %139 : vector<128x128xf32>
    %141 = vector.broadcast %121 : vector<1x128xf32> to vector<128x128xf32>
    %142 = arith.mulf %140, %141 : vector<128x128xf32>
    %143 = vector.broadcast %122 : vector<1x128xf32> to vector<128x128xf32>
    %144 = arith.addf %142, %143 : vector<128x128xf32>
    %145 = arith.truncf %144 : vector<128x128xf32> to vector<128x128xbf16>
    %c0_43 = arith.constant 0 : index
    %c0_44 = arith.constant 0 : index
    %146 = vector.load %arg9[%c0_43, %c0_44] : memref<128x256xbf16, #tpu.memory_space<vmem>>, vector<128x256xbf16>
    %cst_45 = arith.constant dense<0.000000e+00> : vector<128x256xf32>
    %147 = tpu.matmul %145, %146, %cst_45 {dimension_numbers = #tpu.dot_dimension_numbers<[1], [0], [0], [1], [0, 0, 1, 1], [], []>} : vector<128x128xbf16>, vector<128x256xbf16>, vector<128x256xf32> -> vector<128x256xf32>
    %c0_46 = arith.constant 0 : index
    %c0_47 = arith.constant 0 : index
    %148 = vector.load %arg10[%c0_46, %c0_47] : memref<1x256xf32, #tpu.memory_space<vmem>>, vector<1x256xf32>
    %149 = vector.broadcast %148 : vector<1x256xf32> to vector<128x256xf32>
    %150 = arith.addf %147, %149 : vector<128x256xf32>
    %cst_48 = arith.constant 0.000000e+00 : f32
    %151 = vector.broadcast %cst_48 : f32 to vector<128x256xf32>
    %152 = arith.maximumf %150, %151 : vector<128x256xf32>
    %153 = arith.truncf %152 : vector<128x256xf32> to vector<128x256xbf16>
    %c0_49 = arith.constant 0 : index
    %c0_50 = arith.constant 0 : index
    %154 = vector.load %arg11[%c0_49, %c0_50] : memref<256x128xbf16, #tpu.memory_space<vmem>>, vector<256x128xbf16>
    %cst_51 = arith.constant dense<0.000000e+00> : vector<128x128xf32>
    %155 = tpu.matmul %153, %154, %cst_51 {dimension_numbers = #tpu.dot_dimension_numbers<[1], [0], [0], [1], [0, 0, 1, 1], [], []>} : vector<128x256xbf16>, vector<256x128xbf16>, vector<128x128xf32> -> vector<128x128xf32>
    %c0_52 = arith.constant 0 : index
    %c0_53 = arith.constant 0 : index
    %156 = vector.load %arg12[%c0_52, %c0_53] : memref<1x128xf32, #tpu.memory_space<vmem>>, vector<1x128xf32>
    %157 = vector.broadcast %156 : vector<1x128xf32> to vector<128x128xf32>
    %158 = arith.addf %155, %157 : vector<128x128xf32>
    %159 = arith.addf %144, %158 : vector<128x128xf32>
    %c0_54 = arith.constant 0 : index
    %c0_55 = arith.constant 0 : index
    %160 = vector.load %arg13[%c0_54, %c0_55] : memref<1x128xf32, #tpu.memory_space<vmem>>, vector<1x128xf32>
    %c0_56 = arith.constant 0 : index
    %c0_57 = arith.constant 0 : index
    %161 = vector.load %arg14[%c0_56, %c0_57] : memref<1x128xf32, #tpu.memory_space<vmem>>, vector<1x128xf32>
    %cst_58 = arith.constant dense<0.000000e+00> : vector<128xf32>
    %162 = vector.multi_reduction <add>, %159, %cst_58 [1] : vector<128x128xf32> to vector<128xf32>
    %163 = vector.shape_cast %162 : vector<128xf32> to vector<128x1xf32>
    %cst_59 = arith.constant 1.280000e+02 : f32
    %164 = vector.broadcast %cst_59 : f32 to vector<128x1xf32>
    %165 = arith.divf %163, %164 : vector<128x1xf32>
    %166 = vector.broadcast %165 : vector<128x1xf32> to vector<128x128xf32>
    %167 = arith.subf %159, %166 : vector<128x128xf32>
    %168 = arith.mulf %167, %167 : vector<128x128xf32>
    %cst_60 = arith.constant dense<0.000000e+00> : vector<128xf32>
    %169 = vector.multi_reduction <add>, %168, %cst_60 [1] : vector<128x128xf32> to vector<128xf32>
    %170 = vector.shape_cast %169 : vector<128xf32> to vector<128x1xf32>
    %cst_61 = arith.constant 1.280000e+02 : f32
    %171 = vector.broadcast %cst_61 : f32 to vector<128x1xf32>
    %172 = arith.divf %170, %171 : vector<128x1xf32>
    %173 = vector.broadcast %165 : vector<128x1xf32> to vector<128x128xf32>
    %174 = arith.subf %159, %173 : vector<128x128xf32>
    %cst_62 = arith.constant 9.99999974E-6 : f32
    %175 = vector.broadcast %cst_62 : f32 to vector<128x1xf32>
    %176 = arith.addf %172, %175 : vector<128x1xf32>
    %177 = math.rsqrt %176 : vector<128x1xf32>
    %178 = vector.broadcast %177 : vector<128x1xf32> to vector<128x128xf32>
    %179 = arith.mulf %174, %178 : vector<128x128xf32>
    %180 = vector.broadcast %160 : vector<1x128xf32> to vector<128x128xf32>
    %181 = arith.mulf %179, %180 : vector<128x128xf32>
    %182 = vector.broadcast %161 : vector<1x128xf32> to vector<128x128xf32>
    %183 = arith.addf %181, %182 : vector<128x128xf32>
    %184 = vector.shape_cast %183 : vector<128x128xf32> to vector<8x16x128xf32>
    %185 = arith.truncf %184 : vector<8x16x128xf32> to vector<8x16x128xbf16>
    %c0_63 = arith.constant 0 : index
    %c0_64 = arith.constant 0 : index
    %c0_65 = arith.constant 0 : index
    %186 = vector.load %arg15[%c0_63, %c0_64, %c0_65] : memref<8x16x128xbf16, #tpu.memory_space<vmem>>, vector<8x16x128xbf16>
    tpu.vector_store %arg15[%c0_63, %c0_64, %c0_65], %185 {strides = array<i32>} : memref<8x16x128xbf16, #tpu.memory_space<vmem>>, vector<8x16x128xbf16>,
    return
  }
  func.func @transform_0(%arg0: i32) -> (i32, i32, i32) {
    %c0_i32 = arith.constant 0 : i32
    %c0_i32_0 = arith.constant 0 : i32
    %c0_i32_1 = arith.constant 0 : i32
    return %arg0, %c0_i32, %c0_i32_0 : i32, i32, i32
  }
  func.func @transform_1(%arg0: i32) -> (i32, i32, i32) {
    %c0_i32 = arith.constant 0 : i32
    %c0_i32_0 = arith.constant 0 : i32
    %c0_i32_1 = arith.constant 0 : i32
    return %arg0, %c0_i32, %c0_i32_0 : i32, i32, i32
  }
  func.func @transform_2(%arg0: i32) -> (i32, i32) {
    %c0_i32 = arith.constant 0 : i32
    %c0_i32_0 = arith.constant 0 : i32
    %c0_i32_1 = arith.constant 0 : i32
    return %c0_i32, %c0_i32_0 : i32, i32
  }
  func.func @transform_3(%arg0: i32) -> (i32, i32) {
    %c0_i32 = arith.constant 0 : i32
    %c0_i32_0 = arith.constant 0 : i32
    %c0_i32_1 = arith.constant 0 : i32
    return %c0_i32, %c0_i32_0 : i32, i32
  }
  func.func @transform_4(%arg0: i32) -> (i32, i32) {
    %c0_i32 = arith.constant 0 : i32
    %c0_i32_0 = arith.constant 0 : i32
    %c0_i32_1 = arith.constant 0 : i32
    return %c0_i32, %c0_i32_0 : i32, i32
  }
  func.func @transform_5(%arg0: i32) -> (i32, i32) {
    %c0_i32 = arith.constant 0 : i32
    %c0_i32_0 = arith.constant 0 : i32
    %c0_i32_1 = arith.constant 0 : i32
    return %c0_i32, %c0_i32_0 : i32, i32
  }
  func.func @transform_6(%arg0: i32) -> (i32, i32) {
    %c0_i32 = arith.constant 0 : i32
    %c0_i32_0 = arith.constant 0 : i32
    %c0_i32_1 = arith.constant 0 : i32
    return %c0_i32, %c0_i32_0 : i32, i32
  }
  func.func @transform_7(%arg0: i32) -> (i32, i32) {
    %c0_i32 = arith.constant 0 : i32
    %c0_i32_0 = arith.constant 0 : i32
    %c0_i32_1 = arith.constant 0 : i32
    return %c0_i32, %c0_i32_0 : i32, i32
  }
  func.func @transform_8(%arg0: i32) -> (i32, i32) {
    %c0_i32 = arith.constant 0 : i32
    %c0_i32_0 = arith.constant 0 : i32
    %c0_i32_1 = arith.constant 0 : i32
    return %c0_i32, %c0_i32_0 : i32, i32
  }
  func.func @transform_9(%arg0: i32) -> (i32, i32) {
    %c0_i32 = arith.constant 0 : i32
    %c0_i32_0 = arith.constant 0 : i32
    %c0_i32_1 = arith.constant 0 : i32
    return %c0_i32, %c0_i32_0 : i32, i32
  }
  func.func @transform_10(%arg0: i32) -> (i32, i32) {
    %c0_i32 = arith.constant 0 : i32
    %c0_i32_0 = arith.constant 0 : i32
    %c0_i32_1 = arith.constant 0 : i32
    return %c0_i32, %c0_i32_0 : i32, i32
  }
  func.func @transform_11(%arg0: i32) -> (i32, i32) {
    %c0_i32 = arith.constant 0 : i32
    %c0_i32_0 = arith.constant 0 : i32
    %c0_i32_1 = arith.constant 0 : i32
    return %c0_i32, %c0_i32_0 : i32, i32
  }
  func.func @transform_12(%arg0: i32) -> (i32, i32) {
    %c0_i32 = arith.constant 0 : i32
    %c0_i32_0 = arith.constant 0 : i32
    %c0_i32_1 = arith.constant 0 : i32
    return %c0_i32, %c0_i32_0 : i32, i32
  }
  func.func @transform_13(%arg0: i32) -> (i32, i32) {
    %c0_i32 = arith.constant 0 : i32
    %c0_i32_0 = arith.constant 0 : i32
    %c0_i32_1 = arith.constant 0 : i32
    return %c0_i32, %c0_i32_0 : i32, i32
  }
  func.func @transform_14(%arg0: i32) -> (i32, i32, i32) {
    %c0_i32 = arith.constant 0 : i32
    %c0_i32_0 = arith.constant 0 : i32
    %c0_i32_1 = arith.constant 0 : i32
    return %arg0, %c0_i32, %c0_i32_0 : i32, i32, i32
  }
}

</mosaic_0001>

<llo_original>
// kernel: mygo_forward.6
$region0: #{mygo_forward.6}
  #allocation0 [shape = 'u32[]', space=smem, size = 0x4, offset = 0x4, fixed_abs, tag = 'smem constant byte address 0x4 - core index']
  #allocation1 [shape = 'u32[144,128]{1,0:T(1,128)}', space=vmem, size = 0x12000, scoped, tag = 'internal scratch']
  %s0 = inlined_call_operand.vmem [shape: f32[16,128], index: 0, kind: input, shape index: {}]
  %s1 = inlined_call_operand.vmem [shape: f32[1,128], index: 1, kind: input, shape index: {}]
  %s2 = inlined_call_operand.vmem [shape: f32[1,128], index: 2, kind: input, shape index: {}]
  %s3 = inlined_call_operand.vmem [shape: f32[1,128], index: 3, kind: input, shape index: {}]
  %s4 = inlined_call_operand.vmem [shape: bf16[16,128], index: 4, kind: output, shape index: {}]
  %s5 = sld [smem:[#allocation0]]
  $region26: #{mygo_forward.6} parent=0
    _
  %s7 = ssub.s32 1, %s5
  %s8 = scalar_select 0, %s7, %s5
  // Predicated region
  $region2: #{mygo_forward.6} parent=0 // pred_check
    _
  $region3: #{mygo_forward.6} parent=0 // pred_check_branch
    %10 = sbr.rel (0) target = $region5
  $region4: #{mygo_forward.6} parent=0 // pred_region
    _
  $region5: #{mygo_forward.6} parent=0 // pred_fallthru
    _
  // Predicated region
  $region6: #{mygo_forward.6} parent=0 // pred_check
    _
  $region7: #{mygo_forward.6} parent=0 // pred_check_branch
    %12 = sbr.rel (0) target = $region9
  $region8: #{mygo_forward.6} parent=0 // pred_region
    _
  $region9: #{mygo_forward.6} parent=0 // pred_fallthru
    _
  // Predicated region
  $region10: #{mygo_forward.6} parent=0 // pred_check
    _
  $region11: #{mygo_forward.6} parent=0 // pred_check_branch
    %14 = sbr.rel (0) target = $region13
  $region12: #{mygo_forward.6} parent=0 // pred_region
    _
  $region13: #{mygo_forward.6} parent=0 // pred_fallthru
    _
  // Predicated region
  $region14: #{mygo_forward.6} parent=0 // pred_check
    _
  $region15: #{mygo_forward.6} parent=0 // pred_check_branch
    %16 = sbr.rel (0) target = $region17
  $region16: #{mygo_forward.6} parent=0 // pred_region
    _
  $region17: #{mygo_forward.6} parent=0 // pred_fallthru
    _
  %v17 = vld [vmem:[%s0] sm:$0xff]
  %v18 = vld [vmem:[%s0 + $0x8] sm:$0xff]
  %v19 = vld [vmem:[%s1] sm:$0x1]
  %v20 = vld [vmem:[%s2] sm:$0x1]
  %21 = vadd.xlane.f32.xlu0 %v17
  %v22 = vpop.xlane.xlu0 %21
  %23 = vadd.xlane.f32.xlu0 %v18
  %v24 = vpop.xlane.xlu0 %23
  %v25 = vrcp.pop 128.0
  %v26 = vmul.f32 %v22, %v25
  %v27 = vmul.f32 %v24, %v25
  %v28 = vsub.f32 %v17, %v26
  %v29 = vsub.f32 %v18, %v27
  %v30 = vmul.f32 %v28, %v28
  %v31 = vmul.f32 %v29, %v29
  %32 = vadd.xlane.f32.xlu0 %v30
  %v33 = vpop.xlane.xlu0 %32
  %34 = vadd.xlane.f32.xlu0 %v31
  %v35 = vpop.xlane.xlu0 %34
  %v36 = vmul.f32 %v33, %v25
  %v37 = vmul.f32 %v35, %v25
  %v38 = vadd.f32 %v36, 1e-05
  %v39 = vadd.f32 %v37, 1e-05
  %v40 = vrsqrt.pop %v38
  %v41 = vrsqrt.pop %v39
  %v42 = vmul.f32 %v28, %v40
  %v43 = vmul.f32 %v29, %v41
  %v45 = vlaneseq
  %v46 = vshrl.u32 %v45, 7
  %v47 = vsub.s32 0, %v46
  %v48 = vrot.slane %v19, %v47
  %v50 = vmul.f32 %v42, %v48
  %v51 = vmul.f32 %v43, %v48
  %v53 = vlaneseq
  %v54 = vshrl.u32 %v53, 7
  %v55 = vsub.s32 0, %v54
  %v56 = vrot.slane %v20, %v55
  %v58 = vadd.f32 %v50, %v56
  %v59 = vadd.f32 %v51, %v56
  %v60 = vld [vmem:[%s3] sm:$0x1]
  %v62 = vlaneseq
  %v63 = vshrl.u32 %v62, 7
  %v64 = vsub.s32 0, %v63
  %v65 = vrot.slane %v60, %v64
  %v67 = vadd.f32 %v58, %v65
  %v68 = vadd.f32 %v59, %v65
  %v69 = vpack.c.bf16 %v68, %v67
  %v71 = vunpack.c.l.b16 %v69
  %v72 = vunpack.c.h.b16 %v69
  %v73 = vpack.c.b16 %v71, %v71
  %v74 = vpack.c.b16 %v72, %v72
  %77 = vst [vmem:[%s4] sm:$0xf] %v73
  %78 = vst [vmem:[%s4 + $0x4] sm:$0xf] %v74
  // Predicated region
  $region18: #{mygo_forward.6} parent=0 // pred_check
    _
  $region19: #{mygo_forward.6} parent=0 // pred_check_branch
    %80 = sbr.rel (0) target = $region21
  $region20: #{mygo_forward.6} parent=0 // pred_region
    _
  $region21: #{mygo_forward.6} parent=0 // pred_fallthru
    _
  // Predicated region
  $region22: #{mygo_forward.6} parent=0 // pred_check
    _
  $region23: #{mygo_forward.6} parent=0 // pred_check_branch
    %82 = sbr.rel (0) target = $region25
  $region24: #{mygo_forward.6} parent=0 // pred_region
    _
  $region25: #{mygo_forward.6} parent=0 // pred_fallthru
    _

// kernel: mygo_forward.7
$region0: #{mygo_forward.7}
  #allocation0 [shape = 'u32[]', space=smem, size = 0x4, offset = 0x4, fixed_abs, tag = 'smem constant byte address 0x4 - core index']
  #allocation1 [shape = 'u32[144,128]{1,0:T(1,128)}', space=vmem, size = 0x12000, scoped, tag = 'internal scratch']
  %s0 = inlined_call_operand.vmem [shape: bf16[96,192], index: 0, kind: input, shape index: {}]
  %s1 = inlined_call_operand.vmem [shape: bf16[192,128], index: 1, kind: input, shape index: {}]
  %s2 = inlined_call_operand.vmem [shape: f32[1,128], index: 2, kind: input, shape index: {}]
  %s3 = inlined_call_operand.vmem [shape: f32[1,128], index: 3, kind: input, shape index: {}]
  %s4 = inlined_call_operand.vmem [shape: f32[1,128], index: 4, kind: input, shape index: {}]
  %s5 = inlined_call_operand.vmem [shape: f32[1,128], index: 5, kind: input, shape index: {}]
  %s6 = inlined_call_operand.vmem [shape: bf16[96,128], index: 6, kind: output, shape index: {}]
  %s7 = sld [smem:[#allocation0]]
  $region34: #{mygo_forward.7} parent=0
    _
  %s9 = ssub.s32 1, %s7
  %s10 = scalar_select 0, %s9, %s7
  // Predicated region
  $region2: #{mygo_forward.7} parent=0 // pred_check
    _
  $region3: #{mygo_forward.7} parent=0 // pred_check_branch
    %12 = sbr.rel (0) target = $region5
  $region4: #{mygo_forward.7} parent=0 // pred_region
    _
  $region5: #{mygo_forward.7} parent=0 // pred_fallthru
    _
  // Predicated region
  $region6: #{mygo_forward.7} parent=0 // pred_check
    _
  $region7: #{mygo_forward.7} parent=0 // pred_check_branch
    %14 = sbr.rel (0) target = $region9
  $region8: #{mygo_forward.7} parent=0 // pred_region
    _
  $region9: #{mygo_forward.7} parent=0 // pred_fallthru
    _
  // Predicated region
  $region10: #{mygo_forward.7} parent=0 // pred_check
    _
  $region11: #{mygo_forward.7} parent=0 // pred_check_branch
    %16 = sbr.rel (0) target = $region13
  $region12: #{mygo_forward.7} parent=0 // pred_region
    _
  $region13: #{mygo_forward.7} parent=0 // pred_fallthru
    _
  // Predicated region
  $region14: #{mygo_forward.7} parent=0 // pred_check
    _
  $region15: #{mygo_forward.7} parent=0 // pred_check_branch
    %18 = sbr.rel (0) target = $region17
  $region16: #{mygo_forward.7} parent=0 // pred_region
    _
  $region17: #{mygo_forward.7} parent=0 // pred_fallthru
    _
  // Predicated region
  $region18: #{mygo_forward.7} parent=0 // pred_check
    _
  $region19: #{mygo_forward.7} parent=0 // pred_check_branch
    %20 = sbr.rel (0) target = $region21
  $region20: #{mygo_forward.7} parent=0 // pred_region
    _
  $region21: #{mygo_forward.7} parent=0 // pred_fallthru
    _
  // Predicated region
  $region22: #{mygo_forward.7} parent=0 // pred_check
    _
  $region23: #{mygo_forward.7} parent=0 // pred_check_branch
    %22 = sbr.rel (0) target = $region25
  $region24: #{mygo_forward.7} parent=0 // pred_region
    _
  $region25: #{mygo_forward.7} parent=0 // pred_fallthru
    _
  %v24 = vld [vmem:[%s0] sm:$0xff]
  %v25 = vld [vmem:[%s0 + $0x8] sm:$0xff]
  %v26 = vld [vmem:[%s0 + $0x10] sm:$0xff]
  %v27 = vld [vmem:[%s0 + $0x18] sm:$0xff]
  %v28 = vld [vmem:[%s0 + $0x20] sm:$0xff]
  %v29 = vld [vmem:[%s0 + $0x28] sm:$0xff]
  %v30 = vld [vmem:[%s0 + $0x30] sm:$0xff]
  %v31 = vld [vmem:[%s0 + $0x38] sm:$0xff]
  %v32 = vld [vmem:[%s0 + $0x40] sm:$0xff]
  %v33 = vld [vmem:[%s0 + $0x48] sm:$0xff]
  %v34 = vld [vmem:[%s0 + $0x50] sm:$0xff]
  %v35 = vld [vmem:[%s0 + $0x58] sm:$0xff]
  %v36 = vld [vmem:[%s1] sm:$0xf]
  %v37 = vld [vmem:[%s1 + $0x4] sm:$0xf]
  %v38 = vld [vmem:[%s1 + $0x8] sm:$0xf]
  %v39 = vld [vmem:[%s1 + $0xc] sm:$0xf]
  %v40 = vld [vmem:[%s1 + $0x10] sm:$0xf]
  %v41 = vld [vmem:[%s1 + $0x14] sm:$0xf]
  %v42 = vld [vmem:[%s1 + $0x18] sm:$0xf]
  %v43 = vld [vmem:[%s1 + $0x1c] sm:$0xf]
  %v44 = vld [vmem:[%s1 + $0x20] sm:$0xf]
  %v45 = vld [vmem:[%s1 + $0x24] sm:$0xf]
  %v46 = vld [vmem:[%s1 + $0x28] sm:$0xf]
  %v47 = vld [vmem:[%s1 + $0x2c] sm:$0xf]
  %v48 = vld [vmem:[%s1 + $0x30] sm:$0xf]
  %v49 = vld [vmem:[%s1 + $0x34] sm:$0xf]
  %v50 = vld [vmem:[%s1 + $0x38] sm:$0xf]
  %v51 = vld [vmem:[%s1 + $0x3c] sm:$0xf]
  %v52 = vld [vmem:[%s1 + $0x40] sm:$0xf]
  %v53 = vld [vmem:[%s1 + $0x44] sm:$0xf]
  %v54 = vld [vmem:[%s1 + $0x48] sm:$0xf]
  %v55 = vld [vmem:[%s1 + $0x4c] sm:$0xf]
  %v56 = vld [vmem:[%s1 + $0x50] sm:$0xf]
  %v57 = vld [vmem:[%s1 + $0x54] sm:$0xf]
  %v58 = vld [vmem:[%s1 + $0x58] sm:$0xf]
  %v59 = vld [vmem:[%s1 + $0x5c] sm:$0xf]
  %v60 = vld [vmem:[%s2] sm:$0x1]
  %v62 = vlaneseq
  %v63 = vshrl.u32 %v62, 7
  %v64 = vsub.s32 0, %v63
  %v65 = vrot.slane %v60, %v64
  %v79 = vunpack.c.l.b16 %v24
  %v80 = vunpack.c.h.b16 %v24
  %v81 = vunpack.c.l.b16 %v25
  %v82 = vunpack.c.h.b16 %v25
  %v83 = vunpack.c.l.b16 %v26
  %v84 = vunpack.c.h.b16 %v26
  %v85 = vunpack.c.l.b16 %v27
  %v86 = vunpack.c.h.b16 %v27
  %v87 = vunpack.c.l.b16 %v28
  %v88 = vunpack.c.h.b16 %v28
  %v89 = vunpack.c.l.b16 %v29
  %v90 = vunpack.c.h.b16 %v29
  %v91 = vunpack.c.l.b16 %v30
  %v92 = vunpack.c.h.b16 %v30
  %v93 = vunpack.c.l.b16 %v31
  %v94 = vunpack.c.h.b16 %v31
  %v95 = vunpack.c.l.b16 %v32
  %v96 = vunpack.c.h.b16 %v32
  %v97 = vunpack.c.l.b16 %v33
  %v98 = vunpack.c.h.b16 %v33
  %v99 = vunpack.c.l.b16 %v34
  %v100 = vunpack.c.h.b16 %v34
  %v101 = vunpack.c.l.b16 %v35
  %v102 = vunpack.c.h.b16 %v35
  %v103 = vpack.c.b16 %v81, %v79
  %v104 = vpack.c.b16 %v82, %v80
  %v105 = vpack.c.b16 %v85, %v83
  %v106 = vpack.c.b16 %v86, %v84
  %v107 = vpack.c.b16 %v89, %v87
  %v108 = vpack.c.b16 %v90, %v88
  %v109 = vpack.c.b16 %v93, %v91
  %v110 = vpack.c.b16 %v94, %v92
  %v111 = vpack.c.b16 %v97, %v95
  %v112 = vpack.c.b16 %v98, %v96
  %v113 = vpack.c.b16 %v101, %v99
  %v114 = vpack.c.b16 %v102, %v100
  %v145 = vunpack.c.l.b16 %v36
  %v146 = vunpack.c.l.b16 %v37
  %v147 = vunpack.c.l.b16 %v38
  %v148 = vunpack.c.l.b16 %v39
  %v149 = vunpack.c.l.b16 %v40
  %v150 = vunpack.c.l.b16 %v41
  %v151 = vunpack.c.l.b16 %v42
  %v152 = vunpack.c.l.b16 %v43
  %v153 = vunpack.c.l.b16 %v44
  %v154 = vunpack.c.l.b16 %v45
  %v155 = vunpack.c.l.b16 %v46
  %v156 = vunpack.c.l.b16 %v47
  %v157 = vunpack.c.l.b16 %v48
  %v158 = vunpack.c.l.b16 %v49
  %v159 = vunpack.c.l.b16 %v50
  %v160 = vunpack.c.l.b16 %v51
  %v161 = vunpack.c.l.b16 %v52
  %v162 = vunpack.c.l.b16 %v53
  %v163 = vunpack.c.l.b16 %v54
  %v164 = vunpack.c.l.b16 %v55
  %v165 = vunpack.c.l.b16 %v56
  %v166 = vunpack.c.l.b16 %v57
  %v167 = vunpack.c.l.b16 %v58
  %v168 = vunpack.c.l.b16 %v59
  %v169 = vpack.c.b16 %v146, %v145
  %v170 = vpack.c.b16 %v148, %v147
  %v171 = vpack.c.b16 %v150, %v149
  %v172 = vpack.c.b16 %v152, %v151
  %v173 = vpack.c.b16 %v154, %v153
  %v174 = vpack.c.b16 %v156, %v155
  %v175 = vpack.c.b16 %v158, %v157
  %v176 = vpack.c.b16 %v160, %v159
  %v177 = vpack.c.b16 %v162, %v161
  %v178 = vpack.c.b16 %v164, %v163
  %v179 = vpack.c.b16 %v166, %v165
  %v180 = vpack.c.b16 %v168, %v167
  %vm193 = vcmask 523264
  %v195 = vsel %vm193, %v104, 0
  %v198 = vsel %vm193, %v106, 0
  %v201 = vsel %vm193, %v108, 0
  %v204 = vsel %vm193, %v110, 0
  %v207 = vsel %vm193, %v112, 0
  %v210 = vsel %vm193, %v114, 0
  %212 = vmatprep.subr.bf16.mxu0 0
  %213 = vmatpush1.bf16.msra.mxu0 %v169
  %214 = vmatprep.subr.bf16.mxu0 0
  %215 = vmatpush1.bf16.msra.mxu0 %v170
  %216 = vmatprep.subr.bf16.mxu0 0
  %217 = vmatpush1.bf16.msra.mxu0 %v171
  %218 = vmatprep.subr.bf16.mxu0 0
  %219 = vmatpush1.bf16.msra.mxu0 %v172
  %220 = vmatprep.subr.bf16.mxu0 0
  %221 = vmatpush1.bf16.msra.mxu0 %v173
  %222 = vmatprep.subr.bf16.mxu0 0
  %223 = vmatpush1.bf16.msra.mxu0 %v174
  %224 = vmatprep.subr.bf16.mxu0 0
  %225 = vmatpush1.bf16.msra.mxu0 %v175
  %226 = vmatprep.subr.bf16.mxu0 0
  %227 = vmatpush1.bf16.msra.mxu0 %v176
  %228 = vmatprep.subr.bf16.mxu0 0
  %229 = vmatpush1.bf16.msra.mxu0 %v177
  %230 = vmatprep.subr.bf16.mxu0 0
  %231 = vmatpush1.bf16.msra.mxu0 %v178
  %232 = vmatprep.subr.bf16.mxu0 0
  %233 = vmatpush1.bf16.msra.mxu0 %v179
  %234 = vmatprep.subr.bf16.mxu0 0
  %235 = vmatpush1.bf16.msra.mxu0 %v180
  %236 = vmatprep.subr.bf16.mxu0 0
  %237 = vmatpush1.bf16.msra.mxu0 0
  %238 = vmatprep.subr.bf16.mxu0 0
  %239 = vmatpush1.bf16.msra.mxu0 0
  %240 = vmatprep.subr.bf16.mxu0 0
  %241 = vmatpush1.bf16.msra.mxu0 0
  %242 = vmatprep.subr.bf16.mxu0 0
  %243 = vmatpush1.bf16.msra.mxu0 0
  %244 = vmatprep.mubr.bf16.mxu0 %v195
  %245 = vmatmul.mubr.bf16.gmra.mrb[0].mxu0 %v103
  %v246 = vpop.f32.mrb[0].mxu0
  %v247 = vadd.f32 %v65, %v246
  %v248 = vpop.f32.mrb[0].mxu0
  %v249 = vpop.f32.mrb[0].mxu0
  %v250 = vadd.f32 %v65, %v249
  %v251 = vpop.f32.mrb[0].mxu0
  %252 = vmatprep.mubr.bf16.mxu0 %v198
  %253 = vmatmul.mubr.bf16.gmra.mrb[0].mxu0 %v105
  %v254 = vpop.f32.mrb[0].mxu0
  %v255 = vadd.f32 %v65, %v254
  %v256 = vpop.f32.mrb[0].mxu0
  %v257 = vpop.f32.mrb[0].mxu0
  %v258 = vadd.f32 %v65, %v257
  %v259 = vpop.f32.mrb[0].mxu0
  %260 = vmatprep.mubr.bf16.mxu0 %v201
  %261 = vmatmul.mubr.bf16.gmra.mrb[0].mxu0 %v107
  %v262 = vpop.f32.mrb[0].mxu0
  %v263 = vadd.f32 %v65, %v262
  %v264 = vpop.f32.mrb[0].mxu0
  %v265 = vpop.f32.mrb[0].mxu0
  %v266 = vadd.f32 %v65, %v265
  %v267 = vpop.f32.mrb[0].mxu0
  %268 = vmatprep.mubr.bf16.mxu0 %v204
  %269 = vmatmul.mubr.bf16.gmra.mrb[0].mxu0 %v109
  %v270 = vpop.f32.mrb[0].mxu0
  %v271 = vadd.f32 %v65, %v270
  %v272 = vpop.f32.mrb[0].mxu0
  %v273 = vpop.f32.mrb[0].mxu0
  %v274 = vadd.f32 %v65, %v273
  %v275 = vpop.f32.mrb[0].mxu0
  %276 = vmatprep.mubr.bf16.mxu0 %v207
  %277 = vmatmul.mubr.bf16.gmra.mrb[0].mxu0 %v111
  %v278 = vpop.f32.mrb[0].mxu0
  %v279 = vadd.f32 %v65, %v278
  %v280 = vpop.f32.mrb[0].mxu0
  %v281 = vpop.f32.mrb[0].mxu0
  %v282 = vadd.f32 %v65, %v281
  %v283 = vpop.f32.mrb[0].mxu0
  %284 = vmatprep.mubr.bf16.mxu0 %v210
  %285 = vmatmul.mubr.bf16.gmra.mrb[0].mxu0 %v113
  %v286 = vpop.f32.mrb[0].mxu0
  %v287 = vadd.f32 %v65, %v286
  %v288 = vpop.f32.mrb[0].mxu0
  %v289 = vpop.f32.mrb[0].mxu0
  %v290 = vadd.f32 %v65, %v289
  %v291 = vpop.f32.mrb[0].mxu0
  %292 = vdwg.mxu0
  %v293 = vld [vmem:[%s3] sm:$0x1]
  %v294 = vld [vmem:[%s4] sm:$0x1]
  %295 = vadd.xlane.f32.xlu0 %v247
  %v296 = vpop.xlane.xlu0 %295
  %297 = vadd.xlane.f32.xlu0 %v250
  %v298 = vpop.xlane.xlu0 %297
  %299 = vadd.xlane.f32.xlu0 %v255
  %v300 = vpop.xlane.xlu0 %299
  %301 = vadd.xlane.f32.xlu0 %v258
  %v302 = vpop.xlane.xlu0 %301
  %303 = vadd.xlane.f32.xlu0 %v263
  %v304 = vpop.xlane.xlu0 %303
  %305 = vadd.xlane.f32.xlu0 %v266
  %v306 = vpop.xlane.xlu0 %305
  %307 = vadd.xlane.f32.xlu0 %v271
  %v308 = vpop.xlane.xlu0 %307
  %309 = vadd.xlane.f32.xlu0 %v274
  %v310 = vpop.xlane.xlu0 %309
  %311 = vadd.xlane.f32.xlu0 %v279
  %v312 = vpop.xlane.xlu0 %311
  %313 = vadd.xlane.f32.xlu0 %v282
  %v314 = vpop.xlane.xlu0 %313
  %315 = vadd.xlane.f32.xlu0 %v287
  %v316 = vpop.xlane.xlu0 %315
  %317 = vadd.xlane.f32.xlu0 %v290
  %v318 = vpop.xlane.xlu0 %317
  %v319 = vrcp.pop 128.0
  %v320 = vmul.f32 %v296, %v319
  %v321 = vmul.f32 %v298, %v319
  %v322 = vmul.f32 %v300, %v319
  %v323 = vmul.f32 %v302, %v319
  %v324 = vmul.f32 %v304, %v319
  %v325 = vmul.f32 %v306, %v319
  %v326 = vmul.f32 %v308, %v319
  %v327 = vmul.f32 %v310, %v319
  %v328 = vmul.f32 %v312, %v319
  %v329 = vmul.f32 %v314, %v319
  %v330 = vmul.f32 %v316, %v319
  %v331 = vmul.f32 %v318, %v319
  %v332 = vsub.f32 %v247, %v320
  %v333 = vsub.f32 %v250, %v321
  %v334 = vsub.f32 %v255, %v322
  %v335 = vsub.f32 %v258, %v323
  %v336 = vsub.f32 %v263, %v324
  %v337 = vsub.f32 %v266, %v325
  %v338 = vsub.f32 %v271, %v326
  %v339 = vsub.f32 %v274, %v327
  %v340 = vsub.f32 %v279, %v328
  %v341 = vsub.f32 %v282, %v329
  %v342 = vsub.f32 %v287, %v330
  %v343 = vsub.f32 %v290, %v331
  %v344 = vmul.f32 %v332, %v332
  %v345 = vmul.f32 %v333, %v333
  %v346 = vmul.f32 %v334, %v334
  %v347 = vmul.f32 %v335, %v335
  %v348 = vmul.f32 %v336, %v336
  %v349 = vmul.f32 %v337, %v337
  %v350 = vmul.f32 %v338, %v338
  %v351 = vmul.f32 %v339, %v339
  %v352 = vmul.f32 %v340, %v340
  %v353 = vmul.f32 %v341, %v341
  %v354 = vmul.f32 %v342, %v342
  %v355 = vmul.f32 %v343, %v343
  %356 = vadd.xlane.f32.xlu0 %v344
  %v357 = vpop.xlane.xlu0 %356
  %358 = vadd.xlane.f32.xlu0 %v345
  %v359 = vpop.xlane.xlu0 %358
  %360 = vadd.xlane.f32.xlu0 %v346
  %v361 = vpop.xlane.xlu0 %360
  %362 = vadd.xlane.f32.xlu0 %v347
  %v363 = vpop.xlane.xlu0 %362
  %364 = vadd.xlane.f32.xlu0 %v348
  %v365 = vpop.xlane.xlu0 %364
  %366 = vadd.xlane.f32.xlu0 %v349
  %v367 = vpop.xlane.xlu0 %366
  %368 = vadd.xlane.f32.xlu0 %v350
  %v369 = vpop.xlane.xlu0 %368
  %370 = vadd.xlane.f32.xlu0 %v351
  %v371 = vpop.xlane.xlu0 %370
  %372 = vadd.xlane.f32.xlu0 %v352
  %v373 = vpop.xlane.xlu0 %372
  %374 = vadd.xlane.f32.xlu0 %v353
  %v375 = vpop.xlane.xlu0 %374
  %376 = vadd.xlane.f32.xlu0 %v354
  %v377 = vpop.xlane.xlu0 %376
  %378 = vadd.xlane.f32.xlu0 %v355
  %v379 = vpop.xlane.xlu0 %378
  %v380 = vmul.f32 %v357, %v319
  %v381 = vmul.f32 %v359, %v319
  %v382 = vmul.f32 %v361, %v319
  %v383 = vmul.f32 %v363, %v319
  %v384 = vmul.f32 %v365, %v319
  %v385 = vmul.f32 %v367, %v319
  %v386 = vmul.f32 %v369, %v319
  %v387 = vmul.f32 %v371, %v319
  %v388 = vmul.f32 %v373, %v319
  %v389 = vmul.f32 %v375, %v319
  %v390 = vmul.f32 %v377, %v319
  %v391 = vmul.f32 %v379, %v319
  %v392 = vadd.f32 %v380, 1e-05
  %v393 = vadd.f32 %v381, 1e-05
  %v394 = vadd.f32 %v382, 1e-05
  %v395 = vadd.f32 %v383, 1e-05
  %v396 = vadd.f32 %v384, 1e-05
  %v397 = vadd.f32 %v385, 1e-05
  %v398 = vadd.f32 %v386, 1e-05
  %v399 = vadd.f32 %v387, 1e-05
  %v400 = vadd.f32 %v388, 1e-05
  %v401 = vadd.f32 %v389, 1e-05
  %v402 = vadd.f32 %v390, 1e-05
  %v403 = vadd.f32 %v391, 1e-05
  %v404 = vrsqrt.pop %v392
  %v405 = vrsqrt.pop %v393
  %v406 = vrsqrt.pop %v394
  %v407 = vrsqrt.pop %v395
  %v408 = vrsqrt.pop %v396
  %v409 = vrsqrt.pop %v397
  %v410 = vrsqrt.pop %v398
  %v411 = vrsqrt.pop %v399
  %v412 = vrsqrt.pop %v400
  %v413 = vrsqrt.pop %v401
  %v414 = vrsqrt.pop %v402
  %v415 = vrsqrt.pop %v403
  %v416 = vmul.f32 %v332, %v404
  %v417 = vmul.f32 %v333, %v405
  %v418 = vmul.f32 %v334, %v406
  %v419 = vmul.f32 %v335, %v407
  %v420 = vmul.f32 %v336, %v408
  %v421 = vmul.f32 %v337, %v409
  %v422 = vmul.f32 %v338, %v410
  %v423 = vmul.f32 %v339, %v411
  %v424 = vmul.f32 %v340, %v412
  %v425 = vmul.f32 %v341, %v413
  %v426 = vmul.f32 %v342, %v414
  %v427 = vmul.f32 %v343, %v415
  %v429 = vlaneseq
  %v430 = vshrl.u32 %v429, 7
  %v431 = vsub.s32 0, %v430
  %v432 = vrot.slane %v293, %v431
  %v434 = vmul.f32 %v416, %v432
  %v435 = vmul.f32 %v417, %v432
  %v436 = vmul.f32 %v418, %v432
  %v437 = vmul.f32 %v419, %v432
  %v438 = vmul.f32 %v420, %v432
  %v439 = vmul.f32 %v421, %v432
  %v440 = vmul.f32 %v422, %v432
  %v441 = vmul.f32 %v423, %v432
  %v442 = vmul.f32 %v424, %v432
  %v443 = vmul.f32 %v425, %v432
  %v444 = vmul.f32 %v426, %v432
  %v445 = vmul.f32 %v427, %v432
  %v447 = vlaneseq
  %v448 = vshrl.u32 %v447, 7
  %v449 = vsub.s32 0, %v448
  %v450 = vrot.slane %v294, %v449
  %v452 = vadd.f32 %v434, %v450
  %v453 = vadd.f32 %v435, %v450
  %v454 = vadd.f32 %v436, %v450
  %v455 = vadd.f32 %v437, %v450
  %v456 = vadd.f32 %v438, %v450
  %v457 = vadd.f32 %v439, %v450
  %v458 = vadd.f32 %v440, %v450
  %v459 = vadd.f32 %v441, %v450
  %v460 = vadd.f32 %v442, %v450
  %v461 = vadd.f32 %v443, %v450
  %v462 = vadd.f32 %v444, %v450
  %v463 = vadd.f32 %v445, %v450
  %v464 = vld [vmem:[%s5] sm:$0x1]
  %v466 = vlaneseq
  %v467 = vshrl.u32 %v466, 7
  %v468 = vsub.s32 0, %v467
  %v469 = vrot.slane %v464, %v468
  %v471 = vadd.f32 %v452, %v469
  %v472 = vadd.f32 %v453, %v469
  %v473 = vadd.f32 %v454, %v469
  %v474 = vadd.f32 %v455, %v469
  %v475 = vadd.f32 %v456, %v469
  %v476 = vadd.f32 %v457, %v469
  %v477 = vadd.f32 %v458, %v469
  %v478 = vadd.f32 %v459, %v469
  %v479 = vadd.f32 %v460, %v469
  %v480 = vadd.f32 %v461, %v469
  %v481 = vadd.f32 %v462, %v469
  %v482 = vadd.f32 %v463, %v469
  %v483 = vpack.c.bf16 %v472, %v471
  %v484 = vpack.c.bf16 %v474, %v473
  %v485 = vpack.c.bf16 %v476, %v475
  %v486 = vpack.c.bf16 %v478, %v477
  %v487 = vpack.c.bf16 %v480, %v479
  %v488 = vpack.c.bf16 %v482, %v481
  %v495 = vunpack.c.l.b16 %v483
  %v496 = vunpack.c.h.b16 %v483
  %v497 = vunpack.c.l.b16 %v484
  %v498 = vunpack.c.h.b16 %v484
  %v499 = vunpack.c.l.b16 %v485
  %v500 = vunpack.c.h.b16 %v485
  %v501 = vunpack.c.l.b16 %v486
  %v502 = vunpack.c.h.b16 %v486
  %v503 = vunpack.c.l.b16 %v487
  %v504 = vunpack.c.h.b16 %v487
  %v505 = vunpack.c.l.b16 %v488
  %v506 = vunpack.c.h.b16 %v488
  %v507 = vpack.c.b16 %v495, %v495
  %v508 = vpack.c.b16 %v496, %v496
  %v509 = vpack.c.b16 %v497, %v497
  %v510 = vpack.c.b16 %v498, %v498
  %v511 = vpack.c.b16 %v499, %v499
  %v512 = vpack.c.b16 %v500, %v500
  %v513 = vpack.c.b16 %v501, %v501
  %v514 = vpack.c.b16 %v502, %v502
  %v515 = vpack.c.b16 %v503, %v503
  %v516 = vpack.c.b16 %v504, %v504
  %v517 = vpack.c.b16 %v505, %v505
  %v518 = vpack.c.b16 %v506, %v506
  %531 = vst [vmem:[%s6] sm:$0xf] %v507
  %532 = vst [vmem:[%s6 + $0x4] sm:$0xf] %v508
  %533 = vst [vmem:[%s6 + $0x8] sm:$0xf] %v509
  %534 = vst [vmem:[%s6 + $0xc] sm:$0xf] %v510
  %535 = vst [vmem:[%s6 + $0x10] sm:$0xf] %v511
  %536 = vst [vmem:[%s6 + $0x14] sm:$0xf] %v512
  %537 = vst [vmem:[%s6 + $0x18] sm:$0xf] %v513
  %538 = vst [vmem:[%s6 + $0x1c] sm:$0xf] %v514
  %539 = vst [vmem:[%s6 + $0x20] sm:$0xf] %v515
  %540 = vst [vmem:[%s6 + $0x24] sm:$0xf] %v516
  %541 = vst [vmem:[%s6 + $0x28] sm:$0xf] %v517
  %542 = vst [vmem:[%s6 + $0x2c] sm:$0xf] %v518
  // Predicated region
  $region26: #{mygo_forward.7} parent=0 // pred_check
    _
  $region27: #{mygo_forward.7} parent=0 // pred_check_branch
    %544 = sbr.rel (0) target = $region29
  $region28: #{mygo_forward.7} parent=0 // pred_region
    _
  $region29: #{mygo_forward.7} parent=0 // pred_fallthru
    _
  // Predicated region
  $region30: #{mygo_forward.7} parent=0 // pred_check
    _
  $region31: #{mygo_forward.7} parent=0 // pred_check_branch
    %546 = sbr.rel (0) target = $region33
  $region32: #{mygo_forward.7} parent=0 // pred_region
    _
  $region33: #{mygo_forward.7} parent=0 // pred_fallthru
    _

// kernel: mygo_forward.8
$region0: #{mygo_forward.8}
  #allocation0 [shape = 'u32[]', space=smem, size = 0x4, offset = 0x4, fixed_abs, tag = 'smem constant byte address 0x4 - core index']
  #allocation1 [shape = 'u32[144,128]{1,0:T(1,128)}', space=vmem, size = 0x12000, scoped, tag = 'internal scratch']
  %s0 = inlined_call_operand.vmem [shape: bf16[128,160], index: 0, kind: input, shape index: {}]
  %s1 = inlined_call_operand.vmem [shape: bf16[160,128], index: 1, kind: input, shape index: {}]
  %s2 = inlined_call_operand.vmem [shape: f32[1,128], index: 2, kind: input, shape index: {}]
  %s3 = inlined_call_operand.vmem [shape: f32[1,128], index: 3, kind: input, shape index: {}]
  %s4 = inlined_call_operand.vmem [shape: f32[1,128], index: 4, kind: input, shape index: {}]
  %s5 = inlined_call_operand.vmem [shape: f32[1,128], index: 5, kind: input, shape index: {}]
  %s6 = inlined_call_operand.vmem [shape: bf16[128,128], index: 6, kind: output, shape index: {}]
  %s7 = sld [smem:[#allocation0]]
  $region34: #{mygo_forward.8} parent=0
    _
  %s9 = ssub.s32 1, %s7
  %s10 = scalar_select 0, %s9, %s7
  // Predicated region
  $region2: #{mygo_forward.8} parent=0 // pred_check
    _
  $region3: #{mygo_forward.8} parent=0 // pred_check_branch
    %12 = sbr.rel (0) target = $region5
  $region4: #{mygo_forward.8} parent=0 // pred_region
    _
  $region5: #{mygo_forward.8} parent=0 // pred_fallthru
    _
  // Predicated region
  $region6: #{mygo_forward.8} parent=0 // pred_check
    _
  $region7: #{mygo_forward.8} parent=0 // pred_check_branch
    %14 = sbr.rel (0) target = $region9
  $region8: #{mygo_forward.8} parent=0 // pred_region
    _
  $region9: #{mygo_forward.8} parent=0 // pred_fallthru
    _
  // Predicated region
  $region10: #{mygo_forward.8} parent=0 // pred_check
    _
  $region11: #{mygo_forward.8} parent=0 // pred_check_branch
    %16 = sbr.rel (0) target = $region13
  $region12: #{mygo_forward.8} parent=0 // pred_region
    _
  $region13: #{mygo_forward.8} parent=0 // pred_fallthru
    _
  // Predicated region
  $region14: #{mygo_forward.8} parent=0 // pred_check
    _
  $region15: #{mygo_forward.8} parent=0 // pred_check_branch
    %18 = sbr.rel (0) target = $region17
  $region16: #{mygo_forward.8} parent=0 // pred_region
    _
  $region17: #{mygo_forward.8} parent=0 // pred_fallthru
    _
  // Predicated region
  $region18: #{mygo_forward.8} parent=0 // pred_check
    _
  $region19: #{mygo_forward.8} parent=0 // pred_check_branch
    %20 = sbr.rel (0) target = $region21
  $region20: #{mygo_forward.8} parent=0 // pred_region
    _
  $region21: #{mygo_forward.8} parent=0 // pred_fallthru
    _
  // Predicated region
  $region22: #{mygo_forward.8} parent=0 // pred_check
    _
  $region23: #{mygo_forward.8} parent=0 // pred_check_branch
    %22 = sbr.rel (0) target = $region25
  $region24: #{mygo_forward.8} parent=0 // pred_region
    _
  $region25: #{mygo_forward.8} parent=0 // pred_fallthru
    _
  %v24 = vld [vmem:[%s0] sm:$0xff]
  %v25 = vld [vmem:[%s0 + $0x8] sm:$0xff]
  %v26 = vld [vmem:[%s0 + $0x10] sm:$0xff]
  %v27 = vld [vmem:[%s0 + $0x18] sm:$0xff]
  %v28 = vld [vmem:[%s0 + $0x20] sm:$0xff]
  %v29 = vld [vmem:[%s0 + $0x28] sm:$0xff]
  %v30 = vld [vmem:[%s0 + $0x30] sm:$0xff]
  %v31 = vld [vmem:[%s0 + $0x38] sm:$0xff]
  %v32 = vld [vmem:[%s0 + $0x40] sm:$0xff]
  %v33 = vld [vmem:[%s0 + $0x48] sm:$0xff]
  %v34 = vld [vmem:[%s0 + $0x50] sm:$0xff]
  %v35 = vld [vmem:[%s0 + $0x58] sm:$0xff]
  %v36 = vld [vmem:[%s0 + $0x60] sm:$0xff]
  %v37 = vld [vmem:[%s0 + $0x68] sm:$0xff]
  %v38 = vld [vmem:[%s0 + $0x70] sm:$0xff]
  %v39 = vld [vmem:[%s0 + $0x78] sm:$0xff]
  %v40 = vld [vmem:[%s1] sm:$0xf]
  %v41 = vld [vmem:[%s1 + $0x4] sm:$0xf]
  %v42 = vld [vmem:[%s1 + $0x8] sm:$0xf]
  %v43 = vld [vmem:[%s1 + $0xc] sm:$0xf]
  %v44 = vld [vmem:[%s1 + $0x10] sm:$0xf]
  %v45 = vld [vmem:[%s1 + $0x14] sm:$0xf]
  %v46 = vld [vmem:[%s1 + $0x18] sm:$0xf]
  %v47 = vld [vmem:[%s1 + $0x1c] sm:$0xf]
  %v48 = vld [vmem:[%s1 + $0x20] sm:$0xf]
  %v49 = vld [vmem:[%s1 + $0x24] sm:$0xf]
  %v50 = vld [vmem:[%s1 + $0x28] sm:$0xf]
  %v51 = vld [vmem:[%s1 + $0x2c] sm:$0xf]
  %v52 = vld [vmem:[%s1 + $0x30] sm:$0xf]
  %v53 = vld [vmem:[%s1 + $0x34] sm:$0xf]
  %v54 = vld [vmem:[%s1 + $0x38] sm:$0xf]
  %v55 = vld [vmem:[%s1 + $0x3c] sm:$0xf]
  %v56 = vld [vmem:[%s1 + $0x40] sm:$0xf]
  %v57 = vld [vmem:[%s1 + $0x44] sm:$0xf]
  %v58 = vld [vmem:[%s1 + $0x48] sm:$0xf]
  %v59 = vld [vmem:[%s1 + $0x4c] sm:$0xf]
  %v60 = vld [vmem:[%s2] sm:$0x1]
  %v62 = vlaneseq
  %v63 = vshrl.u32 %v62, 7
  %v64 = vsub.s32 0, %v63
  %v65 = vrot.slane %v60, %v64
  %v83 = vunpack.c.l.b16 %v24
  %v84 = vunpack.c.h.b16 %v24
  %v85 = vunpack.c.l.b16 %v25
  %v86 = vunpack.c.h.b16 %v25
  %v87 = vunpack.c.l.b16 %v26
  %v88 = vunpack.c.h.b16 %v26
  %v89 = vunpack.c.l.b16 %v27
  %v90 = vunpack.c.h.b16 %v27
  %v91 = vunpack.c.l.b16 %v28
  %v92 = vunpack.c.h.b16 %v28
  %v93 = vunpack.c.l.b16 %v29
  %v94 = vunpack.c.h.b16 %v29
  %v95 = vunpack.c.l.b16 %v30
  %v96 = vunpack.c.h.b16 %v30
  %v97 = vunpack.c.l.b16 %v31
  %v98 = vunpack.c.h.b16 %v31
  %v99 = vunpack.c.l.b16 %v32
  %v100 = vunpack.c.h.b16 %v32
  %v101 = vunpack.c.l.b16 %v33
  %v102 = vunpack.c.h.b16 %v33
  %v103 = vunpack.c.l.b16 %v34
  %v104 = vunpack.c.h.b16 %v34
  %v105 = vunpack.c.l.b16 %v35
  %v106 = vunpack.c.h.b16 %v35
  %v107 = vunpack.c.l.b16 %v36
  %v108 = vunpack.c.h.b16 %v36
  %v109 = vunpack.c.l.b16 %v37
  %v110 = vunpack.c.h.b16 %v37
  %v111 = vunpack.c.l.b16 %v38
  %v112 = vunpack.c.h.b16 %v38
  %v113 = vunpack.c.l.b16 %v39
  %v114 = vunpack.c.h.b16 %v39
  %v115 = vpack.c.b16 %v85, %v83
  %v116 = vpack.c.b16 %v86, %v84
  %v117 = vpack.c.b16 %v89, %v87
  %v118 = vpack.c.b16 %v90, %v88
  %v119 = vpack.c.b16 %v93, %v91
  %v120 = vpack.c.b16 %v94, %v92
  %v121 = vpack.c.b16 %v97, %v95
  %v122 = vpack.c.b16 %v98, %v96
  %v123 = vpack.c.b16 %v101, %v99
  %v124 = vpack.c.b16 %v102, %v100
  %v125 = vpack.c.b16 %v105, %v103
  %v126 = vpack.c.b16 %v106, %v104
  %v127 = vpack.c.b16 %v109, %v107
  %v128 = vpack.c.b16 %v110, %v108
  %v129 = vpack.c.b16 %v113, %v111
  %v130 = vpack.c.b16 %v114, %v112
  %v159 = vunpack.c.l.b16 %v40
  %v160 = vunpack.c.l.b16 %v41
  %v161 = vunpack.c.l.b16 %v42
  %v162 = vunpack.c.l.b16 %v43
  %v163 = vunpack.c.l.b16 %v44
  %v164 = vunpack.c.l.b16 %v45
  %v165 = vunpack.c.l.b16 %v46
  %v166 = vunpack.c.l.b16 %v47
  %v167 = vunpack.c.l.b16 %v48
  %v168 = vunpack.c.l.b16 %v49
  %v169 = vunpack.c.l.b16 %v50
  %v170 = vunpack.c.l.b16 %v51
  %v171 = vunpack.c.l.b16 %v52
  %v172 = vunpack.c.l.b16 %v53
  %v173 = vunpack.c.l.b16 %v54
  %v174 = vunpack.c.l.b16 %v55
  %v175 = vunpack.c.l.b16 %v56
  %v176 = vunpack.c.l.b16 %v57
  %v177 = vunpack.c.l.b16 %v58
  %v178 = vunpack.c.l.b16 %v59
  %v179 = vpack.c.b16 %v160, %v159
  %v180 = vpack.c.b16 %v162, %v161
  %v181 = vpack.c.b16 %v164, %v163
  %v182 = vpack.c.b16 %v166, %v165
  %v183 = vpack.c.b16 %v168, %v167
  %v184 = vpack.c.b16 %v170, %v169
  %v185 = vpack.c.b16 %v172, %v171
  %v186 = vpack.c.b16 %v174, %v173
  %v187 = vpack.c.b16 %v176, %v175
  %v188 = vpack.c.b16 %v178, %v177
  %vm199 = vcmask 261120
  %v201 = vsel %vm199, %v116, 0
  %v204 = vsel %vm199, %v118, 0
  %v207 = vsel %vm199, %v120, 0
  %v210 = vsel %vm199, %v122, 0
  %v213 = vsel %vm199, %v124, 0
  %v216 = vsel %vm199, %v126, 0
  %v219 = vsel %vm199, %v128, 0
  %v222 = vsel %vm199, %v130, 0
  %224 = vmatprep.subr.bf16.mxu0 0
  %225 = vmatpush1.bf16.msra.mxu0 %v179
  %226 = vmatprep.subr.bf16.mxu0 0
  %227 = vmatpush1.bf16.msra.mxu0 %v180
  %228 = vmatprep.subr.bf16.mxu0 0
  %229 = vmatpush1.bf16.msra.mxu0 %v181
  %230 = vmatprep.subr.bf16.mxu0 0
  %231 = vmatpush1.bf16.msra.mxu0 %v182
  %232 = vmatprep.subr.bf16.mxu0 0
  %233 = vmatpush1.bf16.msra.mxu0 %v183
  %234 = vmatprep.subr.bf16.mxu0 0
  %235 = vmatpush1.bf16.msra.mxu0 %v184
  %236 = vmatprep.subr.bf16.mxu0 0
  %237 = vmatpush1.bf16.msra.mxu0 %v185
  %238 = vmatprep.subr.bf16.mxu0 0
  %239 = vmatpush1.bf16.msra.mxu0 %v186
  %240 = vmatprep.subr.bf16.mxu0 0
  %241 = vmatpush1.bf16.msra.mxu0 %v187
  %242 = vmatprep.subr.bf16.mxu0 0
  %243 = vmatpush1.bf16.msra.mxu0 %v188
  %244 = vmatprep.subr.bf16.mxu0 0
  %245 = vmatpush1.bf16.msra.mxu0 0
  %246 = vmatprep.subr.bf16.mxu0 0
  %247 = vmatpush1.bf16.msra.mxu0 0
  %248 = vmatprep.subr.bf16.mxu0 0
  %249 = vmatpush1.bf16.msra.mxu0 0
  %250 = vmatprep.subr.bf16.mxu0 0
  %251 = vmatpush1.bf16.msra.mxu0 0
  %252 = vmatprep.subr.bf16.mxu0 0
  %253 = vmatpush1.bf16.msra.mxu0 0
  %254 = vmatprep.subr.bf16.mxu0 0
  %255 = vmatpush1.bf16.msra.mxu0 0
  %256 = vmatprep.mubr.bf16.mxu0 %v201
  %257 = vmatmul.mubr.bf16.gmra.mrb[0].mxu0 %v115
  %v258 = vpop.f32.mrb[0].mxu0
  %v259 = vadd.f32 %v65, %v258
  %v260 = vpop.f32.mrb[0].mxu0
  %v261 = vpop.f32.mrb[0].mxu0
  %v262 = vadd.f32 %v65, %v261
  %v263 = vpop.f32.mrb[0].mxu0
  %264 = vmatprep.mubr.bf16.mxu0 %v204
  %265 = vmatmul.mubr.bf16.gmra.mrb[0].mxu0 %v117
  %v266 = vpop.f32.mrb[0].mxu0
  %v267 = vadd.f32 %v65, %v266
  %v268 = vpop.f32.mrb[0].mxu0
  %v269 = vpop.f32.mrb[0].mxu0
  %v270 = vadd.f32 %v65, %v269
  %v271 = vpop.f32.mrb[0].mxu0
  %272 = vmatprep.mubr.bf16.mxu0 %v207
  %273 = vmatmul.mubr.bf16.gmra.mrb[0].mxu0 %v119
  %v274 = vpop.f32.mrb[0].mxu0
  %v275 = vadd.f32 %v65, %v274
  %v276 = vpop.f32.mrb[0].mxu0
  %v277 = vpop.f32.mrb[0].mxu0
  %v278 = vadd.f32 %v65, %v277
  %v279 = vpop.f32.mrb[0].mxu0
  %280 = vmatprep.mubr.bf16.mxu0 %v210
  %281 = vmatmul.mubr.bf16.gmra.mrb[0].mxu0 %v121
  %v282 = vpop.f32.mrb[0].mxu0
  %v283 = vadd.f32 %v65, %v282
  %v284 = vpop.f32.mrb[0].mxu0
  %v285 = vpop.f32.mrb[0].mxu0
  %v286 = vadd.f32 %v65, %v285
  %v287 = vpop.f32.mrb[0].mxu0
  %288 = vmatprep.mubr.bf16.mxu0 %v213
  %289 = vmatmul.mubr.bf16.gmra.mrb[0].mxu0 %v123
  %v290 = vpop.f32.mrb[0].mxu0
  %v291 = vadd.f32 %v65, %v290
  %v292 = vpop.f32.mrb[0].mxu0
  %v293 = vpop.f32.mrb[0].mxu0
  %v294 = vadd.f32 %v65, %v293
  %v295 = vpop.f32.mrb[0].mxu0
  %296 = vmatprep.mubr.bf16.mxu0 %v216
  %297 = vmatmul.mubr.bf16.gmra.mrb[0].mxu0 %v125
  %v298 = vpop.f32.mrb[0].mxu0
  %v299 = vadd.f32 %v65, %v298
  %v300 = vpop.f32.mrb[0].mxu0
  %v301 = vpop.f32.mrb[0].mxu0
  %v302 = vadd.f32 %v65, %v301
  %v303 = vpop.f32.mrb[0].mxu0
  %304 = vmatprep.mubr.bf16.mxu0 %v219
  %305 = vmatmul.mubr.bf16.gmra.mrb[0].mxu0 %v127
  %v306 = vpop.f32.mrb[0].mxu0
  %v307 = vadd.f32 %v65, %v306
  %v308 = vpop.f32.mrb[0].mxu0
  %v309 = vpop.f32.mrb[0].mxu0
  %v310 = vadd.f32 %v65, %v309
  %v311 = vpop.f32.mrb[0].mxu0
  %312 = vmatprep.mubr.bf16.mxu0 %v222
  %313 = vmatmul.mubr.bf16.gmra.mrb[0].mxu0 %v129
  %v314 = vpop.f32.mrb[0].mxu0
  %v315 = vadd.f32 %v65, %v314
  %v316 = vpop.f32.mrb[0].mxu0
  %v317 = vpop.f32.mrb[0].mxu0
  %v318 = vadd.f32 %v65, %v317
  %v319 = vpop.f32.mrb[0].mxu0
  %320 = vdwg.mxu0
  %v321 = vld [vmem:[%s3] sm:$0x1]
  %v322 = vld [vmem:[%s4] sm:$0x1]
  %323 = vadd.xlane.f32.xlu0 %v259
  %v324 = vpop.xlane.xlu0 %323
  %325 = vadd.xlane.f32.xlu0 %v262
  %v326 = vpop.xlane.xlu0 %325
  %327 = vadd.xlane.f32.xlu0 %v267
  %v328 = vpop.xlane.xlu0 %327
  %329 = vadd.xlane.f32.xlu0 %v270
  %v330 = vpop.xlane.xlu0 %329
  %331 = vadd.xlane.f32.xlu0 %v275
  %v332 = vpop.xlane.xlu0 %331
  %333 = vadd.xlane.f32.xlu0 %v278
  %v334 = vpop.xlane.xlu0 %333
  %335 = vadd.xlane.f32.xlu0 %v283
  %v336 = vpop.xlane.xlu0 %335
  %337 = vadd.xlane.f32.xlu0 %v286
  %v338 = vpop.xlane.xlu0 %337
  %339 = vadd.xlane.f32.xlu0 %v291
  %v340 = vpop.xlane.xlu0 %339
  %341 = vadd.xlane.f32.xlu0 %v294
  %v342 = vpop.xlane.xlu0 %341
  %343 = vadd.xlane.f32.xlu0 %v299
  %v344 = vpop.xlane.xlu0 %343
  %345 = vadd.xlane.f32.xlu0 %v302
  %v346 = vpop.xlane.xlu0 %345
  %347 = vadd.xlane.f32.xlu0 %v307
  %v348 = vpop.xlane.xlu0 %347
  %349 = vadd.xlane.f32.xlu0 %v310
  %v350 = vpop.xlane.xlu0 %349
  %351 = vadd.xlane.f32.xlu0 %v315
  %v352 = vpop.xlane.xlu0 %351
  %353 = vadd.xlane.f32.xlu0 %v318
  %v354 = vpop.xlane.xlu0 %353
  %v355 = vrcp.pop 128.0
  %v356 = vmul.f32 %v324, %v355
  %v357 = vmul.f32 %v326, %v355
  %v358 = vmul.f32 %v328, %v355
  %v359 = vmul.f32 %v330, %v355
  %v360 = vmul.f32 %v332, %v355
  %v361 = vmul.f32 %v334, %v355
  %v362 = vmul.f32 %v336, %v355
  %v363 = vmul.f32 %v338, %v355
  %v364 = vmul.f32 %v340, %v355
  %v365 = vmul.f32 %v342, %v355
  %v366 = vmul.f32 %v344, %v355
  %v367 = vmul.f32 %v346, %v355
  %v368 = vmul.f32 %v348, %v355
  %v369 = vmul.f32 %v350, %v355
  %v370 = vmul.f32 %v352, %v355
  %v371 = vmul.f32 %v354, %v355
  %v372 = vsub.f32 %v259, %v356
  %v373 = vsub.f32 %v262, %v357
  %v374 = vsub.f32 %v267, %v358
  %v375 = vsub.f32 %v270, %v359
  %v376 = vsub.f32 %v275, %v360
  %v377 = vsub.f32 %v278, %v361
  %v378 = vsub.f32 %v283, %v362
  %v379 = vsub.f32 %v286, %v363
  %v380 = vsub.f32 %v291, %v364
  %v381 = vsub.f32 %v294, %v365
  %v382 = vsub.f32 %v299, %v366
  %v383 = vsub.f32 %v302, %v367
  %v384 = vsub.f32 %v307, %v368
  %v385 = vsub.f32 %v310, %v369
  %v386 = vsub.f32 %v315, %v370
  %v387 = vsub.f32 %v318, %v371
  %v388 = vmul.f32 %v372, %v372
  %v389 = vmul.f32 %v373, %v373
  %v390 = vmul.f32 %v374, %v374
  %v391 = vmul.f32 %v375, %v375
  %v392 = vmul.f32 %v376, %v376
  %v393 = vmul.f32 %v377, %v377
  %v394 = vmul.f32 %v378, %v378
  %v395 = vmul.f32 %v379, %v379
  %v396 = vmul.f32 %v380, %v380
  %v397 = vmul.f32 %v381, %v381
  %v398 = vmul.f32 %v382, %v382
  %v399 = vmul.f32 %v383, %v383
  %v400 = vmul.f32 %v384, %v384
  %v401 = vmul.f32 %v385, %v385
  %v402 = vmul.f32 %v386, %v386
  %v403 = vmul.f32 %v387, %v387
  %404 = vadd.xlane.f32.xlu0 %v388
  %v405 = vpop.xlane.xlu0 %404
  %406 = vadd.xlane.f32.xlu0 %v389
  %v407 = vpop.xlane.xlu0 %406
  %408 = vadd.xlane.f32.xlu0 %v390
  %v409 = vpop.xlane.xlu0 %408
  %410 = vadd.xlane.f32.xlu0 %v391
  %v411 = vpop.xlane.xlu0 %410
  %412 = vadd.xlane.f32.xlu0 %v392
  %v413 = vpop.xlane.xlu0 %412
  %414 = vadd.xlane.f32.xlu0 %v393
  %v415 = vpop.xlane.xlu0 %414
  %416 = vadd.xlane.f32.xlu0 %v394
  %v417 = vpop.xlane.xlu0 %416
  %418 = vadd.xlane.f32.xlu0 %v395
  %v419 = vpop.xlane.xlu0 %418
  %420 = vadd.xlane.f32.xlu0 %v396
  %v421 = vpop.xlane.xlu0 %420
  %422 = vadd.xlane.f32.xlu0 %v397
  %v423 = vpop.xlane.xlu0 %422
  %424 = vadd.xlane.f32.xlu0 %v398
  %v425 = vpop.xlane.xlu0 %424
  %426 = vadd.xlane.f32.xlu0 %v399
  %v427 = vpop.xlane.xlu0 %426
  %428 = vadd.xlane.f32.xlu0 %v400
  %v429 = vpop.xlane.xlu0 %428
  %430 = vadd.xlane.f32.xlu0 %v401
  %v431 = vpop.xlane.xlu0 %430
  %432 = vadd.xlane.f32.xlu0 %v402
  %v433 = vpop.xlane.xlu0 %432
  %434 = vadd.xlane.f32.xlu0 %v403
  %v435 = vpop.xlane.xlu0 %434
  %v436 = vmul.f32 %v405, %v355
  %v437 = vmul.f32 %v407, %v355
  %v438 = vmul.f32 %v409, %v355
  %v439 = vmul.f32 %v411, %v355
  %v440 = vmul.f32 %v413, %v355
  %v441 = vmul.f32 %v415, %v355
  %v442 = vmul.f32 %v417, %v355
  %v443 = vmul.f32 %v419, %v355
  %v444 = vmul.f32 %v421, %v355
  %v445 = vmul.f32 %v423, %v355
  %v446 = vmul.f32 %v425, %v355
  %v447 = vmul.f32 %v427, %v355
  %v448 = vmul.f32 %v429, %v355
  %v449 = vmul.f32 %v431, %v355
  %v450 = vmul.f32 %v433, %v355
  %v451 = vmul.f32 %v435, %v355
  %v452 = vadd.f32 %v436, 1e-05
  %v453 = vadd.f32 %v437, 1e-05
  %v454 = vadd.f32 %v438, 1e-05
  %v455 = vadd.f32 %v439, 1e-05
  %v456 = vadd.f32 %v440, 1e-05
  %v457 = vadd.f32 %v441, 1e-05
  %v458 = vadd.f32 %v442, 1e-05
  %v459 = vadd.f32 %v443, 1e-05
  %v460 = vadd.f32 %v444, 1e-05
  %v461 = vadd.f32 %v445, 1e-05
  %v462 = vadd.f32 %v446, 1e-05
  %v463 = vadd.f32 %v447, 1e-05
  %v464 = vadd.f32 %v448, 1e-05
  %v465 = vadd.f32 %v449, 1e-05
  %v466 = vadd.f32 %v450, 1e-05
  %v467 = vadd.f32 %v451, 1e-05
  %v468 = vrsqrt.pop %v452
  %v469 = vrsqrt.pop %v453
  %v470 = vrsqrt.pop %v454
  %v471 = vrsqrt.pop %v455
  %v472 = vrsqrt.pop %v456
  %v473 = vrsqrt.pop %v457
  %v474 = vrsqrt.pop %v458
  %v475 = vrsqrt.pop %v459
  %v476 = vrsqrt.pop %v460
  %v477 = vrsqrt.pop %v461
  %v478 = vrsqrt.pop %v462
  %v479 = vrsqrt.pop %v463
  %v480 = vrsqrt.pop %v464
  %v481 = vrsqrt.pop %v465
  %v482 = vrsqrt.pop %v466
  %v483 = vrsqrt.pop %v467
  %v484 = vmul.f32 %v372, %v468
  %v485 = vmul.f32 %v373, %v469
  %v486 = vmul.f32 %v374, %v470
  %v487 = vmul.f32 %v375, %v471
  %v488 = vmul.f32 %v376, %v472
  %v489 = vmul.f32 %v377, %v473
  %v490 = vmul.f32 %v378, %v474
  %v491 = vmul.f32 %v379, %v475
  %v492 = vmul.f32 %v380, %v476
  %v493 = vmul.f32 %v381, %v477
  %v494 = vmul.f32 %v382, %v478
  %v495 = vmul.f32 %v383, %v479
  %v496 = vmul.f32 %v384, %v480
  %v497 = vmul.f32 %v385, %v481
  %v498 = vmul.f32 %v386, %v482
  %v499 = vmul.f32 %v387, %v483
  %v501 = vlaneseq
  %v502 = vshrl.u32 %v501, 7
  %v503 = vsub.s32 0, %v502
  %v504 = vrot.slane %v321, %v503
  %v506 = vmul.f32 %v484, %v504
  %v507 = vmul.f32 %v485, %v504
  %v508 = vmul.f32 %v486, %v504
  %v509 = vmul.f32 %v487, %v504
  %v510 = vmul.f32 %v488, %v504
  %v511 = vmul.f32 %v489, %v504
  %v512 = vmul.f32 %v490, %v504
  %v513 = vmul.f32 %v491, %v504
  %v514 = vmul.f32 %v492, %v504
  %v515 = vmul.f32 %v493, %v504
  %v516 = vmul.f32 %v494, %v504
  %v517 = vmul.f32 %v495, %v504
  %v518 = vmul.f32 %v496, %v504
  %v519 = vmul.f32 %v497, %v504
  %v520 = vmul.f32 %v498, %v504
  %v521 = vmul.f32 %v499, %v504
  %v523 = vlaneseq
  %v524 = vshrl.u32 %v523, 7
  %v525 = vsub.s32 0, %v524
  %v526 = vrot.slane %v322, %v525
  %v528 = vadd.f32 %v506, %v526
  %v529 = vadd.f32 %v507, %v526
  %v530 = vadd.f32 %v508, %v526
  %v531 = vadd.f32 %v509, %v526
  %v532 = vadd.f32 %v510, %v526
  %v533 = vadd.f32 %v511, %v526
  %v534 = vadd.f32 %v512, %v526
  %v535 = vadd.f32 %v513, %v526
  %v536 = vadd.f32 %v514, %v526
  %v537 = vadd.f32 %v515, %v526
  %v538 = vadd.f32 %v516, %v526
  %v539 = vadd.f32 %v517, %v526
  %v540 = vadd.f32 %v518, %v526
  %v541 = vadd.f32 %v519, %v526
  %v542 = vadd.f32 %v520, %v526
  %v543 = vadd.f32 %v521, %v526
  %v544 = vld [vmem:[%s5] sm:$0x1]
  %v546 = vlaneseq
  %v547 = vshrl.u32 %v546, 7
  %v548 = vsub.s32 0, %v547
  %v549 = vrot.slane %v544, %v548
  %v551 = vadd.f32 %v528, %v549
  %v552 = vadd.f32 %v529, %v549
  %v553 = vadd.f32 %v530, %v549
  %v554 = vadd.f32 %v531, %v549
  %v555 = vadd.f32 %v532, %v549
  %v556 = vadd.f32 %v533, %v549
  %v557 = vadd.f32 %v534, %v549
  %v558 = vadd.f32 %v535, %v549
  %v559 = vadd.f32 %v536, %v549
  %v560 = vadd.f32 %v537, %v549
  %v561 = vadd.f32 %v538, %v549
  %v562 = vadd.f32 %v539, %v549
  %v563 = vadd.f32 %v540, %v549
  %v564 = vadd.f32 %v541, %v549
  %v565 = vadd.f32 %v542, %v549
  %v566 = vadd.f32 %v543, %v549
  %v567 = vpack.c.bf16 %v552, %v551
  %v568 = vpack.c.bf16 %v554, %v553
  %v569 = vpack.c.bf16 %v556, %v555
  %v570 = vpack.c.bf16 %v558, %v557
  %v571 = vpack.c.bf16 %v560, %v559
  %v572 = vpack.c.bf16 %v562, %v561
  %v573 = vpack.c.bf16 %v564, %v563
  %v574 = vpack.c.bf16 %v566, %v565
  %v583 = vunpack.c.l.b16 %v567
  %v584 = vunpack.c.h.b16 %v567
  %v585 = vunpack.c.l.b16 %v568
  %v586 = vunpack.c.h.b16 %v568
  %v587 = vunpack.c.l.b16 %v569
  %v588 = vunpack.c.h.b16 %v569
  %v589 = vunpack.c.l.b16 %v570
  %v590 = vunpack.c.h.b16 %v570
  %v591 = vunpack.c.l.b16 %v571
  %v592 = vunpack.c.h.b16 %v571
  %v593 = vunpack.c.l.b16 %v572
  %v594 = vunpack.c.h.b16 %v572
  %v595 = vunpack.c.l.b16 %v573
  %v596 = vunpack.c.h.b16 %v573
  %v597 = vunpack.c.l.b16 %v574
  %v598 = vunpack.c.h.b16 %v574
  %v599 = vpack.c.b16 %v583, %v583
  %v600 = vpack.c.b16 %v584, %v584
  %v601 = vpack.c.b16 %v585, %v585
  %v602 = vpack.c.b16 %v586, %v586
  %v603 = vpack.c.b16 %v587, %v587
  %v604 = vpack.c.b16 %v588, %v588
  %v605 = vpack.c.b16 %v589, %v589
  %v606 = vpack.c.b16 %v590, %v590
  %v607 = vpack.c.b16 %v591, %v591
  %v608 = vpack.c.b16 %v592, %v592
  %v609 = vpack.c.b16 %v593, %v593
  %v610 = vpack.c.b16 %v594, %v594
  %v611 = vpack.c.b16 %v595, %v595
  %v612 = vpack.c.b16 %v596, %v596
  %v613 = vpack.c.b16 %v597, %v597
  %v614 = vpack.c.b16 %v598, %v598
  %631 = vst [vmem:[%s6] sm:$0xf] %v599
  %632 = vst [vmem:[%s6 + $0x4] sm:$0xf] %v600
  %633 = vst [vmem:[%s6 + $0x8] sm:$0xf] %v601
  %634 = vst [vmem:[%s6 + $0xc] sm:$0xf] %v602
  %635 = vst [vmem:[%s6 + $0x10] sm:$0xf] %v603
  %636 = vst [vmem:[%s6 + $0x14] sm:$0xf] %v604
  %637 = vst [vmem:[%s6 + $0x18] sm:$0xf] %v605
  %638 = vst [vmem:[%s6 + $0x1c] sm:$0xf] %v606
  %639 = vst [vmem:[%s6 + $0x20] sm:$0xf] %v607
  %640 = vst [vmem:[%s6 + $0x24] sm:$0xf] %v608
  %641 = vst [vmem:[%s6 + $0x28] sm:$0xf] %v609
  %642 = vst [vmem:[%s6 + $0x2c] sm:$0xf] %v610
  %643 = vst [vmem:[%s6 + $0x30] sm:$0xf] %v611
  %644 = vst [vmem:[%s6 + $0x34] sm:$0xf] %v612
  %645 = vst [vmem:[%s6 + $0x38] sm:$0xf] %v613
  %646 = vst [vmem:[%s6 + $0x3c] sm:$0xf] %v614
  // Predicated region
  $region26: #{mygo_forward.8} parent=0 // pred_check
    _
  $region27: #{mygo_forward.8} parent=0 // pred_check_branch
    %648 = sbr.rel (0) target = $region29
  $region28: #{mygo_forward.8} parent=0 // pred_region
    _
  $region29: #{mygo_forward.8} parent=0 // pred_fallthru
    _
  // Predicated region
  $region30: #{mygo_forward.8} parent=0 // pred_check
    _
  $region31: #{mygo_forward.8} parent=0 // pred_check_branch
    %650 = sbr.rel (0) target = $region33
  $region32: #{mygo_forward.8} parent=0 // pred_region
    _
  $region33: #{mygo_forward.8} parent=0 // pred_fallthru
    _

// kernel: mygo_forward.11
$region0: #{mygo_forward.11}
  #allocation0 [shape = 'u32[]', space=smem, size = 0x4, offset = 0x4, fixed_abs, tag = 'smem constant byte address 0x4 - core index']
  #allocation1 [shape = 'u32[144,128]{1,0:T(1,128)}', space=vmem, size = 0x12000, scoped, tag = 'internal scratch']
  %s0 = inlined_call_operand.vmem [shape: f32[8,128], index: 0, kind: input, shape index: {}]
  %s1 = inlined_call_operand.vmem [shape: f32[1,128], index: 1, kind: input, shape index: {}]
  %s2 = inlined_call_operand.vmem [shape: f32[1,128], index: 2, kind: input, shape index: {}]
  %s3 = inlined_call_operand.vmem [shape: f32[1,128], index: 3, kind: input, shape index: {}]
  %s4 = inlined_call_operand.hbm [shape: f32[8,128], index: 4, kind: output, shape index: {}]
  %s5 = sld [smem:[#allocation0]]
  $region26: #{mygo_forward.11} parent=0
    _
  %s7 = ssub.s32 1, %s5
  %s8 = scalar_select 0, %s7, %s5
  $region1: #{mygo_forward.11} parent=0
    #allocation2 [shape = 'u8[4096]{0}', space=vmem, size = 0x1000, scoped, tag = 'output window, operand 0, single buffered']
    #allocation3 [shape = 's32[1]{0}', space=sflag, size = 0x4, scoped, tag = 'scoped memory for mygo_forward.11']
    %9 = vsyncpa [#allocation3], 0
    // Predicated region
    $region2: #{mygo_forward.11} parent=1 // pred_check
      _
    $region3: #{mygo_forward.11} parent=1 // pred_check_branch
      %11 = sbr.rel (0) target = $region5
    $region4: #{mygo_forward.11} parent=1 // pred_region
      _
    $region5: #{mygo_forward.11} parent=1 // pred_fallthru
      _
    // Predicated region
    $region6: #{mygo_forward.11} parent=1 // pred_check
      _
    $region7: #{mygo_forward.11} parent=1 // pred_check_branch
      %13 = sbr.rel (0) target = $region9
    $region8: #{mygo_forward.11} parent=1 // pred_region
      _
    $region9: #{mygo_forward.11} parent=1 // pred_fallthru
      _
    // Predicated region
    $region10: #{mygo_forward.11} parent=1 // pred_check
      _
    $region11: #{mygo_forward.11} parent=1 // pred_check_branch
      %15 = sbr.rel (0) target = $region13
    $region12: #{mygo_forward.11} parent=1 // pred_region
      _
    $region13: #{mygo_forward.11} parent=1 // pred_fallthru
      _
    // Predicated region
    $region14: #{mygo_forward.11} parent=1 // pred_check
      _
    $region15: #{mygo_forward.11} parent=1 // pred_check_branch
      %17 = sbr.rel (0) target = $region17
    $region16: #{mygo_forward.11} parent=1 // pred_region
      _
    $region17: #{mygo_forward.11} parent=1 // pred_fallthru
      _
    %v18 = vld [vmem:[%s0] sm:$0xff]
    %v19 = vld [vmem:[%s1] sm:$0x1]
    %v20 = vld [vmem:[%s2] sm:$0x1]
    %21 = vadd.xlane.f32.xlu0 %v18
    %v22 = vpop.xlane.xlu0 %21
    %v23 = vrcp.pop 128.0
    %v24 = vmul.f32 %v22, %v23
    %v25 = vsub.f32 %v18, %v24
    %v26 = vmul.f32 %v25, %v25
    %27 = vadd.xlane.f32.xlu0 %v26
    %v28 = vpop.xlane.xlu0 %27
    %v29 = vmul.f32 %v28, %v23
    %v30 = vadd.f32 %v29, 1e-05
    %v31 = vrsqrt.pop %v30
    %v32 = vmul.f32 %v25, %v31
    %v34 = vlaneseq
    %v35 = vshrl.u32 %v34, 7
    %v36 = vsub.s32 0, %v35
    %v37 = vrot.slane %v19, %v36
    %v39 = vmul.f32 %v32, %v37
    %v41 = vlaneseq
    %v42 = vshrl.u32 %v41, 7
    %v43 = vsub.s32 0, %v42
    %v44 = vrot.slane %v20, %v43
    %v46 = vadd.f32 %v39, %v44
    %v47 = vld [vmem:[%s3] sm:$0x1]
    %v49 = vlaneseq
    %v50 = vshrl.u32 %v49, 7
    %v51 = vsub.s32 0, %v50
    %v52 = vrot.slane %v47, %v51
    %v54 = vadd.f32 %v46, %v52
    %55 = vst [vmem:[#allocation2] sm:$0xff] %v54
    // Predicated region
    $region18: #{mygo_forward.11} parent=1 // pred_check
      _
    $region19: #{mygo_forward.11} parent=1 // pred_check_branch
      %57 = sbr.rel (0) target = $region21
    $region20: #{mygo_forward.11} parent=1 // pred_region
      %s59 = ssub.s32 128, 128
      %60 = vsyncadd [#allocation3], %s59
      %s62 = sshll.u32 [#allocation2], 4
      %s63 = int_to_ptr.vmem [resolvable:$true] %s62
      %65 = dma.vmem_to_hbm [thread:$0]  %s63, 128, %s4, [#allocation3]
    $region21: #{mygo_forward.11} parent=1 // pred_fallthru
      _
    // Predicated region
    $region22: #{mygo_forward.11} parent=1 // pred_check
      _
    $region23: #{mygo_forward.11} parent=1 // pred_check_branch
      %67 = sbr.rel (0) target = $region25
    $region24: #{mygo_forward.11} parent=1 // pred_region
      %68 = dma.done [#allocation3], 128
    $region25: #{mygo_forward.11} parent=1 // pred_fallthru
      _
    %69 = vsyncpa [#allocation3], 1

// kernel: mygo_forward.9
$region0: #{mygo_forward.9}
  #allocation0 [shape = 'u32[]', space=smem, size = 0x4, offset = 0x4, fixed_abs, tag = 'smem constant byte address 0x4 - core index']
  #allocation1 [shape = 'u32[144,128]{1,0:T(1,128)}', space=vmem, size = 0x12000, scoped, tag = 'internal scratch']
  %s0 = inlined_call_operand.vmem [shape: bf16[16,16,128], index: 0, kind: input, shape index: {}]
  %s1 = inlined_call_operand.vmem [shape: f32[16,1,16], index: 1, kind: input, shape index: {}]
  %s2 = inlined_call_operand.vmem [shape: bf16[128,384], index: 2, kind: input, shape index: {}]
  %s3 = inlined_call_operand.vmem [shape: f32[1,384], index: 3, kind: input, shape index: {}]
  %s4 = inlined_call_operand.vmem [shape: bf16[128,128], index: 4, kind: input, shape index: {}]
  %s5 = inlined_call_operand.vmem [shape: f32[1,128], index: 5, kind: input, shape index: {}]
  %s6 = inlined_call_operand.vmem [shape: f32[1,128], index: 6, kind: input, shape index: {}]
  %s7 = inlined_call_operand.vmem [shape: f32[1,128], index: 7, kind: input, shape index: {}]
  %s8 = inlined_call_operand.vmem [shape: bf16[128,256], index: 8, kind: input, shape index: {}]
  %s9 = inlined_call_operand.vmem [shape: f32[1,256], index: 9, kind: input, shape index: {}]
  %s10 = inlined_call_operand.vmem [shape: bf16[256,128], index: 10, kind: input, shape index: {}]
  %s11 = inlined_call_operand.vmem [shape: f32[1,128], index: 11, kind: input, shape index: {}]
  %s12 = inlined_call_operand.vmem [shape: f32[1,128], index: 12, kind: input, shape index: {}]
  %s13 = inlined_call_operand.vmem [shape: f32[1,128], index: 13, kind: input, shape index: {}]
  %s14 = inlined_call_operand.vmem [shape: bf16[16,16,128], index: 14, kind: output, shape index: {}]
  %s15 = sld [smem:[#allocation0]]
  $region89: #{mygo_forward.9} parent=0
    _
  %s17 = ssub.s32 1, %s15
  %s18 = scalar_select 0, %s17, %s15
  loop: start=0, step=1, limit=4
  $region2: #{mygo_forward.9} parent=0 // loop_pre_header
    _
  $region3: #{mygo_forward.9} parent=0 // loop_header
    %s20 = sphi 0, %s24
    %p21 = scmp.ge.s32.totalorder %s20, 4
    %s30 = sphi 0, %s32
    %s33 = sphi 0, %s30
    %s34 = sphi 0, %s33
    %s50 = sphi 0, %s34
    %s56 = sphi 0, %s58
    %s59 = sphi 0, %s56
    %s60 = sphi 0, %s59
    %s76 = sphi 0, %s60
    %s80 = sphi 0, %s80
    %s82 = sphi 0, %s80
    %s83 = sphi 0, %s82
    %s97 = sphi 0, %s83
    %s101 = sphi 0, %s101
    %s103 = sphi 0, %s101
    %s104 = sphi 0, %s103
    %s118 = sphi 0, %s104
    %s122 = sphi 0, %s122
    %s124 = sphi 0, %s122
    %s125 = sphi 0, %s124
    %s139 = sphi 0, %s125
    %s143 = sphi 0, %s143
    %s145 = sphi 0, %s143
    %s146 = sphi 0, %s145
    %s160 = sphi 0, %s146
    %s164 = sphi 0, %s164
    %s166 = sphi 0, %s164
    %s167 = sphi 0, %s166
    %s181 = sphi 0, %s167
    %s185 = sphi 0, %s185
    %s187 = sphi 0, %s185
    %s188 = sphi 0, %s187
    %s202 = sphi 0, %s188
    %s206 = sphi 0, %s206
    %s208 = sphi 0, %s206
    %s209 = sphi 0, %s208
    %s223 = sphi 0, %s209
    %s227 = sphi 0, %s227
    %s229 = sphi 0, %s227
    %s230 = sphi 0, %s229
    %s244 = sphi 0, %s230
    %s248 = sphi 0, %s248
    %s250 = sphi 0, %s248
    %s251 = sphi 0, %s250
    %s265 = sphi 0, %s251
    %s269 = sphi 0, %s269
    %s271 = sphi 0, %s269
    %s272 = sphi 0, %s271
    %s286 = sphi 0, %s272
    %s290 = sphi 0, %s290
    %s292 = sphi 0, %s290
    %s293 = sphi 0, %s292
    %s307 = sphi 0, %s293
    %s311 = sphi 0, %s311
    %s313 = sphi 0, %s311
    %s314 = sphi 0, %s313
    %s328 = sphi 0, %s314
    %s334 = sphi 0, %s336
    %s337 = sphi 0, %s334
    %s338 = sphi 0, %s337
    %s354 = sphi 0, %s338
  $region4: #{mygo_forward.9} parent=0 // loop_header_branch
    %23 = sbr.rel (%p21) target = $region8
  $region5: #{mygo_forward.9} parent=0 // loop_body
    %s25 = ssub.s32 %s20, 1
    %s26 = ssub.s32 %s20, 2
    %s27 = sadd.s32 %s20, 1
    %s28 = ssub.s32 %s20, %s27
    %p29 = scmp.eq.s32.totalorder %s28, 0
    %s31 = sadd.s32 %s30, 1
    %s32 = scalar_select %p29, %s30, %s31
    %p35 = pneg %p29
    %p36 = scmp.eq.s32.totalorder %s20, 1
    %p37 = por %p35, %p36
    %p38 = scmp.ne.s32.totalorder %s30, %s33
    %p39 = scmp.eq.s32.totalorder %s20, 0
    %p40 = por %p38, %p39
    %p41 = scmp.ne.s32.totalorder %s30, %s33
    %p42 = scmp.eq.s32.totalorder %s25, 1
    %p43 = por %p41, %p42
    %p44 = scmp.ne.s32.totalorder %s33, %s34
    %p45 = scmp.eq.s32.totalorder %s25, 0
    %p46 = por %p44, %p45
    %p47 = scmp.ne.s32.totalorder %s33, %s34
    %p48 = scmp.eq.s32.totalorder %s26, 1
    %p49 = por %p47, %p48
    %p51 = scmp.ne.s32.totalorder %s34, %s50
    %p52 = scmp.eq.s32.totalorder %s26, 0
    %p53 = por %p51, %p52
    %s54 = ssub.s32 %s20, %s27
    %p55 = scmp.eq.s32.totalorder %s54, 0
    %s57 = sadd.s32 %s56, 1
    %s58 = scalar_select %p55, %s56, %s57
    %p61 = pneg %p55
    %p62 = scmp.eq.s32.totalorder %s20, 1
    %p63 = por %p61, %p62
    %p64 = scmp.ne.s32.totalorder %s56, %s59
    %p65 = scmp.eq.s32.totalorder %s20, 0
    %p66 = por %p64, %p65
    %p67 = scmp.ne.s32.totalorder %s56, %s59
    %p68 = scmp.eq.s32.totalorder %s25, 1
    %p69 = por %p67, %p68
    %p70 = scmp.ne.s32.totalorder %s59, %s60
    %p71 = scmp.eq.s32.totalorder %s25, 0
    %p72 = por %p70, %p71
    %p73 = scmp.ne.s32.totalorder %s59, %s60
    %p74 = scmp.eq.s32.totalorder %s26, 1
    %p75 = por %p73, %p74
    %p77 = scmp.ne.s32.totalorder %s60, %s76
    %p78 = scmp.eq.s32.totalorder %s26, 0
    %p79 = por %p77, %p78
    %s81 = sadd.s32 %s80, 1
    %p84 = scmp.eq.s32.totalorder %s20, 1
    %p85 = scmp.ne.s32.totalorder %s80, %s82
    %p86 = scmp.eq.s32.totalorder %s20, 0
    %p87 = por %p85, %p86
    %p88 = scmp.ne.s32.totalorder %s80, %s82
    %p89 = scmp.eq.s32.totalorder %s25, 1
    %p90 = por %p88, %p89
    %p91 = scmp.ne.s32.totalorder %s82, %s83
    %p92 = scmp.eq.s32.totalorder %s25, 0
    %p93 = por %p91, %p92
    %p94 = scmp.ne.s32.totalorder %s82, %s83
    %p95 = scmp.eq.s32.totalorder %s26, 1
    %p96 = por %p94, %p95
    %p98 = scmp.ne.s32.totalorder %s83, %s97
    %p99 = scmp.eq.s32.totalorder %s26, 0
    %p100 = por %p98, %p99
    %s102 = sadd.s32 %s101, 1
    %p105 = scmp.eq.s32.totalorder %s20, 1
    %p106 = scmp.ne.s32.totalorder %s101, %s103
    %p107 = scmp.eq.s32.totalorder %s20, 0
    %p108 = por %p106, %p107
    %p109 = scmp.ne.s32.totalorder %s101, %s103
    %p110 = scmp.eq.s32.totalorder %s25, 1
    %p111 = por %p109, %p110
    %p112 = scmp.ne.s32.totalorder %s103, %s104
    %p113 = scmp.eq.s32.totalorder %s25, 0
    %p114 = por %p112, %p113
    %p115 = scmp.ne.s32.totalorder %s103, %s104
    %p116 = scmp.eq.s32.totalorder %s26, 1
    %p117 = por %p115, %p116
    %p119 = scmp.ne.s32.totalorder %s104, %s118
    %p120 = scmp.eq.s32.totalorder %s26, 0
    %p121 = por %p119, %p120
    %s123 = sadd.s32 %s122, 1
    %p126 = scmp.eq.s32.totalorder %s20, 1
    %p127 = scmp.ne.s32.totalorder %s122, %s124
    %p128 = scmp.eq.s32.totalorder %s20, 0
    %p129 = por %p127, %p128
    %p130 = scmp.ne.s32.totalorder %s122, %s124
    %p131 = scmp.eq.s32.totalorder %s25, 1
    %p132 = por %p130, %p131
    %p133 = scmp.ne.s32.totalorder %s124, %s125
    %p134 = scmp.eq.s32.totalorder %s25, 0
    %p135 = por %p133, %p134
    %p136 = scmp.ne.s32.totalorder %s124, %s125
    %p137 = scmp.eq.s32.totalorder %s26, 1
    %p138 = por %p136, %p137
    %p140 = scmp.ne.s32.totalorder %s125, %s139
    %p141 = scmp.eq.s32.totalorder %s26, 0
    %p142 = por %p140, %p141
    %s144 = sadd.s32 %s143, 1
    %p147 = scmp.eq.s32.totalorder %s20, 1
    %p148 = scmp.ne.s32.totalorder %s143, %s145
    %p149 = scmp.eq.s32.totalorder %s20, 0
    %p150 = por %p148, %p149
    %p151 = scmp.ne.s32.totalorder %s143, %s145
    %p152 = scmp.eq.s32.totalorder %s25, 1
    %p153 = por %p151, %p152
    %p154 = scmp.ne.s32.totalorder %s145, %s146
    %p155 = scmp.eq.s32.totalorder %s25, 0
    %p156 = por %p154, %p155
    %p157 = scmp.ne.s32.totalorder %s145, %s146
    %p158 = scmp.eq.s32.totalorder %s26, 1
    %p159 = por %p157, %p158
    %p161 = scmp.ne.s32.totalorder %s146, %s160
    %p162 = scmp.eq.s32.totalorder %s26, 0
    %p163 = por %p161, %p162
    %s165 = sadd.s32 %s164, 1
    %p168 = scmp.eq.s32.totalorder %s20, 1
    %p169 = scmp.ne.s32.totalorder %s164, %s166
    %p170 = scmp.eq.s32.totalorder %s20, 0
    %p171 = por %p169, %p170
    %p172 = scmp.ne.s32.totalorder %s164, %s166
    %p173 = scmp.eq.s32.totalorder %s25, 1
    %p174 = por %p172, %p173
    %p175 = scmp.ne.s32.totalorder %s166, %s167
    %p176 = scmp.eq.s32.totalorder %s25, 0
    %p177 = por %p175, %p176
    %p178 = scmp.ne.s32.totalorder %s166, %s167
    %p179 = scmp.eq.s32.totalorder %s26, 1
    %p180 = por %p178, %p179
    %p182 = scmp.ne.s32.totalorder %s167, %s181
    %p183 = scmp.eq.s32.totalorder %s26, 0
    %p184 = por %p182, %p183
    %s186 = sadd.s32 %s185, 1
    %p189 = scmp.eq.s32.totalorder %s20, 1
    %p190 = scmp.ne.s32.totalorder %s185, %s187
    %p191 = scmp.eq.s32.totalorder %s20, 0
    %p192 = por %p190, %p191
    %p193 = scmp.ne.s32.totalorder %s185, %s187
    %p194 = scmp.eq.s32.totalorder %s25, 1
    %p195 = por %p193, %p194
    %p196 = scmp.ne.s32.totalorder %s187, %s188
    %p197 = scmp.eq.s32.totalorder %s25, 0
    %p198 = por %p196, %p197
    %p199 = scmp.ne.s32.totalorder %s187, %s188
    %p200 = scmp.eq.s32.totalorder %s26, 1
    %p201 = por %p199, %p200
    %p203 = scmp.ne.s32.totalorder %s188, %s202
    %p204 = scmp.eq.s32.totalorder %s26, 0
    %p205 = por %p203, %p204
    %s207 = sadd.s32 %s206, 1
    %p210 = scmp.eq.s32.totalorder %s20, 1
    %p211 = scmp.ne.s32.totalorder %s206, %s208
    %p212 = scmp.eq.s32.totalorder %s20, 0
    %p213 = por %p211, %p212
    %p214 = scmp.ne.s32.totalorder %s206, %s208
    %p215 = scmp.eq.s32.totalorder %s25, 1
    %p216 = por %p214, %p215
    %p217 = scmp.ne.s32.totalorder %s208, %s209
    %p218 = scmp.eq.s32.totalorder %s25, 0
    %p219 = por %p217, %p218
    %p220 = scmp.ne.s32.totalorder %s208, %s209
    %p221 = scmp.eq.s32.totalorder %s26, 1
    %p222 = por %p220, %p221
    %p224 = scmp.ne.s32.totalorder %s209, %s223
    %p225 = scmp.eq.s32.totalorder %s26, 0
    %p226 = por %p224, %p225
    %s228 = sadd.s32 %s227, 1
    %p231 = scmp.eq.s32.totalorder %s20, 1
    %p232 = scmp.ne.s32.totalorder %s227, %s229
    %p233 = scmp.eq.s32.totalorder %s20, 0
    %p234 = por %p232, %p233
    %p235 = scmp.ne.s32.totalorder %s227, %s229
    %p236 = scmp.eq.s32.totalorder %s25, 1
    %p237 = por %p235, %p236
    %p238 = scmp.ne.s32.totalorder %s229, %s230
    %p239 = scmp.eq.s32.totalorder %s25, 0
    %p240 = por %p238, %p239
    %p241 = scmp.ne.s32.totalorder %s229, %s230
    %p242 = scmp.eq.s32.totalorder %s26, 1
    %p243 = por %p241, %p242
    %p245 = scmp.ne.s32.totalorder %s230, %s244
    %p246 = scmp.eq.s32.totalorder %s26, 0
    %p247 = por %p245, %p246
    %s249 = sadd.s32 %s248, 1
    %p252 = scmp.eq.s32.totalorder %s20, 1
    %p253 = scmp.ne.s32.totalorder %s248, %s250
    %p254 = scmp.eq.s32.totalorder %s20, 0
    %p255 = por %p253, %p254
    %p256 = scmp.ne.s32.totalorder %s248, %s250
    %p257 = scmp.eq.s32.totalorder %s25, 1
    %p258 = por %p256, %p257
    %p259 = scmp.ne.s32.totalorder %s250, %s251
    %p260 = scmp.eq.s32.totalorder %s25, 0
    %p261 = por %p259, %p260
    %p262 = scmp.ne.s32.totalorder %s250, %s251
    %p263 = scmp.eq.s32.totalorder %s26, 1
    %p264 = por %p262, %p263
    %p266 = scmp.ne.s32.totalorder %s251, %s265
    %p267 = scmp.eq.s32.totalorder %s26, 0
    %p268 = por %p266, %p267
    %s270 = sadd.s32 %s269, 1
    %p273 = scmp.eq.s32.totalorder %s20, 1
    %p274 = scmp.ne.s32.totalorder %s269, %s271
    %p275 = scmp.eq.s32.totalorder %s20, 0
    %p276 = por %p274, %p275
    %p277 = scmp.ne.s32.totalorder %s269, %s271
    %p278 = scmp.eq.s32.totalorder %s25, 1
    %p279 = por %p277, %p278
    %p280 = scmp.ne.s32.totalorder %s271, %s272
    %p281 = scmp.eq.s32.totalorder %s25, 0
    %p282 = por %p280, %p281
    %p283 = scmp.ne.s32.totalorder %s271, %s272
    %p284 = scmp.eq.s32.totalorder %s26, 1
    %p285 = por %p283, %p284
    %p287 = scmp.ne.s32.totalorder %s272, %s286
    %p288 = scmp.eq.s32.totalorder %s26, 0
    %p289 = por %p287, %p288
    %s291 = sadd.s32 %s290, 1
    %p294 = scmp.eq.s32.totalorder %s20, 1
    %p295 = scmp.ne.s32.totalorder %s290, %s292
    %p296 = scmp.eq.s32.totalorder %s20, 0
    %p297 = por %p295, %p296
    %p298 = scmp.ne.s32.totalorder %s290, %s292
    %p299 = scmp.eq.s32.totalorder %s25, 1
    %p300 = por %p298, %p299
    %p301 = scmp.ne.s32.totalorder %s292, %s293
    %p302 = scmp.eq.s32.totalorder %s25, 0
    %p303 = por %p301, %p302
    %p304 = scmp.ne.s32.totalorder %s292, %s293
    %p305 = scmp.eq.s32.totalorder %s26, 1
    %p306 = por %p304, %p305
    %p308 = scmp.ne.s32.totalorder %s293, %s307
    %p309 = scmp.eq.s32.totalorder %s26, 0
    %p310 = por %p308, %p309
    %s312 = sadd.s32 %s311, 1
    %p315 = scmp.eq.s32.totalorder %s20, 1
    %p316 = scmp.ne.s32.totalorder %s311, %s313
    %p317 = scmp.eq.s32.totalorder %s20, 0
    %p318 = por %p316, %p317
    %p319 = scmp.ne.s32.totalorder %s311, %s313
    %p320 = scmp.eq.s32.totalorder %s25, 1
    %p321 = por %p319, %p320
    %p322 = scmp.ne.s32.totalorder %s313, %s314
    %p323 = scmp.eq.s32.totalorder %s25, 0
    %p324 = por %p322, %p323
    %p325 = scmp.ne.s32.totalorder %s313, %s314
    %p326 = scmp.eq.s32.totalorder %s26, 1
    %p327 = por %p325, %p326
    %p329 = scmp.ne.s32.totalorder %s314, %s328
    %p330 = scmp.eq.s32.totalorder %s26, 0
    %p331 = por %p329, %p330
    %s332 = ssub.s32 %s20, %s27
    %p333 = scmp.eq.s32.totalorder %s332, 0
    %s335 = sadd.s32 %s334, 1
    %s336 = scalar_select %p333, %s334, %s335
    %p339 = pneg %p333
    %p340 = scmp.eq.s32.totalorder %s20, 1
    %p341 = por %p339, %p340
    %p342 = scmp.ne.s32.totalorder %s334, %s337
    %p343 = scmp.eq.s32.totalorder %s20, 0
    %p344 = por %p342, %p343
    %p345 = scmp.ne.s32.totalorder %s334, %s337
    %p346 = scmp.eq.s32.totalorder %s25, 1
    %p347 = por %p345, %p346
    %p348 = scmp.ne.s32.totalorder %s337, %s338
    %p349 = scmp.eq.s32.totalorder %s25, 0
    %p350 = por %p348, %p349
    %p351 = scmp.ne.s32.totalorder %s337, %s338
    %p352 = scmp.eq.s32.totalorder %s26, 1
    %p353 = por %p351, %p352
    %p355 = scmp.ne.s32.totalorder %s338, %s354
    %p356 = scmp.eq.s32.totalorder %s26, 0
    %p357 = por %p355, %p356
    %p358 = scmp.le.s32.totalorder 1, %s20
    %p359 = scmp.lt.s32.totalorder %s20, 3
    %p360 = pnand %p358, %p359
    %p361 = pneg %p360
    // Predicated region
    $region9: #{mygo_forward.9} parent=5 // pred_check
      _
    $region10: #{mygo_forward.9} parent=5 // pred_check_branch
      %363 = sbr.rel (%p360) target = $region12
    $region11: #{mygo_forward.9} parent=5 // pred_region
      %s364 = ssub.s32 %s20, 1
      // Predicated region
      $region13: #{mygo_forward.9} parent=11 // pred_check
        %p365 = pneg %p93
      $region14: #{mygo_forward.9} parent=11 // pred_check_branch
        %367 = sbr.rel (%p365) target = $region16
      $region15: #{mygo_forward.9} parent=11 // pred_region
        _
      $region16: #{mygo_forward.9} parent=11 // pred_fallthru
        _
      // Predicated region
      $region17: #{mygo_forward.9} parent=11 // pred_check
        %p368 = pneg %p114
      $region18: #{mygo_forward.9} parent=11 // pred_check_branch
        %370 = sbr.rel (%p368) target = $region20
      $region19: #{mygo_forward.9} parent=11 // pred_region
        _
      $region20: #{mygo_forward.9} parent=11 // pred_fallthru
        _
      // Predicated region
      $region21: #{mygo_forward.9} parent=11 // pred_check
        %p371 = pneg %p135
      $region22: #{mygo_forward.9} parent=11 // pred_check_branch
        %373 = sbr.rel (%p371) target = $region24
      $region23: #{mygo_forward.9} parent=11 // pred_region
        _
      $region24: #{mygo_forward.9} parent=11 // pred_fallthru
        _
      // Predicated region
      $region25: #{mygo_forward.9} parent=11 // pred_check
        %p374 = pneg %p156
      $region26: #{mygo_forward.9} parent=11 // pred_check_branch
        %376 = sbr.rel (%p374) target = $region28
      $region27: #{mygo_forward.9} parent=11 // pred_region
        _
      $region28: #{mygo_forward.9} parent=11 // pred_fallthru
        _
      // Predicated region
      $region29: #{mygo_forward.9} parent=11 // pred_check
        %p377 = pneg %p177
      $region30: #{mygo_forward.9} parent=11 // pred_check_branch
        %379 = sbr.rel (%p377) target = $region32
      $region31: #{mygo_forward.9} parent=11 // pred_region
        _
      $region32: #{mygo_forward.9} parent=11 // pred_fallthru
        _
      // Predicated region
      $region33: #{mygo_forward.9} parent=11 // pred_check
        %p380 = pneg %p198
      $region34: #{mygo_forward.9} parent=11 // pred_check_branch
        %382 = sbr.rel (%p380) target = $region36
      $region35: #{mygo_forward.9} parent=11 // pred_region
        _
      $region36: #{mygo_forward.9} parent=11 // pred_fallthru
        _
      // Predicated region
      $region37: #{mygo_forward.9} parent=11 // pred_check
        %p383 = pneg %p219
      $region38: #{mygo_forward.9} parent=11 // pred_check_branch
        %385 = sbr.rel (%p383) target = $region40
      $region39: #{mygo_forward.9} parent=11 // pred_region
        _
      $region40: #{mygo_forward.9} parent=11 // pred_fallthru
        _
      // Predicated region
      $region41: #{mygo_forward.9} parent=11 // pred_check
        %p386 = pneg %p240
      $region42: #{mygo_forward.9} parent=11 // pred_check_branch
        %388 = sbr.rel (%p386) target = $region44
      $region43: #{mygo_forward.9} parent=11 // pred_region
        _
      $region44: #{mygo_forward.9} parent=11 // pred_fallthru
        _
      // Predicated region
      $region45: #{mygo_forward.9} parent=11 // pred_check
        %p389 = pneg %p261
      $region46: #{mygo_forward.9} parent=11 // pred_check_branch
        %391 = sbr.rel (%p389) target = $region48
      $region47: #{mygo_forward.9} parent=11 // pred_region
        _
      $region48: #{mygo_forward.9} parent=11 // pred_fallthru
        _
      // Predicated region
      $region49: #{mygo_forward.9} parent=11 // pred_check
        %p392 = pneg %p282
      $region50: #{mygo_forward.9} parent=11 // pred_check_branch
        %394 = sbr.rel (%p392) target = $region52
      $region51: #{mygo_forward.9} parent=11 // pred_region
        _
      $region52: #{mygo_forward.9} parent=11 // pred_fallthru
        _
      // Predicated region
      $region53: #{mygo_forward.9} parent=11 // pred_check
        %p395 = pneg %p303
      $region54: #{mygo_forward.9} parent=11 // pred_check_branch
        %397 = sbr.rel (%p395) target = $region56
      $region55: #{mygo_forward.9} parent=11 // pred_region
        _
      $region56: #{mygo_forward.9} parent=11 // pred_fallthru
        _
      // Predicated region
      $region57: #{mygo_forward.9} parent=11 // pred_check
        %p398 = pneg %p324
      $region58: #{mygo_forward.9} parent=11 // pred_check_branch
        %400 = sbr.rel (%p398) target = $region60
      $region59: #{mygo_forward.9} parent=11 // pred_region
        _
      $region60: #{mygo_forward.9} parent=11 // pred_fallthru
        _
    $region12: #{mygo_forward.9} parent=5 // pred_fallthru
      _
    %p401 = scmp.lt.s32.totalorder %s20, 2
    // Predicated region
    $region61: #{mygo_forward.9} parent=5 // pred_check
      %p402 = pneg %p401
    $region62: #{mygo_forward.9} parent=5 // pred_check_branch
      %404 = sbr.rel (%p402) target = $region64
    $region63: #{mygo_forward.9} parent=5 // pred_region
      // Predicated region
      $region65: #{mygo_forward.9} parent=63 // pred_check
        %p405 = pneg %p40
      $region66: #{mygo_forward.9} parent=63 // pred_check_branch
        %407 = sbr.rel (%p405) target = $region68
      $region67: #{mygo_forward.9} parent=63 // pred_region
        %s408 = smul.u32 8, %s20
        %p409 = scmp.lt.s32.totalorder %s408, 15
        %s410 = scalar_select %p409, %s408, 15
        %s411 = smul.addr %s410, 2
        %s412 = smul.addr %s411, 4
        %s413 = scalar_lea.vmem %s0, %s412
        %s414 = smul.u32 8, %s20
      $region68: #{mygo_forward.9} parent=63 // pred_fallthru
        _
      // Predicated region
      $region69: #{mygo_forward.9} parent=63 // pred_check
        %p415 = pneg %p66
      $region70: #{mygo_forward.9} parent=63 // pred_check_branch
        %417 = sbr.rel (%p415) target = $region72
      $region71: #{mygo_forward.9} parent=63 // pred_region
        %s418 = smul.u32 8, %s20
        %p419 = scmp.lt.s32.totalorder %s418, 15
        %s420 = scalar_select %p419, %s418, 15
        %s421 = scalar_lea.vmem %s1, %s420
        %s422 = smul.u32 8, %s20
      $region72: #{mygo_forward.9} parent=63 // pred_fallthru
        _
    $region64: #{mygo_forward.9} parent=5 // pred_fallthru
      _
    %p423 = scmp.le.s32.totalorder 1, %s20
    %p424 = scmp.lt.s32.totalorder %s20, 3
    %p425 = pnand %p423, %p424
    %p426 = pneg %p425
    // Predicated region
    $region73: #{mygo_forward.9} parent=5 // pred_check
      _
    $region74: #{mygo_forward.9} parent=5 // pred_check_branch
      %428 = sbr.rel (%p425) target = $region76
    $region75: #{mygo_forward.9} parent=5 // pred_region
      %s429 = ssub.s32 %s20, 1
      %s430 = smul.u32 8, %s25
      %p431 = scmp.lt.s32.totalorder %s430, 15
      %s432 = scalar_select %p431, %s430, 15
      %s433 = smul.addr %s432, 2
      %s434 = smul.addr %s433, 4
      %s435 = scalar_lea.vmem %s0, %s434
      %p436 = pneg %p46
      %p437 = pneg %p43
      %s438 = smul.u32 8, %s25
      %p439 = scmp.lt.s32.totalorder %s438, 15
      %s440 = scalar_select %p439, %s438, 15
      %s441 = scalar_lea.vmem %s1, %s440
      %p442 = pneg %p72
      %p443 = pneg %p69
      %p444 = pneg %p93
      %p445 = pneg %p90
      %p446 = pneg %p114
      %p447 = pneg %p111
      %p448 = pneg %p135
      %p449 = pneg %p132
      %p450 = pneg %p156
      %p451 = pneg %p153
      %p452 = pneg %p177
      %p453 = pneg %p174
      %p454 = pneg %p198
      %p455 = pneg %p195
      %p456 = pneg %p219
      %p457 = pneg %p216
      %p458 = pneg %p240
      %p459 = pneg %p237
      %p460 = pneg %p261
      %p461 = pneg %p258
      %p462 = pneg %p282
      %p463 = pneg %p279
      %p464 = pneg %p303
      %p465 = pneg %p300
      %p466 = pneg %p324
      %p467 = pneg %p321
      %p468 = pneg %p350
      %p469 = pneg %p347
      %s470 = smul.u32 8, %s25
      %p471 = scmp.lt.s32.totalorder %s470, 15
      %s472 = scalar_select %p471, %s470, 15
      %s473 = smul.addr %s472, 2
      %s474 = smul.addr %s473, 4
      %s475 = scalar_lea.vmem %s14, %s474
      %s476 = smul.u32 8, %s25
      %p477 = scmp.lt.s32.totalorder %s476, 15
      %s478 = scalar_select %p477, %s476, 15
      %s479 = smul.addr %s478, 2
      %s480 = smul.addr %s479, 4
      %s481 = scalar_lea.vmem %s0, %s480
      %s482 = smul.u32 8, %s25
      %s483 = smul.u32 8, %s25
      %p484 = scmp.lt.s32.totalorder %s483, 15
      %s485 = scalar_select %p484, %s483, 15
      %s486 = scalar_lea.vmem %s1, %s485
      %s487 = smul.u32 8, %s25
      %s488 = smul.u32 8, %s25
      %p489 = scmp.lt.s32.totalorder %s488, 15
      %s490 = scalar_select %p489, %s488, 15
      %s491 = smul.addr %s490, 2
      %s492 = smul.addr %s491, 4
      %s493 = scalar_lea.vmem %s14, %s492
      %s494 = smul.u32 8, %s25
      %v496 = vld [vmem:[%s481] sm:$0xf]
      %v497 = vld [vmem:[%s481 + $0x4] sm:$0xf]
      %v498 = vld [vmem:[%s481 + $0x8] sm:$0xf]
      %v499 = vld [vmem:[%s481 + $0xc] sm:$0xf]
      %v500 = vld [vmem:[%s481 + $0x10] sm:$0xf]
      %v501 = vld [vmem:[%s481 + $0x14] sm:$0xf]
      %v502 = vld [vmem:[%s481 + $0x18] sm:$0xf]
      %v503 = vld [vmem:[%s481 + $0x1c] sm:$0xf]
      %v504 = vld [vmem:[%s481 + $0x20] sm:$0xf]
      %v505 = vld [vmem:[%s481 + $0x24] sm:$0xf]
      %v506 = vld [vmem:[%s481 + $0x28] sm:$0xf]
      %v507 = vld [vmem:[%s481 + $0x2c] sm:$0xf]
      %v508 = vld [vmem:[%s481 + $0x30] sm:$0xf]
      %v509 = vld [vmem:[%s481 + $0x34] sm:$0xf]
      %v510 = vld [vmem:[%s481 + $0x38] sm:$0xf]
      %v511 = vld [vmem:[%s481 + $0x3c] sm:$0xf]
      %v512 = vunpack.c.l.bf16 %v496
      %v513 = vunpack.c.l.bf16 %v497
      %v514 = vunpack.c.l.bf16 %v498
      %v515 = vunpack.c.l.bf16 %v499
      %v516 = vunpack.c.l.bf16 %v500
      %v517 = vunpack.c.l.bf16 %v501
      %v518 = vunpack.c.l.bf16 %v502
      %v519 = vunpack.c.l.bf16 %v503
      %v520 = vunpack.c.l.bf16 %v504
      %v521 = vunpack.c.l.bf16 %v505
      %v522 = vunpack.c.l.bf16 %v506
      %v523 = vunpack.c.l.bf16 %v507
      %v524 = vunpack.c.l.bf16 %v508
      %v525 = vunpack.c.l.bf16 %v509
      %v526 = vunpack.c.l.bf16 %v510
      %v527 = vunpack.c.l.bf16 %v511
      %v528 = vld [vmem:[%s486] sm:$0x1]
      %v529 = vld [vmem:[%s486 + $0x1] sm:$0x1]
      %v530 = vld [vmem:[%s486 + $0x2] sm:$0x1]
      %v531 = vld [vmem:[%s486 + $0x3] sm:$0x1]
      %v532 = vld [vmem:[%s486 + $0x4] sm:$0x1]
      %v533 = vld [vmem:[%s486 + $0x5] sm:$0x1]
      %v534 = vld [vmem:[%s486 + $0x6] sm:$0x1]
      %v535 = vld [vmem:[%s486 + $0x7] sm:$0x1]
      %v536 = vld [vmem:[%s2] sm:$0xff]
      %v537 = vld [vmem:[%s2 + $0x8] sm:$0xf]
      %v538 = vld [vmem:[%s2 + $0xc] sm:$0xff]
      %v539 = vld [vmem:[%s2 + $0x14] sm:$0xf]
      %v540 = vld [vmem:[%s2 + $0x18] sm:$0xff]
      %v541 = vld [vmem:[%s2 + $0x20] sm:$0xf]
      %v542 = vld [vmem:[%s2 + $0x24] sm:$0xff]
      %v543 = vld [vmem:[%s2 + $0x2c] sm:$0xf]
      %v544 = vld [vmem:[%s2 + $0x30] sm:$0xff]
      %v545 = vld [vmem:[%s2 + $0x38] sm:$0xf]
      %v546 = vld [vmem:[%s2 + $0x3c] sm:$0xff]
      %v547 = vld [vmem:[%s2 + $0x44] sm:$0xf]
      %v548 = vld [vmem:[%s2 + $0x48] sm:$0xff]
      %v549 = vld [vmem:[%s2 + $0x50] sm:$0xf]
      %v550 = vld [vmem:[%s2 + $0x54] sm:$0xff]
      %v551 = vld [vmem:[%s2 + $0x5c] sm:$0xf]
      %v552 = vld [vmem:[%s2 + $0x60] sm:$0xff]
      %v553 = vld [vmem:[%s2 + $0x68] sm:$0xf]
      %v554 = vld [vmem:[%s2 + $0x6c] sm:$0xff]
      %v555 = vld [vmem:[%s2 + $0x74] sm:$0xf]
      %v556 = vld [vmem:[%s2 + $0x78] sm:$0xff]
      %v557 = vld [vmem:[%s2 + $0x80] sm:$0xf]
      %v558 = vld [vmem:[%s2 + $0x84] sm:$0xff]
      %v559 = vld [vmem:[%s2 + $0x8c] sm:$0xf]
      %v560 = vld [vmem:[%s2 + $0x90] sm:$0xff]
      %v561 = vld [vmem:[%s2 + $0x98] sm:$0xf]
      %v562 = vld [vmem:[%s2 + $0x9c] sm:$0xff]
      %v563 = vld [vmem:[%s2 + $0xa4] sm:$0xf]
      %v564 = vld [vmem:[%s2 + $0xa8] sm:$0xff]
      %v565 = vld [vmem:[%s2 + $0xb0] sm:$0xf]
      %v566 = vld [vmem:[%s2 + $0xb4] sm:$0xff]
      %v567 = vld [vmem:[%s2 + $0xbc] sm:$0xf]
      %v568 = vld [vmem:[%s3] sm:$0x7]
      %v570 = vlaneseq
      %v571 = vshrl.u32 %v570, 7
      %v572 = vsub.s32 0, %v571
      %v573 = vrot.slane %v568, %v572
      %v574 = vlaneseq
      %v575 = vshrl.u32 %v574, 7
      %v576 = vsub.s32 1, %v575
      %v577 = vrot.slane %v568, %v576
      %v578 = vlaneseq
      %v579 = vshrl.u32 %v578, 7
      %v580 = vsub.s32 2, %v579
      %v581 = vrot.slane %v568, %v580
      %v601 = vunpack.c.l.b16 %v496
      %v602 = vunpack.c.l.b16 %v497
      %v603 = vunpack.c.l.b16 %v498
      %v604 = vunpack.c.l.b16 %v499
      %v605 = vunpack.c.l.b16 %v500
      %v606 = vunpack.c.l.b16 %v501
      %v607 = vunpack.c.l.b16 %v502
      %v608 = vunpack.c.l.b16 %v503
      %v609 = vunpack.c.l.b16 %v504
      %v610 = vunpack.c.l.b16 %v505
      %v611 = vunpack.c.l.b16 %v506
      %v612 = vunpack.c.l.b16 %v507
      %v613 = vunpack.c.l.b16 %v508
      %v614 = vunpack.c.l.b16 %v509
      %v615 = vunpack.c.l.b16 %v510
      %v616 = vunpack.c.l.b16 %v511
      %v617 = vpack.c.b16 %v602, %v601
      %v618 = vpack.c.b16 %v604, %v603
      %v619 = vpack.c.b16 %v606, %v605
      %v620 = vpack.c.b16 %v608, %v607
      %v621 = vpack.c.b16 %v610, %v609
      %v622 = vpack.c.b16 %v612, %v611
      %v623 = vpack.c.b16 %v614, %v613
      %v624 = vpack.c.b16 %v616, %v615
      %v665 = vunpack.c.l.b16 %v536
      %v666 = vunpack.c.h.b16 %v536
      %v667 = vunpack.c.l.b16 %v537
      %v668 = vunpack.c.l.b16 %v538
      %v669 = vunpack.c.h.b16 %v538
      %v670 = vunpack.c.l.b16 %v539
      %v671 = vunpack.c.l.b16 %v540
      %v672 = vunpack.c.h.b16 %v540
      %v673 = vunpack.c.l.b16 %v541
      %v674 = vunpack.c.l.b16 %v542
      %v675 = vunpack.c.h.b16 %v542
      %v676 = vunpack.c.l.b16 %v543
      %v677 = vunpack.c.l.b16 %v544
      %v678 = vunpack.c.h.b16 %v544
      %v679 = vunpack.c.l.b16 %v545
      %v680 = vunpack.c.l.b16 %v546
      %v681 = vunpack.c.h.b16 %v546
      %v682 = vunpack.c.l.b16 %v547
      %v683 = vunpack.c.l.b16 %v548
      %v684 = vunpack.c.h.b16 %v548
      %v685 = vunpack.c.l.b16 %v549
      %v686 = vunpack.c.l.b16 %v550
      %v687 = vunpack.c.h.b16 %v550
      %v688 = vunpack.c.l.b16 %v551
      %v689 = vunpack.c.l.b16 %v552
      %v690 = vunpack.c.h.b16 %v552
      %v691 = vunpack.c.l.b16 %v553
      %v692 = vunpack.c.l.b16 %v554
      %v693 = vunpack.c.h.b16 %v554
      %v694 = vunpack.c.l.b16 %v555
      %v695 = vunpack.c.l.b16 %v556
      %v696 = vunpack.c.h.b16 %v556
      %v697 = vunpack.c.l.b16 %v557
      %v698 = vunpack.c.l.b16 %v558
      %v699 = vunpack.c.h.b16 %v558
      %v700 = vunpack.c.l.b16 %v559
      %v701 = vunpack.c.l.b16 %v560
      %v702 = vunpack.c.h.b16 %v560
      %v703 = vunpack.c.l.b16 %v561
      %v704 = vunpack.c.l.b16 %v562
      %v705 = vunpack.c.h.b16 %v562
      %v706 = vunpack.c.l.b16 %v563
      %v707 = vunpack.c.l.b16 %v564
      %v708 = vunpack.c.h.b16 %v564
      %v709 = vunpack.c.l.b16 %v565
      %v710 = vunpack.c.l.b16 %v566
      %v711 = vunpack.c.h.b16 %v566
      %v712 = vunpack.c.l.b16 %v567
      %v713 = vpack.c.b16 %v668, %v665
      %v714 = vpack.c.b16 %v669, %v666
      %v715 = vpack.c.b16 %v670, %v667
      %v716 = vpack.c.b16 %v674, %v671
      %v717 = vpack.c.b16 %v675, %v672
      %v718 = vpack.c.b16 %v676, %v673
      %v719 = vpack.c.b16 %v680, %v677
      %v720 = vpack.c.b16 %v681, %v678
      %v721 = vpack.c.b16 %v682, %v679
      %v722 = vpack.c.b16 %v686, %v683
      %v723 = vpack.c.b16 %v687, %v684
      %v724 = vpack.c.b16 %v688, %v685
      %v725 = vpack.c.b16 %v692, %v689
      %v726 = vpack.c.b16 %v693, %v690
      %v727 = vpack.c.b16 %v694, %v691
      %v728 = vpack.c.b16 %v698, %v695
      %v729 = vpack.c.b16 %v699, %v696
      %v730 = vpack.c.b16 %v700, %v697
      %v731 = vpack.c.b16 %v704, %v701
      %v732 = vpack.c.b16 %v705, %v702
      %v733 = vpack.c.b16 %v706, %v703
      %v734 = vpack.c.b16 %v710, %v707
      %v735 = vpack.c.b16 %v711, %v708
      %v736 = vpack.c.b16 %v712, %v709
      %761 = vmatprep.subr.bf16.mxu0 %v714
      %762 = vmatpush1.bf16.msra.mxu0 %v713
      %763 = vmatprep.subr.bf16.mxu0 %v717
      %764 = vmatpush1.bf16.msra.mxu0 %v716
      %765 = vmatprep.subr.bf16.mxu0 %v720
      %766 = vmatpush1.bf16.msra.mxu0 %v719
      %767 = vmatprep.subr.bf16.mxu0 %v723
      %768 = vmatpush1.bf16.msra.mxu0 %v722
      %769 = vmatprep.subr.bf16.mxu0 %v726
      %770 = vmatpush1.bf16.msra.mxu0 %v725
      %771 = vmatprep.subr.bf16.mxu0 %v729
      %772 = vmatpush1.bf16.msra.mxu0 %v728
      %773 = vmatprep.subr.bf16.mxu0 %v732
      %774 = vmatpush1.bf16.msra.mxu0 %v731
      %775 = vmatprep.subr.bf16.mxu0 %v735
      %776 = vmatpush1.bf16.msra.mxu0 %v734
      %777 = vmatprep.subr.bf16.mxu0 0
      %778 = vmatpush1.bf16.msra.mxu0 0
      %779 = vmatprep.subr.bf16.mxu0 0
      %780 = vmatpush1.bf16.msra.mxu0 0
      %781 = vmatprep.subr.bf16.mxu0 0
      %782 = vmatpush1.bf16.msra.mxu0 0
      %783 = vmatprep.subr.bf16.mxu0 0
      %784 = vmatpush1.bf16.msra.mxu0 0
      %785 = vmatprep.subr.bf16.mxu0 0
      %786 = vmatpush1.bf16.msra.mxu0 0
      %787 = vmatprep.subr.bf16.mxu0 0
      %788 = vmatpush1.bf16.msra.mxu0 0
      %789 = vmatprep.subr.bf16.mxu0 0
      %790 = vmatpush1.bf16.msra.mxu0 0
      %791 = vmatprep.subr.bf16.mxu0 0
      %792 = vmatpush1.bf16.msra.mxu0 0
      %793 = vmatprep.mubr.bf16.mxu0 0
      %794 = vmatmul.mubr.bf16.gmra.mrb[0].mxu0 %v617
      %v795 = vpop.f32.mrb[0].mxu0
      %v796 = vadd.f32 %v573, %v795
      %v797 = vpop.f32.mrb[0].mxu0
      %v798 = vadd.f32 %v577, %v797
      %v799 = vpop.f32.mrb[0].mxu0
      %v800 = vadd.f32 %v573, %v799
      %v801 = vpop.f32.mrb[0].mxu0
      %v802 = vadd.f32 %v577, %v801
      %803 = vmatprep.mubr.bf16.mxu0 0
      %804 = vmatmul.mubr.bf16.gmra.mrb[0].mxu0 %v618
      %v805 = vpop.f32.mrb[0].mxu0
      %v806 = vadd.f32 %v573, %v805
      %v807 = vpop.f32.mrb[0].mxu0
      %v808 = vadd.f32 %v577, %v807
      %v809 = vpop.f32.mrb[0].mxu0
      %v810 = vadd.f32 %v573, %v809
      %v811 = vpop.f32.mrb[0].mxu0
      %v812 = vadd.f32 %v577, %v811
      %813 = vmatprep.mubr.bf16.mxu0 0
      %814 = vmatmul.mubr.bf16.gmra.mrb[0].mxu0 %v619
      %v815 = vpop.f32.mrb[0].mxu0
      %v816 = vadd.f32 %v573, %v815
      %v817 = vpop.f32.mrb[0].mxu0
      %v818 = vadd.f32 %v577, %v817
      %v819 = vpop.f32.mrb[0].mxu0
      %v820 = vadd.f32 %v573, %v819
      %v821 = vpop.f32.mrb[0].mxu0
      %v822 = vadd.f32 %v577, %v821
      %823 = vmatprep.mubr.bf16.mxu0 0
      %824 = vmatmul.mubr.bf16.gmra.mrb[0].mxu0 %v620
      %v825 = vpop.f32.mrb[0].mxu0
      %v826 = vadd.f32 %v573, %v825
      %v827 = vpop.f32.mrb[0].mxu0
      %v828 = vadd.f32 %v577, %v827
      %v829 = vpop.f32.mrb[0].mxu0
      %v830 = vadd.f32 %v573, %v829
      %v831 = vpop.f32.mrb[0].mxu0
      %v832 = vadd.f32 %v577, %v831
      %833 = vmatprep.mubr.bf16.mxu0 0
      %834 = vmatmul.mubr.bf16.gmra.mrb[0].mxu0 %v621
      %v835 = vpop.f32.mrb[0].mxu0
      %v836 = vadd.f32 %v573, %v835
      %v837 = vpop.f32.mrb[0].mxu0
      %v838 = vadd.f32 %v577, %v837
      %v839 = vpop.f32.mrb[0].mxu0
      %v840 = vadd.f32 %v573, %v839
      %v841 = vpop.f32.mrb[0].mxu0
      %v842 = vadd.f32 %v577, %v841
      %843 = vmatprep.mubr.bf16.mxu0 0
      %844 = vmatmul.mubr.bf16.gmra.mrb[0].mxu0 %v622
      %v845 = vpop.f32.mrb[0].mxu0
      %v846 = vadd.f32 %v573, %v845
      %v847 = vpop.f32.mrb[0].mxu0
      %v848 = vadd.f32 %v577, %v847
      %v849 = vpop.f32.mrb[0].mxu0
      %v850 = vadd.f32 %v573, %v849
      %v851 = vpop.f32.mrb[0].mxu0
      %v852 = vadd.f32 %v577, %v851
      %853 = vmatprep.mubr.bf16.mxu0 0
      %854 = vmatmul.mubr.bf16.gmra.mrb[0].mxu0 %v623
      %v855 = vpop.f32.mrb[0].mxu0
      %v856 = vadd.f32 %v573, %v855
      %v857 = vpop.f32.mrb[0].mxu0
      %v858 = vadd.f32 %v577, %v857
      %v859 = vpop.f32.mrb[0].mxu0
      %v860 = vadd.f32 %v573, %v859
      %v861 = vpop.f32.mrb[0].mxu0
      %v862 = vadd.f32 %v577, %v861
      %863 = vmatprep.mubr.bf16.mxu0 0
      %864 = vmatmul.mubr.bf16.gmra.mrb[0].mxu0 %v624
      %v865 = vpop.f32.mrb[0].mxu0
      %v866 = vadd.f32 %v573, %v865
      %v867 = vpop.f32.mrb[0].mxu0
      %v868 = vadd.f32 %v577, %v867
      %v869 = vpop.f32.mrb[0].mxu0
      %v870 = vadd.f32 %v573, %v869
      %v871 = vpop.f32.mrb[0].mxu0
      %v872 = vadd.f32 %v577, %v871
      %873 = vdwg.mxu0
      %874 = vmatprep.subr.bf16.mxu0 0
      %875 = vmatpush1.bf16.msra.mxu0 %v715
      %876 = vmatprep.subr.bf16.mxu0 0
      %877 = vmatpush1.bf16.msra.mxu0 %v718
      %878 = vmatprep.subr.bf16.mxu0 0
      %879 = vmatpush1.bf16.msra.mxu0 %v721
      %880 = vmatprep.subr.bf16.mxu0 0
      %881 = vmatpush1.bf16.msra.mxu0 %v724
      %882 = vmatprep.subr.bf16.mxu0 0
      %883 = vmatpush1.bf16.msra.mxu0 %v727
      %884 = vmatprep.subr.bf16.mxu0 0
      %885 = vmatpush1.bf16.msra.mxu0 %v730
      %886 = vmatprep.subr.bf16.mxu0 0
      %887 = vmatpush1.bf16.msra.mxu0 %v733
      %888 = vmatprep.subr.bf16.mxu0 0
      %889 = vmatpush1.bf16.msra.mxu0 %v736
      %890 = vmatprep.subr.bf16.mxu0 0
      %891 = vmatpush1.bf16.msra.mxu0 0
      %892 = vmatprep.subr.bf16.mxu0 0
      %893 = vmatpush1.bf16.msra.mxu0 0
      %894 = vmatprep.subr.bf16.mxu0 0
      %895 = vmatpush1.bf16.msra.mxu0 0
      %896 = vmatprep.subr.bf16.mxu0 0
      %897 = vmatpush1.bf16.msra.mxu0 0
      %898 = vmatprep.subr.bf16.mxu0 0
      %899 = vmatpush1.bf16.msra.mxu0 0
      %900 = vmatprep.subr.bf16.mxu0 0
      %901 = vmatpush1.bf16.msra.mxu0 0
      %902 = vmatprep.subr.bf16.mxu0 0
      %903 = vmatpush1.bf16.msra.mxu0 0
      %904 = vmatprep.subr.bf16.mxu0 0
      %905 = vmatpush1.bf16.msra.mxu0 0
      %906 = vmatprep.mubr.bf16.mxu0 0
      %907 = vmatmul.mubr.bf16.gmra.mrb[0].mxu0 %v617
      %v908 = vpop.f32.mrb[0].mxu0
      %v909 = vadd.f32 %v581, %v908
      %v910 = vpop.f32.mrb[0].mxu0
      %v911 = vpop.f32.mrb[0].mxu0
      %v912 = vadd.f32 %v581, %v911
      %v913 = vpop.f32.mrb[0].mxu0
      %914 = vmatprep.mubr.bf16.mxu0 0
      %915 = vmatmul.mubr.bf16.gmra.mrb[0].mxu0 %v618
      %v916 = vpop.f32.mrb[0].mxu0
      %v917 = vadd.f32 %v581, %v916
      %v918 = vpop.f32.mrb[0].mxu0
      %v919 = vpop.f32.mrb[0].mxu0
      %v920 = vadd.f32 %v581, %v919
      %v921 = vpop.f32.mrb[0].mxu0
      %922 = vmatprep.mubr.bf16.mxu0 0
      %923 = vmatmul.mubr.bf16.gmra.mrb[0].mxu0 %v619
      %v924 = vpop.f32.mrb[0].mxu0
      %v925 = vadd.f32 %v581, %v924
      %v926 = vpop.f32.mrb[0].mxu0
      %v927 = vpop.f32.mrb[0].mxu0
      %v928 = vadd.f32 %v581, %v927
      %v929 = vpop.f32.mrb[0].mxu0
      %930 = vmatprep.mubr.bf16.mxu0 0
      %931 = vmatmul.mubr.bf16.gmra.mrb[0].mxu0 %v620
      %v932 = vpop.f32.mrb[0].mxu0
      %v933 = vadd.f32 %v581, %v932
      %v934 = vpop.f32.mrb[0].mxu0
      %v935 = vpop.f32.mrb[0].mxu0
      %v936 = vadd.f32 %v581, %v935
      %v937 = vpop.f32.mrb[0].mxu0
      %938 = vmatprep.mubr.bf16.mxu0 0
      %939 = vmatmul.mubr.bf16.gmra.mrb[0].mxu0 %v621
      %v940 = vpop.f32.mrb[0].mxu0
      %v941 = vadd.f32 %v581, %v940
      %v942 = vpop.f32.mrb[0].mxu0
      %v943 = vpop.f32.mrb[0].mxu0
      %v944 = vadd.f32 %v581, %v943
      %v945 = vpop.f32.mrb[0].mxu0
      %946 = vmatprep.mubr.bf16.mxu0 0
      %947 = vmatmul.mubr.bf16.gmra.mrb[0].mxu0 %v622
      %v948 = vpop.f32.mrb[0].mxu0
      %v949 = vadd.f32 %v581, %v948
      %v950 = vpop.f32.mrb[0].mxu0
      %v951 = vpop.f32.mrb[0].mxu0
      %v952 = vadd.f32 %v581, %v951
      %v953 = vpop.f32.mrb[0].mxu0
      %954 = vmatprep.mubr.bf16.mxu0 0
      %955 = vmatmul.mubr.bf16.gmra.mrb[0].mxu0 %v623
      %v956 = vpop.f32.mrb[0].mxu0
      %v957 = vadd.f32 %v581, %v956
      %v958 = vpop.f32.mrb[0].mxu0
      %v959 = vpop.f32.mrb[0].mxu0
      %v960 = vadd.f32 %v581, %v959
      %v961 = vpop.f32.mrb[0].mxu0
      %962 = vmatprep.mubr.bf16.mxu0 0
      %963 = vmatmul.mubr.bf16.gmra.mrb[0].mxu0 %v624
      %v964 = vpop.f32.mrb[0].mxu0
      %v965 = vadd.f32 %v581, %v964
      %v966 = vpop.f32.mrb[0].mxu0
      %v967 = vpop.f32.mrb[0].mxu0
      %v968 = vadd.f32 %v581, %v967
      %v969 = vpop.f32.mrb[0].mxu0
      %970 = vdwg.mxu0
      %v971 = vpack.c.bf16 %v800, %v796
      %v972 = vpack.c.bf16 %v810, %v806
      %v973 = vpack.c.bf16 %v820, %v816
      %v974 = vpack.c.bf16 %v830, %v826
      %v975 = vpack.c.bf16 %v840, %v836
      %v976 = vpack.c.bf16 %v850, %v846
      %v977 = vpack.c.bf16 %v860, %v856
      %v978 = vpack.c.bf16 %v870, %v866
      %v979 = vpack.c.bf16 %v802, %v798
      %v980 = vpack.c.bf16 %v812, %v808
      %v981 = vpack.c.bf16 %v822, %v818
      %v982 = vpack.c.bf16 %v832, %v828
      %v983 = vpack.c.bf16 %v842, %v838
      %v984 = vpack.c.bf16 %v852, %v848
      %v985 = vpack.c.bf16 %v862, %v858
      %v986 = vpack.c.bf16 %v872, %v868
      %v987 = vpack.c.bf16 %v912, %v909
      %v988 = vpack.c.bf16 %v920, %v917
      %v989 = vpack.c.bf16 %v928, %v925
      %v990 = vpack.c.bf16 %v936, %v933
      %v991 = vpack.c.bf16 %v944, %v941
      %v992 = vpack.c.bf16 %v952, %v949
      %v993 = vpack.c.bf16 %v960, %v957
      %v994 = vpack.c.bf16 %v968, %v965
      %vm995 = vcmask 261120
      %v997 = vsel %vm995, %v971, 0
      %v1000 = vsel %vm995, %v979, 0
      %1002 = vmatprep.subr.bf16.mxu0 0
      %1003 = vmatpush1.bf16.xpose.msra.mxu0 %v1000
      %1004 = vmatprep.subr.bf16.mxu0 0
      %1005 = vmatpush1.bf16.xpose.msra.mxu0 0
      %1006 = vmatprep.subr.bf16.mxu0 0
      %1007 = vmatpush1.bf16.xpose.msra.mxu0 0
      %1008 = vmatprep.subr.bf16.mxu0 0
      %1009 = vmatpush1.bf16.xpose.msra.mxu0 0
      %1010 = vmatprep.subr.bf16.mxu0 0
      %1011 = vmatpush1.bf16.xpose.msra.mxu0 0
      %1012 = vmatprep.subr.bf16.mxu0 0
      %1013 = vmatpush1.bf16.xpose.msra.mxu0 0
      %1014 = vmatprep.subr.bf16.mxu0 0
      %1015 = vmatpush1.bf16.xpose.msra.mxu0 0
      %1016 = vmatprep.subr.bf16.mxu0 0
      %1017 = vmatpush1.bf16.xpose.msra.mxu0 0
      %1018 = vmatprep.subr.bf16.mxu0 0
      %1019 = vmatpush1.bf16.xpose.msra.mxu0 0
      %1020 = vmatprep.subr.bf16.mxu0 0
      %1021 = vmatpush1.bf16.xpose.msra.mxu0 0
      %1022 = vmatprep.subr.bf16.mxu0 0
      %1023 = vmatpush1.bf16.xpose.msra.mxu0 0
      %1024 = vmatprep.subr.bf16.mxu0 0
      %1025 = vmatpush1.bf16.xpose.msra.mxu0 0
      %1026 = vmatprep.subr.bf16.mxu0 0
      %1027 = vmatpush1.bf16.xpose.msra.mxu0 0
      %1028 = vmatprep.subr.bf16.mxu0 0
      %1029 = vmatpush1.bf16.xpose.msra.mxu0 0
      %1030 = vmatprep.subr.bf16.mxu0 0
      %1031 = vmatpush1.bf16.xpose.msra.mxu0 0
      %1032 = vmatprep.subr.bf16.mxu0 0
      %1033 = vmatpush1.bf16.xpose.msra.mxu0 0
      %1034 = vmatprep.mubr.bf16.mxu0 0
      %1035 = vmatmul.mubr.bf16.gmra.mrb[0].mxu0 %v997
      %v1036 = vpop.f32.mrb[0].mxu0
      %v1037 = vadd.f32 0.0, %v1036
      %v1038 = vpop.f32.mrb[0].mxu0
      %v1039 = vpop.f32.mrb[0].mxu0
      %v1040 = vadd.f32 0.0, %v1039
      %v1041 = vpop.f32.mrb[0].mxu0
      %1042 = vdwg.mxu0
      %v1044 = vsel %vm995, %v972, 0
      %v1047 = vsel %vm995, %v980, 0
      %1049 = vmatprep.subr.bf16.mxu0 0
      %1050 = vmatpush1.bf16.xpose.msra.mxu0 %v1047
      %1051 = vmatprep.subr.bf16.mxu0 0
      %1052 = vmatpush1.bf16.xpose.msra.mxu0 0
      %1053 = vmatprep.subr.bf16.mxu0 0
      %1054 = vmatpush1.bf16.xpose.msra.mxu0 0
      %1055 = vmatprep.subr.bf16.mxu0 0
      %1056 = vmatpush1.bf16.xpose.msra.mxu0 0
      %1057 = vmatprep.subr.bf16.mxu0 0
      %1058 = vmatpush1.bf16.xpose.msra.mxu0 0
      %1059 = vmatprep.subr.bf16.mxu0 0
      %1060 = vmatpush1.bf16.xpose.msra.mxu0 0
      %1061 = vmatprep.subr.bf16.mxu0 0
      %1062 = vmatpush1.bf16.xpose.msra.mxu0 0
      %1063 = vmatprep.subr.bf16.mxu0 0
      %1064 = vmatpush1.bf16.xpose.msra.mxu0 0
      %1065 = vmatprep.subr.bf16.mxu0 0
      %1066 = vmatpush1.bf16.xpose.msra.mxu0 0
      %1067 = vmatprep.subr.bf16.mxu0 0
      %1068 = vmatpush1.bf16.xpose.msra.mxu0 0
      %1069 = vmatprep.subr.bf16.mxu0 0
      %1070 = vmatpush1.bf16.xpose.msra.mxu0 0
      %1071 = vmatprep.subr.bf16.mxu0 0
      %1072 = vmatpush1.bf16.xpose.msra.mxu0 0
      %1073 = vmatprep.subr.bf16.mxu0 0
      %1074 = vmatpush1.bf16.xpose.msra.mxu0 0
      %1075 = vmatprep.subr.bf16.mxu0 0
      %1076 = vmatpush1.bf16.xpose.msra.mxu0 0
      %1077 = vmatprep.subr.bf16.mxu0 0
      %1078 = vmatpush1.bf16.xpose.msra.mxu0 0
      %1079 = vmatprep.subr.bf16.mxu0 0
      %1080 = vmatpush1.bf16.xpose.msra.mxu0 0
      %1081 = vmatprep.mubr.bf16.mxu0 0
      %1082 = vmatmul.mubr.bf16.gmra.mrb[0].mxu0 %v1044
      %v1083 = vpop.f32.mrb[0].mxu0
      %v1084 = vadd.f32 0.0, %v1083
      %v1085 = vpop.f32.mrb[0].mxu0
      %v1086 = vpop.f32.mrb[0].mxu0
      %v1087 = vadd.f32 0.0, %v1086
      %v1088 = vpop.f32.mrb[0].mxu0
      %1089 = vdwg.mxu0
      %v1091 = vsel %vm995, %v973, 0
      %v1094 = vsel %vm995, %v981, 0
      %1096 = vmatprep.subr.bf16.mxu0 0
      %1097 = vmatpush1.bf16.xpose.msra.mxu0 %v1094
      %1098 = vmatprep.subr.bf16.mxu0 0
      %1099 = vmatpush1.bf16.xpose.msra.mxu0 0
      %1100 = vmatprep.subr.bf16.mxu0 0
      %1101 = vmatpush1.bf16.xpose.msra.mxu0 0
      %1102 = vmatprep.subr.bf16.mxu0 0
      %1103 = vmatpush1.bf16.xpose.msra.mxu0 0
      %1104 = vmatprep.subr.bf16.mxu0 0
      %1105 = vmatpush1.bf16.xpose.msra.mxu0 0
      %1106 = vmatprep.subr.bf16.mxu0 0
      %1107 = vmatpush1.bf16.xpose.msra.mxu0 0
      %1108 = vmatprep.subr.bf16.mxu0 0
      %1109 = vmatpush1.bf16.xpose.msra.mxu0 0
      %1110 = vmatprep.subr.bf16.mxu0 0
      %1111 = vmatpush1.bf16.xpose.msra.mxu0 0
      %1112 = vmatprep.subr.bf16.mxu0 0
      %1113 = vmatpush1.bf16.xpose.msra.mxu0 0
      %1114 = vmatprep.subr.bf16.mxu0 0
      %1115 = vmatpush1.bf16.xpose.msra.mxu0 0
      %1116 = vmatprep.subr.bf16.mxu0 0
      %1117 = vmatpush1.bf16.xpose.msra.mxu0 0
      %1118 = vmatprep.subr.bf16.mxu0 0
      %1119 = vmatpush1.bf16.xpose.msra.mxu0 0
      %1120 = vmatprep.subr.bf16.mxu0 0
      %1121 = vmatpush1.bf16.xpose.msra.mxu0 0
      %1122 = vmatprep.subr.bf16.mxu0 0
      %1123 = vmatpush1.bf16.xpose.msra.mxu0 0
      %1124 = vmatprep.subr.bf16.mxu0 0
      %1125 = vmatpush1.bf16.xpose.msra.mxu0 0
      %1126 = vmatprep.subr.bf16.mxu0 0
      %1127 = vmatpush1.bf16.xpose.msra.mxu0 0
      %1128 = vmatprep.mubr.bf16.mxu0 0
      %1129 = vmatmul.mubr.bf16.gmra.mrb[0].mxu0 %v1091
      %v1130 = vpop.f32.mrb[0].mxu0
      %v1131 = vadd.f32 0.0, %v1130
      %v1132 = vpop.f32.mrb[0].mxu0
      %v1133 = vpop.f32.mrb[0].mxu0
      %v1134 = vadd.f32 0.0, %v1133
      %v1135 = vpop.f32.mrb[0].mxu0
      %1136 = vdwg.mxu0
      %v1138 = vsel %vm995, %v974, 0
      %v1141 = vsel %vm995, %v982, 0
      %1143 = vmatprep.subr.bf16.mxu0 0
      %1144 = vmatpush1.bf16.xpose.msra.mxu0 %v1141
      %1145 = vmatprep.subr.bf16.mxu0 0
      %1146 = vmatpush1.bf16.xpose.msra.mxu0 0
      %1147 = vmatprep.subr.bf16.mxu0 0
      %1148 = vmatpush1.bf16.xpose.msra.mxu0 0
      %1149 = vmatprep.subr.bf16.mxu0 0
      %1150 = vmatpush1.bf16.xpose.msra.mxu0 0
      %1151 = vmatprep.subr.bf16.mxu0 0
      %1152 = vmatpush1.bf16.xpose.msra.mxu0 0
      %1153 = vmatprep.subr.bf16.mxu0 0
      %1154 = vmatpush1.bf16.xpose.msra.mxu0 0
      %1155 = vmatprep.subr.bf16.mxu0 0
      %1156 = vmatpush1.bf16.xpose.msra.mxu0 0
      %1157 = vmatprep.subr.bf16.mxu0 0
      %1158 = vmatpush1.bf16.xpose.msra.mxu0 0
      %1159 = vmatprep.subr.bf16.mxu0 0
      %1160 = vmatpush1.bf16.xpose.msra.mxu0 0
      %1161 = vmatprep.subr.bf16.mxu0 0
      %1162 = vmatpush1.bf16.xpose.msra.mxu0 0
      %1163 = vmatprep.subr.bf16.mxu0 0
      %1164 = vmatpush1.bf16.xpose.msra.mxu0 0
      %1165 = vmatprep.subr.bf16.mxu0 0
      %1166 = vmatpush1.bf16.xpose.msra.mxu0 0
      %1167 = vmatprep.subr.bf16.mxu0 0
      %1168 = vmatpush1.bf16.xpose.msra.mxu0 0
      %1169 = vmatprep.subr.bf16.mxu0 0
      %1170 = vmatpush1.bf16.xpose.msra.mxu0 0
      %1171 = vmatprep.subr.bf16.mxu0 0
      %1172 = vmatpush1.bf16.xpose.msra.mxu0 0
      %1173 = vmatprep.subr.bf16.mxu0 0
      %1174 = vmatpush1.bf16.xpose.msra.mxu0 0
      %1175 = vmatprep.mubr.bf16.mxu0 0
      %1176 = vmatmul.mubr.bf16.gmra.mrb[0].mxu0 %v1138
      %v1177 = vpop.f32.mrb[0].mxu0
      %v1178 = vadd.f32 0.0, %v1177
      %v1179 = vpop.f32.mrb[0].mxu0
      %v1180 = vpop.f32.mrb[0].mxu0
      %v1181 = vadd.f32 0.0, %v1180
      %v1182 = vpop.f32.mrb[0].mxu0
      %1183 = vdwg.mxu0
      %v1185 = vsel %vm995, %v975, 0
      %v1188 = vsel %vm995, %v983, 0
      %1190 = vmatprep.subr.bf16.mxu0 0
      %1191 = vmatpush1.bf16.xpose.msra.mxu0 %v1188
      %1192 = vmatprep.subr.bf16.mxu0 0
      %1193 = vmatpush1.bf16.xpose.msra.mxu0 0
      %1194 = vmatprep.subr.bf16.mxu0 0
      %1195 = vmatpush1.bf16.xpose.msra.mxu0 0
      %1196 = vmatprep.subr.bf16.mxu0 0
      %1197 = vmatpush1.bf16.xpose.msra.mxu0 0
      %1198 = vmatprep.subr.bf16.mxu0 0
      %1199 = vmatpush1.bf16.xpose.msra.mxu0 0
      %1200 = vmatprep.subr.bf16.mxu0 0
      %1201 = vmatpush1.bf16.xpose.msra.mxu0 0
      %1202 = vmatprep.subr.bf16.mxu0 0
      %1203 = vmatpush1.bf16.xpose.msra.mxu0 0
      %1204 = vmatprep.subr.bf16.mxu0 0
      %1205 = vmatpush1.bf16.xpose.msra.mxu0 0
      %1206 = vmatprep.subr.bf16.mxu0 0
      %1207 = vmatpush1.bf16.xpose.msra.mxu0 0
      %1208 = vmatprep.subr.bf16.mxu0 0
      %1209 = vmatpush1.bf16.xpose.msra.mxu0 0
      %1210 = vmatprep.subr.bf16.mxu0 0
      %1211 = vmatpush1.bf16.xpose.msra.mxu0 0
      %1212 = vmatprep.subr.bf16.mxu0 0
      %1213 = vmatpush1.bf16.xpose.msra.mxu0 0
      %1214 = vmatprep.subr.bf16.mxu0 0
      %1215 = vmatpush1.bf16.xpose.msra.mxu0 0
      %1216 = vmatprep.subr.bf16.mxu0 0
      %1217 = vmatpush1.bf16.xpose.msra.mxu0 0
      %1218 = vmatprep.subr.bf16.mxu0 0
      %1219 = vmatpush1.bf16.xpose.msra.mxu0 0
      %1220 = vmatprep.subr.bf16.mxu0 0
      %1221 = vmatpush1.bf16.xpose.msra.mxu0 0
      %1222 = vmatprep.mubr.bf16.mxu0 0
      %1223 = vmatmul.mubr.bf16.gmra.mrb[0].mxu0 %v1185
      %v1224 = vpop.f32.mrb[0].mxu0
      %v1225 = vadd.f32 0.0, %v1224
      %v1226 = vpop.f32.mrb[0].mxu0
      %v1227 = vpop.f32.mrb[0].mxu0
      %v1228 = vadd.f32 0.0, %v1227
      %v1229 = vpop.f32.mrb[0].mxu0
      %1230 = vdwg.mxu0
      %v1232 = vsel %vm995, %v976, 0
      %v1235 = vsel %vm995, %v984, 0
      %1237 = vmatprep.subr.bf16.mxu0 0
      %1238 = vmatpush1.bf16.xpose.msra.mxu0 %v1235
      %1239 = vmatprep.subr.bf16.mxu0 0
      %1240 = vmatpush1.bf16.xpose.msra.mxu0 0
      %1241 = vmatprep.subr.bf16.mxu0 0
      %1242 = vmatpush1.bf16.xpose.msra.mxu0 0
      %1243 = vmatprep.subr.bf16.mxu0 0
      %1244 = vmatpush1.bf16.xpose.msra.mxu0 0
      %1245 = vmatprep.subr.bf16.mxu0 0
      %1246 = vmatpush1.bf16.xpose.msra.mxu0 0
      %1247 = vmatprep.subr.bf16.mxu0 0
      %1248 = vmatpush1.bf16.xpose.msra.mxu0 0
      %1249 = vmatprep.subr.bf16.mxu0 0
      %1250 = vmatpush1.bf16.xpose.msra.mxu0 0
      %1251 = vmatprep.subr.bf16.mxu0 0
      %1252 = vmatpush1.bf16.xpose.msra.mxu0 0
      %1253 = vmatprep.subr.bf16.mxu0 0
      %1254 = vmatpush1.bf16.xpose.msra.mxu0 0
      %1255 = vmatprep.subr.bf16.mxu0 0
      %1256 = vmatpush1.bf16.xpose.msra.mxu0 0
      %1257 = vmatprep.subr.bf16.mxu0 0
      %1258 = vmatpush1.bf16.xpose.msra.mxu0 0
      %1259 = vmatprep.subr.bf16.mxu0 0
      %1260 = vmatpush1.bf16.xpose.msra.mxu0 0
      %1261 = vmatprep.subr.bf16.mxu0 0
      %1262 = vmatpush1.bf16.xpose.msra.mxu0 0
      %1263 = vmatprep.subr.bf16.mxu0 0
      %1264 = vmatpush1.bf16.xpose.msra.mxu0 0
      %1265 = vmatprep.subr.bf16.mxu0 0
      %1266 = vmatpush1.bf16.xpose.msra.mxu0 0
      %1267 = vmatprep.subr.bf16.mxu0 0
      %1268 = vmatpush1.bf16.xpose.msra.mxu0 0
      %1269 = vmatprep.mubr.bf16.mxu0 0
      %1270 = vmatmul.mubr.bf16.gmra.mrb[0].mxu0 %v1232
      %v1271 = vpop.f32.mrb[0].mxu0
      %v1272 = vadd.f32 0.0, %v1271
      %v1273 = vpop.f32.mrb[0].mxu0
      %v1274 = vpop.f32.mrb[0].mxu0
      %v1275 = vadd.f32 0.0, %v1274
      %v1276 = vpop.f32.mrb[0].mxu0
      %1277 = vdwg.mxu0
      %v1279 = vsel %vm995, %v977, 0
      %v1282 = vsel %vm995, %v985, 0
      %1284 = vmatprep.subr.bf16.mxu0 0
      %1285 = vmatpush1.bf16.xpose.msra.mxu0 %v1282
      %1286 = vmatprep.subr.bf16.mxu0 0
      %1287 = vmatpush1.bf16.xpose.msra.mxu0 0
      %1288 = vmatprep.subr.bf16.mxu0 0
      %1289 = vmatpush1.bf16.xpose.msra.mxu0 0
      %1290 = vmatprep.subr.bf16.mxu0 0
      %1291 = vmatpush1.bf16.xpose.msra.mxu0 0
      %1292 = vmatprep.subr.bf16.mxu0 0
      %1293 = vmatpush1.bf16.xpose.msra.mxu0 0
      %1294 = vmatprep.subr.bf16.mxu0 0
      %1295 = vmatpush1.bf16.xpose.msra.mxu0 0
      %1296 = vmatprep.subr.bf16.mxu0 0
      %1297 = vmatpush1.bf16.xpose.msra.mxu0 0
      %1298 = vmatprep.subr.bf16.mxu0 0
      %1299 = vmatpush1.bf16.xpose.msra.mxu0 0
      %1300 = vmatprep.subr.bf16.mxu0 0
      %1301 = vmatpush1.bf16.xpose.msra.mxu0 0
      %1302 = vmatprep.subr.bf16.mxu0 0
      %1303 = vmatpush1.bf16.xpose.msra.mxu0 0
      %1304 = vmatprep.subr.bf16.mxu0 0
      %1305 = vmatpush1.bf16.xpose.msra.mxu0 0
      %1306 = vmatprep.subr.bf16.mxu0 0
      %1307 = vmatpush1.bf16.xpose.msra.mxu0 0
      %1308 = vmatprep.subr.bf16.mxu0 0
      %1309 = vmatpush1.bf16.xpose.msra.mxu0 0
      %1310 = vmatprep.subr.bf16.mxu0 0
      %1311 = vmatpush1.bf16.xpose.msra.mxu0 0
      %1312 = vmatprep.subr.bf16.mxu0 0
      %1313 = vmatpush1.bf16.xpose.msra.mxu0 0
      %1314 = vmatprep.subr.bf16.mxu0 0
      %1315 = vmatpush1.bf16.xpose.msra.mxu0 0
      %1316 = vmatprep.mubr.bf16.mxu0 0
      %1317 = vmatmul.mubr.bf16.gmra.mrb[0].mxu0 %v1279
      %v1318 = vpop.f32.mrb[0].mxu0
      %v1319 = vadd.f32 0.0, %v1318
      %v1320 = vpop.f32.mrb[0].mxu0
      %v1321 = vpop.f32.mrb[0].mxu0
      %v1322 = vadd.f32 0.0, %v1321
      %v1323 = vpop.f32.mrb[0].mxu0
      %1324 = vdwg.mxu0
      %v1326 = vsel %vm995, %v978, 0
      %v1329 = vsel %vm995, %v986, 0
      %1331 = vmatprep.subr.bf16.mxu0 0
      %1332 = vmatpush1.bf16.xpose.msra.mxu0 %v1329
      %1333 = vmatprep.subr.bf16.mxu0 0
      %1334 = vmatpush1.bf16.xpose.msra.mxu0 0
      %1335 = vmatprep.subr.bf16.mxu0 0
      %1336 = vmatpush1.bf16.xpose.msra.mxu0 0
      %1337 = vmatprep.subr.bf16.mxu0 0
      %1338 = vmatpush1.bf16.xpose.msra.mxu0 0
      %1339 = vmatprep.subr.bf16.mxu0 0
      %1340 = vmatpush1.bf16.xpose.msra.mxu0 0
      %1341 = vmatprep.subr.bf16.mxu0 0
      %1342 = vmatpush1.bf16.xpose.msra.mxu0 0
      %1343 = vmatprep.subr.bf16.mxu0 0
      %1344 = vmatpush1.bf16.xpose.msra.mxu0 0
      %1345 = vmatprep.subr.bf16.mxu0 0
      %1346 = vmatpush1.bf16.xpose.msra.mxu0 0
      %1347 = vmatprep.subr.bf16.mxu0 0
      %1348 = vmatpush1.bf16.xpose.msra.mxu0 0
      %1349 = vmatprep.subr.bf16.mxu0 0
      %1350 = vmatpush1.bf16.xpose.msra.mxu0 0
      %1351 = vmatprep.subr.bf16.mxu0 0
      %1352 = vmatpush1.bf16.xpose.msra.mxu0 0
      %1353 = vmatprep.subr.bf16.mxu0 0
      %1354 = vmatpush1.bf16.xpose.msra.mxu0 0
      %1355 = vmatprep.subr.bf16.mxu0 0
      %1356 = vmatpush1.bf16.xpose.msra.mxu0 0
      %1357 = vmatprep.subr.bf16.mxu0 0
      %1358 = vmatpush1.bf16.xpose.msra.mxu0 0
      %1359 = vmatprep.subr.bf16.mxu0 0
      %1360 = vmatpush1.bf16.xpose.msra.mxu0 0
      %1361 = vmatprep.subr.bf16.mxu0 0
      %1362 = vmatpush1.bf16.xpose.msra.mxu0 0
      %1363 = vmatprep.mubr.bf16.mxu0 0
      %1364 = vmatmul.mubr.bf16.gmra.mrb[0].mxu0 %v1326
      %v1365 = vpop.f32.mrb[0].mxu0
      %v1366 = vadd.f32 0.0, %v1365
      %v1367 = vpop.f32.mrb[0].mxu0
      %v1368 = vpop.f32.mrb[0].mxu0
      %v1369 = vadd.f32 0.0, %v1368
      %v1370 = vpop.f32.mrb[0].mxu0
      %1371 = vdwg.mxu0
      %v1372 = vmul.f32 %v1037, 0.17677669
      %v1373 = vmul.f32 %v1040, 0.17677669
      %v1374 = vmul.f32 %v1084, 0.17677669
      %v1375 = vmul.f32 %v1087, 0.17677669
      %v1376 = vmul.f32 %v1131, 0.17677669
      %v1377 = vmul.f32 %v1134, 0.17677669
      %v1378 = vmul.f32 %v1178, 0.17677669
      %v1379 = vmul.f32 %v1181, 0.17677669
      %v1380 = vmul.f32 %v1225, 0.17677669
      %v1381 = vmul.f32 %v1228, 0.17677669
      %v1382 = vmul.f32 %v1272, 0.17677669
      %v1383 = vmul.f32 %v1275, 0.17677669
      %v1384 = vmul.f32 %v1319, 0.17677669
      %v1385 = vmul.f32 %v1322, 0.17677669
      %v1386 = vmul.f32 %v1366, 0.17677669
      %v1387 = vmul.f32 %v1369, 0.17677669
      %v1396 = vlaneseq
      %v1397 = vshrl.u32 %v1396, 7
      %v1398 = vsub.s32 0, %v1397
      %v1399 = vrot.slane %v528, %v1398
      %v1400 = vlaneseq
      %v1401 = vshrl.u32 %v1400, 7
      %v1402 = vsub.s32 0, %v1401
      %v1403 = vrot.slane %v529, %v1402
      %v1404 = vlaneseq
      %v1405 = vshrl.u32 %v1404, 7
      %v1406 = vsub.s32 0, %v1405
      %v1407 = vrot.slane %v530, %v1406
      %v1408 = vlaneseq
      %v1409 = vshrl.u32 %v1408, 7
      %v1410 = vsub.s32 0, %v1409
      %v1411 = vrot.slane %v531, %v1410
      %v1412 = vlaneseq
      %v1413 = vshrl.u32 %v1412, 7
      %v1414 = vsub.s32 0, %v1413
      %v1415 = vrot.slane %v532, %v1414
      %v1416 = vlaneseq
      %v1417 = vshrl.u32 %v1416, 7
      %v1418 = vsub.s32 0, %v1417
      %v1419 = vrot.slane %v533, %v1418
      %v1420 = vlaneseq
      %v1421 = vshrl.u32 %v1420, 7
      %v1422 = vsub.s32 0, %v1421
      %v1423 = vrot.slane %v534, %v1422
      %v1424 = vlaneseq
      %v1425 = vshrl.u32 %v1424, 7
      %v1426 = vsub.s32 0, %v1425
      %v1427 = vrot.slane %v535, %v1426
      %v1436 = vadd.f32 %v1372, %v1399
      %v1437 = vadd.f32 %v1373, %v1399
      %v1438 = vadd.f32 %v1374, %v1403
      %v1439 = vadd.f32 %v1375, %v1403
      %v1440 = vadd.f32 %v1376, %v1407
      %v1441 = vadd.f32 %v1377, %v1407
      %v1442 = vadd.f32 %v1378, %v1411
      %v1443 = vadd.f32 %v1379, %v1411
      %v1444 = vadd.f32 %v1380, %v1415
      %v1445 = vadd.f32 %v1381, %v1415
      %v1446 = vadd.f32 %v1382, %v1419
      %v1447 = vadd.f32 %v1383, %v1419
      %v1448 = vadd.f32 %v1384, %v1423
      %v1449 = vadd.f32 %v1385, %v1423
      %v1450 = vadd.f32 %v1386, %v1427
      %v1451 = vadd.f32 %v1387, %v1427
      %vm1452 = vcmask 130048
      %v1453 = vsel %vm1452, %v1436, -inf
      %1454 = vmax.xlane.f32.xlu0 %v1453
      %v1455 = vpop.xlane.xlu0 %1454
      %v1456 = vsel %vm1452, %v1437, -inf
      %1457 = vmax.xlane.f32.xlu0 %v1456
      %v1458 = vpop.xlane.xlu0 %1457
      %v1459 = vsel %vm1452, %v1438, -inf
      %1460 = vmax.xlane.f32.xlu0 %v1459
      %v1461 = vpop.xlane.xlu0 %1460
      %v1462 = vsel %vm1452, %v1439, -inf
      %1463 = vmax.xlane.f32.xlu0 %v1462
      %v1464 = vpop.xlane.xlu0 %1463
      %v1465 = vsel %vm1452, %v1440, -inf
      %1466 = vmax.xlane.f32.xlu0 %v1465
      %v1467 = vpop.xlane.xlu0 %1466
      %v1468 = vsel %vm1452, %v1441, -inf
      %1469 = vmax.xlane.f32.xlu0 %v1468
      %v1470 = vpop.xlane.xlu0 %1469
      %v1471 = vsel %vm1452, %v1442, -inf
      %1472 = vmax.xlane.f32.xlu0 %v1471
      %v1473 = vpop.xlane.xlu0 %1472
      %v1474 = vsel %vm1452, %v1443, -inf
      %1475 = vmax.xlane.f32.xlu0 %v1474
      %v1476 = vpop.xlane.xlu0 %1475
      %v1477 = vsel %vm1452, %v1444, -inf
      %1478 = vmax.xlane.f32.xlu0 %v1477
      %v1479 = vpop.xlane.xlu0 %1478
      %v1480 = vsel %vm1452, %v1445, -inf
      %1481 = vmax.xlane.f32.xlu0 %v1480
      %v1482 = vpop.xlane.xlu0 %1481
      %v1483 = vsel %vm1452, %v1446, -inf
      %1484 = vmax.xlane.f32.xlu0 %v1483
      %v1485 = vpop.xlane.xlu0 %1484
      %v1486 = vsel %vm1452, %v1447, -inf
      %1487 = vmax.xlane.f32.xlu0 %v1486
      %v1488 = vpop.xlane.xlu0 %1487
      %v1489 = vsel %vm1452, %v1448, -inf
      %1490 = vmax.xlane.f32.xlu0 %v1489
      %v1491 = vpop.xlane.xlu0 %1490
      %v1492 = vsel %vm1452, %v1449, -inf
      %1493 = vmax.xlane.f32.xlu0 %v1492
      %v1494 = vpop.xlane.xlu0 %1493
      %v1495 = vsel %vm1452, %v1450, -inf
      %1496 = vmax.xlane.f32.xlu0 %v1495
      %v1497 = vpop.xlane.xlu0 %1496
      %v1498 = vsel %vm1452, %v1451, -inf
      %1499 = vmax.xlane.f32.xlu0 %v1498
      %v1500 = vpop.xlane.xlu0 %1499
      %v1501 = vsub.f32 %v1436, %v1455
      %v1502 = vsub.f32 %v1437, %v1458
      %v1503 = vsub.f32 %v1438, %v1461
      %v1504 = vsub.f32 %v1439, %v1464
      %v1505 = vsub.f32 %v1440, %v1467
      %v1506 = vsub.f32 %v1441, %v1470
      %v1507 = vsub.f32 %v1442, %v1473
      %v1508 = vsub.f32 %v1443, %v1476
      %v1509 = vsub.f32 %v1444, %v1479
      %v1510 = vsub.f32 %v1445, %v1482
      %v1511 = vsub.f32 %v1446, %v1485
      %v1512 = vsub.f32 %v1447, %v1488
      %v1513 = vsub.f32 %v1448, %v1491
      %v1514 = vsub.f32 %v1449, %v1494
      %v1515 = vsub.f32 %v1450, %v1497
      %v1516 = vsub.f32 %v1451, %v1500
      %v1517 = vmul.f32 %v1501, 1.442695
      %v1518 = vpow.pop %v1517
      %v1519 = vmul.f32 %v1502, 1.442695
      %v1520 = vpow.pop %v1519
      %v1521 = vmul.f32 %v1503, 1.442695
      %v1522 = vpow.pop %v1521
      %v1523 = vmul.f32 %v1504, 1.442695
      %v1524 = vpow.pop %v1523
      %v1525 = vmul.f32 %v1505, 1.442695
      %v1526 = vpow.pop %v1525
      %v1527 = vmul.f32 %v1506, 1.442695
      %v1528 = vpow.pop %v1527
      %v1529 = vmul.f32 %v1507, 1.442695
      %v1530 = vpow.pop %v1529
      %v1531 = vmul.f32 %v1508, 1.442695
      %v1532 = vpow.pop %v1531
      %v1533 = vmul.f32 %v1509, 1.442695
      %v1534 = vpow.pop %v1533
      %v1535 = vmul.f32 %v1510, 1.442695
      %v1536 = vpow.pop %v1535
      %v1537 = vmul.f32 %v1511, 1.442695
      %v1538 = vpow.pop %v1537
      %v1539 = vmul.f32 %v1512, 1.442695
      %v1540 = vpow.pop %v1539
      %v1541 = vmul.f32 %v1513, 1.442695
      %v1542 = vpow.pop %v1541
      %v1543 = vmul.f32 %v1514, 1.442695
      %v1544 = vpow.pop %v1543
      %v1545 = vmul.f32 %v1515, 1.442695
      %v1546 = vpow.pop %v1545
      %v1547 = vmul.f32 %v1516, 1.442695
      %v1548 = vpow.pop %v1547
      %v1549 = vsel %vm1452, %v1518, 0.0
      %1550 = vadd.xlane.f32.xlu0 %v1549
      %v1551 = vpop.xlane.xlu0 %1550
      %v1552 = vsel %vm1452, %v1520, 0.0
      %1553 = vadd.xlane.f32.xlu0 %v1552
      %v1554 = vpop.xlane.xlu0 %1553
      %v1555 = vsel %vm1452, %v1522, 0.0
      %1556 = vadd.xlane.f32.xlu0 %v1555
      %v1557 = vpop.xlane.xlu0 %1556
      %v1558 = vsel %vm1452, %v1524, 0.0
      %1559 = vadd.xlane.f32.xlu0 %v1558
      %v1560 = vpop.xlane.xlu0 %1559
      %v1561 = vsel %vm1452, %v1526, 0.0
      %1562 = vadd.xlane.f32.xlu0 %v1561
      %v1563 = vpop.xlane.xlu0 %1562
      %v1564 = vsel %vm1452, %v1528, 0.0
      %1565 = vadd.xlane.f32.xlu0 %v1564
      %v1566 = vpop.xlane.xlu0 %1565
      %v1567 = vsel %vm1452, %v1530, 0.0
      %1568 = vadd.xlane.f32.xlu0 %v1567
      %v1569 = vpop.xlane.xlu0 %1568
      %v1570 = vsel %vm1452, %v1532, 0.0
      %1571 = vadd.xlane.f32.xlu0 %v1570
      %v1572 = vpop.xlane.xlu0 %1571
      %v1573 = vsel %vm1452, %v1534, 0.0
      %1574 = vadd.xlane.f32.xlu0 %v1573
      %v1575 = vpop.xlane.xlu0 %1574
      %v1576 = vsel %vm1452, %v1536, 0.0
      %1577 = vadd.xlane.f32.xlu0 %v1576
      %v1578 = vpop.xlane.xlu0 %1577
      %v1579 = vsel %vm1452, %v1538, 0.0
      %1580 = vadd.xlane.f32.xlu0 %v1579
      %v1581 = vpop.xlane.xlu0 %1580
      %v1582 = vsel %vm1452, %v1540, 0.0
      %1583 = vadd.xlane.f32.xlu0 %v1582
      %v1584 = vpop.xlane.xlu0 %1583
      %v1585 = vsel %vm1452, %v1542, 0.0
      %1586 = vadd.xlane.f32.xlu0 %v1585
      %v1587 = vpop.xlane.xlu0 %1586
      %v1588 = vsel %vm1452, %v1544, 0.0
      %1589 = vadd.xlane.f32.xlu0 %v1588
      %v1590 = vpop.xlane.xlu0 %1589
      %v1591 = vsel %vm1452, %v1546, 0.0
      %1592 = vadd.xlane.f32.xlu0 %v1591
      %v1593 = vpop.xlane.xlu0 %1592
      %v1594 = vsel %vm1452, %v1548, 0.0
      %1595 = vadd.xlane.f32.xlu0 %v1594
      %v1596 = vpop.xlane.xlu0 %1595
      %v1597 = vrcp.pop %v1551
      %v1598 = vmul.f32 %v1518, %v1597
      %v1599 = vrcp.pop %v1554
      %v1600 = vmul.f32 %v1520, %v1599
      %v1601 = vrcp.pop %v1557
      %v1602 = vmul.f32 %v1522, %v1601
      %v1603 = vrcp.pop %v1560
      %v1604 = vmul.f32 %v1524, %v1603
      %v1605 = vrcp.pop %v1563
      %v1606 = vmul.f32 %v1526, %v1605
      %v1607 = vrcp.pop %v1566
      %v1608 = vmul.f32 %v1528, %v1607
      %v1609 = vrcp.pop %v1569
      %v1610 = vmul.f32 %v1530, %v1609
      %v1611 = vrcp.pop %v1572
      %v1612 = vmul.f32 %v1532, %v1611
      %v1613 = vrcp.pop %v1575
      %v1614 = vmul.f32 %v1534, %v1613
      %v1615 = vrcp.pop %v1578
      %v1616 = vmul.f32 %v1536, %v1615
      %v1617 = vrcp.pop %v1581
      %v1618 = vmul.f32 %v1538, %v1617
      %v1619 = vrcp.pop %v1584
      %v1620 = vmul.f32 %v1540, %v1619
      %v1621 = vrcp.pop %v1587
      %v1622 = vmul.f32 %v1542, %v1621
      %v1623 = vrcp.pop %v1590
      %v1624 = vmul.f32 %v1544, %v1623
      %v1625 = vrcp.pop %v1593
      %v1626 = vmul.f32 %v1546, %v1625
      %v1627 = vrcp.pop %v1596
      %v1628 = vmul.f32 %v1548, %v1627
      %v1629 = vpack.c.bf16 %v1600, %v1598
      %v1630 = vpack.c.bf16 %v1604, %v1602
      %v1631 = vpack.c.bf16 %v1608, %v1606
      %v1632 = vpack.c.bf16 %v1612, %v1610
      %v1633 = vpack.c.bf16 %v1616, %v1614
      %v1634 = vpack.c.bf16 %v1620, %v1618
      %v1635 = vpack.c.bf16 %v1624, %v1622
      %v1636 = vpack.c.bf16 %v1628, %v1626
      %v1638 = vsel %vm1452, %v1629, 0
      %1640 = vmatprep.subr.bf16.mxu0 0
      %1641 = vmatpush1.bf16.msra.mxu0 %v987
      %1642 = vmatprep.subr.bf16.mxu0 0
      %1643 = vmatpush1.bf16.msra.mxu0 0
      %1644 = vmatprep.subr.bf16.mxu0 0
      %1645 = vmatpush1.bf16.msra.mxu0 0
      %1646 = vmatprep.subr.bf16.mxu0 0
      %1647 = vmatpush1.bf16.msra.mxu0 0
      %1648 = vmatprep.subr.bf16.mxu0 0
      %1649 = vmatpush1.bf16.msra.mxu0 0
      %1650 = vmatprep.subr.bf16.mxu0 0
      %1651 = vmatpush1.bf16.msra.mxu0 0
      %1652 = vmatprep.subr.bf16.mxu0 0
      %1653 = vmatpush1.bf16.msra.mxu0 0
      %1654 = vmatprep.subr.bf16.mxu0 0
      %1655 = vmatpush1.bf16.msra.mxu0 0
      %1656 = vmatprep.subr.bf16.mxu0 0
      %1657 = vmatpush1.bf16.msra.mxu0 0
      %1658 = vmatprep.subr.bf16.mxu0 0
      %1659 = vmatpush1.bf16.msra.mxu0 0
      %1660 = vmatprep.subr.bf16.mxu0 0
      %1661 = vmatpush1.bf16.msra.mxu0 0
      %1662 = vmatprep.subr.bf16.mxu0 0
      %1663 = vmatpush1.bf16.msra.mxu0 0
      %1664 = vmatprep.subr.bf16.mxu0 0
      %1665 = vmatpush1.bf16.msra.mxu0 0
      %1666 = vmatprep.subr.bf16.mxu0 0
      %1667 = vmatpush1.bf16.msra.mxu0 0
      %1668 = vmatprep.subr.bf16.mxu0 0
      %1669 = vmatpush1.bf16.msra.mxu0 0
      %1670 = vmatprep.subr.bf16.mxu0 0
      %1671 = vmatpush1.bf16.msra.mxu0 0
      %1672 = vmatprep.mubr.bf16.mxu0 0
      %1673 = vmatmul.mubr.bf16.gmra.mrb[0].mxu0 %v1638
      %v1674 = vpop.f32.mrb[0].mxu0
      %v1675 = vadd.f32 0.0, %v1674
      %v1676 = vpop.f32.mrb[0].mxu0
      %v1677 = vpop.f32.mrb[0].mxu0
      %v1678 = vadd.f32 0.0, %v1677
      %v1679 = vpop.f32.mrb[0].mxu0
      %1680 = vdwg.mxu0
      %v1682 = vsel %vm1452, %v1630, 0
      %1684 = vmatprep.subr.bf16.mxu0 0
      %1685 = vmatpush1.bf16.msra.mxu0 %v988
      %1686 = vmatprep.subr.bf16.mxu0 0
      %1687 = vmatpush1.bf16.msra.mxu0 0
      %1688 = vmatprep.subr.bf16.mxu0 0
      %1689 = vmatpush1.bf16.msra.mxu0 0
      %1690 = vmatprep.subr.bf16.mxu0 0
      %1691 = vmatpush1.bf16.msra.mxu0 0
      %1692 = vmatprep.subr.bf16.mxu0 0
      %1693 = vmatpush1.bf16.msra.mxu0 0
      %1694 = vmatprep.subr.bf16.mxu0 0
      %1695 = vmatpush1.bf16.msra.mxu0 0
      %1696 = vmatprep.subr.bf16.mxu0 0
      %1697 = vmatpush1.bf16.msra.mxu0 0
      %1698 = vmatprep.subr.bf16.mxu0 0
      %1699 = vmatpush1.bf16.msra.mxu0 0
      %1700 = vmatprep.subr.bf16.mxu0 0
      %1701 = vmatpush1.bf16.msra.mxu0 0
      %1702 = vmatprep.subr.bf16.mxu0 0
      %1703 = vmatpush1.bf16.msra.mxu0 0
      %1704 = vmatprep.subr.bf16.mxu0 0
      %1705 = vmatpush1.bf16.msra.mxu0 0
      %1706 = vmatprep.subr.bf16.mxu0 0
      %1707 = vmatpush1.bf16.msra.mxu0 0
      %1708 = vmatprep.subr.bf16.mxu0 0
      %1709 = vmatpush1.bf16.msra.mxu0 0
      %1710 = vmatprep.subr.bf16.mxu0 0
      %1711 = vmatpush1.bf16.msra.mxu0 0
      %1712 = vmatprep.subr.bf16.mxu0 0
      %1713 = vmatpush1.bf16.msra.mxu0 0
      %1714 = vmatprep.subr.bf16.mxu0 0
      %1715 = vmatpush1.bf16.msra.mxu0 0
      %1716 = vmatprep.mubr.bf16.mxu0 0
      %1717 = vmatmul.mubr.bf16.gmra.mrb[0].mxu0 %v1682
      %v1718 = vpop.f32.mrb[0].mxu0
      %v1719 = vadd.f32 0.0, %v1718
      %v1720 = vpop.f32.mrb[0].mxu0
      %v1721 = vpop.f32.mrb[0].mxu0
      %v1722 = vadd.f32 0.0, %v1721
      %v1723 = vpop.f32.mrb[0].mxu0
      %1724 = vdwg.mxu0
      %v1726 = vsel %vm1452, %v1631, 0
      %1728 = vmatprep.subr.bf16.mxu0 0
      %1729 = vmatpush1.bf16.msra.mxu0 %v989
      %1730 = vmatprep.subr.bf16.mxu0 0
      %1731 = vmatpush1.bf16.msra.mxu0 0
      %1732 = vmatprep.subr.bf16.mxu0 0
      %1733 = vmatpush1.bf16.msra.mxu0 0
      %1734 = vmatprep.subr.bf16.mxu0 0
      %1735 = vmatpush1.bf16.msra.mxu0 0
      %1736 = vmatprep.subr.bf16.mxu0 0
      %1737 = vmatpush1.bf16.msra.mxu0 0
      %1738 = vmatprep.subr.bf16.mxu0 0
      %1739 = vmatpush1.bf16.msra.mxu0 0
      %1740 = vmatprep.subr.bf16.mxu0 0
      %1741 = vmatpush1.bf16.msra.mxu0 0
      %1742 = vmatprep.subr.bf16.mxu0 0
      %1743 = vmatpush1.bf16.msra.mxu0 0
      %1744 = vmatprep.subr.bf16.mxu0 0
      %1745 = vmatpush1.bf16.msra.mxu0 0
      %1746 = vmatprep.subr.bf16.mxu0 0
      %1747 = vmatpush1.bf16.msra.mxu0 0
      %1748 = vmatprep.subr.bf16.mxu0 0
      %1749 = vmatpush1.bf16.msra.mxu0 0
      %1750 = vmatprep.subr.bf16.mxu0 0
      %1751 = vmatpush1.bf16.msra.mxu0 0
      %1752 = vmatprep.subr.bf16.mxu0 0
      %1753 = vmatpush1.bf16.msra.mxu0 0
      %1754 = vmatprep.subr.bf16.mxu0 0
      %1755 = vmatpush1.bf16.msra.mxu0 0
      %1756 = vmatprep.subr.bf16.mxu0 0
      %1757 = vmatpush1.bf16.msra.mxu0 0
      %1758 = vmatprep.subr.bf16.mxu0 0
      %1759 = vmatpush1.bf16.msra.mxu0 0
      %1760 = vmatprep.mubr.bf16.mxu0 0
      %1761 = vmatmul.mubr.bf16.gmra.mrb[0].mxu0 %v1726
      %v1762 = vpop.f32.mrb[0].mxu0
      %v1763 = vadd.f32 0.0, %v1762
      %v1764 = vpop.f32.mrb[0].mxu0
      %v1765 = vpop.f32.mrb[0].mxu0
      %v1766 = vadd.f32 0.0, %v1765
      %v1767 = vpop.f32.mrb[0].mxu0
      %1768 = vdwg.mxu0
      %v1770 = vsel %vm1452, %v1632, 0
      %1772 = vmatprep.subr.bf16.mxu0 0
      %1773 = vmatpush1.bf16.msra.mxu0 %v990
      %1774 = vmatprep.subr.bf16.mxu0 0
      %1775 = vmatpush1.bf16.msra.mxu0 0
      %1776 = vmatprep.subr.bf16.mxu0 0
      %1777 = vmatpush1.bf16.msra.mxu0 0
      %1778 = vmatprep.subr.bf16.mxu0 0
      %1779 = vmatpush1.bf16.msra.mxu0 0
      %1780 = vmatprep.subr.bf16.mxu0 0
      %1781 = vmatpush1.bf16.msra.mxu0 0
      %1782 = vmatprep.subr.bf16.mxu0 0
      %1783 = vmatpush1.bf16.msra.mxu0 0
      %1784 = vmatprep.subr.bf16.mxu0 0
      %1785 = vmatpush1.bf16.msra.mxu0 0
      %1786 = vmatprep.subr.bf16.mxu0 0
      %1787 = vmatpush1.bf16.msra.mxu0 0
      %1788 = vmatprep.subr.bf16.mxu0 0
      %1789 = vmatpush1.bf16.msra.mxu0 0
      %1790 = vmatprep.subr.bf16.mxu0 0
      %1791 = vmatpush1.bf16.msra.mxu0 0
      %1792 = vmatprep.subr.bf16.mxu0 0
      %1793 = vmatpush1.bf16.msra.mxu0 0
      %1794 = vmatprep.subr.bf16.mxu0 0
      %1795 = vmatpush1.bf16.msra.mxu0 0
      %1796 = vmatprep.subr.bf16.mxu0 0
      %1797 = vmatpush1.bf16.msra.mxu0 0
      %1798 = vmatprep.subr.bf16.mxu0 0
      %1799 = vmatpush1.bf16.msra.mxu0 0
      %1800 = vmatprep.subr.bf16.mxu0 0
      %1801 = vmatpush1.bf16.msra.mxu0 0
      %1802 = vmatprep.subr.bf16.mxu0 0
      %1803 = vmatpush1.bf16.msra.mxu0 0
      %1804 = vmatprep.mubr.bf16.mxu0 0
      %1805 = vmatmul.mubr.bf16.gmra.mrb[0].mxu0 %v1770
      %v1806 = vpop.f32.mrb[0].mxu0
      %v1807 = vadd.f32 0.0, %v1806
      %v1808 = vpop.f32.mrb[0].mxu0
      %v1809 = vpop.f32.mrb[0].mxu0
      %v1810 = vadd.f32 0.0, %v1809
      %v1811 = vpop.f32.mrb[0].mxu0
      %1812 = vdwg.mxu0
      %v1814 = vsel %vm1452, %v1633, 0
      %1816 = vmatprep.subr.bf16.mxu0 0
      %1817 = vmatpush1.bf16.msra.mxu0 %v991
      %1818 = vmatprep.subr.bf16.mxu0 0
      %1819 = vmatpush1.bf16.msra.mxu0 0
      %1820 = vmatprep.subr.bf16.mxu0 0
      %1821 = vmatpush1.bf16.msra.mxu0 0
      %1822 = vmatprep.subr.bf16.mxu0 0
      %1823 = vmatpush1.bf16.msra.mxu0 0
      %1824 = vmatprep.subr.bf16.mxu0 0
      %1825 = vmatpush1.bf16.msra.mxu0 0
      %1826 = vmatprep.subr.bf16.mxu0 0
      %1827 = vmatpush1.bf16.msra.mxu0 0
      %1828 = vmatprep.subr.bf16.mxu0 0
      %1829 = vmatpush1.bf16.msra.mxu0 0
      %1830 = vmatprep.subr.bf16.mxu0 0
      %1831 = vmatpush1.bf16.msra.mxu0 0
      %1832 = vmatprep.subr.bf16.mxu0 0
      %1833 = vmatpush1.bf16.msra.mxu0 0
      %1834 = vmatprep.subr.bf16.mxu0 0
      %1835 = vmatpush1.bf16.msra.mxu0 0
      %1836 = vmatprep.subr.bf16.mxu0 0
      %1837 = vmatpush1.bf16.msra.mxu0 0
      %1838 = vmatprep.subr.bf16.mxu0 0
      %1839 = vmatpush1.bf16.msra.mxu0 0
      %1840 = vmatprep.subr.bf16.mxu0 0
      %1841 = vmatpush1.bf16.msra.mxu0 0
      %1842 = vmatprep.subr.bf16.mxu0 0
      %1843 = vmatpush1.bf16.msra.mxu0 0
      %1844 = vmatprep.subr.bf16.mxu0 0
      %1845 = vmatpush1.bf16.msra.mxu0 0
      %1846 = vmatprep.subr.bf16.mxu0 0
      %1847 = vmatpush1.bf16.msra.mxu0 0
      %1848 = vmatprep.mubr.bf16.mxu0 0
      %1849 = vmatmul.mubr.bf16.gmra.mrb[0].mxu0 %v1814
      %v1850 = vpop.f32.mrb[0].mxu0
      %v1851 = vadd.f32 0.0, %v1850
      %v1852 = vpop.f32.mrb[0].mxu0
      %v1853 = vpop.f32.mrb[0].mxu0
      %v1854 = vadd.f32 0.0, %v1853
      %v1855 = vpop.f32.mrb[0].mxu0
      %1856 = vdwg.mxu0
      %v1858 = vsel %vm1452, %v1634, 0
      %1860 = vmatprep.subr.bf16.mxu0 0
      %1861 = vmatpush1.bf16.msra.mxu0 %v992
      %1862 = vmatprep.subr.bf16.mxu0 0
      %1863 = vmatpush1.bf16.msra.mxu0 0
      %1864 = vmatprep.subr.bf16.mxu0 0
      %1865 = vmatpush1.bf16.msra.mxu0 0
      %1866 = vmatprep.subr.bf16.mxu0 0
      %1867 = vmatpush1.bf16.msra.mxu0 0
      %1868 = vmatprep.subr.bf16.mxu0 0
      %1869 = vmatpush1.bf16.msra.mxu0 0
      %1870 = vmatprep.subr.bf16.mxu0 0
      %1871 = vmatpush1.bf16.msra.mxu0 0
      %1872 = vmatprep.subr.bf16.mxu0 0
      %1873 = vmatpush1.bf16.msra.mxu0 0
      %1874 = vmatprep.subr.bf16.mxu0 0
      %1875 = vmatpush1.bf16.msra.mxu0 0
      %1876 = vmatprep.subr.bf16.mxu0 0
      %1877 = vmatpush1.bf16.msra.mxu0 0
      %1878 = vmatprep.subr.bf16.mxu0 0
      %1879 = vmatpush1.bf16.msra.mxu0 0
      %1880 = vmatprep.subr.bf16.mxu0 0
      %1881 = vmatpush1.bf16.msra.mxu0 0
      %1882 = vmatprep.subr.bf16.mxu0 0
      %1883 = vmatpush1.bf16.msra.mxu0 0
      %1884 = vmatprep.subr.bf16.mxu0 0
      %1885 = vmatpush1.bf16.msra.mxu0 0
      %1886 = vmatprep.subr.bf16.mxu0 0
      %1887 = vmatpush1.bf16.msra.mxu0 0
      %1888 = vmatprep.subr.bf16.mxu0 0
      %1889 = vmatpush1.bf16.msra.mxu0 0
      %1890 = vmatprep.subr.bf16.mxu0 0
      %1891 = vmatpush1.bf16.msra.mxu0 0
      %1892 = vmatprep.mubr.bf16.mxu0 0
      %1893 = vmatmul.mubr.bf16.gmra.mrb[0].mxu0 %v1858
      %v1894 = vpop.f32.mrb[0].mxu0
      %v1895 = vadd.f32 0.0, %v1894
      %v1896 = vpop.f32.mrb[0].mxu0
      %v1897 = vpop.f32.mrb[0].mxu0
      %v1898 = vadd.f32 0.0, %v1897
      %v1899 = vpop.f32.mrb[0].mxu0
      %1900 = vdwg.mxu0
      %v1902 = vsel %vm1452, %v1635, 0
      %1904 = vmatprep.subr.bf16.mxu0 0
      %1905 = vmatpush1.bf16.msra.mxu0 %v993
      %1906 = vmatprep.subr.bf16.mxu0 0
      %1907 = vmatpush1.bf16.msra.mxu0 0
      %1908 = vmatprep.subr.bf16.mxu0 0
      %1909 = vmatpush1.bf16.msra.mxu0 0
      %1910 = vmatprep.subr.bf16.mxu0 0
      %1911 = vmatpush1.bf16.msra.mxu0 0
      %1912 = vmatprep.subr.bf16.mxu0 0
      %1913 = vmatpush1.bf16.msra.mxu0 0
      %1914 = vmatprep.subr.bf16.mxu0 0
      %1915 = vmatpush1.bf16.msra.mxu0 0
      %1916 = vmatprep.subr.bf16.mxu0 0
      %1917 = vmatpush1.bf16.msra.mxu0 0
      %1918 = vmatprep.subr.bf16.mxu0 0
      %1919 = vmatpush1.bf16.msra.mxu0 0
      %1920 = vmatprep.subr.bf16.mxu0 0
      %1921 = vmatpush1.bf16.msra.mxu0 0
      %1922 = vmatprep.subr.bf16.mxu0 0
      %1923 = vmatpush1.bf16.msra.mxu0 0
      %1924 = vmatprep.subr.bf16.mxu0 0
      %1925 = vmatpush1.bf16.msra.mxu0 0
      %1926 = vmatprep.subr.bf16.mxu0 0
      %1927 = vmatpush1.bf16.msra.mxu0 0
      %1928 = vmatprep.subr.bf16.mxu0 0
      %1929 = vmatpush1.bf16.msra.mxu0 0
      %1930 = vmatprep.subr.bf16.mxu0 0
      %1931 = vmatpush1.bf16.msra.mxu0 0
      %1932 = vmatprep.subr.bf16.mxu0 0
      %1933 = vmatpush1.bf16.msra.mxu0 0
      %1934 = vmatprep.subr.bf16.mxu0 0
      %1935 = vmatpush1.bf16.msra.mxu0 0
      %1936 = vmatprep.mubr.bf16.mxu0 0
      %1937 = vmatmul.mubr.bf16.gmra.mrb[0].mxu0 %v1902
      %v1938 = vpop.f32.mrb[0].mxu0
      %v1939 = vadd.f32 0.0, %v1938
      %v1940 = vpop.f32.mrb[0].mxu0
      %v1941 = vpop.f32.mrb[0].mxu0
      %v1942 = vadd.f32 0.0, %v1941
      %v1943 = vpop.f32.mrb[0].mxu0
      %1944 = vdwg.mxu0
      %v1946 = vsel %vm1452, %v1636, 0
      %1948 = vmatprep.subr.bf16.mxu0 0
      %1949 = vmatpush1.bf16.msra.mxu0 %v994
      %1950 = vmatprep.subr.bf16.mxu0 0
      %1951 = vmatpush1.bf16.msra.mxu0 0
      %1952 = vmatprep.subr.bf16.mxu0 0
      %1953 = vmatpush1.bf16.msra.mxu0 0
      %1954 = vmatprep.subr.bf16.mxu0 0
      %1955 = vmatpush1.bf16.msra.mxu0 0
      %1956 = vmatprep.subr.bf16.mxu0 0
      %1957 = vmatpush1.bf16.msra.mxu0 0
      %1958 = vmatprep.subr.bf16.mxu0 0
      %1959 = vmatpush1.bf16.msra.mxu0 0
      %1960 = vmatprep.subr.bf16.mxu0 0
      %1961 = vmatpush1.bf16.msra.mxu0 0
      %1962 = vmatprep.subr.bf16.mxu0 0
      %1963 = vmatpush1.bf16.msra.mxu0 0
      %1964 = vmatprep.subr.bf16.mxu0 0
      %1965 = vmatpush1.bf16.msra.mxu0 0
      %1966 = vmatprep.subr.bf16.mxu0 0
      %1967 = vmatpush1.bf16.msra.mxu0 0
      %1968 = vmatprep.subr.bf16.mxu0 0
      %1969 = vmatpush1.bf16.msra.mxu0 0
      %1970 = vmatprep.subr.bf16.mxu0 0
      %1971 = vmatpush1.bf16.msra.mxu0 0
      %1972 = vmatprep.subr.bf16.mxu0 0
      %1973 = vmatpush1.bf16.msra.mxu0 0
      %1974 = vmatprep.subr.bf16.mxu0 0
      %1975 = vmatpush1.bf16.msra.mxu0 0
      %1976 = vmatprep.subr.bf16.mxu0 0
      %1977 = vmatpush1.bf16.msra.mxu0 0
      %1978 = vmatprep.subr.bf16.mxu0 0
      %1979 = vmatpush1.bf16.msra.mxu0 0
      %1980 = vmatprep.mubr.bf16.mxu0 0
      %1981 = vmatmul.mubr.bf16.gmra.mrb[0].mxu0 %v1946
      %v1982 = vpop.f32.mrb[0].mxu0
      %v1983 = vadd.f32 0.0, %v1982
      %v1984 = vpop.f32.mrb[0].mxu0
      %v1985 = vpop.f32.mrb[0].mxu0
      %v1986 = vadd.f32 0.0, %v1985
      %v1987 = vpop.f32.mrb[0].mxu0
      %1988 = vdwg.mxu0
      %1990 = vrot.lane.b32.xlu0 %v971, 96
      %v1991 = vpop.permute.xlu0 %1990
      %1993 = vrot.lane.b32.xlu0 %v979, 96
      %v1994 = vpop.permute.xlu0 %1993
      %v1996 = vsel %vm995, %v1991, 0
      %v1999 = vsel %vm995, %v1994, 0
      %2001 = vmatprep.subr.bf16.mxu0 0
      %2002 = vmatpush1.bf16.xpose.msra.mxu0 %v1999
      %2003 = vmatprep.subr.bf16.mxu0 0
      %2004 = vmatpush1.bf16.xpose.msra.mxu0 0
      %2005 = vmatprep.subr.bf16.mxu0 0
      %2006 = vmatpush1.bf16.xpose.msra.mxu0 0
      %2007 = vmatprep.subr.bf16.mxu0 0
      %2008 = vmatpush1.bf16.xpose.msra.mxu0 0
      %2009 = vmatprep.subr.bf16.mxu0 0
      %2010 = vmatpush1.bf16.xpose.msra.mxu0 0
      %2011 = vmatprep.subr.bf16.mxu0 0
      %2012 = vmatpush1.bf16.xpose.msra.mxu0 0
      %2013 = vmatprep.subr.bf16.mxu0 0
      %2014 = vmatpush1.bf16.xpose.msra.mxu0 0
      %2015 = vmatprep.subr.bf16.mxu0 0
      %2016 = vmatpush1.bf16.xpose.msra.mxu0 0
      %2017 = vmatprep.subr.bf16.mxu0 0
      %2018 = vmatpush1.bf16.xpose.msra.mxu0 0
      %2019 = vmatprep.subr.bf16.mxu0 0
      %2020 = vmatpush1.bf16.xpose.msra.mxu0 0
      %2021 = vmatprep.subr.bf16.mxu0 0
      %2022 = vmatpush1.bf16.xpose.msra.mxu0 0
      %2023 = vmatprep.subr.bf16.mxu0 0
      %2024 = vmatpush1.bf16.xpose.msra.mxu0 0
      %2025 = vmatprep.subr.bf16.mxu0 0
      %2026 = vmatpush1.bf16.xpose.msra.mxu0 0
      %2027 = vmatprep.subr.bf16.mxu0 0
      %2028 = vmatpush1.bf16.xpose.msra.mxu0 0
      %2029 = vmatprep.subr.bf16.mxu0 0
      %2030 = vmatpush1.bf16.xpose.msra.mxu0 0
      %2031 = vmatprep.subr.bf16.mxu0 0
      %2032 = vmatpush1.bf16.xpose.msra.mxu0 0
      %2033 = vmatprep.mubr.bf16.mxu0 0
      %2034 = vmatmul.mubr.bf16.gmra.mrb[0].mxu0 %v1996
      %v2035 = vpop.f32.mrb[0].mxu0
      %v2036 = vadd.f32 0.0, %v2035
      %v2037 = vpop.f32.mrb[0].mxu0
      %v2038 = vpop.f32.mrb[0].mxu0
      %v2039 = vadd.f32 0.0, %v2038
      %v2040 = vpop.f32.mrb[0].mxu0
      %2041 = vdwg.mxu0
      %2043 = vrot.lane.b32.xlu0 %v972, 96
      %v2044 = vpop.permute.xlu0 %2043
      %2046 = vrot.lane.b32.xlu0 %v980, 96
      %v2047 = vpop.permute.xlu0 %2046
      %v2049 = vsel %vm995, %v2044, 0
      %v2052 = vsel %vm995, %v2047, 0
      %2054 = vmatprep.subr.bf16.mxu0 0
      %2055 = vmatpush1.bf16.xpose.msra.mxu0 %v2052
      %2056 = vmatprep.subr.bf16.mxu0 0
      %2057 = vmatpush1.bf16.xpose.msra.mxu0 0
      %2058 = vmatprep.subr.bf16.mxu0 0
      %2059 = vmatpush1.bf16.xpose.msra.mxu0 0
      %2060 = vmatprep.subr.bf16.mxu0 0
      %2061 = vmatpush1.bf16.xpose.msra.mxu0 0
      %2062 = vmatprep.subr.bf16.mxu0 0
      %2063 = vmatpush1.bf16.xpose.msra.mxu0 0
      %2064 = vmatprep.subr.bf16.mxu0 0
      %2065 = vmatpush1.bf16.xpose.msra.mxu0 0
      %2066 = vmatprep.subr.bf16.mxu0 0
      %2067 = vmatpush1.bf16.xpose.msra.mxu0 0
      %2068 = vmatprep.subr.bf16.mxu0 0
      %2069 = vmatpush1.bf16.xpose.msra.mxu0 0
      %2070 = vmatprep.subr.bf16.mxu0 0
      %2071 = vmatpush1.bf16.xpose.msra.mxu0 0
      %2072 = vmatprep.subr.bf16.mxu0 0
      %2073 = vmatpush1.bf16.xpose.msra.mxu0 0
      %2074 = vmatprep.subr.bf16.mxu0 0
      %2075 = vmatpush1.bf16.xpose.msra.mxu0 0
      %2076 = vmatprep.subr.bf16.mxu0 0
      %2077 = vmatpush1.bf16.xpose.msra.mxu0 0
      %2078 = vmatprep.subr.bf16.mxu0 0
      %2079 = vmatpush1.bf16.xpose.msra.mxu0 0
      %2080 = vmatprep.subr.bf16.mxu0 0
      %2081 = vmatpush1.bf16.xpose.msra.mxu0 0
      %2082 = vmatprep.subr.bf16.mxu0 0
      %2083 = vmatpush1.bf16.xpose.msra.mxu0 0
      %2084 = vmatprep.subr.bf16.mxu0 0
      %2085 = vmatpush1.bf16.xpose.msra.mxu0 0
      %2086 = vmatprep.mubr.bf16.mxu0 0
      %2087 = vmatmul.mubr.bf16.gmra.mrb[0].mxu0 %v2049
      %v2088 = vpop.f32.mrb[0].mxu0
      %v2089 = vadd.f32 0.0, %v2088
      %v2090 = vpop.f32.mrb[0].mxu0
      %v2091 = vpop.f32.mrb[0].mxu0
      %v2092 = vadd.f32 0.0, %v2091
      %v2093 = vpop.f32.mrb[0].mxu0
      %2094 = vdwg.mxu0
      %2096 = vrot.lane.b32.xlu0 %v973, 96
      %v2097 = vpop.permute.xlu0 %2096
      %2099 = vrot.lane.b32.xlu0 %v981, 96
      %v2100 = vpop.permute.xlu0 %2099
      %v2102 = vsel %vm995, %v2097, 0
      %v2105 = vsel %vm995, %v2100, 0
      %2107 = vmatprep.subr.bf16.mxu0 0
      %2108 = vmatpush1.bf16.xpose.msra.mxu0 %v2105
      %2109 = vmatprep.subr.bf16.mxu0 0
      %2110 = vmatpush1.bf16.xpose.msra.mxu0 0
      %2111 = vmatprep.subr.bf16.mxu0 0
      %2112 = vmatpush1.bf16.xpose.msra.mxu0 0
      %2113 = vmatprep.subr.bf16.mxu0 0
      %2114 = vmatpush1.bf16.xpose.msra.mxu0 0
      %2115 = vmatprep.subr.bf16.mxu0 0
      %2116 = vmatpush1.bf16.xpose.msra.mxu0 0
      %2117 = vmatprep.subr.bf16.mxu0 0
      %2118 = vmatpush1.bf16.xpose.msra.mxu0 0
      %2119 = vmatprep.subr.bf16.mxu0 0
      %2120 = vmatpush1.bf16.xpose.msra.mxu0 0
      %2121 = vmatprep.subr.bf16.mxu0 0
      %2122 = vmatpush1.bf16.xpose.msra.mxu0 0
      %2123 = vmatprep.subr.bf16.mxu0 0
      %2124 = vmatpush1.bf16.xpose.msra.mxu0 0
      %2125 = vmatprep.subr.bf16.mxu0 0
      %2126 = vmatpush1.bf16.xpose.msra.mxu0 0
      %2127 = vmatprep.subr.bf16.mxu0 0
      %2128 = vmatpush1.bf16.xpose.msra.mxu0 0
      %2129 = vmatprep.subr.bf16.mxu0 0
      %2130 = vmatpush1.bf16.xpose.msra.mxu0 0
      %2131 = vmatprep.subr.bf16.mxu0 0
      %2132 = vmatpush1.bf16.xpose.msra.mxu0 0
      %2133 = vmatprep.subr.bf16.mxu0 0
      %2134 = vmatpush1.bf16.xpose.msra.mxu0 0
      %2135 = vmatprep.subr.bf16.mxu0 0
      %2136 = vmatpush1.bf16.xpose.msra.mxu0 0
      %2137 = vmatprep.subr.bf16.mxu0 0
      %2138 = vmatpush1.bf16.xpose.msra.mxu0 0
      %2139 = vmatprep.mubr.bf16.mxu0 0
      %2140 = vmatmul.mubr.bf16.gmra.mrb[0].mxu0 %v2102
      %v2141 = vpop.f32.mrb[0].mxu0
      %v2142 = vadd.f32 0.0, %v2141
      %v2143 = vpop.f32.mrb[0].mxu0
      %v2144 = vpop.f32.mrb[0].mxu0
      %v2145 = vadd.f32 0.0, %v2144
      %v2146 = vpop.f32.mrb[0].mxu0
      %2147 = vdwg.mxu0
      %2149 = vrot.lane.b32.xlu0 %v974, 96
      %v2150 = vpop.permute.xlu0 %2149
      %2152 = vrot.lane.b32.xlu0 %v982, 96
      %v2153 = vpop.permute.xlu0 %2152
      %v2155 = vsel %vm995, %v2150, 0
      %v2158 = vsel %vm995, %v2153, 0
      %2160 = vmatprep.subr.bf16.mxu0 0
      %2161 = vmatpush1.bf16.xpose.msra.mxu0 %v2158
      %2162 = vmatprep.subr.bf16.mxu0 0
      %2163 = vmatpush1.bf16.xpose.msra.mxu0 0
      %2164 = vmatprep.subr.bf16.mxu0 0
      %2165 = vmatpush1.bf16.xpose.msra.mxu0 0
      %2166 = vmatprep.subr.bf16.mxu0 0
      %2167 = vmatpush1.bf16.xpose.msra.mxu0 0
      %2168 = vmatprep.subr.bf16.mxu0 0
      %2169 = vmatpush1.bf16.xpose.msra.mxu0 0
      %2170 = vmatprep.subr.bf16.mxu0 0
      %2171 = vmatpush1.bf16.xpose.msra.mxu0 0
      %2172 = vmatprep.subr.bf16.mxu0 0
      %2173 = vmatpush1.bf16.xpose.msra.mxu0 0
      %2174 = vmatprep.subr.bf16.mxu0 0
      %2175 = vmatpush1.bf16.xpose.msra.mxu0 0
      %2176 = vmatprep.subr.bf16.mxu0 0
      %2177 = vmatpush1.bf16.xpose.msra.mxu0 0
      %2178 = vmatprep.subr.bf16.mxu0 0
      %2179 = vmatpush1.bf16.xpose.msra.mxu0 0
      %2180 = vmatprep.subr.bf16.mxu0 0
      %2181 = vmatpush1.bf16.xpose.msra.mxu0 0
      %2182 = vmatprep.subr.bf16.mxu0 0
      %2183 = vmatpush1.bf16.xpose.msra.mxu0 0
      %2184 = vmatprep.subr.bf16.mxu0 0
      %2185 = vmatpush1.bf16.xpose.msra.mxu0 0
      %2186 = vmatprep.subr.bf16.mxu0 0
      %2187 = vmatpush1.bf16.xpose.msra.mxu0 0
      %2188 = vmatprep.subr.bf16.mxu0 0
      %2189 = vmatpush1.bf16.xpose.msra.mxu0 0
      %2190 = vmatprep.subr.bf16.mxu0 0
      %2191 = vmatpush1.bf16.xpose.msra.mxu0 0
      %2192 = vmatprep.mubr.bf16.mxu0 0
      %2193 = vmatmul.mubr.bf16.gmra.mrb[0].mxu0 %v2155
      %v2194 = vpop.f32.mrb[0].mxu0
      %v2195 = vadd.f32 0.0, %v2194
      %v2196 = vpop.f32.mrb[0].mxu0
      %v2197 = vpop.f32.mrb[0].mxu0
      %v2198 = vadd.f32 0.0, %v2197
      %v2199 = vpop.f32.mrb[0].mxu0
      %2200 = vdwg.mxu0
      %2202 = vrot.lane.b32.xlu0 %v975, 96
      %v2203 = vpop.permute.xlu0 %2202
      %2205 = vrot.lane.b32.xlu0 %v983, 96
      %v2206 = vpop.permute.xlu0 %2205
      %v2208 = vsel %vm995, %v2203, 0
      %v2211 = vsel %vm995, %v2206, 0
      %2213 = vmatprep.subr.bf16.mxu0 0
      %2214 = vmatpush1.bf16.xpose.msra.mxu0 %v2211
      %2215 = vmatprep.subr.bf16.mxu0 0
      %2216 = vmatpush1.bf16.xpose.msra.mxu0 0
      %2217 = vmatprep.subr.bf16.mxu0 0
      %2218 = vmatpush1.bf16.xpose.msra.mxu0 0
      %2219 = vmatprep.subr.bf16.mxu0 0
      %2220 = vmatpush1.bf16.xpose.msra.mxu0 0
      %2221 = vmatprep.subr.bf16.mxu0 0
      %2222 = vmatpush1.bf16.xpose.msra.mxu0 0
      %2223 = vmatprep.subr.bf16.mxu0 0
      %2224 = vmatpush1.bf16.xpose.msra.mxu0 0
      %2225 = vmatprep.subr.bf16.mxu0 0
      %2226 = vmatpush1.bf16.xpose.msra.mxu0 0
      %2227 = vmatprep.subr.bf16.mxu0 0
      %2228 = vmatpush1.bf16.xpose.msra.mxu0 0
      %2229 = vmatprep.subr.bf16.mxu0 0
      %2230 = vmatpush1.bf16.xpose.msra.mxu0 0
      %2231 = vmatprep.subr.bf16.mxu0 0
      %2232 = vmatpush1.bf16.xpose.msra.mxu0 0
      %2233 = vmatprep.subr.bf16.mxu0 0
      %2234 = vmatpush1.bf16.xpose.msra.mxu0 0
      %2235 = vmatprep.subr.bf16.mxu0 0
      %2236 = vmatpush1.bf16.xpose.msra.mxu0 0
      %2237 = vmatprep.subr.bf16.mxu0 0
      %2238 = vmatpush1.bf16.xpose.msra.mxu0 0
      %2239 = vmatprep.subr.bf16.mxu0 0
      %2240 = vmatpush1.bf16.xpose.msra.mxu0 0
      %2241 = vmatprep.subr.bf16.mxu0 0
      %2242 = vmatpush1.bf16.xpose.msra.mxu0 0
      %2243 = vmatprep.subr.bf16.mxu0 0
      %2244 = vmatpush1.bf16.xpose.msra.mxu0 0
      %2245 = vmatprep.mubr.bf16.mxu0 0
      %2246 = vmatmul.mubr.bf16.gmra.mrb[0].mxu0 %v2208
      %v2247 = vpop.f32.mrb[0].mxu0
      %v2248 = vadd.f32 0.0, %v2247
      %v2249 = vpop.f32.mrb[0].mxu0
      %v2250 = vpop.f32.mrb[0].mxu0
      %v2251 = vadd.f32 0.0, %v2250
      %v2252 = vpop.f32.mrb[0].mxu0
      %2253 = vdwg.mxu0
      %2255 = vrot.lane.b32.xlu0 %v976, 96
      %v2256 = vpop.permute.xlu0 %2255
      %2258 = vrot.lane.b32.xlu0 %v984, 96
      %v2259 = vpop.permute.xlu0 %2258
      %v2261 = vsel %vm995, %v2256, 0
      %v2264 = vsel %vm995, %v2259, 0
      %2266 = vmatprep.subr.bf16.mxu0 0
      %2267 = vmatpush1.bf16.xpose.msra.mxu0 %v2264
      %2268 = vmatprep.subr.bf16.mxu0 0
      %2269 = vmatpush1.bf16.xpose.msra.mxu0 0
      %2270 = vmatprep.subr.bf16.mxu0 0
      %2271 = vmatpush1.bf16.xpose.msra.mxu0 0
      %2272 = vmatprep.subr.bf16.mxu0 0
      %2273 = vmatpush1.bf16.xpose.msra.mxu0 0
      %2274 = vmatprep.subr.bf16.mxu0 0
      %2275 = vmatpush1.bf16.xpose.msra.mxu0 0
      %2276 = vmatprep.subr.bf16.mxu0 0
      %2277 = vmatpush1.bf16.xpose.msra.mxu0 0
      %2278 = vmatprep.subr.bf16.mxu0 0
      %2279 = vmatpush1.bf16.xpose.msra.mxu0 0
      %2280 = vmatprep.subr.bf16.mxu0 0
      %2281 = vmatpush1.bf16.xpose.msra.mxu0 0
      %2282 = vmatprep.subr.bf16.mxu0 0
      %2283 = vmatpush1.bf16.xpose.msra.mxu0 0
      %2284 = vmatprep.subr.bf16.mxu0 0
      %2285 = vmatpush1.bf16.xpose.msra.mxu0 0
      %2286 = vmatprep.subr.bf16.mxu0 0
      %2287 = vmatpush1.bf16.xpose.msra.mxu0 0
      %2288 = vmatprep.subr.bf16.mxu0 0
      %2289 = vmatpush1.bf16.xpose.msra.mxu0 0
      %2290 = vmatprep.subr.bf16.mxu0 0
      %2291 = vmatpush1.bf16.xpose.msra.mxu0 0
      %2292 = vmatprep.subr.bf16.mxu0 0
      %2293 = vmatpush1.bf16.xpose.msra.mxu0 0
      %2294 = vmatprep.subr.bf16.mxu0 0
      %2295 = vmatpush1.bf16.xpose.msra.mxu0 0
      %2296 = vmatprep.subr.bf16.mxu0 0
      %2297 = vmatpush1.bf16.xpose.msra.mxu0 0
      %2298 = vmatprep.mubr.bf16.mxu0 0
      %2299 = vmatmul.mubr.bf16.gmra.mrb[0].mxu0 %v2261
      %v2300 = vpop.f32.mrb[0].mxu0
      %v2301 = vadd.f32 0.0, %v2300
      %v2302 = vpop.f32.mrb[0].mxu0
      %v2303 = vpop.f32.mrb[0].mxu0
      %v2304 = vadd.f32 0.0, %v2303
      %v2305 = vpop.f32.mrb[0].mxu0
      %2306 = vdwg.mxu0
      %2308 = vrot.lane.b32.xlu0 %v977, 96
      %v2309 = vpop.permute.xlu0 %2308
      %2311 = vrot.lane.b32.xlu0 %v985, 96
      %v2312 = vpop.permute.xlu0 %2311
      %v2314 = vsel %vm995, %v2309, 0
      %v2317 = vsel %vm995, %v2312, 0
      %2319 = vmatprep.subr.bf16.mxu0 0
      %2320 = vmatpush1.bf16.xpose.msra.mxu0 %v2317
      %2321 = vmatprep.subr.bf16.mxu0 0
      %2322 = vmatpush1.bf16.xpose.msra.mxu0 0
      %2323 = vmatprep.subr.bf16.mxu0 0
      %2324 = vmatpush1.bf16.xpose.msra.mxu0 0
      %2325 = vmatprep.subr.bf16.mxu0 0
      %2326 = vmatpush1.bf16.xpose.msra.mxu0 0
      %2327 = vmatprep.subr.bf16.mxu0 0
      %2328 = vmatpush1.bf16.xpose.msra.mxu0 0
      %2329 = vmatprep.subr.bf16.mxu0 0
      %2330 = vmatpush1.bf16.xpose.msra.mxu0 0
      %2331 = vmatprep.subr.bf16.mxu0 0
      %2332 = vmatpush1.bf16.xpose.msra.mxu0 0
      %2333 = vmatprep.subr.bf16.mxu0 0
      %2334 = vmatpush1.bf16.xpose.msra.mxu0 0
      %2335 = vmatprep.subr.bf16.mxu0 0
      %2336 = vmatpush1.bf16.xpose.msra.mxu0 0
      %2337 = vmatprep.subr.bf16.mxu0 0
      %2338 = vmatpush1.bf16.xpose.msra.mxu0 0
      %2339 = vmatprep.subr.bf16.mxu0 0
      %2340 = vmatpush1.bf16.xpose.msra.mxu0 0
      %2341 = vmatprep.subr.bf16.mxu0 0
      %2342 = vmatpush1.bf16.xpose.msra.mxu0 0
      %2343 = vmatprep.subr.bf16.mxu0 0
      %2344 = vmatpush1.bf16.xpose.msra.mxu0 0
      %2345 = vmatprep.subr.bf16.mxu0 0
      %2346 = vmatpush1.bf16.xpose.msra.mxu0 0
      %2347 = vmatprep.subr.bf16.mxu0 0
      %2348 = vmatpush1.bf16.xpose.msra.mxu0 0
      %2349 = vmatprep.subr.bf16.mxu0 0
      %2350 = vmatpush1.bf16.xpose.msra.mxu0 0
      %2351 = vmatprep.mubr.bf16.mxu0 0
      %2352 = vmatmul.mubr.bf16.gmra.mrb[0].mxu0 %v2314
      %v2353 = vpop.f32.mrb[0].mxu0
      %v2354 = vadd.f32 0.0, %v2353
      %v2355 = vpop.f32.mrb[0].mxu0
      %v2356 = vpop.f32.mrb[0].mxu0
      %v2357 = vadd.f32 0.0, %v2356
      %v2358 = vpop.f32.mrb[0].mxu0
      %2359 = vdwg.mxu0
      %2361 = vrot.lane.b32.xlu0 %v978, 96
      %v2362 = vpop.permute.xlu0 %2361
      %2364 = vrot.lane.b32.xlu0 %v986, 96
      %v2365 = vpop.permute.xlu0 %2364
      %v2367 = vsel %vm995, %v2362, 0
      %v2370 = vsel %vm995, %v2365, 0
      %2372 = vmatprep.subr.bf16.mxu0 0
      %2373 = vmatpush1.bf16.xpose.msra.mxu0 %v2370
      %2374 = vmatprep.subr.bf16.mxu0 0
      %2375 = vmatpush1.bf16.xpose.msra.mxu0 0
      %2376 = vmatprep.subr.bf16.mxu0 0
      %2377 = vmatpush1.bf16.xpose.msra.mxu0 0
      %2378 = vmatprep.subr.bf16.mxu0 0
      %2379 = vmatpush1.bf16.xpose.msra.mxu0 0
      %2380 = vmatprep.subr.bf16.mxu0 0
      %2381 = vmatpush1.bf16.xpose.msra.mxu0 0
      %2382 = vmatprep.subr.bf16.mxu0 0
      %2383 = vmatpush1.bf16.xpose.msra.mxu0 0
      %2384 = vmatprep.subr.bf16.mxu0 0
      %2385 = vmatpush1.bf16.xpose.msra.mxu0 0
      %2386 = vmatprep.subr.bf16.mxu0 0
      %2387 = vmatpush1.bf16.xpose.msra.mxu0 0
      %2388 = vmatprep.subr.bf16.mxu0 0
      %2389 = vmatpush1.bf16.xpose.msra.mxu0 0
      %2390 = vmatprep.subr.bf16.mxu0 0
      %2391 = vmatpush1.bf16.xpose.msra.mxu0 0
      %2392 = vmatprep.subr.bf16.mxu0 0
      %2393 = vmatpush1.bf16.xpose.msra.mxu0 0
      %2394 = vmatprep.subr.bf16.mxu0 0
      %2395 = vmatpush1.bf16.xpose.msra.mxu0 0
      %2396 = vmatprep.subr.bf16.mxu0 0
      %2397 = vmatpush1.bf16.xpose.msra.mxu0 0
      %2398 = vmatprep.subr.bf16.mxu0 0
      %2399 = vmatpush1.bf16.xpose.msra.mxu0 0
      %2400 = vmatprep.subr.bf16.mxu0 0
      %2401 = vmatpush1.bf16.xpose.msra.mxu0 0
      %2402 = vmatprep.subr.bf16.mxu0 0
      %2403 = vmatpush1.bf16.xpose.msra.mxu0 0
      %2404 = vmatprep.mubr.bf16.mxu0 0
      %2405 = vmatmul.mubr.bf16.gmra.mrb[0].mxu0 %v2367
      %v2406 = vpop.f32.mrb[0].mxu0
      %v2407 = vadd.f32 0.0, %v2406
      %v2408 = vpop.f32.mrb[0].mxu0
      %v2409 = vpop.f32.mrb[0].mxu0
      %v2410 = vadd.f32 0.0, %v2409
      %v2411 = vpop.f32.mrb[0].mxu0
      %2412 = vdwg.mxu0
      %v2413 = vmul.f32 %v2036, 0.17677669
      %v2414 = vmul.f32 %v2039, 0.17677669
      %v2415 = vmul.f32 %v2089, 0.17677669
      %v2416 = vmul.f32 %v2092, 0.17677669
      %v2417 = vmul.f32 %v2142, 0.17677669
      %v2418 = vmul.f32 %v2145, 0.17677669
      %v2419 = vmul.f32 %v2195, 0.17677669
      %v2420 = vmul.f32 %v2198, 0.17677669
      %v2421 = vmul.f32 %v2248, 0.17677669
      %v2422 = vmul.f32 %v2251, 0.17677669
      %v2423 = vmul.f32 %v2301, 0.17677669
      %v2424 = vmul.f32 %v2304, 0.17677669
      %v2425 = vmul.f32 %v2354, 0.17677669
      %v2426 = vmul.f32 %v2357, 0.17677669
      %v2427 = vmul.f32 %v2407, 0.17677669
      %v2428 = vmul.f32 %v2410, 0.17677669
      %v2429 = vadd.f32 %v2413, %v1399
      %v2430 = vadd.f32 %v2414, %v1399
      %v2431 = vadd.f32 %v2415, %v1403
      %v2432 = vadd.f32 %v2416, %v1403
      %v2433 = vadd.f32 %v2417, %v1407
      %v2434 = vadd.f32 %v2418, %v1407
      %v2435 = vadd.f32 %v2419, %v1411
      %v2436 = vadd.f32 %v2420, %v1411
      %v2437 = vadd.f32 %v2421, %v1415
      %v2438 = vadd.f32 %v2422, %v1415
      %v2439 = vadd.f32 %v2423, %v1419
      %v2440 = vadd.f32 %v2424, %v1419
      %v2441 = vadd.f32 %v2425, %v1423
      %v2442 = vadd.f32 %v2426, %v1423
      %v2443 = vadd.f32 %v2427, %v1427
      %v2444 = vadd.f32 %v2428, %v1427
      %v2445 = vsel %vm1452, %v2429, -inf
      %2446 = vmax.xlane.f32.xlu0 %v2445
      %v2447 = vpop.xlane.xlu0 %2446
      %v2448 = vsel %vm1452, %v2430, -inf
      %2449 = vmax.xlane.f32.xlu0 %v2448
      %v2450 = vpop.xlane.xlu0 %2449
      %v2451 = vsel %vm1452, %v2431, -inf
      %2452 = vmax.xlane.f32.xlu0 %v2451
      %v2453 = vpop.xlane.xlu0 %2452
      %v2454 = vsel %vm1452, %v2432, -inf
      %2455 = vmax.xlane.f32.xlu0 %v2454
      %v2456 = vpop.xlane.xlu0 %2455
      %v2457 = vsel %vm1452, %v2433, -inf
      %2458 = vmax.xlane.f32.xlu0 %v2457
      %v2459 = vpop.xlane.xlu0 %2458
      %v2460 = vsel %vm1452, %v2434, -inf
      %2461 = vmax.xlane.f32.xlu0 %v2460
      %v2462 = vpop.xlane.xlu0 %2461
      %v2463 = vsel %vm1452, %v2435, -inf
      %2464 = vmax.xlane.f32.xlu0 %v2463
      %v2465 = vpop.xlane.xlu0 %2464
      %v2466 = vsel %vm1452, %v2436, -inf
      %2467 = vmax.xlane.f32.xlu0 %v2466
      %v2468 = vpop.xlane.xlu0 %2467
      %v2469 = vsel %vm1452, %v2437, -inf
      %2470 = vmax.xlane.f32.xlu0 %v2469
      %v2471 = vpop.xlane.xlu0 %2470
      %v2472 = vsel %vm1452, %v2438, -inf
      %2473 = vmax.xlane.f32.xlu0 %v2472
      %v2474 = vpop.xlane.xlu0 %2473
      %v2475 = vsel %vm1452, %v2439, -inf
      %2476 = vmax.xlane.f32.xlu0 %v2475
      %v2477 = vpop.xlane.xlu0 %2476
      %v2478 = vsel %vm1452, %v2440, -inf
      %2479 = vmax.xlane.f32.xlu0 %v2478
      %v2480 = vpop.xlane.xlu0 %2479
      %v2481 = vsel %vm1452, %v2441, -inf
      %2482 = vmax.xlane.f32.xlu0 %v2481
      %v2483 = vpop.xlane.xlu0 %2482
      %v2484 = vsel %vm1452, %v2442, -inf
      %2485 = vmax.xlane.f32.xlu0 %v2484
      %v2486 = vpop.xlane.xlu0 %2485
      %v2487 = vsel %vm1452, %v2443, -inf
      %2488 = vmax.xlane.f32.xlu0 %v2487
      %v2489 = vpop.xlane.xlu0 %2488
      %v2490 = vsel %vm1452, %v2444, -inf
      %2491 = vmax.xlane.f32.xlu0 %v2490
      %v2492 = vpop.xlane.xlu0 %2491
      %v2493 = vsub.f32 %v2429, %v2447
      %v2494 = vsub.f32 %v2430, %v2450
      %v2495 = vsub.f32 %v2431, %v2453
      %v2496 = vsub.f32 %v2432, %v2456
      %v2497 = vsub.f32 %v2433, %v2459
      %v2498 = vsub.f32 %v2434, %v2462
      %v2499 = vsub.f32 %v2435, %v2465
      %v2500 = vsub.f32 %v2436, %v2468
      %v2501 = vsub.f32 %v2437, %v2471
      %v2502 = vsub.f32 %v2438, %v2474
      %v2503 = vsub.f32 %v2439, %v2477
      %v2504 = vsub.f32 %v2440, %v2480
      %v2505 = vsub.f32 %v2441, %v2483
      %v2506 = vsub.f32 %v2442, %v2486
      %v2507 = vsub.f32 %v2443, %v2489
      %v2508 = vsub.f32 %v2444, %v2492
      %v2509 = vmul.f32 %v2493, 1.442695
      %v2510 = vpow.pop %v2509
      %v2511 = vmul.f32 %v2494, 1.442695
      %v2512 = vpow.pop %v2511
      %v2513 = vmul.f32 %v2495, 1.442695
      %v2514 = vpow.pop %v2513
      %v2515 = vmul.f32 %v2496, 1.442695
      %v2516 = vpow.pop %v2515
      %v2517 = vmul.f32 %v2497, 1.442695
      %v2518 = vpow.pop %v2517
      %v2519 = vmul.f32 %v2498, 1.442695
      %v2520 = vpow.pop %v2519
      %v2521 = vmul.f32 %v2499, 1.442695
      %v2522 = vpow.pop %v2521
      %v2523 = vmul.f32 %v2500, 1.442695
      %v2524 = vpow.pop %v2523
      %v2525 = vmul.f32 %v2501, 1.442695
      %v2526 = vpow.pop %v2525
      %v2527 = vmul.f32 %v2502, 1.442695
      %v2528 = vpow.pop %v2527
      %v2529 = vmul.f32 %v2503, 1.442695
      %v2530 = vpow.pop %v2529
      %v2531 = vmul.f32 %v2504, 1.442695
      %v2532 = vpow.pop %v2531
      %v2533 = vmul.f32 %v2505, 1.442695
      %v2534 = vpow.pop %v2533
      %v2535 = vmul.f32 %v2506, 1.442695
      %v2536 = vpow.pop %v2535
      %v2537 = vmul.f32 %v2507, 1.442695
      %v2538 = vpow.pop %v2537
      %v2539 = vmul.f32 %v2508, 1.442695
      %v2540 = vpow.pop %v2539
      %v2541 = vsel %vm1452, %v2510, 0.0
      %2542 = vadd.xlane.f32.xlu0 %v2541
      %v2543 = vpop.xlane.xlu0 %2542
      %v2544 = vsel %vm1452, %v2512, 0.0
      %2545 = vadd.xlane.f32.xlu0 %v2544
      %v2546 = vpop.xlane.xlu0 %2545
      %v2547 = vsel %vm1452, %v2514, 0.0
      %2548 = vadd.xlane.f32.xlu0 %v2547
      %v2549 = vpop.xlane.xlu0 %2548
      %v2550 = vsel %vm1452, %v2516, 0.0
      %2551 = vadd.xlane.f32.xlu0 %v2550
      %v2552 = vpop.xlane.xlu0 %2551
      %v2553 = vsel %vm1452, %v2518, 0.0
      %2554 = vadd.xlane.f32.xlu0 %v2553
      %v2555 = vpop.xlane.xlu0 %2554
      %v2556 = vsel %vm1452, %v2520, 0.0
      %2557 = vadd.xlane.f32.xlu0 %v2556
      %v2558 = vpop.xlane.xlu0 %2557
      %v2559 = vsel %vm1452, %v2522, 0.0
      %2560 = vadd.xlane.f32.xlu0 %v2559
      %v2561 = vpop.xlane.xlu0 %2560
      %v2562 = vsel %vm1452, %v2524, 0.0
      %2563 = vadd.xlane.f32.xlu0 %v2562
      %v2564 = vpop.xlane.xlu0 %2563
      %v2565 = vsel %vm1452, %v2526, 0.0
      %2566 = vadd.xlane.f32.xlu0 %v2565
      %v2567 = vpop.xlane.xlu0 %2566
      %v2568 = vsel %vm1452, %v2528, 0.0
      %2569 = vadd.xlane.f32.xlu0 %v2568
      %v2570 = vpop.xlane.xlu0 %2569
      %v2571 = vsel %vm1452, %v2530, 0.0
      %2572 = vadd.xlane.f32.xlu0 %v2571
      %v2573 = vpop.xlane.xlu0 %2572
      %v2574 = vsel %vm1452, %v2532, 0.0
      %2575 = vadd.xlane.f32.xlu0 %v2574
      %v2576 = vpop.xlane.xlu0 %2575
      %v2577 = vsel %vm1452, %v2534, 0.0
      %2578 = vadd.xlane.f32.xlu0 %v2577
      %v2579 = vpop.xlane.xlu0 %2578
      %v2580 = vsel %vm1452, %v2536, 0.0
      %2581 = vadd.xlane.f32.xlu0 %v2580
      %v2582 = vpop.xlane.xlu0 %2581
      %v2583 = vsel %vm1452, %v2538, 0.0
      %2584 = vadd.xlane.f32.xlu0 %v2583
      %v2585 = vpop.xlane.xlu0 %2584
      %v2586 = vsel %vm1452, %v2540, 0.0
      %2587 = vadd.xlane.f32.xlu0 %v2586
      %v2588 = vpop.xlane.xlu0 %2587
      %v2589 = vrcp.pop %v2543
      %v2590 = vmul.f32 %v2510, %v2589
      %v2591 = vrcp.pop %v2546
      %v2592 = vmul.f32 %v2512, %v2591
      %v2593 = vrcp.pop %v2549
      %v2594 = vmul.f32 %v2514, %v2593
      %v2595 = vrcp.pop %v2552
      %v2596 = vmul.f32 %v2516, %v2595
      %v2597 = vrcp.pop %v2555
      %v2598 = vmul.f32 %v2518, %v2597
      %v2599 = vrcp.pop %v2558
      %v2600 = vmul.f32 %v2520, %v2599
      %v2601 = vrcp.pop %v2561
      %v2602 = vmul.f32 %v2522, %v2601
      %v2603 = vrcp.pop %v2564
      %v2604 = vmul.f32 %v2524, %v2603
      %v2605 = vrcp.pop %v2567
      %v2606 = vmul.f32 %v2526, %v2605
      %v2607 = vrcp.pop %v2570
      %v2608 = vmul.f32 %v2528, %v2607
      %v2609 = vrcp.pop %v2573
      %v2610 = vmul.f32 %v2530, %v2609
      %v2611 = vrcp.pop %v2576
      %v2612 = vmul.f32 %v2532, %v2611
      %v2613 = vrcp.pop %v2579
      %v2614 = vmul.f32 %v2534, %v2613
      %v2615 = vrcp.pop %v2582
      %v2616 = vmul.f32 %v2536, %v2615
      %v2617 = vrcp.pop %v2585
      %v2618 = vmul.f32 %v2538, %v2617
      %v2619 = vrcp.pop %v2588
      %v2620 = vmul.f32 %v2540, %v2619
      %v2621 = vpack.c.bf16 %v2592, %v2590
      %v2622 = vpack.c.bf16 %v2596, %v2594
      %v2623 = vpack.c.bf16 %v2600, %v2598
      %v2624 = vpack.c.bf16 %v2604, %v2602
      %v2625 = vpack.c.bf16 %v2608, %v2606
      %v2626 = vpack.c.bf16 %v2612, %v2610
      %v2627 = vpack.c.bf16 %v2616, %v2614
      %v2628 = vpack.c.bf16 %v2620, %v2618
      %2630 = vrot.lane.b32.xlu0 %v987, 96
      %v2631 = vpop.permute.xlu0 %2630
      %v2634 = vsel %vm1452, %v2621, 0
      %2636 = vmatprep.subr.bf16.mxu0 0
      %2637 = vmatpush1.bf16.msra.mxu0 %v2631
      %2638 = vmatprep.subr.bf16.mxu0 0
      %2639 = vmatpush1.bf16.msra.mxu0 0
      %2640 = vmatprep.subr.bf16.mxu0 0
      %2641 = vmatpush1.bf16.msra.mxu0 0
      %2642 = vmatprep.subr.bf16.mxu0 0
      %2643 = vmatpush1.bf16.msra.mxu0 0
      %2644 = vmatprep.subr.bf16.mxu0 0
      %2645 = vmatpush1.bf16.msra.mxu0 0
      %2646 = vmatprep.subr.bf16.mxu0 0
      %2647 = vmatpush1.bf16.msra.mxu0 0
      %2648 = vmatprep.subr.bf16.mxu0 0
      %2649 = vmatpush1.bf16.msra.mxu0 0
      %2650 = vmatprep.subr.bf16.mxu0 0
      %2651 = vmatpush1.bf16.msra.mxu0 0
      %2652 = vmatprep.subr.bf16.mxu0 0
      %2653 = vmatpush1.bf16.msra.mxu0 0
      %2654 = vmatprep.subr.bf16.mxu0 0
      %2655 = vmatpush1.bf16.msra.mxu0 0
      %2656 = vmatprep.subr.bf16.mxu0 0
      %2657 = vmatpush1.bf16.msra.mxu0 0
      %2658 = vmatprep.subr.bf16.mxu0 0
      %2659 = vmatpush1.bf16.msra.mxu0 0
      %2660 = vmatprep.subr.bf16.mxu0 0
      %2661 = vmatpush1.bf16.msra.mxu0 0
      %2662 = vmatprep.subr.bf16.mxu0 0
      %2663 = vmatpush1.bf16.msra.mxu0 0
      %2664 = vmatprep.subr.bf16.mxu0 0
      %2665 = vmatpush1.bf16.msra.mxu0 0
      %2666 = vmatprep.subr.bf16.mxu0 0
      %2667 = vmatpush1.bf16.msra.mxu0 0
      %2668 = vmatprep.mubr.bf16.mxu0 0
      %2669 = vmatmul.mubr.bf16.gmra.mrb[0].mxu0 %v2634
      %v2670 = vpop.f32.mrb[0].mxu0
      %v2671 = vadd.f32 0.0, %v2670
      %v2672 = vpop.f32.mrb[0].mxu0
      %v2673 = vpop.f32.mrb[0].mxu0
      %v2674 = vadd.f32 0.0, %v2673
      %v2675 = vpop.f32.mrb[0].mxu0
      %2676 = vdwg.mxu0
      %2678 = vrot.lane.b32.xlu0 %v988, 96
      %v2679 = vpop.permute.xlu0 %2678
      %v2682 = vsel %vm1452, %v2622, 0
      %2684 = vmatprep.subr.bf16.mxu0 0
      %2685 = vmatpush1.bf16.msra.mxu0 %v2679
      %2686 = vmatprep.subr.bf16.mxu0 0
      %2687 = vmatpush1.bf16.msra.mxu0 0
      %2688 = vmatprep.subr.bf16.mxu0 0
      %2689 = vmatpush1.bf16.msra.mxu0 0
      %2690 = vmatprep.subr.bf16.mxu0 0
      %2691 = vmatpush1.bf16.msra.mxu0 0
      %2692 = vmatprep.subr.bf16.mxu0 0
      %2693 = vmatpush1.bf16.msra.mxu0 0
      %2694 = vmatprep.subr.bf16.mxu0 0
      %2695 = vmatpush1.bf16.msra.mxu0 0
      %2696 = vmatprep.subr.bf16.mxu0 0
      %2697 = vmatpush1.bf16.msra.mxu0 0
      %2698 = vmatprep.subr.bf16.mxu0 0
      %2699 = vmatpush1.bf16.msra.mxu0 0
      %2700 = vmatprep.subr.bf16.mxu0 0
      %2701 = vmatpush1.bf16.msra.mxu0 0
      %2702 = vmatprep.subr.bf16.mxu0 0
      %2703 = vmatpush1.bf16.msra.mxu0 0
      %2704 = vmatprep.subr.bf16.mxu0 0
      %2705 = vmatpush1.bf16.msra.mxu0 0
      %2706 = vmatprep.subr.bf16.mxu0 0
      %2707 = vmatpush1.bf16.msra.mxu0 0
      %2708 = vmatprep.subr.bf16.mxu0 0
      %2709 = vmatpush1.bf16.msra.mxu0 0
      %2710 = vmatprep.subr.bf16.mxu0 0
      %2711 = vmatpush1.bf16.msra.mxu0 0
      %2712 = vmatprep.subr.bf16.mxu0 0
      %2713 = vmatpush1.bf16.msra.mxu0 0
      %2714 = vmatprep.subr.bf16.mxu0 0
      %2715 = vmatpush1.bf16.msra.mxu0 0
      %2716 = vmatprep.mubr.bf16.mxu0 0
      %2717 = vmatmul.mubr.bf16.gmra.mrb[0].mxu0 %v2682
      %v2718 = vpop.f32.mrb[0].mxu0
      %v2719 = vadd.f32 0.0, %v2718
      %v2720 = vpop.f32.mrb[0].mxu0
      %v2721 = vpop.f32.mrb[0].mxu0
      %v2722 = vadd.f32 0.0, %v2721
      %v2723 = vpop.f32.mrb[0].mxu0
      %2724 = vdwg.mxu0
      %2726 = vrot.lane.b32.xlu0 %v989, 96
      %v2727 = vpop.permute.xlu0 %2726
      %v2730 = vsel %vm1452, %v2623, 0
      %2732 = vmatprep.subr.bf16.mxu0 0
      %2733 = vmatpush1.bf16.msra.mxu0 %v2727
      %2734 = vmatprep.subr.bf16.mxu0 0
      %2735 = vmatpush1.bf16.msra.mxu0 0
      %2736 = vmatprep.subr.bf16.mxu0 0
      %2737 = vmatpush1.bf16.msra.mxu0 0
      %2738 = vmatprep.subr.bf16.mxu0 0
      %2739 = vmatpush1.bf16.msra.mxu0 0
      %2740 = vmatprep.subr.bf16.mxu0 0
      %2741 = vmatpush1.bf16.msra.mxu0 0
      %2742 = vmatprep.subr.bf16.mxu0 0
      %2743 = vmatpush1.bf16.msra.mxu0 0
      %2744 = vmatprep.subr.bf16.mxu0 0
      %2745 = vmatpush1.bf16.msra.mxu0 0
      %2746 = vmatprep.subr.bf16.mxu0 0
      %2747 = vmatpush1.bf16.msra.mxu0 0
      %2748 = vmatprep.subr.bf16.mxu0 0
      %2749 = vmatpush1.bf16.msra.mxu0 0
      %2750 = vmatprep.subr.bf16.mxu0 0
      %2751 = vmatpush1.bf16.msra.mxu0 0
      %2752 = vmatprep.subr.bf16.mxu0 0
      %2753 = vmatpush1.bf16.msra.mxu0 0
      %2754 = vmatprep.subr.bf16.mxu0 0
      %2755 = vmatpush1.bf16.msra.mxu0 0
      %2756 = vmatprep.subr.bf16.mxu0 0
      %2757 = vmatpush1.bf16.msra.mxu0 0
      %2758 = vmatprep.subr.bf16.mxu0 0
      %2759 = vmatpush1.bf16.msra.mxu0 0
      %2760 = vmatprep.subr.bf16.mxu0 0
      %2761 = vmatpush1.bf16.msra.mxu0 0
      %2762 = vmatprep.subr.bf16.mxu0 0
      %2763 = vmatpush1.bf16.msra.mxu0 0
      %2764 = vmatprep.mubr.bf16.mxu0 0
      %2765 = vmatmul.mubr.bf16.gmra.mrb[0].mxu0 %v2730
      %v2766 = vpop.f32.mrb[0].mxu0
      %v2767 = vadd.f32 0.0, %v2766
      %v2768 = vpop.f32.mrb[0].mxu0
      %v2769 = vpop.f32.mrb[0].mxu0
      %v2770 = vadd.f32 0.0, %v2769
      %v2771 = vpop.f32.mrb[0].mxu0
      %2772 = vdwg.mxu0
      %2774 = vrot.lane.b32.xlu0 %v990, 96
      %v2775 = vpop.permute.xlu0 %2774
      %v2778 = vsel %vm1452, %v2624, 0
      %2780 = vmatprep.subr.bf16.mxu0 0
      %2781 = vmatpush1.bf16.msra.mxu0 %v2775
      %2782 = vmatprep.subr.bf16.mxu0 0
      %2783 = vmatpush1.bf16.msra.mxu0 0
      %2784 = vmatprep.subr.bf16.mxu0 0
      %2785 = vmatpush1.bf16.msra.mxu0 0
      %2786 = vmatprep.subr.bf16.mxu0 0
      %2787 = vmatpush1.bf16.msra.mxu0 0
      %2788 = vmatprep.subr.bf16.mxu0 0
      %2789 = vmatpush1.bf16.msra.mxu0 0
      %2790 = vmatprep.subr.bf16.mxu0 0
      %2791 = vmatpush1.bf16.msra.mxu0 0
      %2792 = vmatprep.subr.bf16.mxu0 0
      %2793 = vmatpush1.bf16.msra.mxu0 0
      %2794 = vmatprep.subr.bf16.mxu0 0
      %2795 = vmatpush1.bf16.msra.mxu0 0
      %2796 = vmatprep.subr.bf16.mxu0 0
      %2797 = vmatpush1.bf16.msra.mxu0 0
      %2798 = vmatprep.subr.bf16.mxu0 0
      %2799 = vmatpush1.bf16.msra.mxu0 0
      %2800 = vmatprep.subr.bf16.mxu0 0
      %2801 = vmatpush1.bf16.msra.mxu0 0
      %2802 = vmatprep.subr.bf16.mxu0 0
      %2803 = vmatpush1.bf16.msra.mxu0 0
      %2804 = vmatprep.subr.bf16.mxu0 0
      %2805 = vmatpush1.bf16.msra.mxu0 0
      %2806 = vmatprep.subr.bf16.mxu0 0
      %2807 = vmatpush1.bf16.msra.mxu0 0
      %2808 = vmatprep.subr.bf16.mxu0 0
      %2809 = vmatpush1.bf16.msra.mxu0 0
      %2810 = vmatprep.subr.bf16.mxu0 0
      %2811 = vmatpush1.bf16.msra.mxu0 0
      %2812 = vmatprep.mubr.bf16.mxu0 0
      %2813 = vmatmul.mubr.bf16.gmra.mrb[0].mxu0 %v2778
      %v2814 = vpop.f32.mrb[0].mxu0
      %v2815 = vadd.f32 0.0, %v2814
      %v2816 = vpop.f32.mrb[0].mxu0
      %v2817 = vpop.f32.mrb[0].mxu0
      %v2818 = vadd.f32 0.0, %v2817
      %v2819 = vpop.f32.mrb[0].mxu0
      %2820 = vdwg.mxu0
      %2822 = vrot.lane.b32.xlu0 %v991, 96
      %v2823 = vpop.permute.xlu0 %2822
      %v2826 = vsel %vm1452, %v2625, 0
      %2828 = vmatprep.subr.bf16.mxu0 0
      %2829 = vmatpush1.bf16.msra.mxu0 %v2823
      %2830 = vmatprep.subr.bf16.mxu0 0
      %2831 = vmatpush1.bf16.msra.mxu0 0
      %2832 = vmatprep.subr.bf16.mxu0 0
      %2833 = vmatpush1.bf16.msra.mxu0 0
      %2834 = vmatprep.subr.bf16.mxu0 0
      %2835 = vmatpush1.bf16.msra.mxu0 0
      %2836 = vmatprep.subr.bf16.mxu0 0
      %2837 = vmatpush1.bf16.msra.mxu0 0
      %2838 = vmatprep.subr.bf16.mxu0 0
      %2839 = vmatpush1.bf16.msra.mxu0 0
      %2840 = vmatprep.subr.bf16.mxu0 0
      %2841 = vmatpush1.bf16.msra.mxu0 0
      %2842 = vmatprep.subr.bf16.mxu0 0
      %2843 = vmatpush1.bf16.msra.mxu0 0
      %2844 = vmatprep.subr.bf16.mxu0 0
      %2845 = vmatpush1.bf16.msra.mxu0 0
      %2846 = vmatprep.subr.bf16.mxu0 0
      %2847 = vmatpush1.bf16.msra.mxu0 0
      %2848 = vmatprep.subr.bf16.mxu0 0
      %2849 = vmatpush1.bf16.msra.mxu0 0
      %2850 = vmatprep.subr.bf16.mxu0 0
      %2851 = vmatpush1.bf16.msra.mxu0 0
      %2852 = vmatprep.subr.bf16.mxu0 0
      %2853 = vmatpush1.bf16.msra.mxu0 0
      %2854 = vmatprep.subr.bf16.mxu0 0
      %2855 = vmatpush1.bf16.msra.mxu0 0
      %2856 = vmatprep.subr.bf16.mxu0 0
      %2857 = vmatpush1.bf16.msra.mxu0 0
      %2858 = vmatprep.subr.bf16.mxu0 0
      %2859 = vmatpush1.bf16.msra.mxu0 0
      %2860 = vmatprep.mubr.bf16.mxu0 0
      %2861 = vmatmul.mubr.bf16.gmra.mrb[0].mxu0 %v2826
      %v2862 = vpop.f32.mrb[0].mxu0
      %v2863 = vadd.f32 0.0, %v2862
      %v2864 = vpop.f32.mrb[0].mxu0
      %v2865 = vpop.f32.mrb[0].mxu0
      %v2866 = vadd.f32 0.0, %v2865
      %v2867 = vpop.f32.mrb[0].mxu0
      %2868 = vdwg.mxu0
      %2870 = vrot.lane.b32.xlu0 %v992, 96
      %v2871 = vpop.permute.xlu0 %2870
      %v2874 = vsel %vm1452, %v2626, 0
      %2876 = vmatprep.subr.bf16.mxu0 0
      %2877 = vmatpush1.bf16.msra.mxu0 %v2871
      %2878 = vmatprep.subr.bf16.mxu0 0
      %2879 = vmatpush1.bf16.msra.mxu0 0
      %2880 = vmatprep.subr.bf16.mxu0 0
      %2881 = vmatpush1.bf16.msra.mxu0 0
      %2882 = vmatprep.subr.bf16.mxu0 0
      %2883 = vmatpush1.bf16.msra.mxu0 0
      %2884 = vmatprep.subr.bf16.mxu0 0
      %2885 = vmatpush1.bf16.msra.mxu0 0
      %2886 = vmatprep.subr.bf16.mxu0 0
      %2887 = vmatpush1.bf16.msra.mxu0 0
      %2888 = vmatprep.subr.bf16.mxu0 0
      %2889 = vmatpush1.bf16.msra.mxu0 0
      %2890 = vmatprep.subr.bf16.mxu0 0
      %2891 = vmatpush1.bf16.msra.mxu0 0
      %2892 = vmatprep.subr.bf16.mxu0 0
      %2893 = vmatpush1.bf16.msra.mxu0 0
      %2894 = vmatprep.subr.bf16.mxu0 0
      %2895 = vmatpush1.bf16.msra.mxu0 0
      %2896 = vmatprep.subr.bf16.mxu0 0
      %2897 = vmatpush1.bf16.msra.mxu0 0
      %2898 = vmatprep.subr.bf16.mxu0 0
      %2899 = vmatpush1.bf16.msra.mxu0 0
      %2900 = vmatprep.subr.bf16.mxu0 0
      %2901 = vmatpush1.bf16.msra.mxu0 0
      %2902 = vmatprep.subr.bf16.mxu0 0
      %2903 = vmatpush1.bf16.msra.mxu0 0
      %2904 = vmatprep.subr.bf16.mxu0 0
      %2905 = vmatpush1.bf16.msra.mxu0 0
      %2906 = vmatprep.subr.bf16.mxu0 0
      %2907 = vmatpush1.bf16.msra.mxu0 0
      %2908 = vmatprep.mubr.bf16.mxu0 0
      %2909 = vmatmul.mubr.bf16.gmra.mrb[0].mxu0 %v2874
      %v2910 = vpop.f32.mrb[0].mxu0
      %v2911 = vadd.f32 0.0, %v2910
      %v2912 = vpop.f32.mrb[0].mxu0
      %v2913 = vpop.f32.mrb[0].mxu0
      %v2914 = vadd.f32 0.0, %v2913
      %v2915 = vpop.f32.mrb[0].mxu0
      %2916 = vdwg.mxu0
      %2918 = vrot.lane.b32.xlu0 %v993, 96
      %v2919 = vpop.permute.xlu0 %2918
      %v2922 = vsel %vm1452, %v2627, 0
      %2924 = vmatprep.subr.bf16.mxu0 0
      %2925 = vmatpush1.bf16.msra.mxu0 %v2919
      %2926 = vmatprep.subr.bf16.mxu0 0
      %2927 = vmatpush1.bf16.msra.mxu0 0
      %2928 = vmatprep.subr.bf16.mxu0 0
      %2929 = vmatpush1.bf16.msra.mxu0 0
      %2930 = vmatprep.subr.bf16.mxu0 0
      %2931 = vmatpush1.bf16.msra.mxu0 0
      %2932 = vmatprep.subr.bf16.mxu0 0
      %2933 = vmatpush1.bf16.msra.mxu0 0
      %2934 = vmatprep.subr.bf16.mxu0 0
      %2935 = vmatpush1.bf16.msra.mxu0 0
      %2936 = vmatprep.subr.bf16.mxu0 0
      %2937 = vmatpush1.bf16.msra.mxu0 0
      %2938 = vmatprep.subr.bf16.mxu0 0
      %2939 = vmatpush1.bf16.msra.mxu0 0
      %2940 = vmatprep.subr.bf16.mxu0 0
      %2941 = vmatpush1.bf16.msra.mxu0 0
      %2942 = vmatprep.subr.bf16.mxu0 0
      %2943 = vmatpush1.bf16.msra.mxu0 0
      %2944 = vmatprep.subr.bf16.mxu0 0
      %2945 = vmatpush1.bf16.msra.mxu0 0
      %2946 = vmatprep.subr.bf16.mxu0 0
      %2947 = vmatpush1.bf16.msra.mxu0 0
      %2948 = vmatprep.subr.bf16.mxu0 0
      %2949 = vmatpush1.bf16.msra.mxu0 0
      %2950 = vmatprep.subr.bf16.mxu0 0
      %2951 = vmatpush1.bf16.msra.mxu0 0
      %2952 = vmatprep.subr.bf16.mxu0 0
      %2953 = vmatpush1.bf16.msra.mxu0 0
      %2954 = vmatprep.subr.bf16.mxu0 0
      %2955 = vmatpush1.bf16.msra.mxu0 0
      %2956 = vmatprep.mubr.bf16.mxu0 0
      %2957 = vmatmul.mubr.bf16.gmra.mrb[0].mxu0 %v2922
      %v2958 = vpop.f32.mrb[0].mxu0
      %v2959 = vadd.f32 0.0, %v2958
      %v2960 = vpop.f32.mrb[0].mxu0
      %v2961 = vpop.f32.mrb[0].mxu0
      %v2962 = vadd.f32 0.0, %v2961
      %v2963 = vpop.f32.mrb[0].mxu0
      %2964 = vdwg.mxu0
      %2966 = vrot.lane.b32.xlu0 %v994, 96
      %v2967 = vpop.permute.xlu0 %2966
      %v2970 = vsel %vm1452, %v2628, 0
      %2972 = vmatprep.subr.bf16.mxu0 0
      %2973 = vmatpush1.bf16.msra.mxu0 %v2967
      %2974 = vmatprep.subr.bf16.mxu0 0
      %2975 = vmatpush1.bf16.msra.mxu0 0
      %2976 = vmatprep.subr.bf16.mxu0 0
      %2977 = vmatpush1.bf16.msra.mxu0 0
      %2978 = vmatprep.subr.bf16.mxu0 0
      %2979 = vmatpush1.bf16.msra.mxu0 0
      %2980 = vmatprep.subr.bf16.mxu0 0
      %2981 = vmatpush1.bf16.msra.mxu0 0
      %2982 = vmatprep.subr.bf16.mxu0 0
      %2983 = vmatpush1.bf16.msra.mxu0 0
      %2984 = vmatprep.subr.bf16.mxu0 0
      %2985 = vmatpush1.bf16.msra.mxu0 0
      %2986 = vmatprep.subr.bf16.mxu0 0
      %2987 = vmatpush1.bf16.msra.mxu0 0
      %2988 = vmatprep.subr.bf16.mxu0 0
      %2989 = vmatpush1.bf16.msra.mxu0 0
      %2990 = vmatprep.subr.bf16.mxu0 0
      %2991 = vmatpush1.bf16.msra.mxu0 0
      %2992 = vmatprep.subr.bf16.mxu0 0
      %2993 = vmatpush1.bf16.msra.mxu0 0
      %2994 = vmatprep.subr.bf16.mxu0 0
      %2995 = vmatpush1.bf16.msra.mxu0 0
      %2996 = vmatprep.subr.bf16.mxu0 0
      %2997 = vmatpush1.bf16.msra.mxu0 0
      %2998 = vmatprep.subr.bf16.mxu0 0
      %2999 = vmatpush1.bf16.msra.mxu0 0
      %3000 = vmatprep.subr.bf16.mxu0 0
      %3001 = vmatpush1.bf16.msra.mxu0 0
      %3002 = vmatprep.subr.bf16.mxu0 0
      %3003 = vmatpush1.bf16.msra.mxu0 0
      %3004 = vmatprep.mubr.bf16.mxu0 0
      %3005 = vmatmul.mubr.bf16.gmra.mrb[0].mxu0 %v2970
      %v3006 = vpop.f32.mrb[0].mxu0
      %v3007 = vadd.f32 0.0, %v3006
      %v3008 = vpop.f32.mrb[0].mxu0
      %v3009 = vpop.f32.mrb[0].mxu0
      %v3010 = vadd.f32 0.0, %v3009
      %v3011 = vpop.f32.mrb[0].mxu0
      %3012 = vdwg.mxu0
      %3013 = vrot.lane.b32.xlu0 %v971, 64
      %v3014 = vpop.permute.xlu0 %3013
      %3015 = vrot.lane.b32.xlu0 %v979, 64
      %v3016 = vpop.permute.xlu0 %3015
      %v3018 = vsel %vm995, %v3014, 0
      %v3021 = vsel %vm995, %v3016, 0
      %3023 = vmatprep.subr.bf16.mxu0 0
      %3024 = vmatpush1.bf16.xpose.msra.mxu0 %v3021
      %3025 = vmatprep.subr.bf16.mxu0 0
      %3026 = vmatpush1.bf16.xpose.msra.mxu0 0
      %3027 = vmatprep.subr.bf16.mxu0 0
      %3028 = vmatpush1.bf16.xpose.msra.mxu0 0
      %3029 = vmatprep.subr.bf16.mxu0 0
      %3030 = vmatpush1.bf16.xpose.msra.mxu0 0
      %3031 = vmatprep.subr.bf16.mxu0 0
      %3032 = vmatpush1.bf16.xpose.msra.mxu0 0
      %3033 = vmatprep.subr.bf16.mxu0 0
      %3034 = vmatpush1.bf16.xpose.msra.mxu0 0
      %3035 = vmatprep.subr.bf16.mxu0 0
      %3036 = vmatpush1.bf16.xpose.msra.mxu0 0
      %3037 = vmatprep.subr.bf16.mxu0 0
      %3038 = vmatpush1.bf16.xpose.msra.mxu0 0
      %3039 = vmatprep.subr.bf16.mxu0 0
      %3040 = vmatpush1.bf16.xpose.msra.mxu0 0
      %3041 = vmatprep.subr.bf16.mxu0 0
      %3042 = vmatpush1.bf16.xpose.msra.mxu0 0
      %3043 = vmatprep.subr.bf16.mxu0 0
      %3044 = vmatpush1.bf16.xpose.msra.mxu0 0
      %3045 = vmatprep.subr.bf16.mxu0 0
      %3046 = vmatpush1.bf16.xpose.msra.mxu0 0
      %3047 = vmatprep.subr.bf16.mxu0 0
      %3048 = vmatpush1.bf16.xpose.msra.mxu0 0
      %3049 = vmatprep.subr.bf16.mxu0 0
      %3050 = vmatpush1.bf16.xpose.msra.mxu0 0
      %3051 = vmatprep.subr.bf16.mxu0 0
      %3052 = vmatpush1.bf16.xpose.msra.mxu0 0
      %3053 = vmatprep.subr.bf16.mxu0 0
      %3054 = vmatpush1.bf16.xpose.msra.mxu0 0
      %3055 = vmatprep.mubr.bf16.mxu0 0
      %3056 = vmatmul.mubr.bf16.gmra.mrb[0].mxu0 %v3018
      %v3057 = vpop.f32.mrb[0].mxu0
      %v3058 = vadd.f32 0.0, %v3057
      %v3059 = vpop.f32.mrb[0].mxu0
      %v3060 = vpop.f32.mrb[0].mxu0
      %v3061 = vadd.f32 0.0, %v3060
      %v3062 = vpop.f32.mrb[0].mxu0
      %3063 = vdwg.mxu0
      %3064 = vrot.lane.b32.xlu0 %v972, 64
      %v3065 = vpop.permute.xlu0 %3064
      %3066 = vrot.lane.b32.xlu0 %v980, 64
      %v3067 = vpop.permute.xlu0 %3066
      %v3069 = vsel %vm995, %v3065, 0
      %v3072 = vsel %vm995, %v3067, 0
      %3074 = vmatprep.subr.bf16.mxu0 0
      %3075 = vmatpush1.bf16.xpose.msra.mxu0 %v3072
      %3076 = vmatprep.subr.bf16.mxu0 0
      %3077 = vmatpush1.bf16.xpose.msra.mxu0 0
      %3078 = vmatprep.subr.bf16.mxu0 0
      %3079 = vmatpush1.bf16.xpose.msra.mxu0 0
      %3080 = vmatprep.subr.bf16.mxu0 0
      %3081 = vmatpush1.bf16.xpose.msra.mxu0 0
      %3082 = vmatprep.subr.bf16.mxu0 0
      %3083 = vmatpush1.bf16.xpose.msra.mxu0 0
      %3084 = vmatprep.subr.bf16.mxu0 0
      %3085 = vmatpush1.bf16.xpose.msra.mxu0 0
      %3086 = vmatprep.subr.bf16.mxu0 0
      %3087 = vmatpush1.bf16.xpose.msra.mxu0 0
      %3088 = vmatprep.subr.bf16.mxu0 0
      %3089 = vmatpush1.bf16.xpose.msra.mxu0 0
      %3090 = vmatprep.subr.bf16.mxu0 0
      %3091 = vmatpush1.bf16.xpose.msra.mxu0 0
      %3092 = vmatprep.subr.bf16.mxu0 0
      %3093 = vmatpush1.bf16.xpose.msra.mxu0 0
      %3094 = vmatprep.subr.bf16.mxu0 0
      %3095 = vmatpush1.bf16.xpose.msra.mxu0 0
      %3096 = vmatprep.subr.bf16.mxu0 0
      %3097 = vmatpush1.bf16.xpose.msra.mxu0 0
      %3098 = vmatprep.subr.bf16.mxu0 0
      %3099 = vmatpush1.bf16.xpose.msra.mxu0 0
      %3100 = vmatprep.subr.bf16.mxu0 0
      %3101 = vmatpush1.bf16.xpose.msra.mxu0 0
      %3102 = vmatprep.subr.bf16.mxu0 0
      %3103 = vmatpush1.bf16.xpose.msra.mxu0 0
      %3104 = vmatprep.subr.bf16.mxu0 0
      %3105 = vmatpush1.bf16.xpose.msra.mxu0 0
      %3106 = vmatprep.mubr.bf16.mxu0 0
      %3107 = vmatmul.mubr.bf16.gmra.mrb[0].mxu0 %v3069
      %v3108 = vpop.f32.mrb[0].mxu0
      %v3109 = vadd.f32 0.0, %v3108
      %v3110 = vpop.f32.mrb[0].mxu0
      %v3111 = vpop.f32.mrb[0].mxu0
      %v3112 = vadd.f32 0.0, %v3111
      %v3113 = vpop.f32.mrb[0].mxu0
      %3114 = vdwg.mxu0
      %3115 = vrot.lane.b32.xlu0 %v973, 64
      %v3116 = vpop.permute.xlu0 %3115
      %3117 = vrot.lane.b32.xlu0 %v981, 64
      %v3118 = vpop.permute.xlu0 %3117
      %v3120 = vsel %vm995, %v3116, 0
      %v3123 = vsel %vm995, %v3118, 0
      %3125 = vmatprep.subr.bf16.mxu0 0
      %3126 = vmatpush1.bf16.xpose.msra.mxu0 %v3123
      %3127 = vmatprep.subr.bf16.mxu0 0
      %3128 = vmatpush1.bf16.xpose.msra.mxu0 0
      %3129 = vmatprep.subr.bf16.mxu0 0
      %3130 = vmatpush1.bf16.xpose.msra.mxu0 0
      %3131 = vmatprep.subr.bf16.mxu0 0
      %3132 = vmatpush1.bf16.xpose.msra.mxu0 0
      %3133 = vmatprep.subr.bf16.mxu0 0
      %3134 = vmatpush1.bf16.xpose.msra.mxu0 0
      %3135 = vmatprep.subr.bf16.mxu0 0
      %3136 = vmatpush1.bf16.xpose.msra.mxu0 0
      %3137 = vmatprep.subr.bf16.mxu0 0
      %3138 = vmatpush1.bf16.xpose.msra.mxu0 0
      %3139 = vmatprep.subr.bf16.mxu0 0
      %3140 = vmatpush1.bf16.xpose.msra.mxu0 0
      %3141 = vmatprep.subr.bf16.mxu0 0
      %3142 = vmatpush1.bf16.xpose.msra.mxu0 0
      %3143 = vmatprep.subr.bf16.mxu0 0
      %3144 = vmatpush1.bf16.xpose.msra.mxu0 0
      %3145 = vmatprep.subr.bf16.mxu0 0
      %3146 = vmatpush1.bf16.xpose.msra.mxu0 0
      %3147 = vmatprep.subr.bf16.mxu0 0
      %3148 = vmatpush1.bf16.xpose.msra.mxu0 0
      %3149 = vmatprep.subr.bf16.mxu0 0
      %3150 = vmatpush1.bf16.xpose.msra.mxu0 0
      %3151 = vmatprep.subr.bf16.mxu0 0
      %3152 = vmatpush1.bf16.xpose.msra.mxu0 0
      %3153 = vmatprep.subr.bf16.mxu0 0
      %3154 = vmatpush1.bf16.xpose.msra.mxu0 0
      %3155 = vmatprep.subr.bf16.mxu0 0
      %3156 = vmatpush1.bf16.xpose.msra.mxu0 0
      %3157 = vmatprep.mubr.bf16.mxu0 0
      %3158 = vmatmul.mubr.bf16.gmra.mrb[0].mxu0 %v3120
      %v3159 = vpop.f32.mrb[0].mxu0
      %v3160 = vadd.f32 0.0, %v3159
      %v3161 = vpop.f32.mrb[0].mxu0
      %v3162 = vpop.f32.mrb[0].mxu0
      %v3163 = vadd.f32 0.0, %v3162
      %v3164 = vpop.f32.mrb[0].mxu0
      %3165 = vdwg.mxu0
      %3166 = vrot.lane.b32.xlu0 %v974, 64
      %v3167 = vpop.permute.xlu0 %3166
      %3168 = vrot.lane.b32.xlu0 %v982, 64
      %v3169 = vpop.permute.xlu0 %3168
      %v3171 = vsel %vm995, %v3167, 0
      %v3174 = vsel %vm995, %v3169, 0
      %3176 = vmatprep.subr.bf16.mxu0 0
      %3177 = vmatpush1.bf16.xpose.msra.mxu0 %v3174
      %3178 = vmatprep.subr.bf16.mxu0 0
      %3179 = vmatpush1.bf16.xpose.msra.mxu0 0
      %3180 = vmatprep.subr.bf16.mxu0 0
      %3181 = vmatpush1.bf16.xpose.msra.mxu0 0
      %3182 = vmatprep.subr.bf16.mxu0 0
      %3183 = vmatpush1.bf16.xpose.msra.mxu0 0
      %3184 = vmatprep.subr.bf16.mxu0 0
      %3185 = vmatpush1.bf16.xpose.msra.mxu0 0
      %3186 = vmatprep.subr.bf16.mxu0 0
      %3187 = vmatpush1.bf16.xpose.msra.mxu0 0
      %3188 = vmatprep.subr.bf16.mxu0 0
      %3189 = vmatpush1.bf16.xpose.msra.mxu0 0
      %3190 = vmatprep.subr.bf16.mxu0 0
      %3191 = vmatpush1.bf16.xpose.msra.mxu0 0
      %3192 = vmatprep.subr.bf16.mxu0 0
      %3193 = vmatpush1.bf16.xpose.msra.mxu0 0
      %3194 = vmatprep.subr.bf16.mxu0 0
      %3195 = vmatpush1.bf16.xpose.msra.mxu0 0
      %3196 = vmatprep.subr.bf16.mxu0 0
      %3197 = vmatpush1.bf16.xpose.msra.mxu0 0
      %3198 = vmatprep.subr.bf16.mxu0 0
      %3199 = vmatpush1.bf16.xpose.msra.mxu0 0
      %3200 = vmatprep.subr.bf16.mxu0 0
      %3201 = vmatpush1.bf16.xpose.msra.mxu0 0
      %3202 = vmatprep.subr.bf16.mxu0 0
      %3203 = vmatpush1.bf16.xpose.msra.mxu0 0
      %3204 = vmatprep.subr.bf16.mxu0 0
      %3205 = vmatpush1.bf16.xpose.msra.mxu0 0
      %3206 = vmatprep.subr.bf16.mxu0 0
      %3207 = vmatpush1.bf16.xpose.msra.mxu0 0
      %3208 = vmatprep.mubr.bf16.mxu0 0
      %3209 = vmatmul.mubr.bf16.gmra.mrb[0].mxu0 %v3171
      %v3210 = vpop.f32.mrb[0].mxu0
      %v3211 = vadd.f32 0.0, %v3210
      %v3212 = vpop.f32.mrb[0].mxu0
      %v3213 = vpop.f32.mrb[0].mxu0
      %v3214 = vadd.f32 0.0, %v3213
      %v3215 = vpop.f32.mrb[0].mxu0
      %3216 = vdwg.mxu0
      %3217 = vrot.lane.b32.xlu0 %v975, 64
      %v3218 = vpop.permute.xlu0 %3217
      %3219 = vrot.lane.b32.xlu0 %v983, 64
      %v3220 = vpop.permute.xlu0 %3219
      %v3222 = vsel %vm995, %v3218, 0
      %v3225 = vsel %vm995, %v3220, 0
      %3227 = vmatprep.subr.bf16.mxu0 0
      %3228 = vmatpush1.bf16.xpose.msra.mxu0 %v3225
      %3229 = vmatprep.subr.bf16.mxu0 0
      %3230 = vmatpush1.bf16.xpose.msra.mxu0 0
      %3231 = vmatprep.subr.bf16.mxu0 0
      %3232 = vmatpush1.bf16.xpose.msra.mxu0 0
      %3233 = vmatprep.subr.bf16.mxu0 0
      %3234 = vmatpush1.bf16.xpose.msra.mxu0 0
      %3235 = vmatprep.subr.bf16.mxu0 0
      %3236 = vmatpush1.bf16.xpose.msra.mxu0 0
      %3237 = vmatprep.subr.bf16.mxu0 0
      %3238 = vmatpush1.bf16.xpose.msra.mxu0 0
      %3239 = vmatprep.subr.bf16.mxu0 0
      %3240 = vmatpush1.bf16.xpose.msra.mxu0 0
      %3241 = vmatprep.subr.bf16.mxu0 0
      %3242 = vmatpush1.bf16.xpose.msra.mxu0 0
      %3243 = vmatprep.subr.bf16.mxu0 0
      %3244 = vmatpush1.bf16.xpose.msra.mxu0 0
      %3245 = vmatprep.subr.bf16.mxu0 0
      %3246 = vmatpush1.bf16.xpose.msra.mxu0 0
      %3247 = vmatprep.subr.bf16.mxu0 0
      %3248 = vmatpush1.bf16.xpose.msra.mxu0 0
      %3249 = vmatprep.subr.bf16.mxu0 0
      %3250 = vmatpush1.bf16.xpose.msra.mxu0 0
      %3251 = vmatprep.subr.bf16.mxu0 0
      %3252 = vmatpush1.bf16.xpose.msra.mxu0 0
      %3253 = vmatprep.subr.bf16.mxu0 0
      %3254 = vmatpush1.bf16.xpose.msra.mxu0 0
      %3255 = vmatprep.subr.bf16.mxu0 0
      %3256 = vmatpush1.bf16.xpose.msra.mxu0 0
      %3257 = vmatprep.subr.bf16.mxu0 0
      %3258 = vmatpush1.bf16.xpose.msra.mxu0 0
      %3259 = vmatprep.mubr.bf16.mxu0 0
      %3260 = vmatmul.mubr.bf16.gmra.mrb[0].mxu0 %v3222
      %v3261 = vpop.f32.mrb[0].mxu0
      %v3262 = vadd.f32 0.0, %v3261
      %v3263 = vpop.f32.mrb[0].mxu0
      %v3264 = vpop.f32.mrb[0].mxu0
      %v3265 = vadd.f32 0.0, %v3264
      %v3266 = vpop.f32.mrb[0].mxu0
      %3267 = vdwg.mxu0
      %3268 = vrot.lane.b32.xlu0 %v976, 64
      %v3269 = vpop.permute.xlu0 %3268
      %3270 = vrot.lane.b32.xlu0 %v984, 64
      %v3271 = vpop.permute.xlu0 %3270
      %v3273 = vsel %vm995, %v3269, 0
      %v3276 = vsel %vm995, %v3271, 0
      %3278 = vmatprep.subr.bf16.mxu0 0
      %3279 = vmatpush1.bf16.xpose.msra.mxu0 %v3276
      %3280 = vmatprep.subr.bf16.mxu0 0
      %3281 = vmatpush1.bf16.xpose.msra.mxu0 0
      %3282 = vmatprep.subr.bf16.mxu0 0
      %3283 = vmatpush1.bf16.xpose.msra.mxu0 0
      %3284 = vmatprep.subr.bf16.mxu0 0
      %3285 = vmatpush1.bf16.xpose.msra.mxu0 0
      %3286 = vmatprep.subr.bf16.mxu0 0
      %3287 = vmatpush1.bf16.xpose.msra.mxu0 0
      %3288 = vmatprep.subr.bf16.mxu0 0
      %3289 = vmatpush1.bf16.xpose.msra.mxu0 0
      %3290 = vmatprep.subr.bf16.mxu0 0
      %3291 = vmatpush1.bf16.xpose.msra.mxu0 0
      %3292 = vmatprep.subr.bf16.mxu0 0
      %3293 = vmatpush1.bf16.xpose.msra.mxu0 0
      %3294 = vmatprep.subr.bf16.mxu0 0
      %3295 = vmatpush1.bf16.xpose.msra.mxu0 0
      %3296 = vmatprep.subr.bf16.mxu0 0
      %3297 = vmatpush1.bf16.xpose.msra.mxu0 0
      %3298 = vmatprep.subr.bf16.mxu0 0
      %3299 = vmatpush1.bf16.xpose.msra.mxu0 0
      %3300 = vmatprep.subr.bf16.mxu0 0
      %3301 = vmatpush1.bf16.xpose.msra.mxu0 0
      %3302 = vmatprep.subr.bf16.mxu0 0
      %3303 = vmatpush1.bf16.xpose.msra.mxu0 0
      %3304 = vmatprep.subr.bf16.mxu0 0
      %3305 = vmatpush1.bf16.xpose.msra.mxu0 0
      %3306 = vmatprep.subr.bf16.mxu0 0
      %3307 = vmatpush1.bf16.xpose.msra.mxu0 0
      %3308 = vmatprep.subr.bf16.mxu0 0
      %3309 = vmatpush1.bf16.xpose.msra.mxu0 0
      %3310 = vmatprep.mubr.bf16.mxu0 0
      %3311 = vmatmul.mubr.bf16.gmra.mrb[0].mxu0 %v3273
      %v3312 = vpop.f32.mrb[0].mxu0
      %v3313 = vadd.f32 0.0, %v3312
      %v3314 = vpop.f32.mrb[0].mxu0
      %v3315 = vpop.f32.mrb[0].mxu0
      %v3316 = vadd.f32 0.0, %v3315
      %v3317 = vpop.f32.mrb[0].mxu0
      %3318 = vdwg.mxu0
      %3319 = vrot.lane.b32.xlu0 %v977, 64
      %v3320 = vpop.permute.xlu0 %3319
      %3321 = vrot.lane.b32.xlu0 %v985, 64
      %v3322 = vpop.permute.xlu0 %3321
      %v3324 = vsel %vm995, %v3320, 0
      %v3327 = vsel %vm995, %v3322, 0
      %3329 = vmatprep.subr.bf16.mxu0 0
      %3330 = vmatpush1.bf16.xpose.msra.mxu0 %v3327
      %3331 = vmatprep.subr.bf16.mxu0 0
      %3332 = vmatpush1.bf16.xpose.msra.mxu0 0
      %3333 = vmatprep.subr.bf16.mxu0 0
      %3334 = vmatpush1.bf16.xpose.msra.mxu0 0
      %3335 = vmatprep.subr.bf16.mxu0 0
      %3336 = vmatpush1.bf16.xpose.msra.mxu0 0
      %3337 = vmatprep.subr.bf16.mxu0 0
      %3338 = vmatpush1.bf16.xpose.msra.mxu0 0
      %3339 = vmatprep.subr.bf16.mxu0 0
      %3340 = vmatpush1.bf16.xpose.msra.mxu0 0
      %3341 = vmatprep.subr.bf16.mxu0 0
      %3342 = vmatpush1.bf16.xpose.msra.mxu0 0
      %3343 = vmatprep.subr.bf16.mxu0 0
      %3344 = vmatpush1.bf16.xpose.msra.mxu0 0
      %3345 = vmatprep.subr.bf16.mxu0 0
      %3346 = vmatpush1.bf16.xpose.msra.mxu0 0
      %3347 = vmatprep.subr.bf16.mxu0 0
      %3348 = vmatpush1.bf16.xpose.msra.mxu0 0
      %3349 = vmatprep.subr.bf16.mxu0 0
      %3350 = vmatpush1.bf16.xpose.msra.mxu0 0
      %3351 = vmatprep.subr.bf16.mxu0 0
      %3352 = vmatpush1.bf16.xpose.msra.mxu0 0
      %3353 = vmatprep.subr.bf16.mxu0 0
      %3354 = vmatpush1.bf16.xpose.msra.mxu0 0
      %3355 = vmatprep.subr.bf16.mxu0 0
      %3356 = vmatpush1.bf16.xpose.msra.mxu0 0
      %3357 = vmatprep.subr.bf16.mxu0 0
      %3358 = vmatpush1.bf16.xpose.msra.mxu0 0
      %3359 = vmatprep.subr.bf16.mxu0 0
      %3360 = vmatpush1.bf16.xpose.msra.mxu0 0
      %3361 = vmatprep.mubr.bf16.mxu0 0
      %3362 = vmatmul.mubr.bf16.gmra.mrb[0].mxu0 %v3324
      %v3363 = vpop.f32.mrb[0].mxu0
      %v3364 = vadd.f32 0.0, %v3363
      %v3365 = vpop.f32.mrb[0].mxu0
      %v3366 = vpop.f32.mrb[0].mxu0
      %v3367 = vadd.f32 0.0, %v3366
      %v3368 = vpop.f32.mrb[0].mxu0
      %3369 = vdwg.mxu0
      %3370 = vrot.lane.b32.xlu0 %v978, 64
      %v3371 = vpop.permute.xlu0 %3370
      %3372 = vrot.lane.b32.xlu0 %v986, 64
      %v3373 = vpop.permute.xlu0 %3372
      %v3375 = vsel %vm995, %v3371, 0
      %v3378 = vsel %vm995, %v3373, 0
      %3380 = vmatprep.subr.bf16.mxu0 0
      %3381 = vmatpush1.bf16.xpose.msra.mxu0 %v3378
      %3382 = vmatprep.subr.bf16.mxu0 0
      %3383 = vmatpush1.bf16.xpose.msra.mxu0 0
      %3384 = vmatprep.subr.bf16.mxu0 0
      %3385 = vmatpush1.bf16.xpose.msra.mxu0 0
      %3386 = vmatprep.subr.bf16.mxu0 0
      %3387 = vmatpush1.bf16.xpose.msra.mxu0 0
      %3388 = vmatprep.subr.bf16.mxu0 0
      %3389 = vmatpush1.bf16.xpose.msra.mxu0 0
      %3390 = vmatprep.subr.bf16.mxu0 0
      %3391 = vmatpush1.bf16.xpose.msra.mxu0 0
      %3392 = vmatprep.subr.bf16.mxu0 0
      %3393 = vmatpush1.bf16.xpose.msra.mxu0 0
      %3394 = vmatprep.subr.bf16.mxu0 0
      %3395 = vmatpush1.bf16.xpose.msra.mxu0 0
      %3396 = vmatprep.subr.bf16.mxu0 0
      %3397 = vmatpush1.bf16.xpose.msra.mxu0 0
      %3398 = vmatprep.subr.bf16.mxu0 0
      %3399 = vmatpush1.bf16.xpose.msra.mxu0 0
      %3400 = vmatprep.subr.bf16.mxu0 0
      %3401 = vmatpush1.bf16.xpose.msra.mxu0 0
      %3402 = vmatprep.subr.bf16.mxu0 0
      %3403 = vmatpush1.bf16.xpose.msra.mxu0 0
      %3404 = vmatprep.subr.bf16.mxu0 0
      %3405 = vmatpush1.bf16.xpose.msra.mxu0 0
      %3406 = vmatprep.subr.bf16.mxu0 0
      %3407 = vmatpush1.bf16.xpose.msra.mxu0 0
      %3408 = vmatprep.subr.bf16.mxu0 0
      %3409 = vmatpush1.bf16.xpose.msra.mxu0 0
      %3410 = vmatprep.subr.bf16.mxu0 0
      %3411 = vmatpush1.bf16.xpose.msra.mxu0 0
      %3412 = vmatprep.mubr.bf16.mxu0 0
      %3413 = vmatmul.mubr.bf16.gmra.mrb[0].mxu0 %v3375
      %v3414 = vpop.f32.mrb[0].mxu0
      %v3415 = vadd.f32 0.0, %v3414
      %v3416 = vpop.f32.mrb[0].mxu0
      %v3417 = vpop.f32.mrb[0].mxu0
      %v3418 = vadd.f32 0.0, %v3417
      %v3419 = vpop.f32.mrb[0].mxu0
      %3420 = vdwg.mxu0
      %v3421 = vmul.f32 %v3058, 0.17677669
      %v3422 = vmul.f32 %v3061, 0.17677669
      %v3423 = vmul.f32 %v3109, 0.17677669
      %v3424 = vmul.f32 %v3112, 0.17677669
      %v3425 = vmul.f32 %v3160, 0.17677669
      %v3426 = vmul.f32 %v3163, 0.17677669
      %v3427 = vmul.f32 %v3211, 0.17677669
      %v3428 = vmul.f32 %v3214, 0.17677669
      %v3429 = vmul.f32 %v3262, 0.17677669
      %v3430 = vmul.f32 %v3265, 0.17677669
      %v3431 = vmul.f32 %v3313, 0.17677669
      %v3432 = vmul.f32 %v3316, 0.17677669
      %v3433 = vmul.f32 %v3364, 0.17677669
      %v3434 = vmul.f32 %v3367, 0.17677669
      %v3435 = vmul.f32 %v3415, 0.17677669
      %v3436 = vmul.f32 %v3418, 0.17677669
      %v3437 = vadd.f32 %v3421, %v1399
      %v3438 = vadd.f32 %v3422, %v1399
      %v3439 = vadd.f32 %v3423, %v1403
      %v3440 = vadd.f32 %v3424, %v1403
      %v3441 = vadd.f32 %v3425, %v1407
      %v3442 = vadd.f32 %v3426, %v1407
      %v3443 = vadd.f32 %v3427, %v1411
      %v3444 = vadd.f32 %v3428, %v1411
      %v3445 = vadd.f32 %v3429, %v1415
      %v3446 = vadd.f32 %v3430, %v1415
      %v3447 = vadd.f32 %v3431, %v1419
      %v3448 = vadd.f32 %v3432, %v1419
      %v3449 = vadd.f32 %v3433, %v1423
      %v3450 = vadd.f32 %v3434, %v1423
      %v3451 = vadd.f32 %v3435, %v1427
      %v3452 = vadd.f32 %v3436, %v1427
      %v3453 = vsel %vm1452, %v3437, -inf
      %3454 = vmax.xlane.f32.xlu0 %v3453
      %v3455 = vpop.xlane.xlu0 %3454
      %v3456 = vsel %vm1452, %v3438, -inf
      %3457 = vmax.xlane.f32.xlu0 %v3456
      %v3458 = vpop.xlane.xlu0 %3457
      %v3459 = vsel %vm1452, %v3439, -inf
      %3460 = vmax.xlane.f32.xlu0 %v3459
      %v3461 = vpop.xlane.xlu0 %3460
      %v3462 = vsel %vm1452, %v3440, -inf
      %3463 = vmax.xlane.f32.xlu0 %v3462
      %v3464 = vpop.xlane.xlu0 %3463
      %v3465 = vsel %vm1452, %v3441, -inf
      %3466 = vmax.xlane.f32.xlu0 %v3465
      %v3467 = vpop.xlane.xlu0 %3466
      %v3468 = vsel %vm1452, %v3442, -inf
      %3469 = vmax.xlane.f32.xlu0 %v3468
      %v3470 = vpop.xlane.xlu0 %3469
      %v3471 = vsel %vm1452, %v3443, -inf
      %3472 = vmax.xlane.f32.xlu0 %v3471
      %v3473 = vpop.xlane.xlu0 %3472
      %v3474 = vsel %vm1452, %v3444, -inf
      %3475 = vmax.xlane.f32.xlu0 %v3474
      %v3476 = vpop.xlane.xlu0 %3475
      %v3477 = vsel %vm1452, %v3445, -inf
      %3478 = vmax.xlane.f32.xlu0 %v3477
      %v3479 = vpop.xlane.xlu0 %3478
      %v3480 = vsel %vm1452, %v3446, -inf
      %3481 = vmax.xlane.f32.xlu0 %v3480
      %v3482 = vpop.xlane.xlu0 %3481
      %v3483 = vsel %vm1452, %v3447, -inf
      %3484 = vmax.xlane.f32.xlu0 %v3483
      %v3485 = vpop.xlane.xlu0 %3484
      %v3486 = vsel %vm1452, %v3448, -inf
      %3487 = vmax.xlane.f32.xlu0 %v3486
      %v3488 = vpop.xlane.xlu0 %3487
      %v3489 = vsel %vm1452, %v3449, -inf
      %3490 = vmax.xlane.f32.xlu0 %v3489
      %v3491 = vpop.xlane.xlu0 %3490
      %v3492 = vsel %vm1452, %v3450, -inf
      %3493 = vmax.xlane.f32.xlu0 %v3492
      %v3494 = vpop.xlane.xlu0 %3493
      %v3495 = vsel %vm1452, %v3451, -inf
      %3496 = vmax.xlane.f32.xlu0 %v3495
      %v3497 = vpop.xlane.xlu0 %3496
      %v3498 = vsel %vm1452, %v3452, -inf
      %3499 = vmax.xlane.f32.xlu0 %v3498
      %v3500 = vpop.xlane.xlu0 %3499
      %v3501 = vsub.f32 %v3437, %v3455
      %v3502 = vsub.f32 %v3438, %v3458
      %v3503 = vsub.f32 %v3439, %v3461
      %v3504 = vsub.f32 %v3440, %v3464
      %v3505 = vsub.f32 %v3441, %v3467
      %v3506 = vsub.f32 %v3442, %v3470
      %v3507 = vsub.f32 %v3443, %v3473
      %v3508 = vsub.f32 %v3444, %v3476
      %v3509 = vsub.f32 %v3445, %v3479
      %v3510 = vsub.f32 %v3446, %v3482
      %v3511 = vsub.f32 %v3447, %v3485
      %v3512 = vsub.f32 %v3448, %v3488
      %v3513 = vsub.f32 %v3449, %v3491
      %v3514 = vsub.f32 %v3450, %v3494
      %v3515 = vsub.f32 %v3451, %v3497
      %v3516 = vsub.f32 %v3452, %v3500
      %v3517 = vmul.f32 %v3501, 1.442695
      %v3518 = vpow.pop %v3517
      %v3519 = vmul.f32 %v3502, 1.442695
      %v3520 = vpow.pop %v3519
      %v3521 = vmul.f32 %v3503, 1.442695
      %v3522 = vpow.pop %v3521
      %v3523 = vmul.f32 %v3504, 1.442695
      %v3524 = vpow.pop %v3523
      %v3525 = vmul.f32 %v3505, 1.442695
      %v3526 = vpow.pop %v3525
      %v3527 = vmul.f32 %v3506, 1.442695
      %v3528 = vpow.pop %v3527
      %v3529 = vmul.f32 %v3507, 1.442695
      %v3530 = vpow.pop %v3529
      %v3531 = vmul.f32 %v3508, 1.442695
      %v3532 = vpow.pop %v3531
      %v3533 = vmul.f32 %v3509, 1.442695
      %v3534 = vpow.pop %v3533
      %v3535 = vmul.f32 %v3510, 1.442695
      %v3536 = vpow.pop %v3535
      %v3537 = vmul.f32 %v3511, 1.442695
      %v3538 = vpow.pop %v3537
      %v3539 = vmul.f32 %v3512, 1.442695
      %v3540 = vpow.pop %v3539
      %v3541 = vmul.f32 %v3513, 1.442695
      %v3542 = vpow.pop %v3541
      %v3543 = vmul.f32 %v3514, 1.442695
      %v3544 = vpow.pop %v3543
      %v3545 = vmul.f32 %v3515, 1.442695
      %v3546 = vpow.pop %v3545
      %v3547 = vmul.f32 %v3516, 1.442695
      %v3548 = vpow.pop %v3547
      %v3549 = vsel %vm1452, %v3518, 0.0
      %3550 = vadd.xlane.f32.xlu0 %v3549
      %v3551 = vpop.xlane.xlu0 %3550
      %v3552 = vsel %vm1452, %v3520, 0.0
      %3553 = vadd.xlane.f32.xlu0 %v3552
      %v3554 = vpop.xlane.xlu0 %3553
      %v3555 = vsel %vm1452, %v3522, 0.0
      %3556 = vadd.xlane.f32.xlu0 %v3555
      %v3557 = vpop.xlane.xlu0 %3556
      %v3558 = vsel %vm1452, %v3524, 0.0
      %3559 = vadd.xlane.f32.xlu0 %v3558
      %v3560 = vpop.xlane.xlu0 %3559
      %v3561 = vsel %vm1452, %v3526, 0.0
      %3562 = vadd.xlane.f32.xlu0 %v3561
      %v3563 = vpop.xlane.xlu0 %3562
      %v3564 = vsel %vm1452, %v3528, 0.0
      %3565 = vadd.xlane.f32.xlu0 %v3564
      %v3566 = vpop.xlane.xlu0 %3565
      %v3567 = vsel %vm1452, %v3530, 0.0
      %3568 = vadd.xlane.f32.xlu0 %v3567
      %v3569 = vpop.xlane.xlu0 %3568
      %v3570 = vsel %vm1452, %v3532, 0.0
      %3571 = vadd.xlane.f32.xlu0 %v3570
      %v3572 = vpop.xlane.xlu0 %3571
      %v3573 = vsel %vm1452, %v3534, 0.0
      %3574 = vadd.xlane.f32.xlu0 %v3573
      %v3575 = vpop.xlane.xlu0 %3574
      %v3576 = vsel %vm1452, %v3536, 0.0
      %3577 = vadd.xlane.f32.xlu0 %v3576
      %v3578 = vpop.xlane.xlu0 %3577
      %v3579 = vsel %vm1452, %v3538, 0.0
      %3580 = vadd.xlane.f32.xlu0 %v3579
      %v3581 = vpop.xlane.xlu0 %3580
      %v3582 = vsel %vm1452, %v3540, 0.0
      %3583 = vadd.xlane.f32.xlu0 %v3582
      %v3584 = vpop.xlane.xlu0 %3583
      %v3585 = vsel %vm1452, %v3542, 0.0
      %3586 = vadd.xlane.f32.xlu0 %v3585
      %v3587 = vpop.xlane.xlu0 %3586
      %v3588 = vsel %vm1452, %v3544, 0.0
      %3589 = vadd.xlane.f32.xlu0 %v3588
      %v3590 = vpop.xlane.xlu0 %3589
      %v3591 = vsel %vm1452, %v3546, 0.0
      %3592 = vadd.xlane.f32.xlu0 %v3591
      %v3593 = vpop.xlane.xlu0 %3592
      %v3594 = vsel %vm1452, %v3548, 0.0
      %3595 = vadd.xlane.f32.xlu0 %v3594
      %v3596 = vpop.xlane.xlu0 %3595
      %v3597 = vrcp.pop %v3551
      %v3598 = vmul.f32 %v3518, %v3597
      %v3599 = vrcp.pop %v3554
      %v3600 = vmul.f32 %v3520, %v3599
      %v3601 = vrcp.pop %v3557
      %v3602 = vmul.f32 %v3522, %v3601
      %v3603 = vrcp.pop %v3560
      %v3604 = vmul.f32 %v3524, %v3603
      %v3605 = vrcp.pop %v3563
      %v3606 = vmul.f32 %v3526, %v3605
      %v3607 = vrcp.pop %v3566
      %v3608 = vmul.f32 %v3528, %v3607
      %v3609 = vrcp.pop %v3569
      %v3610 = vmul.f32 %v3530, %v3609
      %v3611 = vrcp.pop %v3572
      %v3612 = vmul.f32 %v3532, %v3611
      %v3613 = vrcp.pop %v3575
      %v3614 = vmul.f32 %v3534, %v3613
      %v3615 = vrcp.pop %v3578
      %v3616 = vmul.f32 %v3536, %v3615
      %v3617 = vrcp.pop %v3581
      %v3618 = vmul.f32 %v3538, %v3617
      %v3619 = vrcp.pop %v3584
      %v3620 = vmul.f32 %v3540, %v3619
      %v3621 = vrcp.pop %v3587
      %v3622 = vmul.f32 %v3542, %v3621
      %v3623 = vrcp.pop %v3590
      %v3624 = vmul.f32 %v3544, %v3623
      %v3625 = vrcp.pop %v3593
      %v3626 = vmul.f32 %v3546, %v3625
      %v3627 = vrcp.pop %v3596
      %v3628 = vmul.f32 %v3548, %v3627
      %v3629 = vpack.c.bf16 %v3600, %v3598
      %v3630 = vpack.c.bf16 %v3604, %v3602
      %v3631 = vpack.c.bf16 %v3608, %v3606
      %v3632 = vpack.c.bf16 %v3612, %v3610
      %v3633 = vpack.c.bf16 %v3616, %v3614
      %v3634 = vpack.c.bf16 %v3620, %v3618
      %v3635 = vpack.c.bf16 %v3624, %v3622
      %v3636 = vpack.c.bf16 %v3628, %v3626
      %3637 = vrot.lane.b32.xlu0 %v987, 64
      %v3638 = vpop.permute.xlu0 %3637
      %v3641 = vsel %vm1452, %v3629, 0
      %3643 = vmatprep.subr.bf16.mxu0 0
      %3644 = vmatpush1.bf16.msra.mxu0 %v3638
      %3645 = vmatprep.subr.bf16.mxu0 0
      %3646 = vmatpush1.bf16.msra.mxu0 0
      %3647 = vmatprep.subr.bf16.mxu0 0
      %3648 = vmatpush1.bf16.msra.mxu0 0
      %3649 = vmatprep.subr.bf16.mxu0 0
      %3650 = vmatpush1.bf16.msra.mxu0 0
      %3651 = vmatprep.subr.bf16.mxu0 0
      %3652 = vmatpush1.bf16.msra.mxu0 0
      %3653 = vmatprep.subr.bf16.mxu0 0
      %3654 = vmatpush1.bf16.msra.mxu0 0
      %3655 = vmatprep.subr.bf16.mxu0 0
      %3656 = vmatpush1.bf16.msra.mxu0 0
      %3657 = vmatprep.subr.bf16.mxu0 0
      %3658 = vmatpush1.bf16.msra.mxu0 0
      %3659 = vmatprep.subr.bf16.mxu0 0
      %3660 = vmatpush1.bf16.msra.mxu0 0
      %3661 = vmatprep.subr.bf16.mxu0 0
      %3662 = vmatpush1.bf16.msra.mxu0 0
      %3663 = vmatprep.subr.bf16.mxu0 0
      %3664 = vmatpush1.bf16.msra.mxu0 0
      %3665 = vmatprep.subr.bf16.mxu0 0
      %3666 = vmatpush1.bf16.msra.mxu0 0
      %3667 = vmatprep.subr.bf16.mxu0 0
      %3668 = vmatpush1.bf16.msra.mxu0 0
      %3669 = vmatprep.subr.bf16.mxu0 0
      %3670 = vmatpush1.bf16.msra.mxu0 0
      %3671 = vmatprep.subr.bf16.mxu0 0
      %3672 = vmatpush1.bf16.msra.mxu0 0
      %3673 = vmatprep.subr.bf16.mxu0 0
      %3674 = vmatpush1.bf16.msra.mxu0 0
      %3675 = vmatprep.mubr.bf16.mxu0 0
      %3676 = vmatmul.mubr.bf16.gmra.mrb[0].mxu0 %v3641
      %v3677 = vpop.f32.mrb[0].mxu0
      %v3678 = vadd.f32 0.0, %v3677
      %v3679 = vpop.f32.mrb[0].mxu0
      %v3680 = vpop.f32.mrb[0].mxu0
      %v3681 = vadd.f32 0.0, %v3680
      %v3682 = vpop.f32.mrb[0].mxu0
      %3683 = vdwg.mxu0
      %3684 = vrot.lane.b32.xlu0 %v988, 64
      %v3685 = vpop.permute.xlu0 %3684
      %v3688 = vsel %vm1452, %v3630, 0
      %3690 = vmatprep.subr.bf16.mxu0 0
      %3691 = vmatpush1.bf16.msra.mxu0 %v3685
      %3692 = vmatprep.subr.bf16.mxu0 0
      %3693 = vmatpush1.bf16.msra.mxu0 0
      %3694 = vmatprep.subr.bf16.mxu0 0
      %3695 = vmatpush1.bf16.msra.mxu0 0
      %3696 = vmatprep.subr.bf16.mxu0 0
      %3697 = vmatpush1.bf16.msra.mxu0 0
      %3698 = vmatprep.subr.bf16.mxu0 0
      %3699 = vmatpush1.bf16.msra.mxu0 0
      %3700 = vmatprep.subr.bf16.mxu0 0
      %3701 = vmatpush1.bf16.msra.mxu0 0
      %3702 = vmatprep.subr.bf16.mxu0 0
      %3703 = vmatpush1.bf16.msra.mxu0 0
      %3704 = vmatprep.subr.bf16.mxu0 0
      %3705 = vmatpush1.bf16.msra.mxu0 0
      %3706 = vmatprep.subr.bf16.mxu0 0
      %3707 = vmatpush1.bf16.msra.mxu0 0
      %3708 = vmatprep.subr.bf16.mxu0 0
      %3709 = vmatpush1.bf16.msra.mxu0 0
      %3710 = vmatprep.subr.bf16.mxu0 0
      %3711 = vmatpush1.bf16.msra.mxu0 0
      %3712 = vmatprep.subr.bf16.mxu0 0
      %3713 = vmatpush1.bf16.msra.mxu0 0
      %3714 = vmatprep.subr.bf16.mxu0 0
      %3715 = vmatpush1.bf16.msra.mxu0 0
      %3716 = vmatprep.subr.bf16.mxu0 0
      %3717 = vmatpush1.bf16.msra.mxu0 0
      %3718 = vmatprep.subr.bf16.mxu0 0
      %3719 = vmatpush1.bf16.msra.mxu0 0
      %3720 = vmatprep.subr.bf16.mxu0 0
      %3721 = vmatpush1.bf16.msra.mxu0 0
      %3722 = vmatprep.mubr.bf16.mxu0 0
      %3723 = vmatmul.mubr.bf16.gmra.mrb[0].mxu0 %v3688
      %v3724 = vpop.f32.mrb[0].mxu0
      %v3725 = vadd.f32 0.0, %v3724
      %v3726 = vpop.f32.mrb[0].mxu0
      %v3727 = vpop.f32.mrb[0].mxu0
      %v3728 = vadd.f32 0.0, %v3727
      %v3729 = vpop.f32.mrb[0].mxu0
      %3730 = vdwg.mxu0
      %3731 = vrot.lane.b32.xlu0 %v989, 64
      %v3732 = vpop.permute.xlu0 %3731
      %v3735 = vsel %vm1452, %v3631, 0
      %3737 = vmatprep.subr.bf16.mxu0 0
      %3738 = vmatpush1.bf16.msra.mxu0 %v3732
      %3739 = vmatprep.subr.bf16.mxu0 0
      %3740 = vmatpush1.bf16.msra.mxu0 0
      %3741 = vmatprep.subr.bf16.mxu0 0
      %3742 = vmatpush1.bf16.msra.mxu0 0
      %3743 = vmatprep.subr.bf16.mxu0 0
      %3744 = vmatpush1.bf16.msra.mxu0 0
      %3745 = vmatprep.subr.bf16.mxu0 0
      %3746 = vmatpush1.bf16.msra.mxu0 0
      %3747 = vmatprep.subr.bf16.mxu0 0
      %3748 = vmatpush1.bf16.msra.mxu0 0
      %3749 = vmatprep.subr.bf16.mxu0 0
      %3750 = vmatpush1.bf16.msra.mxu0 0
      %3751 = vmatprep.subr.bf16.mxu0 0
      %3752 = vmatpush1.bf16.msra.mxu0 0
      %3753 = vmatprep.subr.bf16.mxu0 0
      %3754 = vmatpush1.bf16.msra.mxu0 0
      %3755 = vmatprep.subr.bf16.mxu0 0
      %3756 = vmatpush1.bf16.msra.mxu0 0
      %3757 = vmatprep.subr.bf16.mxu0 0
      %3758 = vmatpush1.bf16.msra.mxu0 0
      %3759 = vmatprep.subr.bf16.mxu0 0
      %3760 = vmatpush1.bf16.msra.mxu0 0
      %3761 = vmatprep.subr.bf16.mxu0 0
      %3762 = vmatpush1.bf16.msra.mxu0 0
      %3763 = vmatprep.subr.bf16.mxu0 0
      %3764 = vmatpush1.bf16.msra.mxu0 0
      %3765 = vmatprep.subr.bf16.mxu0 0
      %3766 = vmatpush1.bf16.msra.mxu0 0
      %3767 = vmatprep.subr.bf16.mxu0 0
      %3768 = vmatpush1.bf16.msra.mxu0 0
      %3769 = vmatprep.mubr.bf16.mxu0 0
      %3770 = vmatmul.mubr.bf16.gmra.mrb[0].mxu0 %v3735
      %v3771 = vpop.f32.mrb[0].mxu0
      %v3772 = vadd.f32 0.0, %v3771
      %v3773 = vpop.f32.mrb[0].mxu0
      %v3774 = vpop.f32.mrb[0].mxu0
      %v3775 = vadd.f32 0.0, %v3774
      %v3776 = vpop.f32.mrb[0].mxu0
      %3777 = vdwg.mxu0
      %3778 = vrot.lane.b32.xlu0 %v990, 64
      %v3779 = vpop.permute.xlu0 %3778
      %v3782 = vsel %vm1452, %v3632, 0
      %3784 = vmatprep.subr.bf16.mxu0 0
      %3785 = vmatpush1.bf16.msra.mxu0 %v3779
      %3786 = vmatprep.subr.bf16.mxu0 0
      %3787 = vmatpush1.bf16.msra.mxu0 0
      %3788 = vmatprep.subr.bf16.mxu0 0
      %3789 = vmatpush1.bf16.msra.mxu0 0
      %3790 = vmatprep.subr.bf16.mxu0 0
      %3791 = vmatpush1.bf16.msra.mxu0 0
      %3792 = vmatprep.subr.bf16.mxu0 0
      %3793 = vmatpush1.bf16.msra.mxu0 0
      %3794 = vmatprep.subr.bf16.mxu0 0
      %3795 = vmatpush1.bf16.msra.mxu0 0
      %3796 = vmatprep.subr.bf16.mxu0 0
      %3797 = vmatpush1.bf16.msra.mxu0 0
      %3798 = vmatprep.subr.bf16.mxu0 0
      %3799 = vmatpush1.bf16.msra.mxu0 0
      %3800 = vmatprep.subr.bf16.mxu0 0
      %3801 = vmatpush1.bf16.msra.mxu0 0
      %3802 = vmatprep.subr.bf16.mxu0 0
      %3803 = vmatpush1.bf16.msra.mxu0 0
      %3804 = vmatprep.subr.bf16.mxu0 0
      %3805 = vmatpush1.bf16.msra.mxu0 0
      %3806 = vmatprep.subr.bf16.mxu0 0
      %3807 = vmatpush1.bf16.msra.mxu0 0
      %3808 = vmatprep.subr.bf16.mxu0 0
      %3809 = vmatpush1.bf16.msra.mxu0 0
      %3810 = vmatprep.subr.bf16.mxu0 0
      %3811 = vmatpush1.bf16.msra.mxu0 0
      %3812 = vmatprep.subr.bf16.mxu0 0
      %3813 = vmatpush1.bf16.msra.mxu0 0
      %3814 = vmatprep.subr.bf16.mxu0 0
      %3815 = vmatpush1.bf16.msra.mxu0 0
      %3816 = vmatprep.mubr.bf16.mxu0 0
      %3817 = vmatmul.mubr.bf16.gmra.mrb[0].mxu0 %v3782
      %v3818 = vpop.f32.mrb[0].mxu0
      %v3819 = vadd.f32 0.0, %v3818
      %v3820 = vpop.f32.mrb[0].mxu0
      %v3821 = vpop.f32.mrb[0].mxu0
      %v3822 = vadd.f32 0.0, %v3821
      %v3823 = vpop.f32.mrb[0].mxu0
      %3824 = vdwg.mxu0
      %3825 = vrot.lane.b32.xlu0 %v991, 64
      %v3826 = vpop.permute.xlu0 %3825
      %v3829 = vsel %vm1452, %v3633, 0
      %3831 = vmatprep.subr.bf16.mxu0 0
      %3832 = vmatpush1.bf16.msra.mxu0 %v3826
      %3833 = vmatprep.subr.bf16.mxu0 0
      %3834 = vmatpush1.bf16.msra.mxu0 0
      %3835 = vmatprep.subr.bf16.mxu0 0
      %3836 = vmatpush1.bf16.msra.mxu0 0
      %3837 = vmatprep.subr.bf16.mxu0 0
      %3838 = vmatpush1.bf16.msra.mxu0 0
      %3839 = vmatprep.subr.bf16.mxu0 0
      %3840 = vmatpush1.bf16.msra.mxu0 0
      %3841 = vmatprep.subr.bf16.mxu0 0
      %3842 = vmatpush1.bf16.msra.mxu0 0
      %3843 = vmatprep.subr.bf16.mxu0 0
      %3844 = vmatpush1.bf16.msra.mxu0 0
      %3845 = vmatprep.subr.bf16.mxu0 0
      %3846 = vmatpush1.bf16.msra.mxu0 0
      %3847 = vmatprep.subr.bf16.mxu0 0
      %3848 = vmatpush1.bf16.msra.mxu0 0
      %3849 = vmatprep.subr.bf16.mxu0 0
      %3850 = vmatpush1.bf16.msra.mxu0 0
      %3851 = vmatprep.subr.bf16.mxu0 0
      %3852 = vmatpush1.bf16.msra.mxu0 0
      %3853 = vmatprep.subr.bf16.mxu0 0
      %3854 = vmatpush1.bf16.msra.mxu0 0
      %3855 = vmatprep.subr.bf16.mxu0 0
      %3856 = vmatpush1.bf16.msra.mxu0 0
      %3857 = vmatprep.subr.bf16.mxu0 0
      %3858 = vmatpush1.bf16.msra.mxu0 0
      %3859 = vmatprep.subr.bf16.mxu0 0
      %3860 = vmatpush1.bf16.msra.mxu0 0
      %3861 = vmatprep.subr.bf16.mxu0 0
      %3862 = vmatpush1.bf16.msra.mxu0 0
      %3863 = vmatprep.mubr.bf16.mxu0 0
      %3864 = vmatmul.mubr.bf16.gmra.mrb[0].mxu0 %v3829
      %v3865 = vpop.f32.mrb[0].mxu0
      %v3866 = vadd.f32 0.0, %v3865
      %v3867 = vpop.f32.mrb[0].mxu0
      %v3868 = vpop.f32.mrb[0].mxu0
      %v3869 = vadd.f32 0.0, %v3868
      %v3870 = vpop.f32.mrb[0].mxu0
      %3871 = vdwg.mxu0
      %3872 = vrot.lane.b32.xlu0 %v992, 64
      %v3873 = vpop.permute.xlu0 %3872
      %v3876 = vsel %vm1452, %v3634, 0
      %3878 = vmatprep.subr.bf16.mxu0 0
      %3879 = vmatpush1.bf16.msra.mxu0 %v3873
      %3880 = vmatprep.subr.bf16.mxu0 0
      %3881 = vmatpush1.bf16.msra.mxu0 0
      %3882 = vmatprep.subr.bf16.mxu0 0
      %3883 = vmatpush1.bf16.msra.mxu0 0
      %3884 = vmatprep.subr.bf16.mxu0 0
      %3885 = vmatpush1.bf16.msra.mxu0 0
      %3886 = vmatprep.subr.bf16.mxu0 0
      %3887 = vmatpush1.bf16.msra.mxu0 0
      %3888 = vmatprep.subr.bf16.mxu0 0
      %3889 = vmatpush1.bf16.msra.mxu0 0
      %3890 = vmatprep.subr.bf16.mxu0 0
      %3891 = vmatpush1.bf16.msra.mxu0 0
      %3892 = vmatprep.subr.bf16.mxu0 0
      %3893 = vmatpush1.bf16.msra.mxu0 0
      %3894 = vmatprep.subr.bf16.mxu0 0
      %3895 = vmatpush1.bf16.msra.mxu0 0
      %3896 = vmatprep.subr.bf16.mxu0 0
      %3897 = vmatpush1.bf16.msra.mxu0 0
      %3898 = vmatprep.subr.bf16.mxu0 0
      %3899 = vmatpush1.bf16.msra.mxu0 0
      %3900 = vmatprep.subr.bf16.mxu0 0
      %3901 = vmatpush1.bf16.msra.mxu0 0
      %3902 = vmatprep.subr.bf16.mxu0 0
      %3903 = vmatpush1.bf16.msra.mxu0 0
      %3904 = vmatprep.subr.bf16.mxu0 0
      %3905 = vmatpush1.bf16.msra.mxu0 0
      %3906 = vmatprep.subr.bf16.mxu0 0
      %3907 = vmatpush1.bf16.msra.mxu0 0
      %3908 = vmatprep.subr.bf16.mxu0 0
      %3909 = vmatpush1.bf16.msra.mxu0 0
      %3910 = vmatprep.mubr.bf16.mxu0 0
      %3911 = vmatmul.mubr.bf16.gmra.mrb[0].mxu0 %v3876
      %v3912 = vpop.f32.mrb[0].mxu0
      %v3913 = vadd.f32 0.0, %v3912
      %v3914 = vpop.f32.mrb[0].mxu0
      %v3915 = vpop.f32.mrb[0].mxu0
      %v3916 = vadd.f32 0.0, %v3915
      %v3917 = vpop.f32.mrb[0].mxu0
      %3918 = vdwg.mxu0
      %3919 = vrot.lane.b32.xlu0 %v993, 64
      %v3920 = vpop.permute.xlu0 %3919
      %v3923 = vsel %vm1452, %v3635, 0
      %3925 = vmatprep.subr.bf16.mxu0 0
      %3926 = vmatpush1.bf16.msra.mxu0 %v3920
      %3927 = vmatprep.subr.bf16.mxu0 0
      %3928 = vmatpush1.bf16.msra.mxu0 0
      %3929 = vmatprep.subr.bf16.mxu0 0
      %3930 = vmatpush1.bf16.msra.mxu0 0
      %3931 = vmatprep.subr.bf16.mxu0 0
      %3932 = vmatpush1.bf16.msra.mxu0 0
      %3933 = vmatprep.subr.bf16.mxu0 0
      %3934 = vmatpush1.bf16.msra.mxu0 0
      %3935 = vmatprep.subr.bf16.mxu0 0
      %3936 = vmatpush1.bf16.msra.mxu0 0
      %3937 = vmatprep.subr.bf16.mxu0 0
      %3938 = vmatpush1.bf16.msra.mxu0 0
      %3939 = vmatprep.subr.bf16.mxu0 0
      %3940 = vmatpush1.bf16.msra.mxu0 0
      %3941 = vmatprep.subr.bf16.mxu0 0
      %3942 = vmatpush1.bf16.msra.mxu0 0
      %3943 = vmatprep.subr.bf16.mxu0 0
      %3944 = vmatpush1.bf16.msra.mxu0 0
      %3945 = vmatprep.subr.bf16.mxu0 0
      %3946 = vmatpush1.bf16.msra.mxu0 0
      %3947 = vmatprep.subr.bf16.mxu0 0
      %3948 = vmatpush1.bf16.msra.mxu0 0
      %3949 = vmatprep.subr.bf16.mxu0 0
      %3950 = vmatpush1.bf16.msra.mxu0 0
      %3951 = vmatprep.subr.bf16.mxu0 0
      %3952 = vmatpush1.bf16.msra.mxu0 0
      %3953 = vmatprep.subr.bf16.mxu0 0
      %3954 = vmatpush1.bf16.msra.mxu0 0
      %3955 = vmatprep.subr.bf16.mxu0 0
      %3956 = vmatpush1.bf16.msra.mxu0 0
      %3957 = vmatprep.mubr.bf16.mxu0 0
      %3958 = vmatmul.mubr.bf16.gmra.mrb[0].mxu0 %v3923
      %v3959 = vpop.f32.mrb[0].mxu0
      %v3960 = vadd.f32 0.0, %v3959
      %v3961 = vpop.f32.mrb[0].mxu0
      %v3962 = vpop.f32.mrb[0].mxu0
      %v3963 = vadd.f32 0.0, %v3962
      %v3964 = vpop.f32.mrb[0].mxu0
      %3965 = vdwg.mxu0
      %3966 = vrot.lane.b32.xlu0 %v994, 64
      %v3967 = vpop.permute.xlu0 %3966
      %v3970 = vsel %vm1452, %v3636, 0
      %3972 = vmatprep.subr.bf16.mxu0 0
      %3973 = vmatpush1.bf16.msra.mxu0 %v3967
      %3974 = vmatprep.subr.bf16.mxu0 0
      %3975 = vmatpush1.bf16.msra.mxu0 0
      %3976 = vmatprep.subr.bf16.mxu0 0
      %3977 = vmatpush1.bf16.msra.mxu0 0
      %3978 = vmatprep.subr.bf16.mxu0 0
      %3979 = vmatpush1.bf16.msra.mxu0 0
      %3980 = vmatprep.subr.bf16.mxu0 0
      %3981 = vmatpush1.bf16.msra.mxu0 0
      %3982 = vmatprep.subr.bf16.mxu0 0
      %3983 = vmatpush1.bf16.msra.mxu0 0
      %3984 = vmatprep.subr.bf16.mxu0 0
      %3985 = vmatpush1.bf16.msra.mxu0 0
      %3986 = vmatprep.subr.bf16.mxu0 0
      %3987 = vmatpush1.bf16.msra.mxu0 0
      %3988 = vmatprep.subr.bf16.mxu0 0
      %3989 = vmatpush1.bf16.msra.mxu0 0
      %3990 = vmatprep.subr.bf16.mxu0 0
      %3991 = vmatpush1.bf16.msra.mxu0 0
      %3992 = vmatprep.subr.bf16.mxu0 0
      %3993 = vmatpush1.bf16.msra.mxu0 0
      %3994 = vmatprep.subr.bf16.mxu0 0
      %3995 = vmatpush1.bf16.msra.mxu0 0
      %3996 = vmatprep.subr.bf16.mxu0 0
      %3997 = vmatpush1.bf16.msra.mxu0 0
      %3998 = vmatprep.subr.bf16.mxu0 0
      %3999 = vmatpush1.bf16.msra.mxu0 0
      %4000 = vmatprep.subr.bf16.mxu0 0
      %4001 = vmatpush1.bf16.msra.mxu0 0
      %4002 = vmatprep.subr.bf16.mxu0 0
      %4003 = vmatpush1.bf16.msra.mxu0 0
      %4004 = vmatprep.mubr.bf16.mxu0 0
      %4005 = vmatmul.mubr.bf16.gmra.mrb[0].mxu0 %v3970
      %v4006 = vpop.f32.mrb[0].mxu0
      %v4007 = vadd.f32 0.0, %v4006
      %v4008 = vpop.f32.mrb[0].mxu0
      %v4009 = vpop.f32.mrb[0].mxu0
      %v4010 = vadd.f32 0.0, %v4009
      %v4011 = vpop.f32.mrb[0].mxu0
      %4012 = vdwg.mxu0
      %4013 = vrot.lane.b32.xlu0 %v971, 32
      %v4014 = vpop.permute.xlu0 %4013
      %4015 = vrot.lane.b32.xlu0 %v979, 32
      %v4016 = vpop.permute.xlu0 %4015
      %v4018 = vsel %vm995, %v4014, 0
      %v4021 = vsel %vm995, %v4016, 0
      %4023 = vmatprep.subr.bf16.mxu0 0
      %4024 = vmatpush1.bf16.xpose.msra.mxu0 %v4021
      %4025 = vmatprep.subr.bf16.mxu0 0
      %4026 = vmatpush1.bf16.xpose.msra.mxu0 0
      %4027 = vmatprep.subr.bf16.mxu0 0
      %4028 = vmatpush1.bf16.xpose.msra.mxu0 0
      %4029 = vmatprep.subr.bf16.mxu0 0
      %4030 = vmatpush1.bf16.xpose.msra.mxu0 0
      %4031 = vmatprep.subr.bf16.mxu0 0
      %4032 = vmatpush1.bf16.xpose.msra.mxu0 0
      %4033 = vmatprep.subr.bf16.mxu0 0
      %4034 = vmatpush1.bf16.xpose.msra.mxu0 0
      %4035 = vmatprep.subr.bf16.mxu0 0
      %4036 = vmatpush1.bf16.xpose.msra.mxu0 0
      %4037 = vmatprep.subr.bf16.mxu0 0
      %4038 = vmatpush1.bf16.xpose.msra.mxu0 0
      %4039 = vmatprep.subr.bf16.mxu0 0
      %4040 = vmatpush1.bf16.xpose.msra.mxu0 0
      %4041 = vmatprep.subr.bf16.mxu0 0
      %4042 = vmatpush1.bf16.xpose.msra.mxu0 0
      %4043 = vmatprep.subr.bf16.mxu0 0
      %4044 = vmatpush1.bf16.xpose.msra.mxu0 0
      %4045 = vmatprep.subr.bf16.mxu0 0
      %4046 = vmatpush1.bf16.xpose.msra.mxu0 0
      %4047 = vmatprep.subr.bf16.mxu0 0
      %4048 = vmatpush1.bf16.xpose.msra.mxu0 0
      %4049 = vmatprep.subr.bf16.mxu0 0
      %4050 = vmatpush1.bf16.xpose.msra.mxu0 0
      %4051 = vmatprep.subr.bf16.mxu0 0
      %4052 = vmatpush1.bf16.xpose.msra.mxu0 0
      %4053 = vmatprep.subr.bf16.mxu0 0
      %4054 = vmatpush1.bf16.xpose.msra.mxu0 0
      %4055 = vmatprep.mubr.bf16.mxu0 0
      %4056 = vmatmul.mubr.bf16.gmra.mrb[0].mxu0 %v4018
      %v4057 = vpop.f32.mrb[0].mxu0
      %v4058 = vadd.f32 0.0, %v4057
      %v4059 = vpop.f32.mrb[0].mxu0
      %v4060 = vpop.f32.mrb[0].mxu0
      %v4061 = vadd.f32 0.0, %v4060
      %v4062 = vpop.f32.mrb[0].mxu0
      %4063 = vdwg.mxu0
      %4064 = vrot.lane.b32.xlu0 %v972, 32
      %v4065 = vpop.permute.xlu0 %4064
      %4066 = vrot.lane.b32.xlu0 %v980, 32
      %v4067 = vpop.permute.xlu0 %4066
      %v4069 = vsel %vm995, %v4065, 0
      %v4072 = vsel %vm995, %v4067, 0
      %4074 = vmatprep.subr.bf16.mxu0 0
      %4075 = vmatpush1.bf16.xpose.msra.mxu0 %v4072
      %4076 = vmatprep.subr.bf16.mxu0 0
      %4077 = vmatpush1.bf16.xpose.msra.mxu0 0
      %4078 = vmatprep.subr.bf16.mxu0 0
      %4079 = vmatpush1.bf16.xpose.msra.mxu0 0
      %4080 = vmatprep.subr.bf16.mxu0 0
      %4081 = vmatpush1.bf16.xpose.msra.mxu0 0
      %4082 = vmatprep.subr.bf16.mxu0 0
      %4083 = vmatpush1.bf16.xpose.msra.mxu0 0
      %4084 = vmatprep.subr.bf16.mxu0 0
      %4085 = vmatpush1.bf16.xpose.msra.mxu0 0
      %4086 = vmatprep.subr.bf16.mxu0 0
      %4087 = vmatpush1.bf16.xpose.msra.mxu0 0
      %4088 = vmatprep.subr.bf16.mxu0 0
      %4089 = vmatpush1.bf16.xpose.msra.mxu0 0
      %4090 = vmatprep.subr.bf16.mxu0 0
      %4091 = vmatpush1.bf16.xpose.msra.mxu0 0
      %4092 = vmatprep.subr.bf16.mxu0 0
      %4093 = vmatpush1.bf16.xpose.msra.mxu0 0
      %4094 = vmatprep.subr.bf16.mxu0 0
      %4095 = vmatpush1.bf16.xpose.msra.mxu0 0
      %4096 = vmatprep.subr.bf16.mxu0 0
      %4097 = vmatpush1.bf16.xpose.msra.mxu0 0
      %4098 = vmatprep.subr.bf16.mxu0 0
      %4099 = vmatpush1.bf16.xpose.msra.mxu0 0
      %4100 = vmatprep.subr.bf16.mxu0 0
      %4101 = vmatpush1.bf16.xpose.msra.mxu0 0
      %4102 = vmatprep.subr.bf16.mxu0 0
      %4103 = vmatpush1.bf16.xpose.msra.mxu0 0
      %4104 = vmatprep.subr.bf16.mxu0 0
      %4105 = vmatpush1.bf16.xpose.msra.mxu0 0
      %4106 = vmatprep.mubr.bf16.mxu0 0
      %4107 = vmatmul.mubr.bf16.gmra.mrb[0].mxu0 %v4069
      %v4108 = vpop.f32.mrb[0].mxu0
      %v4109 = vadd.f32 0.0, %v4108
      %v4110 = vpop.f32.mrb[0].mxu0
      %v4111 = vpop.f32.mrb[0].mxu0
      %v4112 = vadd.f32 0.0, %v4111
      %v4113 = vpop.f32.mrb[0].mxu0
      %4114 = vdwg.mxu0
      %4115 = vrot.lane.b32.xlu0 %v973, 32
      %v4116 = vpop.permute.xlu0 %4115
      %4117 = vrot.lane.b32.xlu0 %v981, 32
      %v4118 = vpop.permute.xlu0 %4117
      %v4120 = vsel %vm995, %v4116, 0
      %v4123 = vsel %vm995, %v4118, 0
      %4125 = vmatprep.subr.bf16.mxu0 0
      %4126 = vmatpush1.bf16.xpose.msra.mxu0 %v4123
      %4127 = vmatprep.subr.bf16.mxu0 0
      %4128 = vmatpush1.bf16.xpose.msra.mxu0 0
      %4129 = vmatprep.subr.bf16.mxu0 0
      %4130 = vmatpush1.bf16.xpose.msra.mxu0 0
      %4131 = vmatprep.subr.bf16.mxu0 0
      %4132 = vmatpush1.bf16.xpose.msra.mxu0 0
      %4133 = vmatprep.subr.bf16.mxu0 0
      %4134 = vmatpush1.bf16.xpose.msra.mxu0 0
      %4135 = vmatprep.subr.bf16.mxu0 0
      %4136 = vmatpush1.bf16.xpose.msra.mxu0 0
      %4137 = vmatprep.subr.bf16.mxu0 0
      %4138 = vmatpush1.bf16.xpose.msra.mxu0 0
      %4139 = vmatprep.subr.bf16.mxu0 0
      %4140 = vmatpush1.bf16.xpose.msra.mxu0 0
      %4141 = vmatprep.subr.bf16.mxu0 0
      %4142 = vmatpush1.bf16.xpose.msra.mxu0 0
      %4143 = vmatprep.subr.bf16.mxu0 0
      %4144 = vmatpush1.bf16.xpose.msra.mxu0 0
      %4145 = vmatprep.subr.bf16.mxu0 0
      %4146 = vmatpush1.bf16.xpose.msra.mxu0 0
      %4147 = vmatprep.subr.bf16.mxu0 0
      %4148 = vmatpush1.bf16.xpose.msra.mxu0 0
      %4149 = vmatprep.subr.bf16.mxu0 0
      %4150 = vmatpush1.bf16.xpose.msra.mxu0 0
      %4151 = vmatprep.subr.bf16.mxu0 0
      %4152 = vmatpush1.bf16.xpose.msra.mxu0 0
      %4153 = vmatprep.subr.bf16.mxu0 0
      %4154 = vmatpush1.bf16.xpose.msra.mxu0 0
      %4155 = vmatprep.subr.bf16.mxu0 0
      %4156 = vmatpush1.bf16.xpose.msra.mxu0 0
      %4157 = vmatprep.mubr.bf16.mxu0 0
      %4158 = vmatmul.mubr.bf16.gmra.mrb[0].mxu0 %v4120
      %v4159 = vpop.f32.mrb[0].mxu0
      %v4160 = vadd.f32 0.0, %v4159
      %v4161 = vpop.f32.mrb[0].mxu0
      %v4162 = vpop.f32.mrb[0].mxu0
      %v4163 = vadd.f32 0.0, %v4162
      %v4164 = vpop.f32.mrb[0].mxu0
      %4165 = vdwg.mxu0
      %4166 = vrot.lane.b32.xlu0 %v974, 32
      %v4167 = vpop.permute.xlu0 %4166
      %4168 = vrot.lane.b32.xlu0 %v982, 32
      %v4169 = vpop.permute.xlu0 %4168
      %v4171 = vsel %vm995, %v4167, 0
      %v4174 = vsel %vm995, %v4169, 0
      %4176 = vmatprep.subr.bf16.mxu0 0
      %4177 = vmatpush1.bf16.xpose.msra.mxu0 %v4174
      %4178 = vmatprep.subr.bf16.mxu0 0
      %4179 = vmatpush1.bf16.xpose.msra.mxu0 0
      %4180 = vmatprep.subr.bf16.mxu0 0
      %4181 = vmatpush1.bf16.xpose.msra.mxu0 0
      %4182 = vmatprep.subr.bf16.mxu0 0
      %4183 = vmatpush1.bf16.xpose.msra.mxu0 0
      %4184 = vmatprep.subr.bf16.mxu0 0
      %4185 = vmatpush1.bf16.xpose.msra.mxu0 0
      %4186 = vmatprep.subr.bf16.mxu0 0
      %4187 = vmatpush1.bf16.xpose.msra.mxu0 0
      %4188 = vmatprep.subr.bf16.mxu0 0
      %4189 = vmatpush1.bf16.xpose.msra.mxu0 0
      %4190 = vmatprep.subr.bf16.mxu0 0
      %4191 = vmatpush1.bf16.xpose.msra.mxu0 0
      %4192 = vmatprep.subr.bf16.mxu0 0
      %4193 = vmatpush1.bf16.xpose.msra.mxu0 0
      %4194 = vmatprep.subr.bf16.mxu0 0
      %4195 = vmatpush1.bf16.xpose.msra.mxu0 0
      %4196 = vmatprep.subr.bf16.mxu0 0
      %4197 = vmatpush1.bf16.xpose.msra.mxu0 0
      %4198 = vmatprep.subr.bf16.mxu0 0
      %4199 = vmatpush1.bf16.xpose.msra.mxu0 0
      %4200 = vmatprep.subr.bf16.mxu0 0
      %4201 = vmatpush1.bf16.xpose.msra.mxu0 0
      %4202 = vmatprep.subr.bf16.mxu0 0
      %4203 = vmatpush1.bf16.xpose.msra.mxu0 0
      %4204 = vmatprep.subr.bf16.mxu0 0
      %4205 = vmatpush1.bf16.xpose.msra.mxu0 0
      %4206 = vmatprep.subr.bf16.mxu0 0
      %4207 = vmatpush1.bf16.xpose.msra.mxu0 0
      %4208 = vmatprep.mubr.bf16.mxu0 0
      %4209 = vmatmul.mubr.bf16.gmra.mrb[0].mxu0 %v4171
      %v4210 = vpop.f32.mrb[0].mxu0
      %v4211 = vadd.f32 0.0, %v4210
      %v4212 = vpop.f32.mrb[0].mxu0
      %v4213 = vpop.f32.mrb[0].mxu0
      %v4214 = vadd.f32 0.0, %v4213
      %v4215 = vpop.f32.mrb[0].mxu0
      %4216 = vdwg.mxu0
      %4217 = vrot.lane.b32.xlu0 %v975, 32
      %v4218 = vpop.permute.xlu0 %4217
      %4219 = vrot.lane.b32.xlu0 %v983, 32
      %v4220 = vpop.permute.xlu0 %4219
      %v4222 = vsel %vm995, %v4218, 0
      %v4225 = vsel %vm995, %v4220, 0
      %4227 = vmatprep.subr.bf16.mxu0 0
      %4228 = vmatpush1.bf16.xpose.msra.mxu0 %v4225
      %4229 = vmatprep.subr.bf16.mxu0 0
      %4230 = vmatpush1.bf16.xpose.msra.mxu0 0
      %4231 = vmatprep.subr.bf16.mxu0 0
      %4232 = vmatpush1.bf16.xpose.msra.mxu0 0
      %4233 = vmatprep.subr.bf16.mxu0 0
      %4234 = vmatpush1.bf16.xpose.msra.mxu0 0
      %4235 = vmatprep.subr.bf16.mxu0 0
      %4236 = vmatpush1.bf16.xpose.msra.mxu0 0
      %4237 = vmatprep.subr.bf16.mxu0 0
      %4238 = vmatpush1.bf16.xpose.msra.mxu0 0
      %4239 = vmatprep.subr.bf16.mxu0 0
      %4240 = vmatpush1.bf16.xpose.msra.mxu0 0
      %4241 = vmatprep.subr.bf16.mxu0 0
      %4242 = vmatpush1.bf16.xpose.msra.mxu0 0
      %4243 = vmatprep.subr.bf16.mxu0 0
      %4244 = vmatpush1.bf16.xpose.msra.mxu0 0
      %4245 = vmatprep.subr.bf16.mxu0 0
      %4246 = vmatpush1.bf16.xpose.msra.mxu0 0
      %4247 = vmatprep.subr.bf16.mxu0 0
      %4248 = vmatpush1.bf16.xpose.msra.mxu0 0
      %4249 = vmatprep.subr.bf16.mxu0 0
      %4250 = vmatpush1.bf16.xpose.msra.mxu0 0
      %4251 = vmatprep.subr.bf16.mxu0 0
      %4252 = vmatpush1.bf16.xpose.msra.mxu0 0
      %4253 = vmatprep.subr.bf16.mxu0 0
      %4254 = vmatpush1.bf16.xpose.msra.mxu0 0
      %4255 = vmatprep.subr.bf16.mxu0 0
      %4256 = vmatpush1.bf16.xpose.msra.mxu0 0
      %4257 = vmatprep.subr.bf16.mxu0 0
      %4258 = vmatpush1.bf16.xpose.msra.mxu0 0
      %4259 = vmatprep.mubr.bf16.mxu0 0
      %4260 = vmatmul.mubr.bf16.gmra.mrb[0].mxu0 %v4222
      %v4261 = vpop.f32.mrb[0].mxu0
      %v4262 = vadd.f32 0.0, %v4261
      %v4263 = vpop.f32.mrb[0].mxu0
      %v4264 = vpop.f32.mrb[0].mxu0
      %v4265 = vadd.f32 0.0, %v4264
      %v4266 = vpop.f32.mrb[0].mxu0
      %4267 = vdwg.mxu0
      %4268 = vrot.lane.b32.xlu0 %v976, 32
      %v4269 = vpop.permute.xlu0 %4268
      %4270 = vrot.lane.b32.xlu0 %v984, 32
      %v4271 = vpop.permute.xlu0 %4270
      %v4273 = vsel %vm995, %v4269, 0
      %v4276 = vsel %vm995, %v4271, 0
      %4278 = vmatprep.subr.bf16.mxu0 0
      %4279 = vmatpush1.bf16.xpose.msra.mxu0 %v4276
      %4280 = vmatprep.subr.bf16.mxu0 0
      %4281 = vmatpush1.bf16.xpose.msra.mxu0 0
      %4282 = vmatprep.subr.bf16.mxu0 0
      %4283 = vmatpush1.bf16.xpose.msra.mxu0 0
      %4284 = vmatprep.subr.bf16.mxu0 0
      %4285 = vmatpush1.bf16.xpose.msra.mxu0 0
      %4286 = vmatprep.subr.bf16.mxu0 0
      %4287 = vmatpush1.bf16.xpose.msra.mxu0 0
      %4288 = vmatprep.subr.bf16.mxu0 0
      %4289 = vmatpush1.bf16.xpose.msra.mxu0 0
      %4290 = vmatprep.subr.bf16.mxu0 0
      %4291 = vmatpush1.bf16.xpose.msra.mxu0 0
      %4292 = vmatprep.subr.bf16.mxu0 0
      %4293 = vmatpush1.bf16.xpose.msra.mxu0 0
      %4294 = vmatprep.subr.bf16.mxu0 0
      %4295 = vmatpush1.bf16.xpose.msra.mxu0 0
      %4296 = vmatprep.subr.bf16.mxu0 0
      %4297 = vmatpush1.bf16.xpose.msra.mxu0 0
      %4298 = vmatprep.subr.bf16.mxu0 0
      %4299 = vmatpush1.bf16.xpose.msra.mxu0 0
      %4300 = vmatprep.subr.bf16.mxu0 0
      %4301 = vmatpush1.bf16.xpose.msra.mxu0 0
      %4302 = vmatprep.subr.bf16.mxu0 0
      %4303 = vmatpush1.bf16.xpose.msra.mxu0 0
      %4304 = vmatprep.subr.bf16.mxu0 0
      %4305 = vmatpush1.bf16.xpose.msra.mxu0 0
      %4306 = vmatprep.subr.bf16.mxu0 0
      %4307 = vmatpush1.bf16.xpose.msra.mxu0 0
      %4308 = vmatprep.subr.bf16.mxu0 0
      %4309 = vmatpush1.bf16.xpose.msra.mxu0 0
      %4310 = vmatprep.mubr.bf16.mxu0 0
      %4311 = vmatmul.mubr.bf16.gmra.mrb[0].mxu0 %v4273
      %v4312 = vpop.f32.mrb[0].mxu0
      %v4313 = vadd.f32 0.0, %v4312
      %v4314 = vpop.f32.mrb[0].mxu0
      %v4315 = vpop.f32.mrb[0].mxu0
      %v4316 = vadd.f32 0.0, %v4315
      %v4317 = vpop.f32.mrb[0].mxu0
      %4318 = vdwg.mxu0
      %4319 = vrot.lane.b32.xlu0 %v977, 32
      %v4320 = vpop.permute.xlu0 %4319
      %4321 = vrot.lane.b32.xlu0 %v985, 32
      %v4322 = vpop.permute.xlu0 %4321
      %v4324 = vsel %vm995, %v4320, 0
      %v4327 = vsel %vm995, %v4322, 0
      %4329 = vmatprep.subr.bf16.mxu0 0
      %4330 = vmatpush1.bf16.xpose.msra.mxu0 %v4327
      %4331 = vmatprep.subr.bf16.mxu0 0
      %4332 = vmatpush1.bf16.xpose.msra.mxu0 0
      %4333 = vmatprep.subr.bf16.mxu0 0
      %4334 = vmatpush1.bf16.xpose.msra.mxu0 0
      %4335 = vmatprep.subr.bf16.mxu0 0
      %4336 = vmatpush1.bf16.xpose.msra.mxu0 0
      %4337 = vmatprep.subr.bf16.mxu0 0
      %4338 = vmatpush1.bf16.xpose.msra.mxu0 0
      %4339 = vmatprep.subr.bf16.mxu0 0
      %4340 = vmatpush1.bf16.xpose.msra.mxu0 0
      %4341 = vmatprep.subr.bf16.mxu0 0
      %4342 = vmatpush1.bf16.xpose.msra.mxu0 0
      %4343 = vmatprep.subr.bf16.mxu0 0
      %4344 = vmatpush1.bf16.xpose.msra.mxu0 0
      %4345 = vmatprep.subr.bf16.mxu0 0
      %4346 = vmatpush1.bf16.xpose.msra.mxu0 0
      %4347 = vmatprep.subr.bf16.mxu0 0
      %4348 = vmatpush1.bf16.xpose.msra.mxu0 0
      %4349 = vmatprep.subr.bf16.mxu0 0
      %4350 = vmatpush1.bf16.xpose.msra.mxu0 0
      %4351 = vmatprep.subr.bf16.mxu0 0
      %4352 = vmatpush1.bf16.xpose.msra.mxu0 0
      %4353 = vmatprep.subr.bf16.mxu0 0
      %4354 = vmatpush1.bf16.xpose.msra.mxu0 0
      %4355 = vmatprep.subr.bf16.mxu0 0
      %4356 = vmatpush1.bf16.xpose.msra.mxu0 0
      %4357 = vmatprep.subr.bf16.mxu0 0
      %4358 = vmatpush1.bf16.xpose.msra.mxu0 0
      %4359 = vmatprep.subr.bf16.mxu0 0
      %4360 = vmatpush1.bf16.xpose.msra.mxu0 0
      %4361 = vmatprep.mubr.bf16.mxu0 0
      %4362 = vmatmul.mubr.bf16.gmra.mrb[0].mxu0 %v4324
      %v4363 = vpop.f32.mrb[0].mxu0
      %v4364 = vadd.f32 0.0, %v4363
      %v4365 = vpop.f32.mrb[0].mxu0
      %v4366 = vpop.f32.mrb[0].mxu0
      %v4367 = vadd.f32 0.0, %v4366
      %v4368 = vpop.f32.mrb[0].mxu0
      %4369 = vdwg.mxu0
      %4370 = vrot.lane.b32.xlu0 %v978, 32
      %v4371 = vpop.permute.xlu0 %4370
      %4372 = vrot.lane.b32.xlu0 %v986, 32
      %v4373 = vpop.permute.xlu0 %4372
      %v4375 = vsel %vm995, %v4371, 0
      %v4378 = vsel %vm995, %v4373, 0
      %4380 = vmatprep.subr.bf16.mxu0 0
      %4381 = vmatpush1.bf16.xpose.msra.mxu0 %v4378
      %4382 = vmatprep.subr.bf16.mxu0 0
      %4383 = vmatpush1.bf16.xpose.msra.mxu0 0
      %4384 = vmatprep.subr.bf16.mxu0 0
      %4385 = vmatpush1.bf16.xpose.msra.mxu0 0
      %4386 = vmatprep.subr.bf16.mxu0 0
      %4387 = vmatpush1.bf16.xpose.msra.mxu0 0
      %4388 = vmatprep.subr.bf16.mxu0 0
      %4389 = vmatpush1.bf16.xpose.msra.mxu0 0
      %4390 = vmatprep.subr.bf16.mxu0 0
      %4391 = vmatpush1.bf16.xpose.msra.mxu0 0
      %4392 = vmatprep.subr.bf16.mxu0 0
      %4393 = vmatpush1.bf16.xpose.msra.mxu0 0
      %4394 = vmatprep.subr.bf16.mxu0 0
      %4395 = vmatpush1.bf16.xpose.msra.mxu0 0
      %4396 = vmatprep.subr.bf16.mxu0 0
      %4397 = vmatpush1.bf16.xpose.msra.mxu0 0
      %4398 = vmatprep.subr.bf16.mxu0 0
      %4399 = vmatpush1.bf16.xpose.msra.mxu0 0
      %4400 = vmatprep.subr.bf16.mxu0 0
      %4401 = vmatpush1.bf16.xpose.msra.mxu0 0
      %4402 = vmatprep.subr.bf16.mxu0 0
      %4403 = vmatpush1.bf16.xpose.msra.mxu0 0
      %4404 = vmatprep.subr.bf16.mxu0 0
      %4405 = vmatpush1.bf16.xpose.msra.mxu0 0
      %4406 = vmatprep.subr.bf16.mxu0 0
      %4407 = vmatpush1.bf16.xpose.msra.mxu0 0
      %4408 = vmatprep.subr.bf16.mxu0 0
      %4409 = vmatpush1.bf16.xpose.msra.mxu0 0
      %4410 = vmatprep.subr.bf16.mxu0 0
      %4411 = vmatpush1.bf16.xpose.msra.mxu0 0
      %4412 = vmatprep.mubr.bf16.mxu0 0
      %4413 = vmatmul.mubr.bf16.gmra.mrb[0].mxu0 %v4375
      %v4414 = vpop.f32.mrb[0].mxu0
      %v4415 = vadd.f32 0.0, %v4414
      %v4416 = vpop.f32.mrb[0].mxu0
      %v4417 = vpop.f32.mrb[0].mxu0
      %v4418 = vadd.f32 0.0, %v4417
      %v4419 = vpop.f32.mrb[0].mxu0
      %4420 = vdwg.mxu0
      %v4421 = vmul.f32 %v4058, 0.17677669
      %v4422 = vmul.f32 %v4061, 0.17677669
      %v4423 = vmul.f32 %v4109, 0.17677669
      %v4424 = vmul.f32 %v4112, 0.17677669
      %v4425 = vmul.f32 %v4160, 0.17677669
      %v4426 = vmul.f32 %v4163, 0.17677669
      %v4427 = vmul.f32 %v4211, 0.17677669
      %v4428 = vmul.f32 %v4214, 0.17677669
      %v4429 = vmul.f32 %v4262, 0.17677669
      %v4430 = vmul.f32 %v4265, 0.17677669
      %v4431 = vmul.f32 %v4313, 0.17677669
      %v4432 = vmul.f32 %v4316, 0.17677669
      %v4433 = vmul.f32 %v4364, 0.17677669
      %v4434 = vmul.f32 %v4367, 0.17677669
      %v4435 = vmul.f32 %v4415, 0.17677669
      %v4436 = vmul.f32 %v4418, 0.17677669
      %v4437 = vadd.f32 %v4421, %v1399
      %v4438 = vadd.f32 %v4422, %v1399
      %v4439 = vadd.f32 %v4423, %v1403
      %v4440 = vadd.f32 %v4424, %v1403
      %v4441 = vadd.f32 %v4425, %v1407
      %v4442 = vadd.f32 %v4426, %v1407
      %v4443 = vadd.f32 %v4427, %v1411
      %v4444 = vadd.f32 %v4428, %v1411
      %v4445 = vadd.f32 %v4429, %v1415
      %v4446 = vadd.f32 %v4430, %v1415
      %v4447 = vadd.f32 %v4431, %v1419
      %v4448 = vadd.f32 %v4432, %v1419
      %v4449 = vadd.f32 %v4433, %v1423
      %v4450 = vadd.f32 %v4434, %v1423
      %v4451 = vadd.f32 %v4435, %v1427
      %v4452 = vadd.f32 %v4436, %v1427
      %v4453 = vsel %vm1452, %v4437, -inf
      %4454 = vmax.xlane.f32.xlu0 %v4453
      %v4455 = vpop.xlane.xlu0 %4454
      %v4456 = vsel %vm1452, %v4438, -inf
      %4457 = vmax.xlane.f32.xlu0 %v4456
      %v4458 = vpop.xlane.xlu0 %4457
      %v4459 = vsel %vm1452, %v4439, -inf
      %4460 = vmax.xlane.f32.xlu0 %v4459
      %v4461 = vpop.xlane.xlu0 %4460
      %v4462 = vsel %vm1452, %v4440, -inf
      %4463 = vmax.xlane.f32.xlu0 %v4462
      %v4464 = vpop.xlane.xlu0 %4463
      %v4465 = vsel %vm1452, %v4441, -inf
      %4466 = vmax.xlane.f32.xlu0 %v4465
      %v4467 = vpop.xlane.xlu0 %4466
      %v4468 = vsel %vm1452, %v4442, -inf
      %4469 = vmax.xlane.f32.xlu0 %v4468
      %v4470 = vpop.xlane.xlu0 %4469
      %v4471 = vsel %vm1452, %v4443, -inf
      %4472 = vmax.xlane.f32.xlu0 %v4471
      %v4473 = vpop.xlane.xlu0 %4472
      %v4474 = vsel %vm1452, %v4444, -inf
      %4475 = vmax.xlane.f32.xlu0 %v4474
      %v4476 = vpop.xlane.xlu0 %4475
      %v4477 = vsel %vm1452, %v4445, -inf
      %4478 = vmax.xlane.f32.xlu0 %v4477
      %v4479 = vpop.xlane.xlu0 %4478
      %v4480 = vsel %vm1452, %v4446, -inf
      %4481 = vmax.xlane.f32.xlu0 %v4480
      %v4482 = vpop.xlane.xlu0 %4481
      %v4483 = vsel %vm1452, %v4447, -inf
      %4484 = vmax.xlane.f32.xlu0 %v4483
      %v4485 = vpop.xlane.xlu0 %4484
      %v4486 = vsel %vm1452, %v4448, -inf
      %4487 = vmax.xlane.f32.xlu0 %v4486
      %v4488 = vpop.xlane.xlu0 %4487
      %v4489 = vsel %vm1452, %v4449, -inf
      %4490 = vmax.xlane.f32.xlu0 %v4489
      %v4491 = vpop.xlane.xlu0 %4490
      %v4492 = vsel %vm1452, %v4450, -inf
      %4493 = vmax.xlane.f32.xlu0 %v4492
      %v4494 = vpop.xlane.xlu0 %4493
      %v4495 = vsel %vm1452, %v4451, -inf
      %4496 = vmax.xlane.f32.xlu0 %v4495
      %v4497 = vpop.xlane.xlu0 %4496
      %v4498 = vsel %vm1452, %v4452, -inf
      %4499 = vmax.xlane.f32.xlu0 %v4498
      %v4500 = vpop.xlane.xlu0 %4499
      %v4501 = vsub.f32 %v4437, %v4455
      %v4502 = vsub.f32 %v4438, %v4458
      %v4503 = vsub.f32 %v4439, %v4461
      %v4504 = vsub.f32 %v4440, %v4464
      %v4505 = vsub.f32 %v4441, %v4467
      %v4506 = vsub.f32 %v4442, %v4470
      %v4507 = vsub.f32 %v4443, %v4473
      %v4508 = vsub.f32 %v4444, %v4476
      %v4509 = vsub.f32 %v4445, %v4479
      %v4510 = vsub.f32 %v4446, %v4482
      %v4511 = vsub.f32 %v4447, %v4485
      %v4512 = vsub.f32 %v4448, %v4488
      %v4513 = vsub.f32 %v4449, %v4491
      %v4514 = vsub.f32 %v4450, %v4494
      %v4515 = vsub.f32 %v4451, %v4497
      %v4516 = vsub.f32 %v4452, %v4500
      %v4517 = vmul.f32 %v4501, 1.442695
      %v4518 = vpow.pop %v4517
      %v4519 = vmul.f32 %v4502, 1.442695
      %v4520 = vpow.pop %v4519
      %v4521 = vmul.f32 %v4503, 1.442695
      %v4522 = vpow.pop %v4521
      %v4523 = vmul.f32 %v4504, 1.442695
      %v4524 = vpow.pop %v4523
      %v4525 = vmul.f32 %v4505, 1.442695
      %v4526 = vpow.pop %v4525
      %v4527 = vmul.f32 %v4506, 1.442695
      %v4528 = vpow.pop %v4527
      %v4529 = vmul.f32 %v4507, 1.442695
      %v4530 = vpow.pop %v4529
      %v4531 = vmul.f32 %v4508, 1.442695
      %v4532 = vpow.pop %v4531
      %v4533 = vmul.f32 %v4509, 1.442695
      %v4534 = vpow.pop %v4533
      %v4535 = vmul.f32 %v4510, 1.442695
      %v4536 = vpow.pop %v4535
      %v4537 = vmul.f32 %v4511, 1.442695
      %v4538 = vpow.pop %v4537
      %v4539 = vmul.f32 %v4512, 1.442695
      %v4540 = vpow.pop %v4539
      %v4541 = vmul.f32 %v4513, 1.442695
      %v4542 = vpow.pop %v4541
      %v4543 = vmul.f32 %v4514, 1.442695
      %v4544 = vpow.pop %v4543
      %v4545 = vmul.f32 %v4515, 1.442695
      %v4546 = vpow.pop %v4545
      %v4547 = vmul.f32 %v4516, 1.442695
      %v4548 = vpow.pop %v4547
      %v4549 = vsel %vm1452, %v4518, 0.0
      %4550 = vadd.xlane.f32.xlu0 %v4549
      %v4551 = vpop.xlane.xlu0 %4550
      %v4552 = vsel %vm1452, %v4520, 0.0
      %4553 = vadd.xlane.f32.xlu0 %v4552
      %v4554 = vpop.xlane.xlu0 %4553
      %v4555 = vsel %vm1452, %v4522, 0.0
      %4556 = vadd.xlane.f32.xlu0 %v4555
      %v4557 = vpop.xlane.xlu0 %4556
      %v4558 = vsel %vm1452, %v4524, 0.0
      %4559 = vadd.xlane.f32.xlu0 %v4558
      %v4560 = vpop.xlane.xlu0 %4559
      %v4561 = vsel %vm1452, %v4526, 0.0
      %4562 = vadd.xlane.f32.xlu0 %v4561
      %v4563 = vpop.xlane.xlu0 %4562
      %v4564 = vsel %vm1452, %v4528, 0.0
      %4565 = vadd.xlane.f32.xlu0 %v4564
      %v4566 = vpop.xlane.xlu0 %4565
      %v4567 = vsel %vm1452, %v4530, 0.0
      %4568 = vadd.xlane.f32.xlu0 %v4567
      %v4569 = vpop.xlane.xlu0 %4568
      %v4570 = vsel %vm1452, %v4532, 0.0
      %4571 = vadd.xlane.f32.xlu0 %v4570
      %v4572 = vpop.xlane.xlu0 %4571
      %v4573 = vsel %vm1452, %v4534, 0.0
      %4574 = vadd.xlane.f32.xlu0 %v4573
      %v4575 = vpop.xlane.xlu0 %4574
      %v4576 = vsel %vm1452, %v4536, 0.0
      %4577 = vadd.xlane.f32.xlu0 %v4576
      %v4578 = vpop.xlane.xlu0 %4577
      %v4579 = vsel %vm1452, %v4538, 0.0
      %4580 = vadd.xlane.f32.xlu0 %v4579
      %v4581 = vpop.xlane.xlu0 %4580
      %v4582 = vsel %vm1452, %v4540, 0.0
      %4583 = vadd.xlane.f32.xlu0 %v4582
      %v4584 = vpop.xlane.xlu0 %4583
      %v4585 = vsel %vm1452, %v4542, 0.0
      %4586 = vadd.xlane.f32.xlu0 %v4585
      %v4587 = vpop.xlane.xlu0 %4586
      %v4588 = vsel %vm1452, %v4544, 0.0
      %4589 = vadd.xlane.f32.xlu0 %v4588
      %v4590 = vpop.xlane.xlu0 %4589
      %v4591 = vsel %vm1452, %v4546, 0.0
      %4592 = vadd.xlane.f32.xlu0 %v4591
      %v4593 = vpop.xlane.xlu0 %4592
      %v4594 = vsel %vm1452, %v4548, 0.0
      %4595 = vadd.xlane.f32.xlu0 %v4594
      %v4596 = vpop.xlane.xlu0 %4595
      %v4597 = vrcp.pop %v4551
      %v4598 = vmul.f32 %v4518, %v4597
      %v4599 = vrcp.pop %v4554
      %v4600 = vmul.f32 %v4520, %v4599
      %v4601 = vrcp.pop %v4557
      %v4602 = vmul.f32 %v4522, %v4601
      %v4603 = vrcp.pop %v4560
      %v4604 = vmul.f32 %v4524, %v4603
      %v4605 = vrcp.pop %v4563
      %v4606 = vmul.f32 %v4526, %v4605
      %v4607 = vrcp.pop %v4566
      %v4608 = vmul.f32 %v4528, %v4607
      %v4609 = vrcp.pop %v4569
      %v4610 = vmul.f32 %v4530, %v4609
      %v4611 = vrcp.pop %v4572
      %v4612 = vmul.f32 %v4532, %v4611
      %v4613 = vrcp.pop %v4575
      %v4614 = vmul.f32 %v4534, %v4613
      %v4615 = vrcp.pop %v4578
      %v4616 = vmul.f32 %v4536, %v4615
      %v4617 = vrcp.pop %v4581
      %v4618 = vmul.f32 %v4538, %v4617
      %v4619 = vrcp.pop %v4584
      %v4620 = vmul.f32 %v4540, %v4619
      %v4621 = vrcp.pop %v4587
      %v4622 = vmul.f32 %v4542, %v4621
      %v4623 = vrcp.pop %v4590
      %v4624 = vmul.f32 %v4544, %v4623
      %v4625 = vrcp.pop %v4593
      %v4626 = vmul.f32 %v4546, %v4625
      %v4627 = vrcp.pop %v4596
      %v4628 = vmul.f32 %v4548, %v4627
      %v4629 = vpack.c.bf16 %v4600, %v4598
      %v4630 = vpack.c.bf16 %v4604, %v4602
      %v4631 = vpack.c.bf16 %v4608, %v4606
      %v4632 = vpack.c.bf16 %v4612, %v4610
      %v4633 = vpack.c.bf16 %v4616, %v4614
      %v4634 = vpack.c.bf16 %v4620, %v4618
      %v4635 = vpack.c.bf16 %v4624, %v4622
      %v4636 = vpack.c.bf16 %v4628, %v4626
      %4637 = vrot.lane.b32.xlu0 %v987, 32
      %v4638 = vpop.permute.xlu0 %4637
      %v4641 = vsel %vm1452, %v4629, 0
      %4643 = vmatprep.subr.bf16.mxu0 0
      %4644 = vmatpush1.bf16.msra.mxu0 %v4638
      %4645 = vmatprep.subr.bf16.mxu0 0
      %4646 = vmatpush1.bf16.msra.mxu0 0
      %4647 = vmatprep.subr.bf16.mxu0 0
      %4648 = vmatpush1.bf16.msra.mxu0 0
      %4649 = vmatprep.subr.bf16.mxu0 0
      %4650 = vmatpush1.bf16.msra.mxu0 0
      %4651 = vmatprep.subr.bf16.mxu0 0
      %4652 = vmatpush1.bf16.msra.mxu0 0
      %4653 = vmatprep.subr.bf16.mxu0 0
      %4654 = vmatpush1.bf16.msra.mxu0 0
      %4655 = vmatprep.subr.bf16.mxu0 0
      %4656 = vmatpush1.bf16.msra.mxu0 0
      %4657 = vmatprep.subr.bf16.mxu0 0
      %4658 = vmatpush1.bf16.msra.mxu0 0
      %4659 = vmatprep.subr.bf16.mxu0 0
      %4660 = vmatpush1.bf16.msra.mxu0 0
      %4661 = vmatprep.subr.bf16.mxu0 0
      %4662 = vmatpush1.bf16.msra.mxu0 0
      %4663 = vmatprep.subr.bf16.mxu0 0
      %4664 = vmatpush1.bf16.msra.mxu0 0
      %4665 = vmatprep.subr.bf16.mxu0 0
      %4666 = vmatpush1.bf16.msra.mxu0 0
      %4667 = vmatprep.subr.bf16.mxu0 0
      %4668 = vmatpush1.bf16.msra.mxu0 0
      %4669 = vmatprep.subr.bf16.mxu0 0
      %4670 = vmatpush1.bf16.msra.mxu0 0
      %4671 = vmatprep.subr.bf16.mxu0 0
      %4672 = vmatpush1.bf16.msra.mxu0 0
      %4673 = vmatprep.subr.bf16.mxu0 0
      %4674 = vmatpush1.bf16.msra.mxu0 0
      %4675 = vmatprep.mubr.bf16.mxu0 0
      %4676 = vmatmul.mubr.bf16.gmra.mrb[0].mxu0 %v4641
      %v4677 = vpop.f32.mrb[0].mxu0
      %v4678 = vadd.f32 0.0, %v4677
      %v4679 = vpop.f32.mrb[0].mxu0
      %v4680 = vpop.f32.mrb[0].mxu0
      %v4681 = vadd.f32 0.0, %v4680
      %v4682 = vpop.f32.mrb[0].mxu0
      %4683 = vdwg.mxu0
      %4684 = vrot.lane.b32.xlu0 %v988, 32
      %v4685 = vpop.permute.xlu0 %4684
      %v4688 = vsel %vm1452, %v4630, 0
      %4690 = vmatprep.subr.bf16.mxu0 0
      %4691 = vmatpush1.bf16.msra.mxu0 %v4685
      %4692 = vmatprep.subr.bf16.mxu0 0
      %4693 = vmatpush1.bf16.msra.mxu0 0
      %4694 = vmatprep.subr.bf16.mxu0 0
      %4695 = vmatpush1.bf16.msra.mxu0 0
      %4696 = vmatprep.subr.bf16.mxu0 0
      %4697 = vmatpush1.bf16.msra.mxu0 0
      %4698 = vmatprep.subr.bf16.mxu0 0
      %4699 = vmatpush1.bf16.msra.mxu0 0
      %4700 = vmatprep.subr.bf16.mxu0 0
      %4701 = vmatpush1.bf16.msra.mxu0 0
      %4702 = vmatprep.subr.bf16.mxu0 0
      %4703 = vmatpush1.bf16.msra.mxu0 0
      %4704 = vmatprep.subr.bf16.mxu0 0
      %4705 = vmatpush1.bf16.msra.mxu0 0
      %4706 = vmatprep.subr.bf16.mxu0 0
      %4707 = vmatpush1.bf16.msra.mxu0 0
      %4708 = vmatprep.subr.bf16.mxu0 0
      %4709 = vmatpush1.bf16.msra.mxu0 0
      %4710 = vmatprep.subr.bf16.mxu0 0
      %4711 = vmatpush1.bf16.msra.mxu0 0
      %4712 = vmatprep.subr.bf16.mxu0 0
      %4713 = vmatpush1.bf16.msra.mxu0 0
      %4714 = vmatprep.subr.bf16.mxu0 0
      %4715 = vmatpush1.bf16.msra.mxu0 0
      %4716 = vmatprep.subr.bf16.mxu0 0
      %4717 = vmatpush1.bf16.msra.mxu0 0
      %4718 = vmatprep.subr.bf16.mxu0 0
      %4719 = vmatpush1.bf16.msra.mxu0 0
      %4720 = vmatprep.subr.bf16.mxu0 0
      %4721 = vmatpush1.bf16.msra.mxu0 0
      %4722 = vmatprep.mubr.bf16.mxu0 0
      %4723 = vmatmul.mubr.bf16.gmra.mrb[0].mxu0 %v4688
      %v4724 = vpop.f32.mrb[0].mxu0
      %v4725 = vadd.f32 0.0, %v4724
      %v4726 = vpop.f32.mrb[0].mxu0
      %v4727 = vpop.f32.mrb[0].mxu0
      %v4728 = vadd.f32 0.0, %v4727
      %v4729 = vpop.f32.mrb[0].mxu0
      %4730 = vdwg.mxu0
      %4731 = vrot.lane.b32.xlu0 %v989, 32
      %v4732 = vpop.permute.xlu0 %4731
      %v4735 = vsel %vm1452, %v4631, 0
      %4737 = vmatprep.subr.bf16.mxu0 0
      %4738 = vmatpush1.bf16.msra.mxu0 %v4732
      %4739 = vmatprep.subr.bf16.mxu0 0
      %4740 = vmatpush1.bf16.msra.mxu0 0
      %4741 = vmatprep.subr.bf16.mxu0 0
      %4742 = vmatpush1.bf16.msra.mxu0 0
      %4743 = vmatprep.subr.bf16.mxu0 0
      %4744 = vmatpush1.bf16.msra.mxu0 0
      %4745 = vmatprep.subr.bf16.mxu0 0
      %4746 = vmatpush1.bf16.msra.mxu0 0
      %4747 = vmatprep.subr.bf16.mxu0 0
      %4748 = vmatpush1.bf16.msra.mxu0 0
      %4749 = vmatprep.subr.bf16.mxu0 0
      %4750 = vmatpush1.bf16.msra.mxu0 0
      %4751 = vmatprep.subr.bf16.mxu0 0
      %4752 = vmatpush1.bf16.msra.mxu0 0
      %4753 = vmatprep.subr.bf16.mxu0 0
      %4754 = vmatpush1.bf16.msra.mxu0 0
      %4755 = vmatprep.subr.bf16.mxu0 0
      %4756 = vmatpush1.bf16.msra.mxu0 0
      %4757 = vmatprep.subr.bf16.mxu0 0
      %4758 = vmatpush1.bf16.msra.mxu0 0
      %4759 = vmatprep.subr.bf16.mxu0 0
      %4760 = vmatpush1.bf16.msra.mxu0 0
      %4761 = vmatprep.subr.bf16.mxu0 0
      %4762 = vmatpush1.bf16.msra.mxu0 0
      %4763 = vmatprep.subr.bf16.mxu0 0
      %4764 = vmatpush1.bf16.msra.mxu0 0
      %4765 = vmatprep.subr.bf16.mxu0 0
      %4766 = vmatpush1.bf16.msra.mxu0 0
      %4767 = vmatprep.subr.bf16.mxu0 0
      %4768 = vmatpush1.bf16.msra.mxu0 0
      %4769 = vmatprep.mubr.bf16.mxu0 0
      %4770 = vmatmul.mubr.bf16.gmra.mrb[0].mxu0 %v4735
      %v4771 = vpop.f32.mrb[0].mxu0
      %v4772 = vadd.f32 0.0, %v4771
      %v4773 = vpop.f32.mrb[0].mxu0
      %v4774 = vpop.f32.mrb[0].mxu0
      %v4775 = vadd.f32 0.0, %v4774
      %v4776 = vpop.f32.mrb[0].mxu0
      %4777 = vdwg.mxu0
      %4778 = vrot.lane.b32.xlu0 %v990, 32
      %v4779 = vpop.permute.xlu0 %4778
      %v4782 = vsel %vm1452, %v4632, 0
      %4784 = vmatprep.subr.bf16.mxu0 0
      %4785 = vmatpush1.bf16.msra.mxu0 %v4779
      %4786 = vmatprep.subr.bf16.mxu0 0
      %4787 = vmatpush1.bf16.msra.mxu0 0
      %4788 = vmatprep.subr.bf16.mxu0 0
      %4789 = vmatpush1.bf16.msra.mxu0 0
      %4790 = vmatprep.subr.bf16.mxu0 0
      %4791 = vmatpush1.bf16.msra.mxu0 0
      %4792 = vmatprep.subr.bf16.mxu0 0
      %4793 = vmatpush1.bf16.msra.mxu0 0
      %4794 = vmatprep.subr.bf16.mxu0 0
      %4795 = vmatpush1.bf16.msra.mxu0 0
      %4796 = vmatprep.subr.bf16.mxu0 0
      %4797 = vmatpush1.bf16.msra.mxu0 0
      %4798 = vmatprep.subr.bf16.mxu0 0
      %4799 = vmatpush1.bf16.msra.mxu0 0
      %4800 = vmatprep.subr.bf16.mxu0 0
      %4801 = vmatpush1.bf16.msra.mxu0 0
      %4802 = vmatprep.subr.bf16.mxu0 0
      %4803 = vmatpush1.bf16.msra.mxu0 0
      %4804 = vmatprep.subr.bf16.mxu0 0
      %4805 = vmatpush1.bf16.msra.mxu0 0
      %4806 = vmatprep.subr.bf16.mxu0 0
      %4807 = vmatpush1.bf16.msra.mxu0 0
      %4808 = vmatprep.subr.bf16.mxu0 0
      %4809 = vmatpush1.bf16.msra.mxu0 0
      %4810 = vmatprep.subr.bf16.mxu0 0
      %4811 = vmatpush1.bf16.msra.mxu0 0
      %4812 = vmatprep.subr.bf16.mxu0 0
      %4813 = vmatpush1.bf16.msra.mxu0 0
      %4814 = vmatprep.subr.bf16.mxu0 0
      %4815 = vmatpush1.bf16.msra.mxu0 0
      %4816 = vmatprep.mubr.bf16.mxu0 0
      %4817 = vmatmul.mubr.bf16.gmra.mrb[0].mxu0 %v4782
      %v4818 = vpop.f32.mrb[0].mxu0
      %v4819 = vadd.f32 0.0, %v4818
      %v4820 = vpop.f32.mrb[0].mxu0
      %v4821 = vpop.f32.mrb[0].mxu0
      %v4822 = vadd.f32 0.0, %v4821
      %v4823 = vpop.f32.mrb[0].mxu0
      %4824 = vdwg.mxu0
      %4825 = vrot.lane.b32.xlu0 %v991, 32
      %v4826 = vpop.permute.xlu0 %4825
      %v4829 = vsel %vm1452, %v4633, 0
      %4831 = vmatprep.subr.bf16.mxu0 0
      %4832 = vmatpush1.bf16.msra.mxu0 %v4826
      %4833 = vmatprep.subr.bf16.mxu0 0
      %4834 = vmatpush1.bf16.msra.mxu0 0
      %4835 = vmatprep.subr.bf16.mxu0 0
      %4836 = vmatpush1.bf16.msra.mxu0 0
      %4837 = vmatprep.subr.bf16.mxu0 0
      %4838 = vmatpush1.bf16.msra.mxu0 0
      %4839 = vmatprep.subr.bf16.mxu0 0
      %4840 = vmatpush1.bf16.msra.mxu0 0
      %4841 = vmatprep.subr.bf16.mxu0 0
      %4842 = vmatpush1.bf16.msra.mxu0 0
      %4843 = vmatprep.subr.bf16.mxu0 0
      %4844 = vmatpush1.bf16.msra.mxu0 0
      %4845 = vmatprep.subr.bf16.mxu0 0
      %4846 = vmatpush1.bf16.msra.mxu0 0
      %4847 = vmatprep.subr.bf16.mxu0 0
      %4848 = vmatpush1.bf16.msra.mxu0 0
      %4849 = vmatprep.subr.bf16.mxu0 0
      %4850 = vmatpush1.bf16.msra.mxu0 0
      %4851 = vmatprep.subr.bf16.mxu0 0
      %4852 = vmatpush1.bf16.msra.mxu0 0
      %4853 = vmatprep.subr.bf16.mxu0 0
      %4854 = vmatpush1.bf16.msra.mxu0 0
      %4855 = vmatprep.subr.bf16.mxu0 0
      %4856 = vmatpush1.bf16.msra.mxu0 0
      %4857 = vmatprep.subr.bf16.mxu0 0
      %4858 = vmatpush1.bf16.msra.mxu0 0
      %4859 = vmatprep.subr.bf16.mxu0 0
      %4860 = vmatpush1.bf16.msra.mxu0 0
      %4861 = vmatprep.subr.bf16.mxu0 0
      %4862 = vmatpush1.bf16.msra.mxu0 0
      %4863 = vmatprep.mubr.bf16.mxu0 0
      %4864 = vmatmul.mubr.bf16.gmra.mrb[0].mxu0 %v4829
      %v4865 = vpop.f32.mrb[0].mxu0
      %v4866 = vadd.f32 0.0, %v4865
      %v4867 = vpop.f32.mrb[0].mxu0
      %v4868 = vpop.f32.mrb[0].mxu0
      %v4869 = vadd.f32 0.0, %v4868
      %v4870 = vpop.f32.mrb[0].mxu0
      %4871 = vdwg.mxu0
      %4872 = vrot.lane.b32.xlu0 %v992, 32
      %v4873 = vpop.permute.xlu0 %4872
      %v4876 = vsel %vm1452, %v4634, 0
      %4878 = vmatprep.subr.bf16.mxu0 0
      %4879 = vmatpush1.bf16.msra.mxu0 %v4873
      %4880 = vmatprep.subr.bf16.mxu0 0
      %4881 = vmatpush1.bf16.msra.mxu0 0
      %4882 = vmatprep.subr.bf16.mxu0 0
      %4883 = vmatpush1.bf16.msra.mxu0 0
      %4884 = vmatprep.subr.bf16.mxu0 0
      %4885 = vmatpush1.bf16.msra.mxu0 0
      %4886 = vmatprep.subr.bf16.mxu0 0
      %4887 = vmatpush1.bf16.msra.mxu0 0
      %4888 = vmatprep.subr.bf16.mxu0 0
      %4889 = vmatpush1.bf16.msra.mxu0 0
      %4890 = vmatprep.subr.bf16.mxu0 0
      %4891 = vmatpush1.bf16.msra.mxu0 0
      %4892 = vmatprep.subr.bf16.mxu0 0
      %4893 = vmatpush1.bf16.msra.mxu0 0
      %4894 = vmatprep.subr.bf16.mxu0 0
      %4895 = vmatpush1.bf16.msra.mxu0 0
      %4896 = vmatprep.subr.bf16.mxu0 0
      %4897 = vmatpush1.bf16.msra.mxu0 0
      %4898 = vmatprep.subr.bf16.mxu0 0
      %4899 = vmatpush1.bf16.msra.mxu0 0
      %4900 = vmatprep.subr.bf16.mxu0 0
      %4901 = vmatpush1.bf16.msra.mxu0 0
      %4902 = vmatprep.subr.bf16.mxu0 0
      %4903 = vmatpush1.bf16.msra.mxu0 0
      %4904 = vmatprep.subr.bf16.mxu0 0
      %4905 = vmatpush1.bf16.msra.mxu0 0
      %4906 = vmatprep.subr.bf16.mxu0 0
      %4907 = vmatpush1.bf16.msra.mxu0 0
      %4908 = vmatprep.subr.bf16.mxu0 0
      %4909 = vmatpush1.bf16.msra.mxu0 0
      %4910 = vmatprep.mubr.bf16.mxu0 0
      %4911 = vmatmul.mubr.bf16.gmra.mrb[0].mxu0 %v4876
      %v4912 = vpop.f32.mrb[0].mxu0
      %v4913 = vadd.f32 0.0, %v4912
      %v4914 = vpop.f32.mrb[0].mxu0
      %v4915 = vpop.f32.mrb[0].mxu0
      %v4916 = vadd.f32 0.0, %v4915
      %v4917 = vpop.f32.mrb[0].mxu0
      %4918 = vdwg.mxu0
      %4919 = vrot.lane.b32.xlu0 %v993, 32
      %v4920 = vpop.permute.xlu0 %4919
      %v4923 = vsel %vm1452, %v4635, 0
      %4925 = vmatprep.subr.bf16.mxu0 0
      %4926 = vmatpush1.bf16.msra.mxu0 %v4920
      %4927 = vmatprep.subr.bf16.mxu0 0
      %4928 = vmatpush1.bf16.msra.mxu0 0
      %4929 = vmatprep.subr.bf16.mxu0 0
      %4930 = vmatpush1.bf16.msra.mxu0 0
      %4931 = vmatprep.subr.bf16.mxu0 0
      %4932 = vmatpush1.bf16.msra.mxu0 0
      %4933 = vmatprep.subr.bf16.mxu0 0
      %4934 = vmatpush1.bf16.msra.mxu0 0
      %4935 = vmatprep.subr.bf16.mxu0 0
      %4936 = vmatpush1.bf16.msra.mxu0 0
      %4937 = vmatprep.subr.bf16.mxu0 0
      %4938 = vmatpush1.bf16.msra.mxu0 0
      %4939 = vmatprep.subr.bf16.mxu0 0
      %4940 = vmatpush1.bf16.msra.mxu0 0
      %4941 = vmatprep.subr.bf16.mxu0 0
      %4942 = vmatpush1.bf16.msra.mxu0 0
      %4943 = vmatprep.subr.bf16.mxu0 0
      %4944 = vmatpush1.bf16.msra.mxu0 0
      %4945 = vmatprep.subr.bf16.mxu0 0
      %4946 = vmatpush1.bf16.msra.mxu0 0
      %4947 = vmatprep.subr.bf16.mxu0 0
      %4948 = vmatpush1.bf16.msra.mxu0 0
      %4949 = vmatprep.subr.bf16.mxu0 0
      %4950 = vmatpush1.bf16.msra.mxu0 0
      %4951 = vmatprep.subr.bf16.mxu0 0
      %4952 = vmatpush1.bf16.msra.mxu0 0
      %4953 = vmatprep.subr.bf16.mxu0 0
      %4954 = vmatpush1.bf16.msra.mxu0 0
      %4955 = vmatprep.subr.bf16.mxu0 0
      %4956 = vmatpush1.bf16.msra.mxu0 0
      %4957 = vmatprep.mubr.bf16.mxu0 0
      %4958 = vmatmul.mubr.bf16.gmra.mrb[0].mxu0 %v4923
      %v4959 = vpop.f32.mrb[0].mxu0
      %v4960 = vadd.f32 0.0, %v4959
      %v4961 = vpop.f32.mrb[0].mxu0
      %v4962 = vpop.f32.mrb[0].mxu0
      %v4963 = vadd.f32 0.0, %v4962
      %v4964 = vpop.f32.mrb[0].mxu0
      %4965 = vdwg.mxu0
      %4966 = vrot.lane.b32.xlu0 %v994, 32
      %v4967 = vpop.permute.xlu0 %4966
      %v4970 = vsel %vm1452, %v4636, 0
      %4972 = vmatprep.subr.bf16.mxu0 0
      %4973 = vmatpush1.bf16.msra.mxu0 %v4967
      %4974 = vmatprep.subr.bf16.mxu0 0
      %4975 = vmatpush1.bf16.msra.mxu0 0
      %4976 = vmatprep.subr.bf16.mxu0 0
      %4977 = vmatpush1.bf16.msra.mxu0 0
      %4978 = vmatprep.subr.bf16.mxu0 0
      %4979 = vmatpush1.bf16.msra.mxu0 0
      %4980 = vmatprep.subr.bf16.mxu0 0
      %4981 = vmatpush1.bf16.msra.mxu0 0
      %4982 = vmatprep.subr.bf16.mxu0 0
      %4983 = vmatpush1.bf16.msra.mxu0 0
      %4984 = vmatprep.subr.bf16.mxu0 0
      %4985 = vmatpush1.bf16.msra.mxu0 0
      %4986 = vmatprep.subr.bf16.mxu0 0
      %4987 = vmatpush1.bf16.msra.mxu0 0
      %4988 = vmatprep.subr.bf16.mxu0 0
      %4989 = vmatpush1.bf16.msra.mxu0 0
      %4990 = vmatprep.subr.bf16.mxu0 0
      %4991 = vmatpush1.bf16.msra.mxu0 0
      %4992 = vmatprep.subr.bf16.mxu0 0
      %4993 = vmatpush1.bf16.msra.mxu0 0
      %4994 = vmatprep.subr.bf16.mxu0 0
      %4995 = vmatpush1.bf16.msra.mxu0 0
      %4996 = vmatprep.subr.bf16.mxu0 0
      %4997 = vmatpush1.bf16.msra.mxu0 0
      %4998 = vmatprep.subr.bf16.mxu0 0
      %4999 = vmatpush1.bf16.msra.mxu0 0
      %5000 = vmatprep.subr.bf16.mxu0 0
      %5001 = vmatpush1.bf16.msra.mxu0 0
      %5002 = vmatprep.subr.bf16.mxu0 0
      %5003 = vmatpush1.bf16.msra.mxu0 0
      %5004 = vmatprep.mubr.bf16.mxu0 0
      %5005 = vmatmul.mubr.bf16.gmra.mrb[0].mxu0 %v4970
      %v5006 = vpop.f32.mrb[0].mxu0
      %v5007 = vadd.f32 0.0, %v5006
      %v5008 = vpop.f32.mrb[0].mxu0
      %v5009 = vpop.f32.mrb[0].mxu0
      %v5010 = vadd.f32 0.0, %v5009
      %v5011 = vpop.f32.mrb[0].mxu0
      %5012 = vdwg.mxu0
      %5029 = vrot.lane.b32.xlu0 %v2671, 32
      %v5030 = vpop.permute.xlu0 %5029
      %5031 = vrot.lane.b32.xlu0 %v2674, 32
      %v5032 = vpop.permute.xlu0 %5031
      %5033 = vrot.lane.b32.xlu0 %v2719, 32
      %v5034 = vpop.permute.xlu0 %5033
      %5035 = vrot.lane.b32.xlu0 %v2722, 32
      %v5036 = vpop.permute.xlu0 %5035
      %5037 = vrot.lane.b32.xlu0 %v2767, 32
      %v5038 = vpop.permute.xlu0 %5037
      %5039 = vrot.lane.b32.xlu0 %v2770, 32
      %v5040 = vpop.permute.xlu0 %5039
      %5041 = vrot.lane.b32.xlu0 %v2815, 32
      %v5042 = vpop.permute.xlu0 %5041
      %5043 = vrot.lane.b32.xlu0 %v2818, 32
      %v5044 = vpop.permute.xlu0 %5043
      %5045 = vrot.lane.b32.xlu0 %v2863, 32
      %v5046 = vpop.permute.xlu0 %5045
      %5047 = vrot.lane.b32.xlu0 %v2866, 32
      %v5048 = vpop.permute.xlu0 %5047
      %5049 = vrot.lane.b32.xlu0 %v2911, 32
      %v5050 = vpop.permute.xlu0 %5049
      %5051 = vrot.lane.b32.xlu0 %v2914, 32
      %v5052 = vpop.permute.xlu0 %5051
      %5053 = vrot.lane.b32.xlu0 %v2959, 32
      %v5054 = vpop.permute.xlu0 %5053
      %5055 = vrot.lane.b32.xlu0 %v2962, 32
      %v5056 = vpop.permute.xlu0 %5055
      %5057 = vrot.lane.b32.xlu0 %v3007, 32
      %v5058 = vpop.permute.xlu0 %5057
      %5059 = vrot.lane.b32.xlu0 %v3010, 32
      %v5060 = vpop.permute.xlu0 %5059
      %5093 = vrot.lane.b32.xlu0 %v3678, 64
      %v5094 = vpop.permute.xlu0 %5093
      %5095 = vrot.lane.b32.xlu0 %v3681, 64
      %v5096 = vpop.permute.xlu0 %5095
      %5097 = vrot.lane.b32.xlu0 %v3725, 64
      %v5098 = vpop.permute.xlu0 %5097
      %5099 = vrot.lane.b32.xlu0 %v3728, 64
      %v5100 = vpop.permute.xlu0 %5099
      %5101 = vrot.lane.b32.xlu0 %v3772, 64
      %v5102 = vpop.permute.xlu0 %5101
      %5103 = vrot.lane.b32.xlu0 %v3775, 64
      %v5104 = vpop.permute.xlu0 %5103
      %5105 = vrot.lane.b32.xlu0 %v3819, 64
      %v5106 = vpop.permute.xlu0 %5105
      %5107 = vrot.lane.b32.xlu0 %v3822, 64
      %v5108 = vpop.permute.xlu0 %5107
      %5109 = vrot.lane.b32.xlu0 %v3866, 64
      %v5110 = vpop.permute.xlu0 %5109
      %5111 = vrot.lane.b32.xlu0 %v3869, 64
      %v5112 = vpop.permute.xlu0 %5111
      %5113 = vrot.lane.b32.xlu0 %v3913, 64
      %v5114 = vpop.permute.xlu0 %5113
      %5115 = vrot.lane.b32.xlu0 %v3916, 64
      %v5116 = vpop.permute.xlu0 %5115
      %5117 = vrot.lane.b32.xlu0 %v3960, 64
      %v5118 = vpop.permute.xlu0 %5117
      %5119 = vrot.lane.b32.xlu0 %v3963, 64
      %v5120 = vpop.permute.xlu0 %5119
      %5121 = vrot.lane.b32.xlu0 %v4007, 64
      %v5122 = vpop.permute.xlu0 %5121
      %5123 = vrot.lane.b32.xlu0 %v4010, 64
      %v5124 = vpop.permute.xlu0 %5123
      %5157 = vrot.lane.b32.xlu0 %v4678, 96
      %v5158 = vpop.permute.xlu0 %5157
      %5159 = vrot.lane.b32.xlu0 %v4681, 96
      %v5160 = vpop.permute.xlu0 %5159
      %5161 = vrot.lane.b32.xlu0 %v4725, 96
      %v5162 = vpop.permute.xlu0 %5161
      %5163 = vrot.lane.b32.xlu0 %v4728, 96
      %v5164 = vpop.permute.xlu0 %5163
      %5165 = vrot.lane.b32.xlu0 %v4772, 96
      %v5166 = vpop.permute.xlu0 %5165
      %5167 = vrot.lane.b32.xlu0 %v4775, 96
      %v5168 = vpop.permute.xlu0 %5167
      %5169 = vrot.lane.b32.xlu0 %v4819, 96
      %v5170 = vpop.permute.xlu0 %5169
      %5171 = vrot.lane.b32.xlu0 %v4822, 96
      %v5172 = vpop.permute.xlu0 %5171
      %5173 = vrot.lane.b32.xlu0 %v4866, 96
      %v5174 = vpop.permute.xlu0 %5173
      %5175 = vrot.lane.b32.xlu0 %v4869, 96
      %v5176 = vpop.permute.xlu0 %5175
      %5177 = vrot.lane.b32.xlu0 %v4913, 96
      %v5178 = vpop.permute.xlu0 %5177
      %5179 = vrot.lane.b32.xlu0 %v4916, 96
      %v5180 = vpop.permute.xlu0 %5179
      %5181 = vrot.lane.b32.xlu0 %v4960, 96
      %v5182 = vpop.permute.xlu0 %5181
      %5183 = vrot.lane.b32.xlu0 %v4963, 96
      %v5184 = vpop.permute.xlu0 %5183
      %5185 = vrot.lane.b32.xlu0 %v5007, 96
      %v5186 = vpop.permute.xlu0 %5185
      %5187 = vrot.lane.b32.xlu0 %v5010, 96
      %v5188 = vpop.permute.xlu0 %5187
      %v5205 = vsel %vm995, %v1675, %v5030
      %v5206 = vsel %vm995, %v1678, %v5032
      %v5207 = vsel %vm995, %v1719, %v5034
      %v5208 = vsel %vm995, %v1722, %v5036
      %v5209 = vsel %vm995, %v1763, %v5038
      %v5210 = vsel %vm995, %v1766, %v5040
      %v5211 = vsel %vm995, %v1807, %v5042
      %v5212 = vsel %vm995, %v1810, %v5044
      %v5213 = vsel %vm995, %v1851, %v5046
      %v5214 = vsel %vm995, %v1854, %v5048
      %v5215 = vsel %vm995, %v1895, %v5050
      %v5216 = vsel %vm995, %v1898, %v5052
      %v5217 = vsel %vm995, %v1939, %v5054
      %v5218 = vsel %vm995, %v1942, %v5056
      %v5219 = vsel %vm995, %v1983, %v5058
      %v5220 = vsel %vm995, %v1986, %v5060
      %vm5221 = vcmask 523264
      %v5222 = vsel %vm5221, %v5205, %v5094
      %v5223 = vsel %vm5221, %v5206, %v5096
      %v5224 = vsel %vm5221, %v5207, %v5098
      %v5225 = vsel %vm5221, %v5208, %v5100
      %v5226 = vsel %vm5221, %v5209, %v5102
      %v5227 = vsel %vm5221, %v5210, %v5104
      %v5228 = vsel %vm5221, %v5211, %v5106
      %v5229 = vsel %vm5221, %v5212, %v5108
      %v5230 = vsel %vm5221, %v5213, %v5110
      %v5231 = vsel %vm5221, %v5214, %v5112
      %v5232 = vsel %vm5221, %v5215, %v5114
      %v5233 = vsel %vm5221, %v5216, %v5116
      %v5234 = vsel %vm5221, %v5217, %v5118
      %v5235 = vsel %vm5221, %v5218, %v5120
      %v5236 = vsel %vm5221, %v5219, %v5122
      %v5237 = vsel %vm5221, %v5220, %v5124
      %vm5238 = vcmask 785408
      %v5239 = vsel %vm5238, %v5222, %v5158
      %v5240 = vsel %vm5238, %v5223, %v5160
      %v5241 = vsel %vm5238, %v5224, %v5162
      %v5242 = vsel %vm5238, %v5225, %v5164
      %v5243 = vsel %vm5238, %v5226, %v5166
      %v5244 = vsel %vm5238, %v5227, %v5168
      %v5245 = vsel %vm5238, %v5228, %v5170
      %v5246 = vsel %vm5238, %v5229, %v5172
      %v5247 = vsel %vm5238, %v5230, %v5174
      %v5248 = vsel %vm5238, %v5231, %v5176
      %v5249 = vsel %vm5238, %v5232, %v5178
      %v5250 = vsel %vm5238, %v5233, %v5180
      %v5251 = vsel %vm5238, %v5234, %v5182
      %v5252 = vsel %vm5238, %v5235, %v5184
      %v5253 = vsel %vm5238, %v5236, %v5186
      %v5254 = vsel %vm5238, %v5237, %v5188
      %v5255 = vpack.c.bf16 %v5240, %v5239
      %v5256 = vpack.c.bf16 %v5242, %v5241
      %v5257 = vpack.c.bf16 %v5244, %v5243
      %v5258 = vpack.c.bf16 %v5246, %v5245
      %v5259 = vpack.c.bf16 %v5248, %v5247
      %v5260 = vpack.c.bf16 %v5250, %v5249
      %v5261 = vpack.c.bf16 %v5252, %v5251
      %v5262 = vpack.c.bf16 %v5254, %v5253
      %v5263 = vld [vmem:[%s4] sm:$0xf]
      %v5264 = vld [vmem:[%s4 + $0x4] sm:$0xf]
      %v5265 = vld [vmem:[%s4 + $0x8] sm:$0xf]
      %v5266 = vld [vmem:[%s4 + $0xc] sm:$0xf]
      %v5267 = vld [vmem:[%s4 + $0x10] sm:$0xf]
      %v5268 = vld [vmem:[%s4 + $0x14] sm:$0xf]
      %v5269 = vld [vmem:[%s4 + $0x18] sm:$0xf]
      %v5270 = vld [vmem:[%s4 + $0x1c] sm:$0xf]
      %v5271 = vld [vmem:[%s4 + $0x20] sm:$0xf]
      %v5272 = vld [vmem:[%s4 + $0x24] sm:$0xf]
      %v5273 = vld [vmem:[%s4 + $0x28] sm:$0xf]
      %v5274 = vld [vmem:[%s4 + $0x2c] sm:$0xf]
      %v5275 = vld [vmem:[%s4 + $0x30] sm:$0xf]
      %v5276 = vld [vmem:[%s4 + $0x34] sm:$0xf]
      %v5277 = vld [vmem:[%s4 + $0x38] sm:$0xf]
      %v5278 = vld [vmem:[%s4 + $0x3c] sm:$0xf]
      %v5279 = vld [vmem:[%s5] sm:$0x1]
      %v5281 = vlaneseq
      %v5282 = vshrl.u32 %v5281, 7
      %v5283 = vsub.s32 0, %v5282
      %v5284 = vrot.slane %v5279, %v5283
      %v5302 = vunpack.c.l.b16 %v5263
      %v5303 = vunpack.c.l.b16 %v5264
      %v5304 = vunpack.c.l.b16 %v5265
      %v5305 = vunpack.c.l.b16 %v5266
      %v5306 = vunpack.c.l.b16 %v5267
      %v5307 = vunpack.c.l.b16 %v5268
      %v5308 = vunpack.c.l.b16 %v5269
      %v5309 = vunpack.c.l.b16 %v5270
      %v5310 = vunpack.c.l.b16 %v5271
      %v5311 = vunpack.c.l.b16 %v5272
      %v5312 = vunpack.c.l.b16 %v5273
      %v5313 = vunpack.c.l.b16 %v5274
      %v5314 = vunpack.c.l.b16 %v5275
      %v5315 = vunpack.c.l.b16 %v5276
      %v5316 = vunpack.c.l.b16 %v5277
      %v5317 = vunpack.c.l.b16 %v5278
      %v5318 = vpack.c.b16 %v5303, %v5302
      %v5319 = vpack.c.b16 %v5305, %v5304
      %v5320 = vpack.c.b16 %v5307, %v5306
      %v5321 = vpack.c.b16 %v5309, %v5308
      %v5322 = vpack.c.b16 %v5311, %v5310
      %v5323 = vpack.c.b16 %v5313, %v5312
      %v5324 = vpack.c.b16 %v5315, %v5314
      %v5325 = vpack.c.b16 %v5317, %v5316
      %5334 = vmatprep.subr.bf16.mxu0 0
      %5335 = vmatpush1.bf16.msra.mxu0 %v5318
      %5336 = vmatprep.subr.bf16.mxu0 0
      %5337 = vmatpush1.bf16.msra.mxu0 %v5319
      %5338 = vmatprep.subr.bf16.mxu0 0
      %5339 = vmatpush1.bf16.msra.mxu0 %v5320
      %5340 = vmatprep.subr.bf16.mxu0 0
      %5341 = vmatpush1.bf16.msra.mxu0 %v5321
      %5342 = vmatprep.subr.bf16.mxu0 0
      %5343 = vmatpush1.bf16.msra.mxu0 %v5322
      %5344 = vmatprep.subr.bf16.mxu0 0
      %5345 = vmatpush1.bf16.msra.mxu0 %v5323
      %5346 = vmatprep.subr.bf16.mxu0 0
      %5347 = vmatpush1.bf16.msra.mxu0 %v5324
      %5348 = vmatprep.subr.bf16.mxu0 0
      %5349 = vmatpush1.bf16.msra.mxu0 %v5325
      %5350 = vmatprep.subr.bf16.mxu0 0
      %5351 = vmatpush1.bf16.msra.mxu0 0
      %5352 = vmatprep.subr.bf16.mxu0 0
      %5353 = vmatpush1.bf16.msra.mxu0 0
      %5354 = vmatprep.subr.bf16.mxu0 0
      %5355 = vmatpush1.bf16.msra.mxu0 0
      %5356 = vmatprep.subr.bf16.mxu0 0
      %5357 = vmatpush1.bf16.msra.mxu0 0
      %5358 = vmatprep.subr.bf16.mxu0 0
      %5359 = vmatpush1.bf16.msra.mxu0 0
      %5360 = vmatprep.subr.bf16.mxu0 0
      %5361 = vmatpush1.bf16.msra.mxu0 0
      %5362 = vmatprep.subr.bf16.mxu0 0
      %5363 = vmatpush1.bf16.msra.mxu0 0
      %5364 = vmatprep.subr.bf16.mxu0 0
      %5365 = vmatpush1.bf16.msra.mxu0 0
      %5366 = vmatprep.mubr.bf16.mxu0 0
      %5367 = vmatmul.mubr.bf16.gmra.mrb[0].mxu0 %v5255
      %v5368 = vpop.f32.mrb[0].mxu0
      %v5369 = vadd.f32 %v5284, %v5368
      %v5370 = vpop.f32.mrb[0].mxu0
      %v5371 = vpop.f32.mrb[0].mxu0
      %v5372 = vadd.f32 %v5284, %v5371
      %v5373 = vpop.f32.mrb[0].mxu0
      %5374 = vmatprep.mubr.bf16.mxu0 0
      %5375 = vmatmul.mubr.bf16.gmra.mrb[0].mxu0 %v5256
      %v5376 = vpop.f32.mrb[0].mxu0
      %v5377 = vadd.f32 %v5284, %v5376
      %v5378 = vpop.f32.mrb[0].mxu0
      %v5379 = vpop.f32.mrb[0].mxu0
      %v5380 = vadd.f32 %v5284, %v5379
      %v5381 = vpop.f32.mrb[0].mxu0
      %5382 = vmatprep.mubr.bf16.mxu0 0
      %5383 = vmatmul.mubr.bf16.gmra.mrb[0].mxu0 %v5257
      %v5384 = vpop.f32.mrb[0].mxu0
      %v5385 = vadd.f32 %v5284, %v5384
      %v5386 = vpop.f32.mrb[0].mxu0
      %v5387 = vpop.f32.mrb[0].mxu0
      %v5388 = vadd.f32 %v5284, %v5387
      %v5389 = vpop.f32.mrb[0].mxu0
      %5390 = vmatprep.mubr.bf16.mxu0 0
      %5391 = vmatmul.mubr.bf16.gmra.mrb[0].mxu0 %v5258
      %v5392 = vpop.f32.mrb[0].mxu0
      %v5393 = vadd.f32 %v5284, %v5392
      %v5394 = vpop.f32.mrb[0].mxu0
      %v5395 = vpop.f32.mrb[0].mxu0
      %v5396 = vadd.f32 %v5284, %v5395
      %v5397 = vpop.f32.mrb[0].mxu0
      %5398 = vmatprep.mubr.bf16.mxu0 0
      %5399 = vmatmul.mubr.bf16.gmra.mrb[0].mxu0 %v5259
      %v5400 = vpop.f32.mrb[0].mxu0
      %v5401 = vadd.f32 %v5284, %v5400
      %v5402 = vpop.f32.mrb[0].mxu0
      %v5403 = vpop.f32.mrb[0].mxu0
      %v5404 = vadd.f32 %v5284, %v5403
      %v5405 = vpop.f32.mrb[0].mxu0
      %5406 = vmatprep.mubr.bf16.mxu0 0
      %5407 = vmatmul.mubr.bf16.gmra.mrb[0].mxu0 %v5260
      %v5408 = vpop.f32.mrb[0].mxu0
      %v5409 = vadd.f32 %v5284, %v5408
      %v5410 = vpop.f32.mrb[0].mxu0
      %v5411 = vpop.f32.mrb[0].mxu0
      %v5412 = vadd.f32 %v5284, %v5411
      %v5413 = vpop.f32.mrb[0].mxu0
      %5414 = vmatprep.mubr.bf16.mxu0 0
      %5415 = vmatmul.mubr.bf16.gmra.mrb[0].mxu0 %v5261
      %v5416 = vpop.f32.mrb[0].mxu0
      %v5417 = vadd.f32 %v5284, %v5416
      %v5418 = vpop.f32.mrb[0].mxu0
      %v5419 = vpop.f32.mrb[0].mxu0
      %v5420 = vadd.f32 %v5284, %v5419
      %v5421 = vpop.f32.mrb[0].mxu0
      %5422 = vmatprep.mubr.bf16.mxu0 0
      %5423 = vmatmul.mubr.bf16.gmra.mrb[0].mxu0 %v5262
      %v5424 = vpop.f32.mrb[0].mxu0
      %v5425 = vadd.f32 %v5284, %v5424
      %v5426 = vpop.f32.mrb[0].mxu0
      %v5427 = vpop.f32.mrb[0].mxu0
      %v5428 = vadd.f32 %v5284, %v5427
      %v5429 = vpop.f32.mrb[0].mxu0
      %5430 = vdwg.mxu0
      %v5431 = vadd.f32 %v512, %v5369
      %v5432 = vadd.f32 %v513, %v5372
      %v5433 = vadd.f32 %v514, %v5377
      %v5434 = vadd.f32 %v515, %v5380
      %v5435 = vadd.f32 %v516, %v5385
      %v5436 = vadd.f32 %v517, %v5388
      %v5437 = vadd.f32 %v518, %v5393
      %v5438 = vadd.f32 %v519, %v5396
      %v5439 = vadd.f32 %v520, %v5401
      %v5440 = vadd.f32 %v521, %v5404
      %v5441 = vadd.f32 %v522, %v5409
      %v5442 = vadd.f32 %v523, %v5412
      %v5443 = vadd.f32 %v524, %v5417
      %v5444 = vadd.f32 %v525, %v5420
      %v5445 = vadd.f32 %v526, %v5425
      %v5446 = vadd.f32 %v527, %v5428
      %v5447 = vld [vmem:[%s6] sm:$0x1]
      %v5448 = vld [vmem:[%s7] sm:$0x1]
      %5449 = vadd.xlane.f32.xlu0 %v5431
      %v5450 = vpop.xlane.xlu0 %5449
      %5451 = vadd.xlane.f32.xlu0 %v5432
      %v5452 = vpop.xlane.xlu0 %5451
      %5453 = vadd.xlane.f32.xlu0 %v5433
      %v5454 = vpop.xlane.xlu0 %5453
      %5455 = vadd.xlane.f32.xlu0 %v5434
      %v5456 = vpop.xlane.xlu0 %5455
      %5457 = vadd.xlane.f32.xlu0 %v5435
      %v5458 = vpop.xlane.xlu0 %5457
      %5459 = vadd.xlane.f32.xlu0 %v5436
      %v5460 = vpop.xlane.xlu0 %5459
      %5461 = vadd.xlane.f32.xlu0 %v5437
      %v5462 = vpop.xlane.xlu0 %5461
      %5463 = vadd.xlane.f32.xlu0 %v5438
      %v5464 = vpop.xlane.xlu0 %5463
      %5465 = vadd.xlane.f32.xlu0 %v5439
      %v5466 = vpop.xlane.xlu0 %5465
      %5467 = vadd.xlane.f32.xlu0 %v5440
      %v5468 = vpop.xlane.xlu0 %5467
      %5469 = vadd.xlane.f32.xlu0 %v5441
      %v5470 = vpop.xlane.xlu0 %5469
      %5471 = vadd.xlane.f32.xlu0 %v5442
      %v5472 = vpop.xlane.xlu0 %5471
      %5473 = vadd.xlane.f32.xlu0 %v5443
      %v5474 = vpop.xlane.xlu0 %5473
      %5475 = vadd.xlane.f32.xlu0 %v5444
      %v5476 = vpop.xlane.xlu0 %5475
      %5477 = vadd.xlane.f32.xlu0 %v5445
      %v5478 = vpop.xlane.xlu0 %5477
      %5479 = vadd.xlane.f32.xlu0 %v5446
      %v5480 = vpop.xlane.xlu0 %5479
      %v5481 = vrcp.pop 128.0
      %v5482 = vmul.f32 %v5450, %v5481
      %v5483 = vmul.f32 %v5452, %v5481
      %v5484 = vmul.f32 %v5454, %v5481
      %v5485 = vmul.f32 %v5456, %v5481
      %v5486 = vmul.f32 %v5458, %v5481
      %v5487 = vmul.f32 %v5460, %v5481
      %v5488 = vmul.f32 %v5462, %v5481
      %v5489 = vmul.f32 %v5464, %v5481
      %v5490 = vmul.f32 %v5466, %v5481
      %v5491 = vmul.f32 %v5468, %v5481
      %v5492 = vmul.f32 %v5470, %v5481
      %v5493 = vmul.f32 %v5472, %v5481
      %v5494 = vmul.f32 %v5474, %v5481
      %v5495 = vmul.f32 %v5476, %v5481
      %v5496 = vmul.f32 %v5478, %v5481
      %v5497 = vmul.f32 %v5480, %v5481
      %v5498 = vsub.f32 %v5431, %v5482
      %v5499 = vsub.f32 %v5432, %v5483
      %v5500 = vsub.f32 %v5433, %v5484
      %v5501 = vsub.f32 %v5434, %v5485
      %v5502 = vsub.f32 %v5435, %v5486
      %v5503 = vsub.f32 %v5436, %v5487
      %v5504 = vsub.f32 %v5437, %v5488
      %v5505 = vsub.f32 %v5438, %v5489
      %v5506 = vsub.f32 %v5439, %v5490
      %v5507 = vsub.f32 %v5440, %v5491
      %v5508 = vsub.f32 %v5441, %v5492
      %v5509 = vsub.f32 %v5442, %v5493
      %v5510 = vsub.f32 %v5443, %v5494
      %v5511 = vsub.f32 %v5444, %v5495
      %v5512 = vsub.f32 %v5445, %v5496
      %v5513 = vsub.f32 %v5446, %v5497
      %v5514 = vmul.f32 %v5498, %v5498
      %v5515 = vmul.f32 %v5499, %v5499
      %v5516 = vmul.f32 %v5500, %v5500
      %v5517 = vmul.f32 %v5501, %v5501
      %v5518 = vmul.f32 %v5502, %v5502
      %v5519 = vmul.f32 %v5503, %v5503
      %v5520 = vmul.f32 %v5504, %v5504
      %v5521 = vmul.f32 %v5505, %v5505
      %v5522 = vmul.f32 %v5506, %v5506
      %v5523 = vmul.f32 %v5507, %v5507
      %v5524 = vmul.f32 %v5508, %v5508
      %v5525 = vmul.f32 %v5509, %v5509
      %v5526 = vmul.f32 %v5510, %v5510
      %v5527 = vmul.f32 %v5511, %v5511
      %v5528 = vmul.f32 %v5512, %v5512
      %v5529 = vmul.f32 %v5513, %v5513
      %5530 = vadd.xlane.f32.xlu0 %v5514
      %v5531 = vpop.xlane.xlu0 %5530
      %5532 = vadd.xlane.f32.xlu0 %v5515
      %v5533 = vpop.xlane.xlu0 %5532
      %5534 = vadd.xlane.f32.xlu0 %v5516
      %v5535 = vpop.xlane.xlu0 %5534
      %5536 = vadd.xlane.f32.xlu0 %v5517
      %v5537 = vpop.xlane.xlu0 %5536
      %5538 = vadd.xlane.f32.xlu0 %v5518
      %v5539 = vpop.xlane.xlu0 %5538
      %5540 = vadd.xlane.f32.xlu0 %v5519
      %v5541 = vpop.xlane.xlu0 %5540
      %5542 = vadd.xlane.f32.xlu0 %v5520
      %v5543 = vpop.xlane.xlu0 %5542
      %5544 = vadd.xlane.f32.xlu0 %v5521
      %v5545 = vpop.xlane.xlu0 %5544
      %5546 = vadd.xlane.f32.xlu0 %v5522
      %v5547 = vpop.xlane.xlu0 %5546
      %5548 = vadd.xlane.f32.xlu0 %v5523
      %v5549 = vpop.xlane.xlu0 %5548
      %5550 = vadd.xlane.f32.xlu0 %v5524
      %v5551 = vpop.xlane.xlu0 %5550
      %5552 = vadd.xlane.f32.xlu0 %v5525
      %v5553 = vpop.xlane.xlu0 %5552
      %5554 = vadd.xlane.f32.xlu0 %v5526
      %v5555 = vpop.xlane.xlu0 %5554
      %5556 = vadd.xlane.f32.xlu0 %v5527
      %v5557 = vpop.xlane.xlu0 %5556
      %5558 = vadd.xlane.f32.xlu0 %v5528
      %v5559 = vpop.xlane.xlu0 %5558
      %5560 = vadd.xlane.f32.xlu0 %v5529
      %v5561 = vpop.xlane.xlu0 %5560
      %v5562 = vmul.f32 %v5531, %v5481
      %v5563 = vmul.f32 %v5533, %v5481
      %v5564 = vmul.f32 %v5535, %v5481
      %v5565 = vmul.f32 %v5537, %v5481
      %v5566 = vmul.f32 %v5539, %v5481
      %v5567 = vmul.f32 %v5541, %v5481
      %v5568 = vmul.f32 %v5543, %v5481
      %v5569 = vmul.f32 %v5545, %v5481
      %v5570 = vmul.f32 %v5547, %v5481
      %v5571 = vmul.f32 %v5549, %v5481
      %v5572 = vmul.f32 %v5551, %v5481
      %v5573 = vmul.f32 %v5553, %v5481
      %v5574 = vmul.f32 %v5555, %v5481
      %v5575 = vmul.f32 %v5557, %v5481
      %v5576 = vmul.f32 %v5559, %v5481
      %v5577 = vmul.f32 %v5561, %v5481
      %v5578 = vadd.f32 %v5562, 1e-05
      %v5579 = vadd.f32 %v5563, 1e-05
      %v5580 = vadd.f32 %v5564, 1e-05
      %v5581 = vadd.f32 %v5565, 1e-05
      %v5582 = vadd.f32 %v5566, 1e-05
      %v5583 = vadd.f32 %v5567, 1e-05
      %v5584 = vadd.f32 %v5568, 1e-05
      %v5585 = vadd.f32 %v5569, 1e-05
      %v5586 = vadd.f32 %v5570, 1e-05
      %v5587 = vadd.f32 %v5571, 1e-05
      %v5588 = vadd.f32 %v5572, 1e-05
      %v5589 = vadd.f32 %v5573, 1e-05
      %v5590 = vadd.f32 %v5574, 1e-05
      %v5591 = vadd.f32 %v5575, 1e-05
      %v5592 = vadd.f32 %v5576, 1e-05
      %v5593 = vadd.f32 %v5577, 1e-05
      %v5594 = vrsqrt.pop %v5578
      %v5595 = vrsqrt.pop %v5579
      %v5596 = vrsqrt.pop %v5580
      %v5597 = vrsqrt.pop %v5581
      %v5598 = vrsqrt.pop %v5582
      %v5599 = vrsqrt.pop %v5583
      %v5600 = vrsqrt.pop %v5584
      %v5601 = vrsqrt.pop %v5585
      %v5602 = vrsqrt.pop %v5586
      %v5603 = vrsqrt.pop %v5587
      %v5604 = vrsqrt.pop %v5588
      %v5605 = vrsqrt.pop %v5589
      %v5606 = vrsqrt.pop %v5590
      %v5607 = vrsqrt.pop %v5591
      %v5608 = vrsqrt.pop %v5592
      %v5609 = vrsqrt.pop %v5593
      %v5610 = vmul.f32 %v5498, %v5594
      %v5611 = vmul.f32 %v5499, %v5595
      %v5612 = vmul.f32 %v5500, %v5596
      %v5613 = vmul.f32 %v5501, %v5597
      %v5614 = vmul.f32 %v5502, %v5598
      %v5615 = vmul.f32 %v5503, %v5599
      %v5616 = vmul.f32 %v5504, %v5600
      %v5617 = vmul.f32 %v5505, %v5601
      %v5618 = vmul.f32 %v5506, %v5602
      %v5619 = vmul.f32 %v5507, %v5603
      %v5620 = vmul.f32 %v5508, %v5604
      %v5621 = vmul.f32 %v5509, %v5605
      %v5622 = vmul.f32 %v5510, %v5606
      %v5623 = vmul.f32 %v5511, %v5607
      %v5624 = vmul.f32 %v5512, %v5608
      %v5625 = vmul.f32 %v5513, %v5609
      %v5627 = vlaneseq
      %v5628 = vshrl.u32 %v5627, 7
      %v5629 = vsub.s32 0, %v5628
      %v5630 = vrot.slane %v5447, %v5629
      %v5632 = vmul.f32 %v5610, %v5630
      %v5633 = vmul.f32 %v5611, %v5630
      %v5634 = vmul.f32 %v5612, %v5630
      %v5635 = vmul.f32 %v5613, %v5630
      %v5636 = vmul.f32 %v5614, %v5630
      %v5637 = vmul.f32 %v5615, %v5630
      %v5638 = vmul.f32 %v5616, %v5630
      %v5639 = vmul.f32 %v5617, %v5630
      %v5640 = vmul.f32 %v5618, %v5630
      %v5641 = vmul.f32 %v5619, %v5630
      %v5642 = vmul.f32 %v5620, %v5630
      %v5643 = vmul.f32 %v5621, %v5630
      %v5644 = vmul.f32 %v5622, %v5630
      %v5645 = vmul.f32 %v5623, %v5630
      %v5646 = vmul.f32 %v5624, %v5630
      %v5647 = vmul.f32 %v5625, %v5630
      %v5649 = vlaneseq
      %v5650 = vshrl.u32 %v5649, 7
      %v5651 = vsub.s32 0, %v5650
      %v5652 = vrot.slane %v5448, %v5651
      %v5654 = vadd.f32 %v5632, %v5652
      %v5655 = vadd.f32 %v5633, %v5652
      %v5656 = vadd.f32 %v5634, %v5652
      %v5657 = vadd.f32 %v5635, %v5652
      %v5658 = vadd.f32 %v5636, %v5652
      %v5659 = vadd.f32 %v5637, %v5652
      %v5660 = vadd.f32 %v5638, %v5652
      %v5661 = vadd.f32 %v5639, %v5652
      %v5662 = vadd.f32 %v5640, %v5652
      %v5663 = vadd.f32 %v5641, %v5652
      %v5664 = vadd.f32 %v5642, %v5652
      %v5665 = vadd.f32 %v5643, %v5652
      %v5666 = vadd.f32 %v5644, %v5652
      %v5667 = vadd.f32 %v5645, %v5652
      %v5668 = vadd.f32 %v5646, %v5652
      %v5669 = vadd.f32 %v5647, %v5652
      %v5670 = vpack.c.bf16 %v5655, %v5654
      %v5671 = vpack.c.bf16 %v5657, %v5656
      %v5672 = vpack.c.bf16 %v5659, %v5658
      %v5673 = vpack.c.bf16 %v5661, %v5660
      %v5674 = vpack.c.bf16 %v5663, %v5662
      %v5675 = vpack.c.bf16 %v5665, %v5664
      %v5676 = vpack.c.bf16 %v5667, %v5666
      %v5677 = vpack.c.bf16 %v5669, %v5668
      %v5678 = vld [vmem:[%s8] sm:$0xff]
      %v5679 = vld [vmem:[%s8 + $0x8] sm:$0xff]
      %v5680 = vld [vmem:[%s8 + $0x10] sm:$0xff]
      %v5681 = vld [vmem:[%s8 + $0x18] sm:$0xff]
      %v5682 = vld [vmem:[%s8 + $0x20] sm:$0xff]
      %v5683 = vld [vmem:[%s8 + $0x28] sm:$0xff]
      %v5684 = vld [vmem:[%s8 + $0x30] sm:$0xff]
      %v5685 = vld [vmem:[%s8 + $0x38] sm:$0xff]
      %v5686 = vld [vmem:[%s8 + $0x40] sm:$0xff]
      %v5687 = vld [vmem:[%s8 + $0x48] sm:$0xff]
      %v5688 = vld [vmem:[%s8 + $0x50] sm:$0xff]
      %v5689 = vld [vmem:[%s8 + $0x58] sm:$0xff]
      %v5690 = vld [vmem:[%s8 + $0x60] sm:$0xff]
      %v5691 = vld [vmem:[%s8 + $0x68] sm:$0xff]
      %v5692 = vld [vmem:[%s8 + $0x70] sm:$0xff]
      %v5693 = vld [vmem:[%s8 + $0x78] sm:$0xff]
      %v5694 = vld [vmem:[%s9] sm:$0x3]
      %v5696 = vlaneseq
      %v5697 = vshrl.u32 %v5696, 7
      %v5698 = vsub.s32 0, %v5697
      %v5699 = vrot.slane %v5694, %v5698
      %v5700 = vlaneseq
      %v5701 = vshrl.u32 %v5700, 7
      %v5702 = vsub.s32 1, %v5701
      %v5703 = vrot.slane %v5694, %v5702
      %v5722 = vunpack.c.l.b16 %v5678
      %v5723 = vunpack.c.h.b16 %v5678
      %v5724 = vunpack.c.l.b16 %v5679
      %v5725 = vunpack.c.h.b16 %v5679
      %v5726 = vunpack.c.l.b16 %v5680
      %v5727 = vunpack.c.h.b16 %v5680
      %v5728 = vunpack.c.l.b16 %v5681
      %v5729 = vunpack.c.h.b16 %v5681
      %v5730 = vunpack.c.l.b16 %v5682
      %v5731 = vunpack.c.h.b16 %v5682
      %v5732 = vunpack.c.l.b16 %v5683
      %v5733 = vunpack.c.h.b16 %v5683
      %v5734 = vunpack.c.l.b16 %v5684
      %v5735 = vunpack.c.h.b16 %v5684
      %v5736 = vunpack.c.l.b16 %v5685
      %v5737 = vunpack.c.h.b16 %v5685
      %v5738 = vunpack.c.l.b16 %v5686
      %v5739 = vunpack.c.h.b16 %v5686
      %v5740 = vunpack.c.l.b16 %v5687
      %v5741 = vunpack.c.h.b16 %v5687
      %v5742 = vunpack.c.l.b16 %v5688
      %v5743 = vunpack.c.h.b16 %v5688
      %v5744 = vunpack.c.l.b16 %v5689
      %v5745 = vunpack.c.h.b16 %v5689
      %v5746 = vunpack.c.l.b16 %v5690
      %v5747 = vunpack.c.h.b16 %v5690
      %v5748 = vunpack.c.l.b16 %v5691
      %v5749 = vunpack.c.h.b16 %v5691
      %v5750 = vunpack.c.l.b16 %v5692
      %v5751 = vunpack.c.h.b16 %v5692
      %v5752 = vunpack.c.l.b16 %v5693
      %v5753 = vunpack.c.h.b16 %v5693
      %v5754 = vpack.c.b16 %v5724, %v5722
      %v5755 = vpack.c.b16 %v5725, %v5723
      %v5756 = vpack.c.b16 %v5728, %v5726
      %v5757 = vpack.c.b16 %v5729, %v5727
      %v5758 = vpack.c.b16 %v5732, %v5730
      %v5759 = vpack.c.b16 %v5733, %v5731
      %v5760 = vpack.c.b16 %v5736, %v5734
      %v5761 = vpack.c.b16 %v5737, %v5735
      %v5762 = vpack.c.b16 %v5740, %v5738
      %v5763 = vpack.c.b16 %v5741, %v5739
      %v5764 = vpack.c.b16 %v5744, %v5742
      %v5765 = vpack.c.b16 %v5745, %v5743
      %v5766 = vpack.c.b16 %v5748, %v5746
      %v5767 = vpack.c.b16 %v5749, %v5747
      %v5768 = vpack.c.b16 %v5752, %v5750
      %v5769 = vpack.c.b16 %v5753, %v5751
      %5786 = vmatprep.subr.bf16.mxu0 %v5755
      %5787 = vmatpush1.bf16.msra.mxu0 %v5754
      %5788 = vmatprep.subr.bf16.mxu0 %v5757
      %5789 = vmatpush1.bf16.msra.mxu0 %v5756
      %5790 = vmatprep.subr.bf16.mxu0 %v5759
      %5791 = vmatpush1.bf16.msra.mxu0 %v5758
      %5792 = vmatprep.subr.bf16.mxu0 %v5761
      %5793 = vmatpush1.bf16.msra.mxu0 %v5760
      %5794 = vmatprep.subr.bf16.mxu0 %v5763
      %5795 = vmatpush1.bf16.msra.mxu0 %v5762
      %5796 = vmatprep.subr.bf16.mxu0 %v5765
      %5797 = vmatpush1.bf16.msra.mxu0 %v5764
      %5798 = vmatprep.subr.bf16.mxu0 %v5767
      %5799 = vmatpush1.bf16.msra.mxu0 %v5766
      %5800 = vmatprep.subr.bf16.mxu0 %v5769
      %5801 = vmatpush1.bf16.msra.mxu0 %v5768
      %5802 = vmatprep.subr.bf16.mxu0 0
      %5803 = vmatpush1.bf16.msra.mxu0 0
      %5804 = vmatprep.subr.bf16.mxu0 0
      %5805 = vmatpush1.bf16.msra.mxu0 0
      %5806 = vmatprep.subr.bf16.mxu0 0
      %5807 = vmatpush1.bf16.msra.mxu0 0
      %5808 = vmatprep.subr.bf16.mxu0 0
      %5809 = vmatpush1.bf16.msra.mxu0 0
      %5810 = vmatprep.subr.bf16.mxu0 0
      %5811 = vmatpush1.bf16.msra.mxu0 0
      %5812 = vmatprep.subr.bf16.mxu0 0
      %5813 = vmatpush1.bf16.msra.mxu0 0
      %5814 = vmatprep.subr.bf16.mxu0 0
      %5815 = vmatpush1.bf16.msra.mxu0 0
      %5816 = vmatprep.subr.bf16.mxu0 0
      %5817 = vmatpush1.bf16.msra.mxu0 0
      %5818 = vmatprep.mubr.bf16.mxu0 0
      %5819 = vmatmul.mubr.bf16.gmra.mrb[0].mxu0 %v5670
      %v5820 = vpop.f32.mrb[0].mxu0
      %v5821 = vadd.f32 %v5699, %v5820
      %v5822 = vpop.f32.mrb[0].mxu0
      %v5823 = vadd.f32 %v5703, %v5822
      %v5824 = vpop.f32.mrb[0].mxu0
      %v5825 = vadd.f32 %v5699, %v5824
      %v5826 = vpop.f32.mrb[0].mxu0
      %v5827 = vadd.f32 %v5703, %v5826
      %5828 = vmatprep.mubr.bf16.mxu0 0
      %5829 = vmatmul.mubr.bf16.gmra.mrb[0].mxu0 %v5671
      %v5830 = vpop.f32.mrb[0].mxu0
      %v5831 = vadd.f32 %v5699, %v5830
      %v5832 = vpop.f32.mrb[0].mxu0
      %v5833 = vadd.f32 %v5703, %v5832
      %v5834 = vpop.f32.mrb[0].mxu0
      %v5835 = vadd.f32 %v5699, %v5834
      %v5836 = vpop.f32.mrb[0].mxu0
      %v5837 = vadd.f32 %v5703, %v5836
      %5838 = vmatprep.mubr.bf16.mxu0 0
      %5839 = vmatmul.mubr.bf16.gmra.mrb[0].mxu0 %v5672
      %v5840 = vpop.f32.mrb[0].mxu0
      %v5841 = vadd.f32 %v5699, %v5840
      %v5842 = vpop.f32.mrb[0].mxu0
      %v5843 = vadd.f32 %v5703, %v5842
      %v5844 = vpop.f32.mrb[0].mxu0
      %v5845 = vadd.f32 %v5699, %v5844
      %v5846 = vpop.f32.mrb[0].mxu0
      %v5847 = vadd.f32 %v5703, %v5846
      %5848 = vmatprep.mubr.bf16.mxu0 0
      %5849 = vmatmul.mubr.bf16.gmra.mrb[0].mxu0 %v5673
      %v5850 = vpop.f32.mrb[0].mxu0
      %v5851 = vadd.f32 %v5699, %v5850
      %v5852 = vpop.f32.mrb[0].mxu0
      %v5853 = vadd.f32 %v5703, %v5852
      %v5854 = vpop.f32.mrb[0].mxu0
      %v5855 = vadd.f32 %v5699, %v5854
      %v5856 = vpop.f32.mrb[0].mxu0
      %v5857 = vadd.f32 %v5703, %v5856
      %5858 = vmatprep.mubr.bf16.mxu0 0
      %5859 = vmatmul.mubr.bf16.gmra.mrb[0].mxu0 %v5674
      %v5860 = vpop.f32.mrb[0].mxu0
      %v5861 = vadd.f32 %v5699, %v5860
      %v5862 = vpop.f32.mrb[0].mxu0
      %v5863 = vadd.f32 %v5703, %v5862
      %v5864 = vpop.f32.mrb[0].mxu0
      %v5865 = vadd.f32 %v5699, %v5864
      %v5866 = vpop.f32.mrb[0].mxu0
      %v5867 = vadd.f32 %v5703, %v5866
      %5868 = vmatprep.mubr.bf16.mxu0 0
      %5869 = vmatmul.mubr.bf16.gmra.mrb[0].mxu0 %v5675
      %v5870 = vpop.f32.mrb[0].mxu0
      %v5871 = vadd.f32 %v5699, %v5870
      %v5872 = vpop.f32.mrb[0].mxu0
      %v5873 = vadd.f32 %v5703, %v5872
      %v5874 = vpop.f32.mrb[0].mxu0
      %v5875 = vadd.f32 %v5699, %v5874
      %v5876 = vpop.f32.mrb[0].mxu0
      %v5877 = vadd.f32 %v5703, %v5876
      %5878 = vmatprep.mubr.bf16.mxu0 0
      %5879 = vmatmul.mubr.bf16.gmra.mrb[0].mxu0 %v5676
      %v5880 = vpop.f32.mrb[0].mxu0
      %v5881 = vadd.f32 %v5699, %v5880
      %v5882 = vpop.f32.mrb[0].mxu0
      %v5883 = vadd.f32 %v5703, %v5882
      %v5884 = vpop.f32.mrb[0].mxu0
      %v5885 = vadd.f32 %v5699, %v5884
      %v5886 = vpop.f32.mrb[0].mxu0
      %v5887 = vadd.f32 %v5703, %v5886
      %5888 = vmatprep.mubr.bf16.mxu0 0
      %5889 = vmatmul.mubr.bf16.gmra.mrb[0].mxu0 %v5677
      %v5890 = vpop.f32.mrb[0].mxu0
      %v5891 = vadd.f32 %v5699, %v5890
      %v5892 = vpop.f32.mrb[0].mxu0
      %v5893 = vadd.f32 %v5703, %v5892
      %v5894 = vpop.f32.mrb[0].mxu0
      %v5895 = vadd.f32 %v5699, %v5894
      %v5896 = vpop.f32.mrb[0].mxu0
      %v5897 = vadd.f32 %v5703, %v5896
      %5898 = vdwg.mxu0
      %v5899 = vmax.f32 %v5821, 0.0
      %v5900 = vmax.f32 %v5823, 0.0
      %v5901 = vmax.f32 %v5825, 0.0
      %v5902 = vmax.f32 %v5827, 0.0
      %v5903 = vmax.f32 %v5831, 0.0
      %v5904 = vmax.f32 %v5833, 0.0
      %v5905 = vmax.f32 %v5835, 0.0
      %v5906 = vmax.f32 %v5837, 0.0
      %v5907 = vmax.f32 %v5841, 0.0
      %v5908 = vmax.f32 %v5843, 0.0
      %v5909 = vmax.f32 %v5845, 0.0
      %v5910 = vmax.f32 %v5847, 0.0
      %v5911 = vmax.f32 %v5851, 0.0
      %v5912 = vmax.f32 %v5853, 0.0
      %v5913 = vmax.f32 %v5855, 0.0
      %v5914 = vmax.f32 %v5857, 0.0
      %v5915 = vmax.f32 %v5861, 0.0
      %v5916 = vmax.f32 %v5863, 0.0
      %v5917 = vmax.f32 %v5865, 0.0
      %v5918 = vmax.f32 %v5867, 0.0
      %v5919 = vmax.f32 %v5871, 0.0
      %v5920 = vmax.f32 %v5873, 0.0
      %v5921 = vmax.f32 %v5875, 0.0
      %v5922 = vmax.f32 %v5877, 0.0
      %v5923 = vmax.f32 %v5881, 0.0
      %v5924 = vmax.f32 %v5883, 0.0
      %v5925 = vmax.f32 %v5885, 0.0
      %v5926 = vmax.f32 %v5887, 0.0
      %v5927 = vmax.f32 %v5891, 0.0
      %v5928 = vmax.f32 %v5893, 0.0
      %v5929 = vmax.f32 %v5895, 0.0
      %v5930 = vmax.f32 %v5897, 0.0
      %v5931 = vpack.c.bf16 %v5901, %v5899
      %v5932 = vpack.c.bf16 %v5902, %v5900
      %v5933 = vpack.c.bf16 %v5905, %v5903
      %v5934 = vpack.c.bf16 %v5906, %v5904
      %v5935 = vpack.c.bf16 %v5909, %v5907
      %v5936 = vpack.c.bf16 %v5910, %v5908
      %v5937 = vpack.c.bf16 %v5913, %v5911
      %v5938 = vpack.c.bf16 %v5914, %v5912
      %v5939 = vpack.c.bf16 %v5917, %v5915
      %v5940 = vpack.c.bf16 %v5918, %v5916
      %v5941 = vpack.c.bf16 %v5921, %v5919
      %v5942 = vpack.c.bf16 %v5922, %v5920
      %v5943 = vpack.c.bf16 %v5925, %v5923
      %v5944 = vpack.c.bf16 %v5926, %v5924
      %v5945 = vpack.c.bf16 %v5929, %v5927
      %v5946 = vpack.c.bf16 %v5930, %v5928
      %v5947 = vld [vmem:[%s10] sm:$0xf]
      %v5948 = vld [vmem:[%s10 + $0x4] sm:$0xf]
      %v5949 = vld [vmem:[%s10 + $0x8] sm:$0xf]
      %v5950 = vld [vmem:[%s10 + $0xc] sm:$0xf]
      %v5951 = vld [vmem:[%s10 + $0x10] sm:$0xf]
      %v5952 = vld [vmem:[%s10 + $0x14] sm:$0xf]
      %v5953 = vld [vmem:[%s10 + $0x18] sm:$0xf]
      %v5954 = vld [vmem:[%s10 + $0x1c] sm:$0xf]
      %v5955 = vld [vmem:[%s10 + $0x20] sm:$0xf]
      %v5956 = vld [vmem:[%s10 + $0x24] sm:$0xf]
      %v5957 = vld [vmem:[%s10 + $0x28] sm:$0xf]
      %v5958 = vld [vmem:[%s10 + $0x2c] sm:$0xf]
      %v5959 = vld [vmem:[%s10 + $0x30] sm:$0xf]
      %v5960 = vld [vmem:[%s10 + $0x34] sm:$0xf]
      %v5961 = vld [vmem:[%s10 + $0x38] sm:$0xf]
      %v5962 = vld [vmem:[%s10 + $0x3c] sm:$0xf]
      %v5963 = vld [vmem:[%s10 + $0x40] sm:$0xf]
      %v5964 = vld [vmem:[%s10 + $0x44] sm:$0xf]
      %v5965 = vld [vmem:[%s10 + $0x48] sm:$0xf]
      %v5966 = vld [vmem:[%s10 + $0x4c] sm:$0xf]
      %v5967 = vld [vmem:[%s10 + $0x50] sm:$0xf]
      %v5968 = vld [vmem:[%s10 + $0x54] sm:$0xf]
      %v5969 = vld [vmem:[%s10 + $0x58] sm:$0xf]
      %v5970 = vld [vmem:[%s10 + $0x5c] sm:$0xf]
      %v5971 = vld [vmem:[%s10 + $0x60] sm:$0xf]
      %v5972 = vld [vmem:[%s10 + $0x64] sm:$0xf]
      %v5973 = vld [vmem:[%s10 + $0x68] sm:$0xf]
      %v5974 = vld [vmem:[%s10 + $0x6c] sm:$0xf]
      %v5975 = vld [vmem:[%s10 + $0x70] sm:$0xf]
      %v5976 = vld [vmem:[%s10 + $0x74] sm:$0xf]
      %v5977 = vld [vmem:[%s10 + $0x78] sm:$0xf]
      %v5978 = vld [vmem:[%s10 + $0x7c] sm:$0xf]
      %v5979 = vld [vmem:[%s11] sm:$0x1]
      %v5981 = vlaneseq
      %v5982 = vshrl.u32 %v5981, 7
      %v5983 = vsub.s32 0, %v5982
      %v5984 = vrot.slane %v5979, %v5983
      %v6018 = vunpack.c.l.b16 %v5947
      %v6019 = vunpack.c.l.b16 %v5948
      %v6020 = vunpack.c.l.b16 %v5949
      %v6021 = vunpack.c.l.b16 %v5950
      %v6022 = vunpack.c.l.b16 %v5951
      %v6023 = vunpack.c.l.b16 %v5952
      %v6024 = vunpack.c.l.b16 %v5953
      %v6025 = vunpack.c.l.b16 %v5954
      %v6026 = vunpack.c.l.b16 %v5955
      %v6027 = vunpack.c.l.b16 %v5956
      %v6028 = vunpack.c.l.b16 %v5957
      %v6029 = vunpack.c.l.b16 %v5958
      %v6030 = vunpack.c.l.b16 %v5959
      %v6031 = vunpack.c.l.b16 %v5960
      %v6032 = vunpack.c.l.b16 %v5961
      %v6033 = vunpack.c.l.b16 %v5962
      %v6034 = vunpack.c.l.b16 %v5963
      %v6035 = vunpack.c.l.b16 %v5964
      %v6036 = vunpack.c.l.b16 %v5965
      %v6037 = vunpack.c.l.b16 %v5966
      %v6038 = vunpack.c.l.b16 %v5967
      %v6039 = vunpack.c.l.b16 %v5968
      %v6040 = vunpack.c.l.b16 %v5969
      %v6041 = vunpack.c.l.b16 %v5970
      %v6042 = vunpack.c.l.b16 %v5971
      %v6043 = vunpack.c.l.b16 %v5972
      %v6044 = vunpack.c.l.b16 %v5973
      %v6045 = vunpack.c.l.b16 %v5974
      %v6046 = vunpack.c.l.b16 %v5975
      %v6047 = vunpack.c.l.b16 %v5976
      %v6048 = vunpack.c.l.b16 %v5977
      %v6049 = vunpack.c.l.b16 %v5978
      %v6050 = vpack.c.b16 %v6019, %v6018
      %v6051 = vpack.c.b16 %v6021, %v6020
      %v6052 = vpack.c.b16 %v6023, %v6022
      %v6053 = vpack.c.b16 %v6025, %v6024
      %v6054 = vpack.c.b16 %v6027, %v6026
      %v6055 = vpack.c.b16 %v6029, %v6028
      %v6056 = vpack.c.b16 %v6031, %v6030
      %v6057 = vpack.c.b16 %v6033, %v6032
      %v6058 = vpack.c.b16 %v6035, %v6034
      %v6059 = vpack.c.b16 %v6037, %v6036
      %v6060 = vpack.c.b16 %v6039, %v6038
      %v6061 = vpack.c.b16 %v6041, %v6040
      %v6062 = vpack.c.b16 %v6043, %v6042
      %v6063 = vpack.c.b16 %v6045, %v6044
      %v6064 = vpack.c.b16 %v6047, %v6046
      %v6065 = vpack.c.b16 %v6049, %v6048
      %6082 = vmatprep.subr.bf16.mxu0 0
      %6083 = vmatpush1.bf16.msra.mxu0 %v6050
      %6084 = vmatprep.subr.bf16.mxu0 0
      %6085 = vmatpush1.bf16.msra.mxu0 %v6051
      %6086 = vmatprep.subr.bf16.mxu0 0
      %6087 = vmatpush1.bf16.msra.mxu0 %v6052
      %6088 = vmatprep.subr.bf16.mxu0 0
      %6089 = vmatpush1.bf16.msra.mxu0 %v6053
      %6090 = vmatprep.subr.bf16.mxu0 0
      %6091 = vmatpush1.bf16.msra.mxu0 %v6054
      %6092 = vmatprep.subr.bf16.mxu0 0
      %6093 = vmatpush1.bf16.msra.mxu0 %v6055
      %6094 = vmatprep.subr.bf16.mxu0 0
      %6095 = vmatpush1.bf16.msra.mxu0 %v6056
      %6096 = vmatprep.subr.bf16.mxu0 0
      %6097 = vmatpush1.bf16.msra.mxu0 %v6057
      %6098 = vmatprep.subr.bf16.mxu0 0
      %6099 = vmatpush1.bf16.msra.mxu0 %v6058
      %6100 = vmatprep.subr.bf16.mxu0 0
      %6101 = vmatpush1.bf16.msra.mxu0 %v6059
      %6102 = vmatprep.subr.bf16.mxu0 0
      %6103 = vmatpush1.bf16.msra.mxu0 %v6060
      %6104 = vmatprep.subr.bf16.mxu0 0
      %6105 = vmatpush1.bf16.msra.mxu0 %v6061
      %6106 = vmatprep.subr.bf16.mxu0 0
      %6107 = vmatpush1.bf16.msra.mxu0 %v6062
      %6108 = vmatprep.subr.bf16.mxu0 0
      %6109 = vmatpush1.bf16.msra.mxu0 %v6063
      %6110 = vmatprep.subr.bf16.mxu0 0
      %6111 = vmatpush1.bf16.msra.mxu0 %v6064
      %6112 = vmatprep.subr.bf16.mxu0 0
      %6113 = vmatpush1.bf16.msra.mxu0 %v6065
      %6114 = vmatprep.mubr.bf16.mxu0 %v5932
      %6115 = vmatmul.mubr.bf16.gmra.mrb[0].mxu0 %v5931
      %v6116 = vpop.f32.mrb[0].mxu0
      %v6117 = vadd.f32 %v5984, %v6116
      %v6118 = vpop.f32.mrb[0].mxu0
      %v6119 = vpop.f32.mrb[0].mxu0
      %v6120 = vadd.f32 %v5984, %v6119
      %v6121 = vpop.f32.mrb[0].mxu0
      %6122 = vmatprep.mubr.bf16.mxu0 %v5934
      %6123 = vmatmul.mubr.bf16.gmra.mrb[0].mxu0 %v5933
      %v6124 = vpop.f32.mrb[0].mxu0
      %v6125 = vadd.f32 %v5984, %v6124
      %v6126 = vpop.f32.mrb[0].mxu0
      %v6127 = vpop.f32.mrb[0].mxu0
      %v6128 = vadd.f32 %v5984, %v6127
      %v6129 = vpop.f32.mrb[0].mxu0
      %6130 = vmatprep.mubr.bf16.mxu0 %v5936
      %6131 = vmatmul.mubr.bf16.gmra.mrb[0].mxu0 %v5935
      %v6132 = vpop.f32.mrb[0].mxu0
      %v6133 = vadd.f32 %v5984, %v6132
      %v6134 = vpop.f32.mrb[0].mxu0
      %v6135 = vpop.f32.mrb[0].mxu0
      %v6136 = vadd.f32 %v5984, %v6135
      %v6137 = vpop.f32.mrb[0].mxu0
      %6138 = vmatprep.mubr.bf16.mxu0 %v5938
      %6139 = vmatmul.mubr.bf16.gmra.mrb[0].mxu0 %v5937
      %v6140 = vpop.f32.mrb[0].mxu0
      %v6141 = vadd.f32 %v5984, %v6140
      %v6142 = vpop.f32.mrb[0].mxu0
      %v6143 = vpop.f32.mrb[0].mxu0
      %v6144 = vadd.f32 %v5984, %v6143
      %v6145 = vpop.f32.mrb[0].mxu0
      %6146 = vmatprep.mubr.bf16.mxu0 %v5940
      %6147 = vmatmul.mubr.bf16.gmra.mrb[0].mxu0 %v5939
      %v6148 = vpop.f32.mrb[0].mxu0
      %v6149 = vadd.f32 %v5984, %v6148
      %v6150 = vpop.f32.mrb[0].mxu0
      %v6151 = vpop.f32.mrb[0].mxu0
      %v6152 = vadd.f32 %v5984, %v6151
      %v6153 = vpop.f32.mrb[0].mxu0
      %6154 = vmatprep.mubr.bf16.mxu0 %v5942
      %6155 = vmatmul.mubr.bf16.gmra.mrb[0].mxu0 %v5941
      %v6156 = vpop.f32.mrb[0].mxu0
      %v6157 = vadd.f32 %v5984, %v6156
      %v6158 = vpop.f32.mrb[0].mxu0
      %v6159 = vpop.f32.mrb[0].mxu0
      %v6160 = vadd.f32 %v5984, %v6159
      %v6161 = vpop.f32.mrb[0].mxu0
      %6162 = vmatprep.mubr.bf16.mxu0 %v5944
      %6163 = vmatmul.mubr.bf16.gmra.mrb[0].mxu0 %v5943
      %v6164 = vpop.f32.mrb[0].mxu0
      %v6165 = vadd.f32 %v5984, %v6164
      %v6166 = vpop.f32.mrb[0].mxu0
      %v6167 = vpop.f32.mrb[0].mxu0
      %v6168 = vadd.f32 %v5984, %v6167
      %v6169 = vpop.f32.mrb[0].mxu0
      %6170 = vmatprep.mubr.bf16.mxu0 %v5946
      %6171 = vmatmul.mubr.bf16.gmra.mrb[0].mxu0 %v5945
      %v6172 = vpop.f32.mrb[0].mxu0
      %v6173 = vadd.f32 %v5984, %v6172
      %v6174 = vpop.f32.mrb[0].mxu0
      %v6175 = vpop.f32.mrb[0].mxu0
      %v6176 = vadd.f32 %v5984, %v6175
      %v6177 = vpop.f32.mrb[0].mxu0
      %6178 = vdwg.mxu0
      %v6179 = vadd.f32 %v5654, %v6117
      %v6180 = vadd.f32 %v5655, %v6120
      %v6181 = vadd.f32 %v5656, %v6125
      %v6182 = vadd.f32 %v5657, %v6128
      %v6183 = vadd.f32 %v5658, %v6133
      %v6184 = vadd.f32 %v5659, %v6136
      %v6185 = vadd.f32 %v5660, %v6141
      %v6186 = vadd.f32 %v5661, %v6144
      %v6187 = vadd.f32 %v5662, %v6149
      %v6188 = vadd.f32 %v5663, %v6152
      %v6189 = vadd.f32 %v5664, %v6157
      %v6190 = vadd.f32 %v5665, %v6160
      %v6191 = vadd.f32 %v5666, %v6165
      %v6192 = vadd.f32 %v5667, %v6168
      %v6193 = vadd.f32 %v5668, %v6173
      %v6194 = vadd.f32 %v5669, %v6176
      %v6195 = vld [vmem:[%s12] sm:$0x1]
      %v6196 = vld [vmem:[%s13] sm:$0x1]
      %6197 = vadd.xlane.f32.xlu0 %v6179
      %v6198 = vpop.xlane.xlu0 %6197
      %6199 = vadd.xlane.f32.xlu0 %v6180
      %v6200 = vpop.xlane.xlu0 %6199
      %6201 = vadd.xlane.f32.xlu0 %v6181
      %v6202 = vpop.xlane.xlu0 %6201
      %6203 = vadd.xlane.f32.xlu0 %v6182
      %v6204 = vpop.xlane.xlu0 %6203
      %6205 = vadd.xlane.f32.xlu0 %v6183
      %v6206 = vpop.xlane.xlu0 %6205
      %6207 = vadd.xlane.f32.xlu0 %v6184
      %v6208 = vpop.xlane.xlu0 %6207
      %6209 = vadd.xlane.f32.xlu0 %v6185
      %v6210 = vpop.xlane.xlu0 %6209
      %6211 = vadd.xlane.f32.xlu0 %v6186
      %v6212 = vpop.xlane.xlu0 %6211
      %6213 = vadd.xlane.f32.xlu0 %v6187
      %v6214 = vpop.xlane.xlu0 %6213
      %6215 = vadd.xlane.f32.xlu0 %v6188
      %v6216 = vpop.xlane.xlu0 %6215
      %6217 = vadd.xlane.f32.xlu0 %v6189
      %v6218 = vpop.xlane.xlu0 %6217
      %6219 = vadd.xlane.f32.xlu0 %v6190
      %v6220 = vpop.xlane.xlu0 %6219
      %6221 = vadd.xlane.f32.xlu0 %v6191
      %v6222 = vpop.xlane.xlu0 %6221
      %6223 = vadd.xlane.f32.xlu0 %v6192
      %v6224 = vpop.xlane.xlu0 %6223
      %6225 = vadd.xlane.f32.xlu0 %v6193
      %v6226 = vpop.xlane.xlu0 %6225
      %6227 = vadd.xlane.f32.xlu0 %v6194
      %v6228 = vpop.xlane.xlu0 %6227
      %v6229 = vmul.f32 %v6198, %v5481
      %v6230 = vmul.f32 %v6200, %v5481
      %v6231 = vmul.f32 %v6202, %v5481
      %v6232 = vmul.f32 %v6204, %v5481
      %v6233 = vmul.f32 %v6206, %v5481
      %v6234 = vmul.f32 %v6208, %v5481
      %v6235 = vmul.f32 %v6210, %v5481
      %v6236 = vmul.f32 %v6212, %v5481
      %v6237 = vmul.f32 %v6214, %v5481
      %v6238 = vmul.f32 %v6216, %v5481
      %v6239 = vmul.f32 %v6218, %v5481
      %v6240 = vmul.f32 %v6220, %v5481
      %v6241 = vmul.f32 %v6222, %v5481
      %v6242 = vmul.f32 %v6224, %v5481
      %v6243 = vmul.f32 %v6226, %v5481
      %v6244 = vmul.f32 %v6228, %v5481
      %v6245 = vsub.f32 %v6179, %v6229
      %v6246 = vsub.f32 %v6180, %v6230
      %v6247 = vsub.f32 %v6181, %v6231
      %v6248 = vsub.f32 %v6182, %v6232
      %v6249 = vsub.f32 %v6183, %v6233
      %v6250 = vsub.f32 %v6184, %v6234
      %v6251 = vsub.f32 %v6185, %v6235
      %v6252 = vsub.f32 %v6186, %v6236
      %v6253 = vsub.f32 %v6187, %v6237
      %v6254 = vsub.f32 %v6188, %v6238
      %v6255 = vsub.f32 %v6189, %v6239
      %v6256 = vsub.f32 %v6190, %v6240
      %v6257 = vsub.f32 %v6191, %v6241
      %v6258 = vsub.f32 %v6192, %v6242
      %v6259 = vsub.f32 %v6193, %v6243
      %v6260 = vsub.f32 %v6194, %v6244
      %v6261 = vmul.f32 %v6245, %v6245
      %v6262 = vmul.f32 %v6246, %v6246
      %v6263 = vmul.f32 %v6247, %v6247
      %v6264 = vmul.f32 %v6248, %v6248
      %v6265 = vmul.f32 %v6249, %v6249
      %v6266 = vmul.f32 %v6250, %v6250
      %v6267 = vmul.f32 %v6251, %v6251
      %v6268 = vmul.f32 %v6252, %v6252
      %v6269 = vmul.f32 %v6253, %v6253
      %v6270 = vmul.f32 %v6254, %v6254
      %v6271 = vmul.f32 %v6255, %v6255
      %v6272 = vmul.f32 %v6256, %v6256
      %v6273 = vmul.f32 %v6257, %v6257
      %v6274 = vmul.f32 %v6258, %v6258
      %v6275 = vmul.f32 %v6259, %v6259
      %v6276 = vmul.f32 %v6260, %v6260
      %6277 = vadd.xlane.f32.xlu0 %v6261
      %v6278 = vpop.xlane.xlu0 %6277
      %6279 = vadd.xlane.f32.xlu0 %v6262
      %v6280 = vpop.xlane.xlu0 %6279
      %6281 = vadd.xlane.f32.xlu0 %v6263
      %v6282 = vpop.xlane.xlu0 %6281
      %6283 = vadd.xlane.f32.xlu0 %v6264
      %v6284 = vpop.xlane.xlu0 %6283
      %6285 = vadd.xlane.f32.xlu0 %v6265
      %v6286 = vpop.xlane.xlu0 %6285
      %6287 = vadd.xlane.f32.xlu0 %v6266
      %v6288 = vpop.xlane.xlu0 %6287
      %6289 = vadd.xlane.f32.xlu0 %v6267
      %v6290 = vpop.xlane.xlu0 %6289
      %6291 = vadd.xlane.f32.xlu0 %v6268
      %v6292 = vpop.xlane.xlu0 %6291
      %6293 = vadd.xlane.f32.xlu0 %v6269
      %v6294 = vpop.xlane.xlu0 %6293
      %6295 = vadd.xlane.f32.xlu0 %v6270
      %v6296 = vpop.xlane.xlu0 %6295
      %6297 = vadd.xlane.f32.xlu0 %v6271
      %v6298 = vpop.xlane.xlu0 %6297
      %6299 = vadd.xlane.f32.xlu0 %v6272
      %v6300 = vpop.xlane.xlu0 %6299
      %6301 = vadd.xlane.f32.xlu0 %v6273
      %v6302 = vpop.xlane.xlu0 %6301
      %6303 = vadd.xlane.f32.xlu0 %v6274
      %v6304 = vpop.xlane.xlu0 %6303
      %6305 = vadd.xlane.f32.xlu0 %v6275
      %v6306 = vpop.xlane.xlu0 %6305
      %6307 = vadd.xlane.f32.xlu0 %v6276
      %v6308 = vpop.xlane.xlu0 %6307
      %v6309 = vmul.f32 %v6278, %v5481
      %v6310 = vmul.f32 %v6280, %v5481
      %v6311 = vmul.f32 %v6282, %v5481
      %v6312 = vmul.f32 %v6284, %v5481
      %v6313 = vmul.f32 %v6286, %v5481
      %v6314 = vmul.f32 %v6288, %v5481
      %v6315 = vmul.f32 %v6290, %v5481
      %v6316 = vmul.f32 %v6292, %v5481
      %v6317 = vmul.f32 %v6294, %v5481
      %v6318 = vmul.f32 %v6296, %v5481
      %v6319 = vmul.f32 %v6298, %v5481
      %v6320 = vmul.f32 %v6300, %v5481
      %v6321 = vmul.f32 %v6302, %v5481
      %v6322 = vmul.f32 %v6304, %v5481
      %v6323 = vmul.f32 %v6306, %v5481
      %v6324 = vmul.f32 %v6308, %v5481
      %v6325 = vadd.f32 %v6309, 1e-05
      %v6326 = vadd.f32 %v6310, 1e-05
      %v6327 = vadd.f32 %v6311, 1e-05
      %v6328 = vadd.f32 %v6312, 1e-05
      %v6329 = vadd.f32 %v6313, 1e-05
      %v6330 = vadd.f32 %v6314, 1e-05
      %v6331 = vadd.f32 %v6315, 1e-05
      %v6332 = vadd.f32 %v6316, 1e-05
      %v6333 = vadd.f32 %v6317, 1e-05
      %v6334 = vadd.f32 %v6318, 1e-05
      %v6335 = vadd.f32 %v6319, 1e-05
      %v6336 = vadd.f32 %v6320, 1e-05
      %v6337 = vadd.f32 %v6321, 1e-05
      %v6338 = vadd.f32 %v6322, 1e-05
      %v6339 = vadd.f32 %v6323, 1e-05
      %v6340 = vadd.f32 %v6324, 1e-05
      %v6341 = vrsqrt.pop %v6325
      %v6342 = vrsqrt.pop %v6326
      %v6343 = vrsqrt.pop %v6327
      %v6344 = vrsqrt.pop %v6328
      %v6345 = vrsqrt.pop %v6329
      %v6346 = vrsqrt.pop %v6330
      %v6347 = vrsqrt.pop %v6331
      %v6348 = vrsqrt.pop %v6332
      %v6349 = vrsqrt.pop %v6333
      %v6350 = vrsqrt.pop %v6334
      %v6351 = vrsqrt.pop %v6335
      %v6352 = vrsqrt.pop %v6336
      %v6353 = vrsqrt.pop %v6337
      %v6354 = vrsqrt.pop %v6338
      %v6355 = vrsqrt.pop %v6339
      %v6356 = vrsqrt.pop %v6340
      %v6357 = vmul.f32 %v6245, %v6341
      %v6358 = vmul.f32 %v6246, %v6342
      %v6359 = vmul.f32 %v6247, %v6343
      %v6360 = vmul.f32 %v6248, %v6344
      %v6361 = vmul.f32 %v6249, %v6345
      %v6362 = vmul.f32 %v6250, %v6346
      %v6363 = vmul.f32 %v6251, %v6347
      %v6364 = vmul.f32 %v6252, %v6348
      %v6365 = vmul.f32 %v6253, %v6349
      %v6366 = vmul.f32 %v6254, %v6350
      %v6367 = vmul.f32 %v6255, %v6351
      %v6368 = vmul.f32 %v6256, %v6352
      %v6369 = vmul.f32 %v6257, %v6353
      %v6370 = vmul.f32 %v6258, %v6354
      %v6371 = vmul.f32 %v6259, %v6355
      %v6372 = vmul.f32 %v6260, %v6356
      %v6374 = vlaneseq
      %v6375 = vshrl.u32 %v6374, 7
      %v6376 = vsub.s32 0, %v6375
      %v6377 = vrot.slane %v6195, %v6376
      %v6379 = vmul.f32 %v6357, %v6377
      %v6380 = vmul.f32 %v6358, %v6377
      %v6381 = vmul.f32 %v6359, %v6377
      %v6382 = vmul.f32 %v6360, %v6377
      %v6383 = vmul.f32 %v6361, %v6377
      %v6384 = vmul.f32 %v6362, %v6377
      %v6385 = vmul.f32 %v6363, %v6377
      %v6386 = vmul.f32 %v6364, %v6377
      %v6387 = vmul.f32 %v6365, %v6377
      %v6388 = vmul.f32 %v6366, %v6377
      %v6389 = vmul.f32 %v6367, %v6377
      %v6390 = vmul.f32 %v6368, %v6377
      %v6391 = vmul.f32 %v6369, %v6377
      %v6392 = vmul.f32 %v6370, %v6377
      %v6393 = vmul.f32 %v6371, %v6377
      %v6394 = vmul.f32 %v6372, %v6377
      %v6396 = vlaneseq
      %v6397 = vshrl.u32 %v6396, 7
      %v6398 = vsub.s32 0, %v6397
      %v6399 = vrot.slane %v6196, %v6398
      %v6401 = vadd.f32 %v6379, %v6399
      %v6402 = vadd.f32 %v6380, %v6399
      %v6403 = vadd.f32 %v6381, %v6399
      %v6404 = vadd.f32 %v6382, %v6399
      %v6405 = vadd.f32 %v6383, %v6399
      %v6406 = vadd.f32 %v6384, %v6399
      %v6407 = vadd.f32 %v6385, %v6399
      %v6408 = vadd.f32 %v6386, %v6399
      %v6409 = vadd.f32 %v6387, %v6399
      %v6410 = vadd.f32 %v6388, %v6399
      %v6411 = vadd.f32 %v6389, %v6399
      %v6412 = vadd.f32 %v6390, %v6399
      %v6413 = vadd.f32 %v6391, %v6399
      %v6414 = vadd.f32 %v6392, %v6399
      %v6415 = vadd.f32 %v6393, %v6399
      %v6416 = vadd.f32 %v6394, %v6399
      %v6417 = vpack.c.bf16 %v6402, %v6401
      %v6418 = vpack.c.bf16 %v6404, %v6403
      %v6419 = vpack.c.bf16 %v6406, %v6405
      %v6420 = vpack.c.bf16 %v6408, %v6407
      %v6421 = vpack.c.bf16 %v6410, %v6409
      %v6422 = vpack.c.bf16 %v6412, %v6411
      %v6423 = vpack.c.bf16 %v6414, %v6413
      %v6424 = vpack.c.bf16 %v6416, %v6415
      %v6433 = vunpack.c.l.b16 %v6417
      %v6434 = vunpack.c.h.b16 %v6417
      %v6435 = vunpack.c.l.b16 %v6418
      %v6436 = vunpack.c.h.b16 %v6418
      %v6437 = vunpack.c.l.b16 %v6419
      %v6438 = vunpack.c.h.b16 %v6419
      %v6439 = vunpack.c.l.b16 %v6420
      %v6440 = vunpack.c.h.b16 %v6420
      %v6441 = vunpack.c.l.b16 %v6421
      %v6442 = vunpack.c.h.b16 %v6421
      %v6443 = vunpack.c.l.b16 %v6422
      %v6444 = vunpack.c.h.b16 %v6422
      %v6445 = vunpack.c.l.b16 %v6423
      %v6446 = vunpack.c.h.b16 %v6423
      %v6447 = vunpack.c.l.b16 %v6424
      %v6448 = vunpack.c.h.b16 %v6424
      %v6449 = vpack.c.b16 %v6433, %v6433
      %v6450 = vpack.c.b16 %v6434, %v6434
      %v6451 = vpack.c.b16 %v6435, %v6435
      %v6452 = vpack.c.b16 %v6436, %v6436
      %v6453 = vpack.c.b16 %v6437, %v6437
      %v6454 = vpack.c.b16 %v6438, %v6438
      %v6455 = vpack.c.b16 %v6439, %v6439
      %v6456 = vpack.c.b16 %v6440, %v6440
      %v6457 = vpack.c.b16 %v6441, %v6441
      %v6458 = vpack.c.b16 %v6442, %v6442
      %v6459 = vpack.c.b16 %v6443, %v6443
      %v6460 = vpack.c.b16 %v6444, %v6444
      %v6461 = vpack.c.b16 %v6445, %v6445
      %v6462 = vpack.c.b16 %v6446, %v6446
      %v6463 = vpack.c.b16 %v6447, %v6447
      %v6464 = vpack.c.b16 %v6448, %v6448
      %6481 = vst [vmem:[%s493] sm:$0xf] %v6449
      %6482 = vst [vmem:[%s493 + $0x4] sm:$0xf] %v6450
      %6483 = vst [vmem:[%s493 + $0x8] sm:$0xf] %v6451
      %6484 = vst [vmem:[%s493 + $0xc] sm:$0xf] %v6452
      %6485 = vst [vmem:[%s493 + $0x10] sm:$0xf] %v6453
      %6486 = vst [vmem:[%s493 + $0x14] sm:$0xf] %v6454
      %6487 = vst [vmem:[%s493 + $0x18] sm:$0xf] %v6455
      %6488 = vst [vmem:[%s493 + $0x1c] sm:$0xf] %v6456
      %6489 = vst [vmem:[%s493 + $0x20] sm:$0xf] %v6457
      %6490 = vst [vmem:[%s493 + $0x24] sm:$0xf] %v6458
      %6491 = vst [vmem:[%s493 + $0x28] sm:$0xf] %v6459
      %6492 = vst [vmem:[%s493 + $0x2c] sm:$0xf] %v6460
      %6493 = vst [vmem:[%s493 + $0x30] sm:$0xf] %v6461
      %6494 = vst [vmem:[%s493 + $0x34] sm:$0xf] %v6462
      %6495 = vst [vmem:[%s493 + $0x38] sm:$0xf] %v6463
      %6496 = vst [vmem:[%s493 + $0x3c] sm:$0xf] %v6464
      %s6497 = smul.u32 8, %s25
      %p6498 = scmp.lt.s32.totalorder %s6497, 15
      %s6499 = scalar_select %p6498, %s6497, 15
      %s6500 = smul.addr %s6499, 2
      %s6501 = smul.addr %s6500, 4
      %s6502 = scalar_lea.vmem %s14, %s6501
      // Predicated region
      $region77: #{mygo_forward.9} parent=75 // pred_check
        %p6503 = pneg %p347
      $region78: #{mygo_forward.9} parent=75 // pred_check_branch
        %6505 = sbr.rel (%p6503) target = $region80
      $region79: #{mygo_forward.9} parent=75 // pred_region
        %s6506 = smul.u32 8, %s25
      $region80: #{mygo_forward.9} parent=75 // pred_fallthru
        _
    $region76: #{mygo_forward.9} parent=5 // pred_fallthru
      _
    %p6507 = scmp.le.s32.totalorder 2, %s20
    // Predicated region
    $region81: #{mygo_forward.9} parent=5 // pred_check
      %p6508 = pneg %p6507
    $region82: #{mygo_forward.9} parent=5 // pred_check_branch
      %6510 = sbr.rel (%p6508) target = $region84
    $region83: #{mygo_forward.9} parent=5 // pred_region
      %s6511 = ssub.s32 %s20, 2
      // Predicated region
      $region85: #{mygo_forward.9} parent=83 // pred_check
        %p6512 = pneg %p353
      $region86: #{mygo_forward.9} parent=83 // pred_check_branch
        %6514 = sbr.rel (%p6512) target = $region88
      $region87: #{mygo_forward.9} parent=83 // pred_region
        %s6515 = smul.u32 8, %s26
        %p6516 = scmp.lt.s32.totalorder %s6515, 15
        %s6517 = scalar_select %p6516, %s6515, 15
        %s6518 = smul.addr %s6517, 2
        %s6519 = smul.addr %s6518, 4
        %s6520 = scalar_lea.vmem %s14, %s6519
      $region88: #{mygo_forward.9} parent=83 // pred_fallthru
        _
    $region84: #{mygo_forward.9} parent=5 // pred_fallthru
      _
  $region6: #{mygo_forward.9} parent=0 // loop_footer
    %s24 = sadd.s32 1, %s20
  $region7: #{mygo_forward.9} parent=0 // loop_footer_branch
    %19 = sbr.rel target = $region3
  $region8: #{mygo_forward.9} parent=0 // loop_exit
    _

</llo_original>
